<compile_context>
chip_gen: v7x
topology: tpu7x:2x2x1
jax: 0.10.0
libtpu: 0.0.40
codegen_flags: <defaults>
</compile_context>

<pallas_src>
import functools

import jax
import jax.numpy as jnp
from jax.experimental import pallas as pl
from jax.experimental.pallas import tpu as pltpu

_EPS = 1e-5


# ----------------------------- Pallas kernels ------------------------------

def fc_bias_kernel(z_ref, w_ref, b_ref, out_ref):
    # (B, Z) @ (Z, F) + (1, F).  bf16 operands, f32 accumulation (one MXU pass).
    y = jnp.dot(z_ref[...].astype(jnp.bfloat16),
                w_ref[...].astype(jnp.bfloat16),
                preferred_element_type=jnp.float32)
    out_ref[...] = y + b_ref[...]


def bn_relu_kernel(x_ref, g_ref, b_ref, out_ref):
    # Training-mode BatchNorm (batch stats, biased variance) + ReLU on (N, C).
    x = x_ref[...]
    mean = jnp.mean(x, axis=0, keepdims=True)
    var = jnp.mean((x - mean) ** 2, axis=0, keepdims=True)
    y = (x - mean) * jax.lax.rsqrt(var + _EPS) * g_ref[...] + b_ref[...]
    out_ref[...] = jnp.maximum(y, 0.0)


def patches_gemm_bn_relu_kernel(p_ref, w_ref, g_ref, b_ref, out_ref):
    # Fused im2col-GEMM (conv bias omitted: cancelled by BN) + BN + ReLU.
    y = jnp.dot(p_ref[...].astype(jnp.bfloat16),
                w_ref[...].astype(jnp.bfloat16),
                preferred_element_type=jnp.float32)
    mean = jnp.mean(y, axis=0, keepdims=True)
    var = jnp.mean((y - mean) ** 2, axis=0, keepdims=True)
    yn = (y - mean) * jax.lax.rsqrt(var + _EPS) * g_ref[...] + b_ref[...]
    out_ref[...] = jnp.maximum(yn, 0.0)


def deconv_bn_relu_kernel(xp_ref, w_ref, g_ref, b_ref, out_ref, *, ksize, ho, wo):
    # In-kernel im2col: accumulate K*K small dots over shifted windows of the
    # VMEM-resident zero-dilated/padded input, then fused BN + ReLU epilogue.
    # (Conv bias omitted: exactly cancelled by the following BatchNorm.)
    nb = xp_ref.shape[0]
    cin = xp_ref.shape[3]
    cout = w_ref.shape[3]
    m = nb * ho * wo
    acc = jnp.zeros((m, cout), jnp.float32)
    for kh in range(ksize):
        for kw in range(ksize):
            x_sl = xp_ref[:, kh:kh + ho, kw:kw + wo, :]        # (B, ho, wo, cin)
            # wo % 8 == 0 -> this collapse is sublane-tile aligned (free).
            x2 = x_sl.reshape(m, cin).astype(jnp.bfloat16)
            wk = w_ref[kh, kw, :, :].astype(jnp.bfloat16)      # (cin, cout)
            acc = acc + jnp.dot(x2, wk, preferred_element_type=jnp.float32)
    mean = jnp.mean(acc, axis=0, keepdims=True)
    var = jnp.mean((acc - mean) ** 2, axis=0, keepdims=True)
    y = (acc - mean) * jax.lax.rsqrt(var + _EPS) * g_ref[...] + b_ref[...]
    out_ref[...] = jnp.maximum(y, 0.0)


def deconv_tanh_kernel(wt_ref, pt_ref, b_ref, out_ref):
    # Transposed orientation: (Cout, Kd) @ (Kd, Mt) + bias, tanh.
    # Output last dim = Mt (multiple of 128) -> lane-dense stores / EUP work.
    y = jnp.dot(wt_ref[...].astype(jnp.bfloat16),
                pt_ref[...].astype(jnp.bfloat16),
                preferred_element_type=jnp.float32) + b_ref[...]
    out_ref[...] = jnp.tanh(y)


# ----------------------------- Pallas wrappers ------------------------------

def fc_bias_pallas(z, w, b):
    B, Z = z.shape
    F = w.shape[1]
    return pl.pallas_call(
        fc_bias_kernel,
        out_shape=jax.ShapeDtypeStruct((B, F), jnp.float32),
        grid=(1,),
        in_specs=[pl.BlockSpec((B, Z), lambda i: (0, 0)),
                  pl.BlockSpec((Z, F), lambda i: (0, 0)),
                  pl.BlockSpec((1, F), lambda i: (0, 0))],
        out_specs=pl.BlockSpec((B, F), lambda i: (0, 0)),
        compiler_params=pltpu.CompilerParams(dimension_semantics=("arbitrary",)),
    )(z, w, b.reshape(1, F))


def bn_relu_pallas(x2, gamma, beta):
    N, C = x2.shape
    return pl.pallas_call(
        bn_relu_kernel,
        out_shape=jax.ShapeDtypeStruct((N, C), jnp.float32),
        grid=(1,),
        in_specs=[pl.BlockSpec((N, C), lambda i: (0, 0)),
                  pl.BlockSpec((1, C), lambda i: (0, 0)),
                  pl.BlockSpec((1, C), lambda i: (0, 0))],
        out_specs=pl.BlockSpec((N, C), lambda i: (0, 0)),
        compiler_params=pltpu.CompilerParams(dimension_semantics=("arbitrary",)),
    )(x2, gamma.reshape(1, C), beta.reshape(1, C))


def _patches_gemm_bn_relu_call(patches, w2, gamma, beta):
    M, Kd = patches.shape
    Cout = w2.shape[1]
    return pl.pallas_call(
        patches_gemm_bn_relu_kernel,
        out_shape=jax.ShapeDtypeStruct((M, Cout), jnp.float32),
        grid=(1,),
        in_specs=[pl.BlockSpec((M, Kd), lambda i: (0, 0)),
                  pl.BlockSpec((Kd, Cout), lambda i: (0, 0)),
                  pl.BlockSpec((1, Cout), lambda i: (0, 0)),
                  pl.BlockSpec((1, Cout), lambda i: (0, 0))],
        out_specs=pl.BlockSpec((M, Cout), lambda i: (0, 0)),
        compiler_params=pltpu.CompilerParams(dimension_semantics=("arbitrary",)),
    )(patches, w2, gamma.reshape(1, Cout), beta.reshape(1, Cout))


def _deconv_bn_relu_fused_call(xp, w_hwio, gamma, beta, *, ksize, ho, wo):
    B, Hp, Wp, Cin = xp.shape
    Cout = w_hwio.shape[3]
    M = B * ho * wo
    kernel = functools.partial(deconv_bn_relu_kernel, ksize=ksize, ho=ho, wo=wo)
    return pl.pallas_call(
        kernel,
        out_shape=jax.ShapeDtypeStruct((M, Cout), jnp.float32),
        grid=(1,),
        in_specs=[pl.BlockSpec((B, Hp, Wp, Cin), lambda i: (0, 0, 0, 0)),
                  pl.BlockSpec((ksize, ksize, Cin, Cout), lambda i: (0, 0, 0, 0)),
                  pl.BlockSpec((1, Cout), lambda i: (0, 0)),
                  pl.BlockSpec((1, Cout), lambda i: (0, 0))],
        out_specs=pl.BlockSpec((M, Cout), lambda i: (0, 0)),
        compiler_params=pltpu.CompilerParams(dimension_semantics=("arbitrary",)),
    )(xp, w_hwio, gamma.reshape(1, Cout), beta.reshape(1, Cout))


# One-time probe: verify the in-kernel-im2col fused path lowers and matches the
# wrapper-im2col path; otherwise fall back (guarantees a clean run everywhere).
_IM2COL_FUSED_OK = None


def _in_kernel_im2col_ok():
    global _IM2COL_FUSED_OK
    if _IM2COL_FUSED_OK is not None:
        return _IM2COL_FUSED_OK
    try:
        k1, k2 = jax.random.split(jax.random.PRNGKey(42))
        xp = jax.random.normal(k1, (2, 11, 11, 16), jnp.float32)
        w = 0.1 * jax.random.normal(k2, (4, 4, 16, 8), jnp.float32)
        g = jnp.ones((8,), jnp.float32)
        b = jnp.zeros((8,), jnp.float32)
        fused = _deconv_bn_relu_fused_call(xp, w, g, b, ksize=4, ho=8, wo=8)
        patches = jnp.stack([xp[:, kh:kh + 8, kw:kw + 8, :]
                             for kh in range(4) for kw in range(4)], axis=3)
        patches = patches.reshape(2 * 8 * 8, 4 * 4 * 16)
        ref = _patches_gemm_bn_relu_call(patches, w.reshape(4 * 4 * 16, 8), g, b)
        err = float(jnp.max(jnp.abs(fused - ref)))
        _IM2COL_FUSED_OK = bool(err < 1e-2)
    except Exception:
        _IM2COL_FUSED_OK = False
    return _IM2COL_FUSED_OK


# ------------------------------ Layer wrappers ------------------------------

def _dilate_and_pad(x_nhwc, ksize, stride, padding):
    B, H, W, Cin = x_nhwc.shape
    if stride > 1:
        Hd, Wd = (H - 1) * stride + 1, (W - 1) * stride + 1
        xd = jnp.zeros((B, Hd, Wd, Cin), x_nhwc.dtype)
        xd = xd.at[:, ::stride, ::stride, :].set(x_nhwc)
    else:
        xd = x_nhwc
    p = ksize - 1 - padding
    xp = jnp.pad(xd, ((0, 0), (p, p), (p, p), (0, 0)))
    Ho = (H - 1) * stride - 2 * padding + ksize
    Wo = (W - 1) * stride - 2 * padding + ksize
    return xp, Ho, Wo


def deconv_bn_relu(x_nhwc, w_torch, gamma, beta, *, stride, padding):
    """ConvTranspose2d (bias dropped: cancelled by BN) + BatchNorm + ReLU."""
    B = x_nhwc.shape[0]
    Cin, Cout, ksize, _ = w_torch.shape
    w_hwio = jnp.transpose(w_torch[:, :, ::-1, ::-1], (2, 3, 0, 1))  # (K,K,Cin,Cout)
    xp, Ho, Wo = _dilate_and_pad(x_nhwc, ksize, stride, padding)
    if Wo % 8 == 0 and _in_kernel_im2col_ok():
        y = _deconv_bn_relu_fused_call(xp, w_hwio, gamma, beta,
                                       ksize=ksize, ho=Ho, wo=Wo)
    else:
        # TODO(synk): move this im2col in-kernel too once the non-8-aligned
        # (Wo=4) sublane-collapse reshape is confirmed supported by Mosaic.
        patches = jnp.stack([xp[:, kh:kh + Ho, kw:kw + Wo, :]
                             for kh in range(ksize) for kw in range(ksize)],
                            axis=3)                       # (B,Ho,Wo,K*K,Cin)
        patches = patches.reshape(B * Ho * Wo, ksize * ksize * Cin)
        y = _patches_gemm_bn_relu_call(
            patches, w_hwio.reshape(ksize * ksize * Cin, Cout), gamma, beta)
    return y.reshape(B, Ho, Wo, Cout)


def deconv_tanh_nchw(x_nhwc, w_torch, bias, *, stride, padding):
    """Final ConvTranspose2d + bias + tanh, lane-dense, NCHW output."""
    B = x_nhwc.shape[0]
    Cin, Cout, ksize, _ = w_torch.shape
    w_hwio = jnp.transpose(w_torch[:, :, ::-1, ::-1], (2, 3, 0, 1))
    xp, Ho, Wo = _dilate_and_pad(x_nhwc, ksize, stride, padding)
    M = B * Ho * Wo
    Kd = ksize * ksize * Cin
    # Transposed im2col (Kd, M): kernel output (Cout, M) has the long spatial
    # axis on lanes and is already channel-major for the NCHW result.
    xpc = jnp.transpose(xp, (3, 0, 1, 2))                 # (Cin, B, Hp, Wp)
    pt = jnp.stack([xpc[:, :, kh:kh + Ho, kw:kw + Wo]
                    for kh in range(ksize) for kw in range(ksize)], axis=0)
    pt = pt.reshape(Kd, M)
    w2t = jnp.transpose(w_hwio, (3, 0, 1, 2)).reshape(Cout, Kd)
    n_m = 2 if M % 256 == 0 else 1      # 2 'parallel' M tiles -> both v7x cores
    Mt = M // n_m
    y = pl.pallas_call(
        deconv_tanh_kernel,
        out_shape=jax.ShapeDtypeStruct((Cout, M), jnp.float32),
        grid=(n_m,),
        in_specs=[pl.BlockSpec((Cout, Kd), lambda i: (0, 0)),
                  pl.BlockSpec((Kd, Mt), lambda i: (0, i)),
                  pl.BlockSpec((Cout, 1), lambda i: (0, 0))],
        out_specs=pl.BlockSpec((Cout, Mt), lambda i: (0, i)),
        compiler_params=pltpu.CompilerParams(dimension_semantics=("parallel",)),
    )(w2t, pt, bias.reshape(Cout, 1))
    return jnp.transpose(y.reshape(Cout, B, Ho, Wo), (1, 0, 2, 3))   # NCHW


# ------------------------------ Model forward -------------------------------

def generator_forward(params, z, *, image_size, channel_size):
    B, zdim = z.shape
    s = image_size // 8
    c8 = channel_size * 8
    F = s * s * c8

    # fc: permute weight columns once so the GEMM writes the activation in
    # NHWC-flattened order (no XLA transpose between fc and the deconv stack).
    # The per-feature fc bias is kept (it varies spatially -> NOT cancelled by bn0).
    w_p = jnp.transpose(params["fc_w"].reshape(c8, s, s, zdim),
                        (1, 2, 0, 3)).reshape(F, zdim)
    b_p = jnp.transpose(params["fc_b"].reshape(c8, s, s), (1, 2, 0)).reshape(F)
    a = fc_bias_pallas(z, w_p.T, b_p)                       # (B, F), F = (h, w, c)
    a = bn_relu_pallas(a.reshape(B * s * s, c8),
                       params["bn0_g"], params["bn0_b"])
    g = a.reshape(B, s, s, c8)                              # NHWC

    g = deconv_bn_relu(g, params["d1_w"], params["bn1_g"], params["bn1_b"],
                       stride=2, padding=1)
    g = deconv_bn_relu(g, params["d2_w"], params["bn2_g"], params["bn2_b"],
                       stride=2, padding=1)
    g = deconv_bn_relu(g, params["d3_w"], params["bn3_g"], params["bn3_b"],
                       stride=2, padding=1)
    return deconv_tanh_nchw(g, params["d4_w"], params["d4_b"],
                            stride=1, padding=1)            # (B, C_img, H, W)


# --------------------------- Pure-JAX reference -----------------------------

def _ref_bn_relu(x, g, b):
    mean = x.mean(axis=(0, 1, 2), keepdims=True)
    var = ((x - mean) ** 2).mean(axis=(0, 1, 2), keepdims=True)
    return jnp.maximum((x - mean) * jax.lax.rsqrt(var + _EPS) * g + b, 0.0)


def _ref_deconv(x, w, b, stride, padding):
    K = w.shape[2]
    w_hwio = jnp.transpose(w[:, :, ::-1, ::-1], (2, 3, 0, 1))
    y = jax.lax.conv_general_dilated(
        x.astype(jnp.bfloat16), w_hwio.astype(jnp.bfloat16),
        window_strides=(1, 1),
        padding=[(K - 1 - padding,) * 2] * 2,
        lhs_dilation=(stride, stride),
        dimension_numbers=("NHWC", "HWIO", "NHWC"),
        preferred_element_type=jnp.float32)
    return y + b.reshape(1, 1, 1, -1)


def ref_forward(params, z, *, image_size, channel_size):
    B = z.shape[0]
    s = image_size // 8
    c8 = channel_size * 8
    g = jnp.dot(z.astype(jnp.bfloat16), params["fc_w"].T.astype(jnp.bfloat16),
                preferred_element_type=jnp.float32) + params["fc_b"]
    g = jnp.transpose(g.reshape(B, c8, s, s), (0, 2, 3, 1))
    g = _ref_bn_relu(g, params["bn0_g"], params["bn0_b"])
    g = _ref_bn_relu(_ref_deconv(g, params["d1_w"], params["d1_b"], 2, 1),
                     params["bn1_g"], params["bn1_b"])
    g = _ref_bn_relu(_ref_deconv(g, params["d2_w"], params["d2_b"], 2, 1),
                     params["bn2_g"], params["bn2_b"])
    g = _ref_bn_relu(_ref_deconv(g, params["d3_w"], params["d3_b"], 2, 1),
                     params["bn3_g"], params["bn3_b"])
    g = jnp.tanh(_ref_deconv(g, params["d4_w"], params["d4_b"], 1, 1))
    return jnp.transpose(g, (0, 3, 1, 2))


# ------------------------------- Init params --------------------------------

def init_params(key, z_size, image_size, image_channel_size, channel_size):
    s = image_size // 8
    c8, c4, c2, c1 = (channel_size * 8, channel_size * 4,
                      channel_size * 2, channel_size)
    F = s * s * c8
    ks = jax.random.split(key, 18)

    def n(k, shape, scale=0.1):
        return scale * jax.random.normal(k, shape, jnp.float32)

    return dict(
        fc_w=n(ks[0], (F, z_size)),   fc_b=n(ks[1], (F,)),
        bn0_g=1.0 + n(ks[2], (c8,)),  bn0_b=n(ks[3], (c8,)),
        d1_w=n(ks[4], (c8, c4, 4, 4)), d1_b=n(ks[5], (c4,)),
        bn1_g=1.0 + n(ks[6], (c4,)),  bn1_b=n(ks[7], (c4,)),
        d2_w=n(ks[8], (c4, c2, 4, 4)), d2_b=n(ks[9], (c2,)),
        bn2_g=1.0 + n(ks[10], (c2,)), bn2_b=n(ks[11], (c2,)),
        d3_w=n(ks[12], (c2, c1, 4, 4)), d3_b=n(ks[13], (c1,)),
        bn3_g=1.0 + n(ks[14], (c1,)), bn3_b=n(ks[15], (c1,)),
        d4_w=n(ks[16], (c1, image_channel_size, 3, 3)),
        d4_b=n(ks[17], (image_channel_size,)),
    )


# ----------------------------------- Main ------------------------------------

if __name__ == "__main__":
    Z_SIZE, IMAGE_SIZE, IMAGE_CHANNELS, CHANNEL_SIZE = 32, 16, 3, 8
    BATCH = 2

    key = jax.random.PRNGKey(0)
    kz, kp = jax.random.split(key)
    params = init_params(kp, Z_SIZE, IMAGE_SIZE, IMAGE_CHANNELS, CHANNEL_SIZE)
    z = jax.random.normal(kz, (BATCH, Z_SIZE), jnp.float32)

    # Resolve the in-kernel-im2col probe before jitting the forward pass.
    _in_kernel_im2col_ok()

    fwd = jax.jit(functools.partial(generator_forward,
                                    image_size=IMAGE_SIZE,
                                    channel_size=CHANNEL_SIZE))
    out = jax.block_until_ready(fwd(params, z))

    assert out.shape == (BATCH, IMAGE_CHANNELS, IMAGE_SIZE, IMAGE_SIZE), out.shape
    assert bool(jnp.all(jnp.isfinite(out)))

    ref = ref_forward(params, z, image_size=IMAGE_SIZE, channel_size=CHANNEL_SIZE)
    err = float(jnp.max(jnp.abs(out - ref)))
    # bf16 MXU inputs (f32 accumulation) on both sides -> small rounding drift.
    assert err < 2e-2, f"mismatch vs reference: {err}"

    print("KERNEL_OK")
</pallas_src>

<mosaic_0001>
module attributes {stable_mosaic.version = 11 : i64} {
  func.func @deconv_bn_relu_kernel(%arg0: i32, %arg1: memref<2x11x11x16xf32, #tpu.memory_space<vmem>>, %arg2: memref<4x4x16x8xf32, #tpu.memory_space<vmem>>, %arg3: memref<1x8xf32, #tpu.memory_space<vmem>>, %arg4: memref<1x8xf32, #tpu.memory_space<vmem>>, %arg5: memref<128x8xf32, #tpu.memory_space<vmem>>) attributes {dimension_semantics = [#tpu.dimension_semantics<arbitrary>], iteration_bounds = array<i64: 1>, scalar_prefetch = 0 : i64, scratch_operands = 0 : i64, tpu.core_type = #tpu.core_type<tc>, window_params = [{pipeline_mode = #tpu.pipeline_mode<synchronous>, transform_indices = @transform_0, window_bounds = array<i64: 2, 11, 11, 16>}, {pipeline_mode = #tpu.pipeline_mode<synchronous>, transform_indices = @transform_1, window_bounds = array<i64: 4, 4, 16, 8>}, {pipeline_mode = #tpu.pipeline_mode<synchronous>, transform_indices = @transform_2, window_bounds = array<i64: 1, 8>}, {pipeline_mode = #tpu.pipeline_mode<synchronous>, transform_indices = @transform_3, window_bounds = array<i64: 1, 8>}, {pipeline_mode = #tpu.pipeline_mode<synchronous>, transform_indices = @transform_4, window_bounds = array<i64: 128, 8>}]} {
    %cst = arith.constant 0.000000e+00 : f32
    %0 = vector.broadcast %cst : f32 to vector<128x8xf32>
    %c0 = arith.constant 0 : index
    %c0_0 = arith.constant 0 : index
    %c0_1 = arith.constant 0 : index
    %c0_2 = arith.constant 0 : index
    %1 = vector.load %arg1[%c0, %c0_0, %c0_1, %c0_2] : memref<2x11x11x16xf32, #tpu.memory_space<vmem>>, vector<2x8x8x16xf32>
    %2 = vector.shape_cast %1 : vector<2x8x8x16xf32> to vector<128x16xf32>
    %3 = arith.truncf %2 : vector<128x16xf32> to vector<128x16xbf16>
    %c0_3 = arith.constant 0 : index
    %c0_4 = arith.constant 0 : index
    %c0_5 = arith.constant 0 : index
    %c0_6 = arith.constant 0 : index
    %4 = vector.load %arg2[%c0_3, %c0_4, %c0_5, %c0_6] : memref<4x4x16x8xf32, #tpu.memory_space<vmem>>, vector<1x1x16x8xf32>
    %5 = vector.shape_cast %4 : vector<1x1x16x8xf32> to vector<16x8xf32>
    %6 = arith.truncf %5 : vector<16x8xf32> to vector<16x8xbf16>
    %cst_7 = arith.constant dense<0.000000e+00> : vector<128x8xf32>
    %7 = tpu.matmul %3, %6, %cst_7 {dimension_numbers = #tpu.dot_dimension_numbers<[1], [0], [0], [1], [0, 0, 1, 1], [], []>} : vector<128x16xbf16>, vector<16x8xbf16>, vector<128x8xf32> -> vector<128x8xf32>
    %8 = arith.addf %0, %7 : vector<128x8xf32>
    %c0_8 = arith.constant 0 : index
    %c0_9 = arith.constant 0 : index
    %c1 = arith.constant 1 : index
    %c0_10 = arith.constant 0 : index
    %9 = vector.load %arg1[%c0_8, %c0_9, %c1, %c0_10] : memref<2x11x11x16xf32, #tpu.memory_space<vmem>>, vector<2x8x8x16xf32>
    %10 = vector.shape_cast %9 : vector<2x8x8x16xf32> to vector<128x16xf32>
    %11 = arith.truncf %10 : vector<128x16xf32> to vector<128x16xbf16>
    %c0_11 = arith.constant 0 : index
    %c1_12 = arith.constant 1 : index
    %c0_13 = arith.constant 0 : index
    %c0_14 = arith.constant 0 : index
    %12 = vector.load %arg2[%c0_11, %c1_12, %c0_13, %c0_14] : memref<4x4x16x8xf32, #tpu.memory_space<vmem>>, vector<1x1x16x8xf32>
    %13 = vector.shape_cast %12 : vector<1x1x16x8xf32> to vector<16x8xf32>
    %14 = arith.truncf %13 : vector<16x8xf32> to vector<16x8xbf16>
    %cst_15 = arith.constant dense<0.000000e+00> : vector<128x8xf32>
    %15 = tpu.matmul %11, %14, %cst_15 {dimension_numbers = #tpu.dot_dimension_numbers<[1], [0], [0], [1], [0, 0, 1, 1], [], []>} : vector<128x16xbf16>, vector<16x8xbf16>, vector<128x8xf32> -> vector<128x8xf32>
    %16 = arith.addf %8, %15 : vector<128x8xf32>
    %c0_16 = arith.constant 0 : index
    %c0_17 = arith.constant 0 : index
    %c2 = arith.constant 2 : index
    %c0_18 = arith.constant 0 : index
    %17 = vector.load %arg1[%c0_16, %c0_17, %c2, %c0_18] : memref<2x11x11x16xf32, #tpu.memory_space<vmem>>, vector<2x8x8x16xf32>
    %18 = vector.shape_cast %17 : vector<2x8x8x16xf32> to vector<128x16xf32>
    %19 = arith.truncf %18 : vector<128x16xf32> to vector<128x16xbf16>
    %c0_19 = arith.constant 0 : index
    %c2_20 = arith.constant 2 : index
    %c0_21 = arith.constant 0 : index
    %c0_22 = arith.constant 0 : index
    %20 = vector.load %arg2[%c0_19, %c2_20, %c0_21, %c0_22] : memref<4x4x16x8xf32, #tpu.memory_space<vmem>>, vector<1x1x16x8xf32>
    %21 = vector.shape_cast %20 : vector<1x1x16x8xf32> to vector<16x8xf32>
    %22 = arith.truncf %21 : vector<16x8xf32> to vector<16x8xbf16>
    %cst_23 = arith.constant dense<0.000000e+00> : vector<128x8xf32>
    %23 = tpu.matmul %19, %22, %cst_23 {dimension_numbers = #tpu.dot_dimension_numbers<[1], [0], [0], [1], [0, 0, 1, 1], [], []>} : vector<128x16xbf16>, vector<16x8xbf16>, vector<128x8xf32> -> vector<128x8xf32>
    %24 = arith.addf %16, %23 : vector<128x8xf32>
    %c0_24 = arith.constant 0 : index
    %c0_25 = arith.constant 0 : index
    %c3 = arith.constant 3 : index
    %c0_26 = arith.constant 0 : index
    %25 = vector.load %arg1[%c0_24, %c0_25, %c3, %c0_26] : memref<2x11x11x16xf32, #tpu.memory_space<vmem>>, vector<2x8x8x16xf32>
    %26 = vector.shape_cast %25 : vector<2x8x8x16xf32> to vector<128x16xf32>
    %27 = arith.truncf %26 : vector<128x16xf32> to vector<128x16xbf16>
    %c0_27 = arith.constant 0 : index
    %c3_28 = arith.constant 3 : index
    %c0_29 = arith.constant 0 : index
    %c0_30 = arith.constant 0 : index
    %28 = vector.load %arg2[%c0_27, %c3_28, %c0_29, %c0_30] : memref<4x4x16x8xf32, #tpu.memory_space<vmem>>, vector<1x1x16x8xf32>
    %29 = vector.shape_cast %28 : vector<1x1x16x8xf32> to vector<16x8xf32>
    %30 = arith.truncf %29 : vector<16x8xf32> to vector<16x8xbf16>
    %cst_31 = arith.constant dense<0.000000e+00> : vector<128x8xf32>
    %31 = tpu.matmul %27, %30, %cst_31 {dimension_numbers = #tpu.dot_dimension_numbers<[1], [0], [0], [1], [0, 0, 1, 1], [], []>} : vector<128x16xbf16>, vector<16x8xbf16>, vector<128x8xf32> -> vector<128x8xf32>
    %32 = arith.addf %24, %31 : vector<128x8xf32>
    %c0_32 = arith.constant 0 : index
    %c1_33 = arith.constant 1 : index
    %c0_34 = arith.constant 0 : index
    %c0_35 = arith.constant 0 : index
    %33 = vector.load %arg1[%c0_32, %c1_33, %c0_34, %c0_35] : memref<2x11x11x16xf32, #tpu.memory_space<vmem>>, vector<2x8x8x16xf32>
    %34 = vector.shape_cast %33 : vector<2x8x8x16xf32> to vector<128x16xf32>
    %35 = arith.truncf %34 : vector<128x16xf32> to vector<128x16xbf16>
    %c1_36 = arith.constant 1 : index
    %c0_37 = arith.constant 0 : index
    %c0_38 = arith.constant 0 : index
    %c0_39 = arith.constant 0 : index
    %36 = vector.load %arg2[%c1_36, %c0_37, %c0_38, %c0_39] : memref<4x4x16x8xf32, #tpu.memory_space<vmem>>, vector<1x1x16x8xf32>
    %37 = vector.shape_cast %36 : vector<1x1x16x8xf32> to vector<16x8xf32>
    %38 = arith.truncf %37 : vector<16x8xf32> to vector<16x8xbf16>
    %cst_40 = arith.constant dense<0.000000e+00> : vector<128x8xf32>
    %39 = tpu.matmul %35, %38, %cst_40 {dimension_numbers = #tpu.dot_dimension_numbers<[1], [0], [0], [1], [0, 0, 1, 1], [], []>} : vector<128x16xbf16>, vector<16x8xbf16>, vector<128x8xf32> -> vector<128x8xf32>
    %40 = arith.addf %32, %39 : vector<128x8xf32>
    %c0_41 = arith.constant 0 : index
    %c1_42 = arith.constant 1 : index
    %c1_43 = arith.constant 1 : index
    %c0_44 = arith.constant 0 : index
    %41 = vector.load %arg1[%c0_41, %c1_42, %c1_43, %c0_44] : memref<2x11x11x16xf32, #tpu.memory_space<vmem>>, vector<2x8x8x16xf32>
    %42 = vector.shape_cast %41 : vector<2x8x8x16xf32> to vector<128x16xf32>
    %43 = arith.truncf %42 : vector<128x16xf32> to vector<128x16xbf16>
    %c1_45 = arith.constant 1 : index
    %c1_46 = arith.constant 1 : index
    %c0_47 = arith.constant 0 : index
    %c0_48 = arith.constant 0 : index
    %44 = vector.load %arg2[%c1_45, %c1_46, %c0_47, %c0_48] : memref<4x4x16x8xf32, #tpu.memory_space<vmem>>, vector<1x1x16x8xf32>
    %45 = vector.shape_cast %44 : vector<1x1x16x8xf32> to vector<16x8xf32>
    %46 = arith.truncf %45 : vector<16x8xf32> to vector<16x8xbf16>
    %cst_49 = arith.constant dense<0.000000e+00> : vector<128x8xf32>
    %47 = tpu.matmul %43, %46, %cst_49 {dimension_numbers = #tpu.dot_dimension_numbers<[1], [0], [0], [1], [0, 0, 1, 1], [], []>} : vector<128x16xbf16>, vector<16x8xbf16>, vector<128x8xf32> -> vector<128x8xf32>
    %48 = arith.addf %40, %47 : vector<128x8xf32>
    %c0_50 = arith.constant 0 : index
    %c1_51 = arith.constant 1 : index
    %c2_52 = arith.constant 2 : index
    %c0_53 = arith.constant 0 : index
    %49 = vector.load %arg1[%c0_50, %c1_51, %c2_52, %c0_53] : memref<2x11x11x16xf32, #tpu.memory_space<vmem>>, vector<2x8x8x16xf32>
    %50 = vector.shape_cast %49 : vector<2x8x8x16xf32> to vector<128x16xf32>
    %51 = arith.truncf %50 : vector<128x16xf32> to vector<128x16xbf16>
    %c1_54 = arith.constant 1 : index
    %c2_55 = arith.constant 2 : index
    %c0_56 = arith.constant 0 : index
    %c0_57 = arith.constant 0 : index
    %52 = vector.load %arg2[%c1_54, %c2_55, %c0_56, %c0_57] : memref<4x4x16x8xf32, #tpu.memory_space<vmem>>, vector<1x1x16x8xf32>
    %53 = vector.shape_cast %52 : vector<1x1x16x8xf32> to vector<16x8xf32>
    %54 = arith.truncf %53 : vector<16x8xf32> to vector<16x8xbf16>
    %cst_58 = arith.constant dense<0.000000e+00> : vector<128x8xf32>
    %55 = tpu.matmul %51, %54, %cst_58 {dimension_numbers = #tpu.dot_dimension_numbers<[1], [0], [0], [1], [0, 0, 1, 1], [], []>} : vector<128x16xbf16>, vector<16x8xbf16>, vector<128x8xf32> -> vector<128x8xf32>
    %56 = arith.addf %48, %55 : vector<128x8xf32>
    %c0_59 = arith.constant 0 : index
    %c1_60 = arith.constant 1 : index
    %c3_61 = arith.constant 3 : index
    %c0_62 = arith.constant 0 : index
    %57 = vector.load %arg1[%c0_59, %c1_60, %c3_61, %c0_62] : memref<2x11x11x16xf32, #tpu.memory_space<vmem>>, vector<2x8x8x16xf32>
    %58 = vector.shape_cast %57 : vector<2x8x8x16xf32> to vector<128x16xf32>
    %59 = arith.truncf %58 : vector<128x16xf32> to vector<128x16xbf16>
    %c1_63 = arith.constant 1 : index
    %c3_64 = arith.constant 3 : index
    %c0_65 = arith.constant 0 : index
    %c0_66 = arith.constant 0 : index
    %60 = vector.load %arg2[%c1_63, %c3_64, %c0_65, %c0_66] : memref<4x4x16x8xf32, #tpu.memory_space<vmem>>, vector<1x1x16x8xf32>
    %61 = vector.shape_cast %60 : vector<1x1x16x8xf32> to vector<16x8xf32>
    %62 = arith.truncf %61 : vector<16x8xf32> to vector<16x8xbf16>
    %cst_67 = arith.constant dense<0.000000e+00> : vector<128x8xf32>
    %63 = tpu.matmul %59, %62, %cst_67 {dimension_numbers = #tpu.dot_dimension_numbers<[1], [0], [0], [1], [0, 0, 1, 1], [], []>} : vector<128x16xbf16>, vector<16x8xbf16>, vector<128x8xf32> -> vector<128x8xf32>
    %64 = arith.addf %56, %63 : vector<128x8xf32>
    %c0_68 = arith.constant 0 : index
    %c2_69 = arith.constant 2 : index
    %c0_70 = arith.constant 0 : index
    %c0_71 = arith.constant 0 : index
    %65 = vector.load %arg1[%c0_68, %c2_69, %c0_70, %c0_71] : memref<2x11x11x16xf32, #tpu.memory_space<vmem>>, vector<2x8x8x16xf32>
    %66 = vector.shape_cast %65 : vector<2x8x8x16xf32> to vector<128x16xf32>
    %67 = arith.truncf %66 : vector<128x16xf32> to vector<128x16xbf16>
    %c2_72 = arith.constant 2 : index
    %c0_73 = arith.constant 0 : index
    %c0_74 = arith.constant 0 : index
    %c0_75 = arith.constant 0 : index
    %68 = vector.load %arg2[%c2_72, %c0_73, %c0_74, %c0_75] : memref<4x4x16x8xf32, #tpu.memory_space<vmem>>, vector<1x1x16x8xf32>
    %69 = vector.shape_cast %68 : vector<1x1x16x8xf32> to vector<16x8xf32>
    %70 = arith.truncf %69 : vector<16x8xf32> to vector<16x8xbf16>
    %cst_76 = arith.constant dense<0.000000e+00> : vector<128x8xf32>
    %71 = tpu.matmul %67, %70, %cst_76 {dimension_numbers = #tpu.dot_dimension_numbers<[1], [0], [0], [1], [0, 0, 1, 1], [], []>} : vector<128x16xbf16>, vector<16x8xbf16>, vector<128x8xf32> -> vector<128x8xf32>
    %72 = arith.addf %64, %71 : vector<128x8xf32>
    %c0_77 = arith.constant 0 : index
    %c2_78 = arith.constant 2 : index
    %c1_79 = arith.constant 1 : index
    %c0_80 = arith.constant 0 : index
    %73 = vector.load %arg1[%c0_77, %c2_78, %c1_79, %c0_80] : memref<2x11x11x16xf32, #tpu.memory_space<vmem>>, vector<2x8x8x16xf32>
    %74 = vector.shape_cast %73 : vector<2x8x8x16xf32> to vector<128x16xf32>
    %75 = arith.truncf %74 : vector<128x16xf32> to vector<128x16xbf16>
    %c2_81 = arith.constant 2 : index
    %c1_82 = arith.constant 1 : index
    %c0_83 = arith.constant 0 : index
    %c0_84 = arith.constant 0 : index
    %76 = vector.load %arg2[%c2_81, %c1_82, %c0_83, %c0_84] : memref<4x4x16x8xf32, #tpu.memory_space<vmem>>, vector<1x1x16x8xf32>
    %77 = vector.shape_cast %76 : vector<1x1x16x8xf32> to vector<16x8xf32>
    %78 = arith.truncf %77 : vector<16x8xf32> to vector<16x8xbf16>
    %cst_85 = arith.constant dense<0.000000e+00> : vector<128x8xf32>
    %79 = tpu.matmul %75, %78, %cst_85 {dimension_numbers = #tpu.dot_dimension_numbers<[1], [0], [0], [1], [0, 0, 1, 1], [], []>} : vector<128x16xbf16>, vector<16x8xbf16>, vector<128x8xf32> -> vector<128x8xf32>
    %80 = arith.addf %72, %79 : vector<128x8xf32>
    %c0_86 = arith.constant 0 : index
    %c2_87 = arith.constant 2 : index
    %c2_88 = arith.constant 2 : index
    %c0_89 = arith.constant 0 : index
    %81 = vector.load %arg1[%c0_86, %c2_87, %c2_88, %c0_89] : memref<2x11x11x16xf32, #tpu.memory_space<vmem>>, vector<2x8x8x16xf32>
    %82 = vector.shape_cast %81 : vector<2x8x8x16xf32> to vector<128x16xf32>
    %83 = arith.truncf %82 : vector<128x16xf32> to vector<128x16xbf16>
    %c2_90 = arith.constant 2 : index
    %c2_91 = arith.constant 2 : index
    %c0_92 = arith.constant 0 : index
    %c0_93 = arith.constant 0 : index
    %84 = vector.load %arg2[%c2_90, %c2_91, %c0_92, %c0_93] : memref<4x4x16x8xf32, #tpu.memory_space<vmem>>, vector<1x1x16x8xf32>
    %85 = vector.shape_cast %84 : vector<1x1x16x8xf32> to vector<16x8xf32>
    %86 = arith.truncf %85 : vector<16x8xf32> to vector<16x8xbf16>
    %cst_94 = arith.constant dense<0.000000e+00> : vector<128x8xf32>
    %87 = tpu.matmul %83, %86, %cst_94 {dimension_numbers = #tpu.dot_dimension_numbers<[1], [0], [0], [1], [0, 0, 1, 1], [], []>} : vector<128x16xbf16>, vector<16x8xbf16>, vector<128x8xf32> -> vector<128x8xf32>
    %88 = arith.addf %80, %87 : vector<128x8xf32>
    %c0_95 = arith.constant 0 : index
    %c2_96 = arith.constant 2 : index
    %c3_97 = arith.constant 3 : index
    %c0_98 = arith.constant 0 : index
    %89 = vector.load %arg1[%c0_95, %c2_96, %c3_97, %c0_98] : memref<2x11x11x16xf32, #tpu.memory_space<vmem>>, vector<2x8x8x16xf32>
    %90 = vector.shape_cast %89 : vector<2x8x8x16xf32> to vector<128x16xf32>
    %91 = arith.truncf %90 : vector<128x16xf32> to vector<128x16xbf16>
    %c2_99 = arith.constant 2 : index
    %c3_100 = arith.constant 3 : index
    %c0_101 = arith.constant 0 : index
    %c0_102 = arith.constant 0 : index
    %92 = vector.load %arg2[%c2_99, %c3_100, %c0_101, %c0_102] : memref<4x4x16x8xf32, #tpu.memory_space<vmem>>, vector<1x1x16x8xf32>
    %93 = vector.shape_cast %92 : vector<1x1x16x8xf32> to vector<16x8xf32>
    %94 = arith.truncf %93 : vector<16x8xf32> to vector<16x8xbf16>
    %cst_103 = arith.constant dense<0.000000e+00> : vector<128x8xf32>
    %95 = tpu.matmul %91, %94, %cst_103 {dimension_numbers = #tpu.dot_dimension_numbers<[1], [0], [0], [1], [0, 0, 1, 1], [], []>} : vector<128x16xbf16>, vector<16x8xbf16>, vector<128x8xf32> -> vector<128x8xf32>
    %96 = arith.addf %88, %95 : vector<128x8xf32>
    %c0_104 = arith.constant 0 : index
    %c3_105 = arith.constant 3 : index
    %c0_106 = arith.constant 0 : index
    %c0_107 = arith.constant 0 : index
    %97 = vector.load %arg1[%c0_104, %c3_105, %c0_106, %c0_107] : memref<2x11x11x16xf32, #tpu.memory_space<vmem>>, vector<2x8x8x16xf32>
    %98 = vector.shape_cast %97 : vector<2x8x8x16xf32> to vector<128x16xf32>
    %99 = arith.truncf %98 : vector<128x16xf32> to vector<128x16xbf16>
    %c3_108 = arith.constant 3 : index
    %c0_109 = arith.constant 0 : index
    %c0_110 = arith.constant 0 : index
    %c0_111 = arith.constant 0 : index
    %100 = vector.load %arg2[%c3_108, %c0_109, %c0_110, %c0_111] : memref<4x4x16x8xf32, #tpu.memory_space<vmem>>, vector<1x1x16x8xf32>
    %101 = vector.shape_cast %100 : vector<1x1x16x8xf32> to vector<16x8xf32>
    %102 = arith.truncf %101 : vector<16x8xf32> to vector<16x8xbf16>
    %cst_112 = arith.constant dense<0.000000e+00> : vector<128x8xf32>
    %103 = tpu.matmul %99, %102, %cst_112 {dimension_numbers = #tpu.dot_dimension_numbers<[1], [0], [0], [1], [0, 0, 1, 1], [], []>} : vector<128x16xbf16>, vector<16x8xbf16>, vector<128x8xf32> -> vector<128x8xf32>
    %104 = arith.addf %96, %103 : vector<128x8xf32>
    %c0_113 = arith.constant 0 : index
    %c3_114 = arith.constant 3 : index
    %c1_115 = arith.constant 1 : index
    %c0_116 = arith.constant 0 : index
    %105 = vector.load %arg1[%c0_113, %c3_114, %c1_115, %c0_116] : memref<2x11x11x16xf32, #tpu.memory_space<vmem>>, vector<2x8x8x16xf32>
    %106 = vector.shape_cast %105 : vector<2x8x8x16xf32> to vector<128x16xf32>
    %107 = arith.truncf %106 : vector<128x16xf32> to vector<128x16xbf16>
    %c3_117 = arith.constant 3 : index
    %c1_118 = arith.constant 1 : index
    %c0_119 = arith.constant 0 : index
    %c0_120 = arith.constant 0 : index
    %108 = vector.load %arg2[%c3_117, %c1_118, %c0_119, %c0_120] : memref<4x4x16x8xf32, #tpu.memory_space<vmem>>, vector<1x1x16x8xf32>
    %109 = vector.shape_cast %108 : vector<1x1x16x8xf32> to vector<16x8xf32>
    %110 = arith.truncf %109 : vector<16x8xf32> to vector<16x8xbf16>
    %cst_121 = arith.constant dense<0.000000e+00> : vector<128x8xf32>
    %111 = tpu.matmul %107, %110, %cst_121 {dimension_numbers = #tpu.dot_dimension_numbers<[1], [0], [0], [1], [0, 0, 1, 1], [], []>} : vector<128x16xbf16>, vector<16x8xbf16>, vector<128x8xf32> -> vector<128x8xf32>
    %112 = arith.addf %104, %111 : vector<128x8xf32>
    %c0_122 = arith.constant 0 : index
    %c3_123 = arith.constant 3 : index
    %c2_124 = arith.constant 2 : index
    %c0_125 = arith.constant 0 : index
    %113 = vector.load %arg1[%c0_122, %c3_123, %c2_124, %c0_125] : memref<2x11x11x16xf32, #tpu.memory_space<vmem>>, vector<2x8x8x16xf32>
    %114 = vector.shape_cast %113 : vector<2x8x8x16xf32> to vector<128x16xf32>
    %115 = arith.truncf %114 : vector<128x16xf32> to vector<128x16xbf16>
    %c3_126 = arith.constant 3 : index
    %c2_127 = arith.constant 2 : index
    %c0_128 = arith.constant 0 : index
    %c0_129 = arith.constant 0 : index
    %116 = vector.load %arg2[%c3_126, %c2_127, %c0_128, %c0_129] : memref<4x4x16x8xf32, #tpu.memory_space<vmem>>, vector<1x1x16x8xf32>
    %117 = vector.shape_cast %116 : vector<1x1x16x8xf32> to vector<16x8xf32>
    %118 = arith.truncf %117 : vector<16x8xf32> to vector<16x8xbf16>
    %cst_130 = arith.constant dense<0.000000e+00> : vector<128x8xf32>
    %119 = tpu.matmul %115, %118, %cst_130 {dimension_numbers = #tpu.dot_dimension_numbers<[1], [0], [0], [1], [0, 0, 1, 1], [], []>} : vector<128x16xbf16>, vector<16x8xbf16>, vector<128x8xf32> -> vector<128x8xf32>
    %120 = arith.addf %112, %119 : vector<128x8xf32>
    %c0_131 = arith.constant 0 : index
    %c3_132 = arith.constant 3 : index
    %c3_133 = arith.constant 3 : index
    %c0_134 = arith.constant 0 : index
    %121 = vector.load %arg1[%c0_131, %c3_132, %c3_133, %c0_134] : memref<2x11x11x16xf32, #tpu.memory_space<vmem>>, vector<2x8x8x16xf32>
    %122 = vector.shape_cast %121 : vector<2x8x8x16xf32> to vector<128x16xf32>
    %123 = arith.truncf %122 : vector<128x16xf32> to vector<128x16xbf16>
    %c3_135 = arith.constant 3 : index
    %c3_136 = arith.constant 3 : index
    %c0_137 = arith.constant 0 : index
    %c0_138 = arith.constant 0 : index
    %124 = vector.load %arg2[%c3_135, %c3_136, %c0_137, %c0_138] : memref<4x4x16x8xf32, #tpu.memory_space<vmem>>, vector<1x1x16x8xf32>
    %125 = vector.shape_cast %124 : vector<1x1x16x8xf32> to vector<16x8xf32>
    %126 = arith.truncf %125 : vector<16x8xf32> to vector<16x8xbf16>
    %cst_139 = arith.constant dense<0.000000e+00> : vector<128x8xf32>
    %127 = tpu.matmul %123, %126, %cst_139 {dimension_numbers = #tpu.dot_dimension_numbers<[1], [0], [0], [1], [0, 0, 1, 1], [], []>} : vector<128x16xbf16>, vector<16x8xbf16>, vector<128x8xf32> -> vector<128x8xf32>
    %128 = arith.addf %120, %127 : vector<128x8xf32>
    %cst_140 = arith.constant dense<0.000000e+00> : vector<8xf32>
    %129 = vector.multi_reduction <add>, %128, %cst_140 [0] : vector<128x8xf32> to vector<8xf32>
    %130 = vector.shape_cast %129 : vector<8xf32> to vector<1x8xf32>
    %cst_141 = arith.constant 1.280000e+02 : f32
    %131 = vector.broadcast %cst_141 : f32 to vector<1x8xf32>
    %132 = arith.divf %130, %131 : vector<1x8xf32>
    %133 = vector.broadcast %132 : vector<1x8xf32> to vector<128x8xf32>
    %134 = arith.subf %128, %133 : vector<128x8xf32>
    %135 = arith.mulf %134, %134 : vector<128x8xf32>
    %cst_142 = arith.constant dense<0.000000e+00> : vector<8xf32>
    %136 = vector.multi_reduction <add>, %135, %cst_142 [0] : vector<128x8xf32> to vector<8xf32>
    %137 = vector.shape_cast %136 : vector<8xf32> to vector<1x8xf32>
    %cst_143 = arith.constant 1.280000e+02 : f32
    %138 = vector.broadcast %cst_143 : f32 to vector<1x8xf32>
    %139 = arith.divf %137, %138 : vector<1x8xf32>
    %140 = vector.broadcast %132 : vector<1x8xf32> to vector<128x8xf32>
    %141 = arith.subf %128, %140 : vector<128x8xf32>
    %cst_144 = arith.constant 9.99999974E-6 : f32
    %142 = vector.broadcast %cst_144 : f32 to vector<1x8xf32>
    %143 = arith.addf %139, %142 : vector<1x8xf32>
    %144 = math.rsqrt %143 : vector<1x8xf32>
    %145 = vector.broadcast %144 : vector<1x8xf32> to vector<128x8xf32>
    %146 = arith.mulf %141, %145 : vector<128x8xf32>
    %c0_145 = arith.constant 0 : index
    %c0_146 = arith.constant 0 : index
    %147 = vector.load %arg3[%c0_145, %c0_146] : memref<1x8xf32, #tpu.memory_space<vmem>>, vector<1x8xf32>
    %148 = vector.broadcast %147 : vector<1x8xf32> to vector<128x8xf32>
    %149 = arith.mulf %146, %148 : vector<128x8xf32>
    %c0_147 = arith.constant 0 : index
    %c0_148 = arith.constant 0 : index
    %150 = vector.load %arg4[%c0_147, %c0_148] : memref<1x8xf32, #tpu.memory_space<vmem>>, vector<1x8xf32>
    %151 = vector.broadcast %150 : vector<1x8xf32> to vector<128x8xf32>
    %152 = arith.addf %149, %151 : vector<128x8xf32>
    %cst_149 = arith.constant 0.000000e+00 : f32
    %153 = vector.broadcast %cst_149 : f32 to vector<128x8xf32>
    %154 = arith.maximumf %152, %153 : vector<128x8xf32>
    %c0_150 = arith.constant 0 : index
    %c0_151 = arith.constant 0 : index
    %155 = vector.load %arg5[%c0_150, %c0_151] : memref<128x8xf32, #tpu.memory_space<vmem>>, vector<128x8xf32>
    tpu.vector_store %arg5[%c0_150, %c0_151], %154 {strides = array<i32>} : memref<128x8xf32, #tpu.memory_space<vmem>>, vector<128x8xf32>,
    return
  }
  func.func @transform_0(%arg0: i32) -> (i32, i32, i32, i32) {
    %c0_i32 = arith.constant 0 : i32
    %c0_i32_0 = arith.constant 0 : i32
    %c0_i32_1 = arith.constant 0 : i32
    %c0_i32_2 = arith.constant 0 : i32
    %c0_i32_3 = arith.constant 0 : i32
    return %c0_i32, %c0_i32_0, %c0_i32_1, %c0_i32_2 : i32, i32, i32, i32
  }
  func.func @transform_1(%arg0: i32) -> (i32, i32, i32, i32) {
    %c0_i32 = arith.constant 0 : i32
    %c0_i32_0 = arith.constant 0 : i32
    %c0_i32_1 = arith.constant 0 : i32
    %c0_i32_2 = arith.constant 0 : i32
    %c0_i32_3 = arith.constant 0 : i32
    return %c0_i32, %c0_i32_0, %c0_i32_1, %c0_i32_2 : i32, i32, i32, i32
  }
  func.func @transform_2(%arg0: i32) -> (i32, i32) {
    %c0_i32 = arith.constant 0 : i32
    %c0_i32_0 = arith.constant 0 : i32
    %c0_i32_1 = arith.constant 0 : i32
    return %c0_i32, %c0_i32_0 : i32, i32
  }
  func.func @transform_3(%arg0: i32) -> (i32, i32) {
    %c0_i32 = arith.constant 0 : i32
    %c0_i32_0 = arith.constant 0 : i32
    %c0_i32_1 = arith.constant 0 : i32
    return %c0_i32, %c0_i32_0 : i32, i32
  }
  func.func @transform_4(%arg0: i32) -> (i32, i32) {
    %c0_i32 = arith.constant 0 : i32
    %c0_i32_0 = arith.constant 0 : i32
    %c0_i32_1 = arith.constant 0 : i32
    return %c0_i32, %c0_i32_0 : i32, i32
  }
}

module attributes {stable_mosaic.version = 11 : i64} {
  func.func @fc_bias_kernel(%arg0: i32, %arg1: memref<2x32xf32, #tpu.memory_space<vmem>>, %arg2: memref<32x256xf32, #tpu.memory_space<vmem>>, %arg3: memref<1x256xf32, #tpu.memory_space<vmem>>, %arg4: memref<2x256xf32, #tpu.memory_space<vmem>>) attributes {dimension_semantics = [#tpu.dimension_semantics<arbitrary>], iteration_bounds = array<i64: 1>, scalar_prefetch = 0 : i64, scratch_operands = 0 : i64, tpu.core_type = #tpu.core_type<tc>, window_params = [{pipeline_mode = #tpu.pipeline_mode<synchronous>, transform_indices = @transform_0, window_bounds = array<i64: 2, 32>}, {pipeline_mode = #tpu.pipeline_mode<synchronous>, transform_indices = @transform_1, window_bounds = array<i64: 32, 256>}, {pipeline_mode = #tpu.pipeline_mode<synchronous>, transform_indices = @transform_2, window_bounds = array<i64: 1, 256>}, {pipeline_mode = #tpu.pipeline_mode<synchronous>, transform_indices = @transform_3, window_bounds = array<i64: 2, 256>}]} {
    %c0 = arith.constant 0 : index
    %c0_0 = arith.constant 0 : index
    %0 = vector.load %arg1[%c0, %c0_0] : memref<2x32xf32, #tpu.memory_space<vmem>>, vector<2x32xf32>
    %1 = arith.truncf %0 : vector<2x32xf32> to vector<2x32xbf16>
    %c0_1 = arith.constant 0 : index
    %c0_2 = arith.constant 0 : index
    %2 = vector.load %arg2[%c0_1, %c0_2] : memref<32x256xf32, #tpu.memory_space<vmem>>, vector<32x256xf32>
    %3 = arith.truncf %2 : vector<32x256xf32> to vector<32x256xbf16>
    %cst = arith.constant dense<0.000000e+00> : vector<2x256xf32>
    %4 = tpu.matmul %1, %3, %cst {dimension_numbers = #tpu.dot_dimension_numbers<[1], [0], [0], [1], [0, 0, 1, 1], [], []>} : vector<2x32xbf16>, vector<32x256xbf16>, vector<2x256xf32> -> vector<2x256xf32>
    %c0_3 = arith.constant 0 : index
    %c0_4 = arith.constant 0 : index
    %5 = vector.load %arg3[%c0_3, %c0_4] : memref<1x256xf32, #tpu.memory_space<vmem>>, vector<1x256xf32>
    %6 = vector.broadcast %5 : vector<1x256xf32> to vector<2x256xf32>
    %7 = arith.addf %4, %6 : vector<2x256xf32>
    %c0_5 = arith.constant 0 : index
    %c0_6 = arith.constant 0 : index
    %8 = vector.load %arg4[%c0_5, %c0_6] : memref<2x256xf32, #tpu.memory_space<vmem>>, vector<2x256xf32>
    tpu.vector_store %arg4[%c0_5, %c0_6], %7 {strides = array<i32>} : memref<2x256xf32, #tpu.memory_space<vmem>>, vector<2x256xf32>,
    return
  }
  func.func @transform_0(%arg0: i32) -> (i32, i32) {
    %c0_i32 = arith.constant 0 : i32
    %c0_i32_0 = arith.constant 0 : i32
    %c0_i32_1 = arith.constant 0 : i32
    return %c0_i32, %c0_i32_0 : i32, i32
  }
  func.func @transform_1(%arg0: i32) -> (i32, i32) {
    %c0_i32 = arith.constant 0 : i32
    %c0_i32_0 = arith.constant 0 : i32
    %c0_i32_1 = arith.constant 0 : i32
    return %c0_i32, %c0_i32_0 : i32, i32
  }
  func.func @transform_2(%arg0: i32) -> (i32, i32) {
    %c0_i32 = arith.constant 0 : i32
    %c0_i32_0 = arith.constant 0 : i32
    %c0_i32_1 = arith.constant 0 : i32
    return %c0_i32, %c0_i32_0 : i32, i32
  }
  func.func @transform_3(%arg0: i32) -> (i32, i32) {
    %c0_i32 = arith.constant 0 : i32
    %c0_i32_0 = arith.constant 0 : i32
    %c0_i32_1 = arith.constant 0 : i32
    return %c0_i32, %c0_i32_0 : i32, i32
  }
}

module attributes {stable_mosaic.version = 11 : i64} {
  func.func @bn_relu_kernel(%arg0: i32, %arg1: memref<8x64xf32, #tpu.memory_space<vmem>>, %arg2: memref<1x64xf32, #tpu.memory_space<vmem>>, %arg3: memref<1x64xf32, #tpu.memory_space<vmem>>, %arg4: memref<8x64xf32, #tpu.memory_space<vmem>>) attributes {dimension_semantics = [#tpu.dimension_semantics<arbitrary>], iteration_bounds = array<i64: 1>, scalar_prefetch = 0 : i64, scratch_operands = 0 : i64, tpu.core_type = #tpu.core_type<tc>, window_params = [{pipeline_mode = #tpu.pipeline_mode<synchronous>, transform_indices = @transform_0, window_bounds = array<i64: 8, 64>}, {pipeline_mode = #tpu.pipeline_mode<synchronous>, transform_indices = @transform_1, window_bounds = array<i64: 1, 64>}, {pipeline_mode = #tpu.pipeline_mode<synchronous>, transform_indices = @transform_2, window_bounds = array<i64: 1, 64>}, {pipeline_mode = #tpu.pipeline_mode<synchronous>, transform_indices = @transform_3, window_bounds = array<i64: 8, 64>}]} {
    %c0 = arith.constant 0 : index
    %c0_0 = arith.constant 0 : index
    %0 = vector.load %arg1[%c0, %c0_0] : memref<8x64xf32, #tpu.memory_space<vmem>>, vector<8x64xf32>
    %cst = arith.constant dense<0.000000e+00> : vector<64xf32>
    %1 = vector.multi_reduction <add>, %0, %cst [0] : vector<8x64xf32> to vector<64xf32>
    %2 = vector.shape_cast %1 : vector<64xf32> to vector<1x64xf32>
    %cst_1 = arith.constant 8.000000e+00 : f32
    %3 = vector.broadcast %cst_1 : f32 to vector<1x64xf32>
    %4 = arith.divf %2, %3 : vector<1x64xf32>
    %5 = vector.broadcast %4 : vector<1x64xf32> to vector<8x64xf32>
    %6 = arith.subf %0, %5 : vector<8x64xf32>
    %7 = arith.mulf %6, %6 : vector<8x64xf32>
    %cst_2 = arith.constant dense<0.000000e+00> : vector<64xf32>
    %8 = vector.multi_reduction <add>, %7, %cst_2 [0] : vector<8x64xf32> to vector<64xf32>
    %9 = vector.shape_cast %8 : vector<64xf32> to vector<1x64xf32>
    %cst_3 = arith.constant 8.000000e+00 : f32
    %10 = vector.broadcast %cst_3 : f32 to vector<1x64xf32>
    %11 = arith.divf %9, %10 : vector<1x64xf32>
    %12 = vector.broadcast %4 : vector<1x64xf32> to vector<8x64xf32>
    %13 = arith.subf %0, %12 : vector<8x64xf32>
    %cst_4 = arith.constant 9.99999974E-6 : f32
    %14 = vector.broadcast %cst_4 : f32 to vector<1x64xf32>
    %15 = arith.addf %11, %14 : vector<1x64xf32>
    %16 = math.rsqrt %15 : vector<1x64xf32>
    %17 = vector.broadcast %16 : vector<1x64xf32> to vector<8x64xf32>
    %18 = arith.mulf %13, %17 : vector<8x64xf32>
    %c0_5 = arith.constant 0 : index
    %c0_6 = arith.constant 0 : index
    %19 = vector.load %arg2[%c0_5, %c0_6] : memref<1x64xf32, #tpu.memory_space<vmem>>, vector<1x64xf32>
    %20 = vector.broadcast %19 : vector<1x64xf32> to vector<8x64xf32>
    %21 = arith.mulf %18, %20 : vector<8x64xf32>
    %c0_7 = arith.constant 0 : index
    %c0_8 = arith.constant 0 : index
    %22 = vector.load %arg3[%c0_7, %c0_8] : memref<1x64xf32, #tpu.memory_space<vmem>>, vector<1x64xf32>
    %23 = vector.broadcast %22 : vector<1x64xf32> to vector<8x64xf32>
    %24 = arith.addf %21, %23 : vector<8x64xf32>
    %cst_9 = arith.constant 0.000000e+00 : f32
    %25 = vector.broadcast %cst_9 : f32 to vector<8x64xf32>
    %26 = arith.maximumf %24, %25 : vector<8x64xf32>
    %c0_10 = arith.constant 0 : index
    %c0_11 = arith.constant 0 : index
    %27 = vector.load %arg4[%c0_10, %c0_11] : memref<8x64xf32, #tpu.memory_space<vmem>>, vector<8x64xf32>
    tpu.vector_store %arg4[%c0_10, %c0_11], %26 {strides = array<i32>} : memref<8x64xf32, #tpu.memory_space<vmem>>, vector<8x64xf32>,
    return
  }
  func.func @transform_0(%arg0: i32) -> (i32, i32) {
    %c0_i32 = arith.constant 0 : i32
    %c0_i32_0 = arith.constant 0 : i32
    %c0_i32_1 = arith.constant 0 : i32
    return %c0_i32, %c0_i32_0 : i32, i32
  }
  func.func @transform_1(%arg0: i32) -> (i32, i32) {
    %c0_i32 = arith.constant 0 : i32
    %c0_i32_0 = arith.constant 0 : i32
    %c0_i32_1 = arith.constant 0 : i32
    return %c0_i32, %c0_i32_0 : i32, i32
  }
  func.func @transform_2(%arg0: i32) -> (i32, i32) {
    %c0_i32 = arith.constant 0 : i32
    %c0_i32_0 = arith.constant 0 : i32
    %c0_i32_1 = arith.constant 0 : i32
    return %c0_i32, %c0_i32_0 : i32, i32
  }
  func.func @transform_3(%arg0: i32) -> (i32, i32) {
    %c0_i32 = arith.constant 0 : i32
    %c0_i32_0 = arith.constant 0 : i32
    %c0_i32_1 = arith.constant 0 : i32
    return %c0_i32, %c0_i32_0 : i32, i32
  }
}

module attributes {stable_mosaic.version = 11 : i64} {
  func.func @patches_gemm_bn_relu_kernel(%arg0: i32, %arg1: memref<32x1024xf32, #tpu.memory_space<vmem>>, %arg2: memref<1024x32xf32, #tpu.memory_space<vmem>>, %arg3: memref<1x32xf32, #tpu.memory_space<vmem>>, %arg4: memref<1x32xf32, #tpu.memory_space<vmem>>, %arg5: memref<32x32xf32, #tpu.memory_space<vmem>>) attributes {dimension_semantics = [#tpu.dimension_semantics<arbitrary>], iteration_bounds = array<i64: 1>, scalar_prefetch = 0 : i64, scratch_operands = 0 : i64, tpu.core_type = #tpu.core_type<tc>, window_params = [{pipeline_mode = #tpu.pipeline_mode<synchronous>, transform_indices = @transform_0, window_bounds = array<i64: 32, 1024>}, {pipeline_mode = #tpu.pipeline_mode<synchronous>, transform_indices = @transform_1, window_bounds = array<i64: 1024, 32>}, {pipeline_mode = #tpu.pipeline_mode<synchronous>, transform_indices = @transform_2, window_bounds = array<i64: 1, 32>}, {pipeline_mode = #tpu.pipeline_mode<synchronous>, transform_indices = @transform_3, window_bounds = array<i64: 1, 32>}, {pipeline_mode = #tpu.pipeline_mode<synchronous>, transform_indices = @transform_4, window_bounds = array<i64: 32, 32>}]} {
    %c0 = arith.constant 0 : index
    %c0_0 = arith.constant 0 : index
    %0 = vector.load %arg1[%c0, %c0_0] : memref<32x1024xf32, #tpu.memory_space<vmem>>, vector<32x1024xf32>
    %1 = arith.truncf %0 : vector<32x1024xf32> to vector<32x1024xbf16>
    %c0_1 = arith.constant 0 : index
    %c0_2 = arith.constant 0 : index
    %2 = vector.load %arg2[%c0_1, %c0_2] : memref<1024x32xf32, #tpu.memory_space<vmem>>, vector<1024x32xf32>
    %3 = arith.truncf %2 : vector<1024x32xf32> to vector<1024x32xbf16>
    %cst = arith.constant dense<0.000000e+00> : vector<32x32xf32>
    %4 = tpu.matmul %1, %3, %cst {dimension_numbers = #tpu.dot_dimension_numbers<[1], [0], [0], [1], [0, 0, 1, 1], [], []>} : vector<32x1024xbf16>, vector<1024x32xbf16>, vector<32x32xf32> -> vector<32x32xf32>
    %cst_3 = arith.constant dense<0.000000e+00> : vector<32xf32>
    %5 = vector.multi_reduction <add>, %4, %cst_3 [0] : vector<32x32xf32> to vector<32xf32>
    %6 = vector.shape_cast %5 : vector<32xf32> to vector<1x32xf32>
    %cst_4 = arith.constant 3.200000e+01 : f32
    %7 = vector.broadcast %cst_4 : f32 to vector<1x32xf32>
    %8 = arith.divf %6, %7 : vector<1x32xf32>
    %9 = vector.broadcast %8 : vector<1x32xf32> to vector<32x32xf32>
    %10 = arith.subf %4, %9 : vector<32x32xf32>
    %11 = arith.mulf %10, %10 : vector<32x32xf32>
    %cst_5 = arith.constant dense<0.000000e+00> : vector<32xf32>
    %12 = vector.multi_reduction <add>, %11, %cst_5 [0] : vector<32x32xf32> to vector<32xf32>
    %13 = vector.shape_cast %12 : vector<32xf32> to vector<1x32xf32>
    %cst_6 = arith.constant 3.200000e+01 : f32
    %14 = vector.broadcast %cst_6 : f32 to vector<1x32xf32>
    %15 = arith.divf %13, %14 : vector<1x32xf32>
    %16 = vector.broadcast %8 : vector<1x32xf32> to vector<32x32xf32>
    %17 = arith.subf %4, %16 : vector<32x32xf32>
    %cst_7 = arith.constant 9.99999974E-6 : f32
    %18 = vector.broadcast %cst_7 : f32 to vector<1x32xf32>
    %19 = arith.addf %15, %18 : vector<1x32xf32>
    %20 = math.rsqrt %19 : vector<1x32xf32>
    %21 = vector.broadcast %20 : vector<1x32xf32> to vector<32x32xf32>
    %22 = arith.mulf %17, %21 : vector<32x32xf32>
    %c0_8 = arith.constant 0 : index
    %c0_9 = arith.constant 0 : index
    %23 = vector.load %arg3[%c0_8, %c0_9] : memref<1x32xf32, #tpu.memory_space<vmem>>, vector<1x32xf32>
    %24 = vector.broadcast %23 : vector<1x32xf32> to vector<32x32xf32>
    %25 = arith.mulf %22, %24 : vector<32x32xf32>
    %c0_10 = arith.constant 0 : index
    %c0_11 = arith.constant 0 : index
    %26 = vector.load %arg4[%c0_10, %c0_11] : memref<1x32xf32, #tpu.memory_space<vmem>>, vector<1x32xf32>
    %27 = vector.broadcast %26 : vector<1x32xf32> to vector<32x32xf32>
    %28 = arith.addf %25, %27 : vector<32x32xf32>
    %cst_12 = arith.constant 0.000000e+00 : f32
    %29 = vector.broadcast %cst_12 : f32 to vector<32x32xf32>
    %30 = arith.maximumf %28, %29 : vector<32x32xf32>
    %c0_13 = arith.constant 0 : index
    %c0_14 = arith.constant 0 : index
    %31 = vector.load %arg5[%c0_13, %c0_14] : memref<32x32xf32, #tpu.memory_space<vmem>>, vector<32x32xf32>
    tpu.vector_store %arg5[%c0_13, %c0_14], %30 {strides = array<i32>} : memref<32x32xf32, #tpu.memory_space<vmem>>, vector<32x32xf32>,
    return
  }
  func.func @transform_0(%arg0: i32) -> (i32, i32) {
    %c0_i32 = arith.constant 0 : i32
    %c0_i32_0 = arith.constant 0 : i32
    %c0_i32_1 = arith.constant 0 : i32
    return %c0_i32, %c0_i32_0 : i32, i32
  }
  func.func @transform_1(%arg0: i32) -> (i32, i32) {
    %c0_i32 = arith.constant 0 : i32
    %c0_i32_0 = arith.constant 0 : i32
    %c0_i32_1 = arith.constant 0 : i32
    return %c0_i32, %c0_i32_0 : i32, i32
  }
  func.func @transform_2(%arg0: i32) -> (i32, i32) {
    %c0_i32 = arith.constant 0 : i32
    %c0_i32_0 = arith.constant 0 : i32
    %c0_i32_1 = arith.constant 0 : i32
    return %c0_i32, %c0_i32_0 : i32, i32
  }
  func.func @transform_3(%arg0: i32) -> (i32, i32) {
    %c0_i32 = arith.constant 0 : i32
    %c0_i32_0 = arith.constant 0 : i32
    %c0_i32_1 = arith.constant 0 : i32
    return %c0_i32, %c0_i32_0 : i32, i32
  }
  func.func @transform_4(%arg0: i32) -> (i32, i32) {
    %c0_i32 = arith.constant 0 : i32
    %c0_i32_0 = arith.constant 0 : i32
    %c0_i32_1 = arith.constant 0 : i32
    return %c0_i32, %c0_i32_0 : i32, i32
  }
}

module attributes {stable_mosaic.version = 11 : i64} {
  func.func @patches_gemm_bn_relu_kernel(%arg0: i32, %arg1: memref<128x512xf32, #tpu.memory_space<vmem>>, %arg2: memref<512x16xf32, #tpu.memory_space<vmem>>, %arg3: memref<1x16xf32, #tpu.memory_space<vmem>>, %arg4: memref<1x16xf32, #tpu.memory_space<vmem>>, %arg5: memref<128x16xf32, #tpu.memory_space<vmem>>) attributes {dimension_semantics = [#tpu.dimension_semantics<arbitrary>], iteration_bounds = array<i64: 1>, scalar_prefetch = 0 : i64, scratch_operands = 0 : i64, tpu.core_type = #tpu.core_type<tc>, window_params = [{pipeline_mode = #tpu.pipeline_mode<synchronous>, transform_indices = @transform_0, window_bounds = array<i64: 128, 512>}, {pipeline_mode = #tpu.pipeline_mode<synchronous>, transform_indices = @transform_1, window_bounds = array<i64: 512, 16>}, {pipeline_mode = #tpu.pipeline_mode<synchronous>, transform_indices = @transform_2, window_bounds = array<i64: 1, 16>}, {pipeline_mode = #tpu.pipeline_mode<synchronous>, transform_indices = @transform_3, window_bounds = array<i64: 1, 16>}, {pipeline_mode = #tpu.pipeline_mode<synchronous>, transform_indices = @transform_4, window_bounds = array<i64: 128, 16>}]} {
    %c0 = arith.constant 0 : index
    %c0_0 = arith.constant 0 : index
    %0 = vector.load %arg1[%c0, %c0_0] : memref<128x512xf32, #tpu.memory_space<vmem>>, vector<128x512xf32>
    %1 = arith.truncf %0 : vector<128x512xf32> to vector<128x512xbf16>
    %c0_1 = arith.constant 0 : index
    %c0_2 = arith.constant 0 : index
    %2 = vector.load %arg2[%c0_1, %c0_2] : memref<512x16xf32, #tpu.memory_space<vmem>>, vector<512x16xf32>
    %3 = arith.truncf %2 : vector<512x16xf32> to vector<512x16xbf16>
    %cst = arith.constant dense<0.000000e+00> : vector<128x16xf32>
    %4 = tpu.matmul %1, %3, %cst {dimension_numbers = #tpu.dot_dimension_numbers<[1], [0], [0], [1], [0, 0, 1, 1], [], []>} : vector<128x512xbf16>, vector<512x16xbf16>, vector<128x16xf32> -> vector<128x16xf32>
    %cst_3 = arith.constant dense<0.000000e+00> : vector<16xf32>
    %5 = vector.multi_reduction <add>, %4, %cst_3 [0] : vector<128x16xf32> to vector<16xf32>
    %6 = vector.shape_cast %5 : vector<16xf32> to vector<1x16xf32>
    %cst_4 = arith.constant 1.280000e+02 : f32
    %7 = vector.broadcast %cst_4 : f32 to vector<1x16xf32>
    %8 = arith.divf %6, %7 : vector<1x16xf32>
    %9 = vector.broadcast %8 : vector<1x16xf32> to vector<128x16xf32>
    %10 = arith.subf %4, %9 : vector<128x16xf32>
    %11 = arith.mulf %10, %10 : vector<128x16xf32>
    %cst_5 = arith.constant dense<0.000000e+00> : vector<16xf32>
    %12 = vector.multi_reduction <add>, %11, %cst_5 [0] : vector<128x16xf32> to vector<16xf32>
    %13 = vector.shape_cast %12 : vector<16xf32> to vector<1x16xf32>
    %cst_6 = arith.constant 1.280000e+02 : f32
    %14 = vector.broadcast %cst_6 : f32 to vector<1x16xf32>
    %15 = arith.divf %13, %14 : vector<1x16xf32>
    %16 = vector.broadcast %8 : vector<1x16xf32> to vector<128x16xf32>
    %17 = arith.subf %4, %16 : vector<128x16xf32>
    %cst_7 = arith.constant 9.99999974E-6 : f32
    %18 = vector.broadcast %cst_7 : f32 to vector<1x16xf32>
    %19 = arith.addf %15, %18 : vector<1x16xf32>
    %20 = math.rsqrt %19 : vector<1x16xf32>
    %21 = vector.broadcast %20 : vector<1x16xf32> to vector<128x16xf32>
    %22 = arith.mulf %17, %21 : vector<128x16xf32>
    %c0_8 = arith.constant 0 : index
    %c0_9 = arith.constant 0 : index
    %23 = vector.load %arg3[%c0_8, %c0_9] : memref<1x16xf32, #tpu.memory_space<vmem>>, vector<1x16xf32>
    %24 = vector.broadcast %23 : vector<1x16xf32> to vector<128x16xf32>
    %25 = arith.mulf %22, %24 : vector<128x16xf32>
    %c0_10 = arith.constant 0 : index
    %c0_11 = arith.constant 0 : index
    %26 = vector.load %arg4[%c0_10, %c0_11] : memref<1x16xf32, #tpu.memory_space<vmem>>, vector<1x16xf32>
    %27 = vector.broadcast %26 : vector<1x16xf32> to vector<128x16xf32>
    %28 = arith.addf %25, %27 : vector<128x16xf32>
    %cst_12 = arith.constant 0.000000e+00 : f32
    %29 = vector.broadcast %cst_12 : f32 to vector<128x16xf32>
    %30 = arith.maximumf %28, %29 : vector<128x16xf32>
    %c0_13 = arith.constant 0 : index
    %c0_14 = arith.constant 0 : index
    %31 = vector.load %arg5[%c0_13, %c0_14] : memref<128x16xf32, #tpu.memory_space<vmem>>, vector<128x16xf32>
    tpu.vector_store %arg5[%c0_13, %c0_14], %30 {strides = array<i32>} : memref<128x16xf32, #tpu.memory_space<vmem>>, vector<128x16xf32>,
    return
  }
  func.func @transform_0(%arg0: i32) -> (i32, i32) {
    %c0_i32 = arith.constant 0 : i32
    %c0_i32_0 = arith.constant 0 : i32
    %c0_i32_1 = arith.constant 0 : i32
    return %c0_i32, %c0_i32_0 : i32, i32
  }
  func.func @transform_1(%arg0: i32) -> (i32, i32) {
    %c0_i32 = arith.constant 0 : i32
    %c0_i32_0 = arith.constant 0 : i32
    %c0_i32_1 = arith.constant 0 : i32
    return %c0_i32, %c0_i32_0 : i32, i32
  }
  func.func @transform_2(%arg0: i32) -> (i32, i32) {
    %c0_i32 = arith.constant 0 : i32
    %c0_i32_0 = arith.constant 0 : i32
    %c0_i32_1 = arith.constant 0 : i32
    return %c0_i32, %c0_i32_0 : i32, i32
  }
  func.func @transform_3(%arg0: i32) -> (i32, i32) {
    %c0_i32 = arith.constant 0 : i32
    %c0_i32_0 = arith.constant 0 : i32
    %c0_i32_1 = arith.constant 0 : i32
    return %c0_i32, %c0_i32_0 : i32, i32
  }
  func.func @transform_4(%arg0: i32) -> (i32, i32) {
    %c0_i32 = arith.constant 0 : i32
    %c0_i32_0 = arith.constant 0 : i32
    %c0_i32_1 = arith.constant 0 : i32
    return %c0_i32, %c0_i32_0 : i32, i32
  }
}

module attributes {stable_mosaic.version = 11 : i64} {
  func.func @patches_gemm_bn_relu_kernel(%arg0: i32, %arg1: memref<512x256xf32, #tpu.memory_space<vmem>>, %arg2: memref<256x8xf32, #tpu.memory_space<vmem>>, %arg3: memref<1x8xf32, #tpu.memory_space<vmem>>, %arg4: memref<1x8xf32, #tpu.memory_space<vmem>>, %arg5: memref<512x8xf32, #tpu.memory_space<vmem>>) attributes {dimension_semantics = [#tpu.dimension_semantics<arbitrary>], iteration_bounds = array<i64: 1>, scalar_prefetch = 0 : i64, scratch_operands = 0 : i64, tpu.core_type = #tpu.core_type<tc>, window_params = [{pipeline_mode = #tpu.pipeline_mode<synchronous>, transform_indices = @transform_0, window_bounds = array<i64: 512, 256>}, {pipeline_mode = #tpu.pipeline_mode<synchronous>, transform_indices = @transform_1, window_bounds = array<i64: 256, 8>}, {pipeline_mode = #tpu.pipeline_mode<synchronous>, transform_indices = @transform_2, window_bounds = array<i64: 1, 8>}, {pipeline_mode = #tpu.pipeline_mode<synchronous>, transform_indices = @transform_3, window_bounds = array<i64: 1, 8>}, {pipeline_mode = #tpu.pipeline_mode<synchronous>, transform_indices = @transform_4, window_bounds = array<i64: 512, 8>}]} {
    %c0 = arith.constant 0 : index
    %c0_0 = arith.constant 0 : index
    %0 = vector.load %arg1[%c0, %c0_0] : memref<512x256xf32, #tpu.memory_space<vmem>>, vector<512x256xf32>
    %1 = arith.truncf %0 : vector<512x256xf32> to vector<512x256xbf16>
    %c0_1 = arith.constant 0 : index
    %c0_2 = arith.constant 0 : index
    %2 = vector.load %arg2[%c0_1, %c0_2] : memref<256x8xf32, #tpu.memory_space<vmem>>, vector<256x8xf32>
    %3 = arith.truncf %2 : vector<256x8xf32> to vector<256x8xbf16>
    %cst = arith.constant dense<0.000000e+00> : vector<512x8xf32>
    %4 = tpu.matmul %1, %3, %cst {dimension_numbers = #tpu.dot_dimension_numbers<[1], [0], [0], [1], [0, 0, 1, 1], [], []>} : vector<512x256xbf16>, vector<256x8xbf16>, vector<512x8xf32> -> vector<512x8xf32>
    %cst_3 = arith.constant dense<0.000000e+00> : vector<8xf32>
    %5 = vector.multi_reduction <add>, %4, %cst_3 [0] : vector<512x8xf32> to vector<8xf32>
    %6 = vector.shape_cast %5 : vector<8xf32> to vector<1x8xf32>
    %cst_4 = arith.constant 5.120000e+02 : f32
    %7 = vector.broadcast %cst_4 : f32 to vector<1x8xf32>
    %8 = arith.divf %6, %7 : vector<1x8xf32>
    %9 = vector.broadcast %8 : vector<1x8xf32> to vector<512x8xf32>
    %10 = arith.subf %4, %9 : vector<512x8xf32>
    %11 = arith.mulf %10, %10 : vector<512x8xf32>
    %cst_5 = arith.constant dense<0.000000e+00> : vector<8xf32>
    %12 = vector.multi_reduction <add>, %11, %cst_5 [0] : vector<512x8xf32> to vector<8xf32>
    %13 = vector.shape_cast %12 : vector<8xf32> to vector<1x8xf32>
    %cst_6 = arith.constant 5.120000e+02 : f32
    %14 = vector.broadcast %cst_6 : f32 to vector<1x8xf32>
    %15 = arith.divf %13, %14 : vector<1x8xf32>
    %16 = vector.broadcast %8 : vector<1x8xf32> to vector<512x8xf32>
    %17 = arith.subf %4, %16 : vector<512x8xf32>
    %cst_7 = arith.constant 9.99999974E-6 : f32
    %18 = vector.broadcast %cst_7 : f32 to vector<1x8xf32>
    %19 = arith.addf %15, %18 : vector<1x8xf32>
    %20 = math.rsqrt %19 : vector<1x8xf32>
    %21 = vector.broadcast %20 : vector<1x8xf32> to vector<512x8xf32>
    %22 = arith.mulf %17, %21 : vector<512x8xf32>
    %c0_8 = arith.constant 0 : index
    %c0_9 = arith.constant 0 : index
    %23 = vector.load %arg3[%c0_8, %c0_9] : memref<1x8xf32, #tpu.memory_space<vmem>>, vector<1x8xf32>
    %24 = vector.broadcast %23 : vector<1x8xf32> to vector<512x8xf32>
    %25 = arith.mulf %22, %24 : vector<512x8xf32>
    %c0_10 = arith.constant 0 : index
    %c0_11 = arith.constant 0 : index
    %26 = vector.load %arg4[%c0_10, %c0_11] : memref<1x8xf32, #tpu.memory_space<vmem>>, vector<1x8xf32>
    %27 = vector.broadcast %26 : vector<1x8xf32> to vector<512x8xf32>
    %28 = arith.addf %25, %27 : vector<512x8xf32>
    %cst_12 = arith.constant 0.000000e+00 : f32
    %29 = vector.broadcast %cst_12 : f32 to vector<512x8xf32>
    %30 = arith.maximumf %28, %29 : vector<512x8xf32>
    %c0_13 = arith.constant 0 : index
    %c0_14 = arith.constant 0 : index
    %31 = vector.load %arg5[%c0_13, %c0_14] : memref<512x8xf32, #tpu.memory_space<vmem>>, vector<512x8xf32>
    tpu.vector_store %arg5[%c0_13, %c0_14], %30 {strides = array<i32>} : memref<512x8xf32, #tpu.memory_space<vmem>>, vector<512x8xf32>,
    return
  }
  func.func @transform_0(%arg0: i32) -> (i32, i32) {
    %c0_i32 = arith.constant 0 : i32
    %c0_i32_0 = arith.constant 0 : i32
    %c0_i32_1 = arith.constant 0 : i32
    return %c0_i32, %c0_i32_0 : i32, i32
  }
  func.func @transform_1(%arg0: i32) -> (i32, i32) {
    %c0_i32 = arith.constant 0 : i32
    %c0_i32_0 = arith.constant 0 : i32
    %c0_i32_1 = arith.constant 0 : i32
    return %c0_i32, %c0_i32_0 : i32, i32
  }
  func.func @transform_2(%arg0: i32) -> (i32, i32) {
    %c0_i32 = arith.constant 0 : i32
    %c0_i32_0 = arith.constant 0 : i32
    %c0_i32_1 = arith.constant 0 : i32
    return %c0_i32, %c0_i32_0 : i32, i32
  }
  func.func @transform_3(%arg0: i32) -> (i32, i32) {
    %c0_i32 = arith.constant 0 : i32
    %c0_i32_0 = arith.constant 0 : i32
    %c0_i32_1 = arith.constant 0 : i32
    return %c0_i32, %c0_i32_0 : i32, i32
  }
  func.func @transform_4(%arg0: i32) -> (i32, i32) {
    %c0_i32 = arith.constant 0 : i32
    %c0_i32_0 = arith.constant 0 : i32
    %c0_i32_1 = arith.constant 0 : i32
    return %c0_i32, %c0_i32_0 : i32, i32
  }
}

module attributes {stable_mosaic.version = 11 : i64} {
  func.func @deconv_tanh_kernel(%arg0: i32, %arg1: memref<3x72xf32, #tpu.memory_space<vmem>>, %arg2: memref<72x256xf32, #tpu.memory_space<vmem>>, %arg3: memref<3x1xf32, #tpu.memory_space<vmem>>, %arg4: memref<3x256xf32, #tpu.memory_space<vmem>>) attributes {dimension_semantics = [#tpu.dimension_semantics<parallel>], iteration_bounds = array<i64: 2>, scalar_prefetch = 0 : i64, scratch_operands = 0 : i64, tpu.core_type = #tpu.core_type<tc>, window_params = [{pipeline_mode = #tpu.pipeline_mode<synchronous>, transform_indices = @transform_0, window_bounds = array<i64: 3, 72>}, {transform_indices = @transform_1, window_bounds = array<i64: 72, 256>}, {pipeline_mode = #tpu.pipeline_mode<synchronous>, transform_indices = @transform_2, window_bounds = array<i64: 3, 1>}, {transform_indices = @transform_3, window_bounds = array<i64: 3, 256>}]} {
    %c0 = arith.constant 0 : index
    %c0_0 = arith.constant 0 : index
    %0 = vector.load %arg1[%c0, %c0_0] : memref<3x72xf32, #tpu.memory_space<vmem>>, vector<3x72xf32>
    %1 = arith.truncf %0 : vector<3x72xf32> to vector<3x72xbf16>
    %c0_1 = arith.constant 0 : index
    %c0_2 = arith.constant 0 : index
    %2 = vector.load %arg2[%c0_1, %c0_2] : memref<72x256xf32, #tpu.memory_space<vmem>>, vector<72x256xf32>
    %3 = arith.truncf %2 : vector<72x256xf32> to vector<72x256xbf16>
    %cst = arith.constant dense<0.000000e+00> : vector<3x256xf32>
    %4 = tpu.matmul %1, %3, %cst {dimension_numbers = #tpu.dot_dimension_numbers<[1], [0], [0], [1], [0, 0, 1, 1], [], []>} : vector<3x72xbf16>, vector<72x256xbf16>, vector<3x256xf32> -> vector<3x256xf32>
    %c0_3 = arith.constant 0 : index
    %c0_4 = arith.constant 0 : index
    %5 = vector.load %arg3[%c0_3, %c0_4] : memref<3x1xf32, #tpu.memory_space<vmem>>, vector<3x1xf32>
    %6 = vector.broadcast %5 : vector<3x1xf32> to vector<3x256xf32>
    %7 = arith.addf %4, %6 : vector<3x256xf32>
    %8 = math.tanh %7 : vector<3x256xf32>
    %c0_5 = arith.constant 0 : index
    %c0_6 = arith.constant 0 : index
    %9 = vector.load %arg4[%c0_5, %c0_6] : memref<3x256xf32, #tpu.memory_space<vmem>>, vector<3x256xf32>
    tpu.vector_store %arg4[%c0_5, %c0_6], %8 {strides = array<i32>} : memref<3x256xf32, #tpu.memory_space<vmem>>, vector<3x256xf32>,
    return
  }
  func.func @transform_0(%arg0: i32) -> (i32, i32) {
    %c0_i32 = arith.constant 0 : i32
    %c0_i32_0 = arith.constant 0 : i32
    %c0_i32_1 = arith.constant 0 : i32
    return %c0_i32, %c0_i32_0 : i32, i32
  }
  func.func @transform_1(%arg0: i32) -> (i32, i32) {
    %c0_i32 = arith.constant 0 : i32
    %c0_i32_0 = arith.constant 0 : i32
    return %c0_i32, %arg0 : i32, i32
  }
  func.func @transform_2(%arg0: i32) -> (i32, i32) {
    %c0_i32 = arith.constant 0 : i32
    %c0_i32_0 = arith.constant 0 : i32
    %c0_i32_1 = arith.constant 0 : i32
    return %c0_i32, %c0_i32_0 : i32, i32
  }
  func.func @transform_3(%arg0: i32) -> (i32, i32) {
    %c0_i32 = arith.constant 0 : i32
    %c0_i32_0 = arith.constant 0 : i32
    return %c0_i32, %arg0 : i32, i32
  }
}

</mosaic_0001>

<llo_original>
// kernel: tpu_custom_call.1
$region0: #{tpu_custom_call.1}
  #allocation0 [shape = 'u32[]', space=smem, size = 0x4, offset = 0x4, fixed_abs, tag = 'smem constant byte address 0x4 - core index']
  #allocation1 [shape = 'u32[144,128]{1,0:T(1,128)}', space=vmem, size = 0x12000, scoped, tag = 'internal scratch']
  %s0 = inlined_call_operand.vmem [shape: f32[2,11,11,16], index: 0, kind: input, shape index: {}]
  %s1 = inlined_call_operand.vmem [shape: f32[4,4,16,8], index: 1, kind: input, shape index: {}]
  %s2 = inlined_call_operand.vmem [shape: f32[1,8], index: 2, kind: input, shape index: {}]
  %s3 = inlined_call_operand.vmem [shape: f32[1,8], index: 3, kind: input, shape index: {}]
  %s4 = inlined_call_operand.vmem [shape: f32[128,8], index: 4, kind: output, shape index: {}]
  %s5 = sld [smem:[#allocation0]]
  $region26: #{tpu_custom_call.1} parent=0
    _
  %s7 = ssub.s32 1, %s5
  %s8 = scalar_select 0, %s7, %s5
  // Predicated region
  $region2: #{tpu_custom_call.1} parent=0 // pred_check
    _
  $region3: #{tpu_custom_call.1} parent=0 // pred_check_branch
    %10 = sbr.rel (0) target = $region5
  $region4: #{tpu_custom_call.1} parent=0 // pred_region
    _
  $region5: #{tpu_custom_call.1} parent=0 // pred_fallthru
    _
  // Predicated region
  $region6: #{tpu_custom_call.1} parent=0 // pred_check
    _
  $region7: #{tpu_custom_call.1} parent=0 // pred_check_branch
    %12 = sbr.rel (0) target = $region9
  $region8: #{tpu_custom_call.1} parent=0 // pred_region
    _
  $region9: #{tpu_custom_call.1} parent=0 // pred_fallthru
    _
  // Predicated region
  $region10: #{tpu_custom_call.1} parent=0 // pred_check
    _
  $region11: #{tpu_custom_call.1} parent=0 // pred_check_branch
    %14 = sbr.rel (0) target = $region13
  $region12: #{tpu_custom_call.1} parent=0 // pred_region
    _
  $region13: #{tpu_custom_call.1} parent=0 // pred_fallthru
    _
  // Predicated region
  $region14: #{tpu_custom_call.1} parent=0 // pred_check
    _
  $region15: #{tpu_custom_call.1} parent=0 // pred_check_branch
    %16 = sbr.rel (0) target = $region17
  $region16: #{tpu_custom_call.1} parent=0 // pred_region
    _
  $region17: #{tpu_custom_call.1} parent=0 // pred_fallthru
    _
  %v18 = vld [vmem:[%s0] sm:$0xff]
  %v19 = vld [vmem:[%s0 + $0x10] sm:$0xff]
  %v20 = vld [vmem:[%s0 + $0x20] sm:$0xff]
  %v21 = vld [vmem:[%s0 + $0x30] sm:$0xff]
  %v22 = vld [vmem:[%s0 + $0x40] sm:$0xff]
  %v23 = vld [vmem:[%s0 + $0x50] sm:$0xff]
  %v24 = vld [vmem:[%s0 + $0x60] sm:$0xff]
  %v25 = vld [vmem:[%s0 + $0x70] sm:$0xff]
  %v26 = vld [vmem:[%s0 + $0xb0] sm:$0xff]
  %v27 = vld [vmem:[%s0 + $0xc0] sm:$0xff]
  %v28 = vld [vmem:[%s0 + $0xd0] sm:$0xff]
  %v29 = vld [vmem:[%s0 + $0xe0] sm:$0xff]
  %v30 = vld [vmem:[%s0 + $0xf0] sm:$0xff]
  %v31 = vld [vmem:[%s0 + $0x100] sm:$0xff]
  %v32 = vld [vmem:[%s0 + $0x110] sm:$0xff]
  %v33 = vld [vmem:[%s0 + $0x120] sm:$0xff]
  %v34 = vpack.c.bf16 %v19, %v18
  %v35 = vpack.c.bf16 %v21, %v20
  %v36 = vpack.c.bf16 %v23, %v22
  %v37 = vpack.c.bf16 %v25, %v24
  %v38 = vpack.c.bf16 %v27, %v26
  %v39 = vpack.c.bf16 %v29, %v28
  %v40 = vpack.c.bf16 %v31, %v30
  %v41 = vpack.c.bf16 %v33, %v32
  %v42 = vld [vmem:[%s1] sm:$0xff]
  %v43 = vld [vmem:[%s1 + $0x8] sm:$0xff]
  %v44 = vpack.c.bf16 %v43, %v42
  %v45 = vld [vmem:[%s0 + $0x1] sm:$0xff]
  %v46 = vld [vmem:[%s0 + $0x11] sm:$0xff]
  %v47 = vld [vmem:[%s0 + $0x21] sm:$0xff]
  %v48 = vld [vmem:[%s0 + $0x31] sm:$0xff]
  %v49 = vld [vmem:[%s0 + $0x41] sm:$0xff]
  %v50 = vld [vmem:[%s0 + $0x51] sm:$0xff]
  %v51 = vld [vmem:[%s0 + $0x61] sm:$0xff]
  %v52 = vld [vmem:[%s0 + $0x71] sm:$0xff]
  %v53 = vld [vmem:[%s0 + $0xb1] sm:$0xff]
  %v54 = vld [vmem:[%s0 + $0xc1] sm:$0xff]
  %v55 = vld [vmem:[%s0 + $0xd1] sm:$0xff]
  %v56 = vld [vmem:[%s0 + $0xe1] sm:$0xff]
  %v57 = vld [vmem:[%s0 + $0xf1] sm:$0xff]
  %v58 = vld [vmem:[%s0 + $0x101] sm:$0xff]
  %v59 = vld [vmem:[%s0 + $0x111] sm:$0xff]
  %v60 = vld [vmem:[%s0 + $0x121] sm:$0xff]
  %v61 = vpack.c.bf16 %v46, %v45
  %v62 = vpack.c.bf16 %v48, %v47
  %v63 = vpack.c.bf16 %v50, %v49
  %v64 = vpack.c.bf16 %v52, %v51
  %v65 = vpack.c.bf16 %v54, %v53
  %v66 = vpack.c.bf16 %v56, %v55
  %v67 = vpack.c.bf16 %v58, %v57
  %v68 = vpack.c.bf16 %v60, %v59
  %s69 = scalar_lea.vmem %s1, 16
  %v70 = vld [vmem:[%s69] sm:$0xff]
  %v71 = vld [vmem:[%s69 + $0x8] sm:$0xff]
  %v72 = vpack.c.bf16 %v71, %v70
  %vm73 = vcmask 130048
  %v75 = vsel %vm73, %v61, 0
  %v78 = vsel %vm73, %v62, 0
  %v81 = vsel %vm73, %v63, 0
  %v84 = vsel %vm73, %v64, 0
  %v87 = vsel %vm73, %v65, 0
  %v90 = vsel %vm73, %v66, 0
  %v93 = vsel %vm73, %v67, 0
  %v96 = vsel %vm73, %v68, 0
  %98 = vmatprep.subr.bf16.mxu0 0
  %99 = vmatpush1.bf16.msra.mxu0 %v72
  %100 = vmatprep.subr.bf16.mxu0 0
  %101 = vmatpush1.bf16.msra.mxu0 0
  %102 = vmatprep.subr.bf16.mxu0 0
  %103 = vmatpush1.bf16.msra.mxu0 0
  %104 = vmatprep.subr.bf16.mxu0 0
  %105 = vmatpush1.bf16.msra.mxu0 0
  %106 = vmatprep.subr.bf16.mxu0 0
  %107 = vmatpush1.bf16.msra.mxu0 0
  %108 = vmatprep.subr.bf16.mxu0 0
  %109 = vmatpush1.bf16.msra.mxu0 0
  %110 = vmatprep.subr.bf16.mxu0 0
  %111 = vmatpush1.bf16.msra.mxu0 0
  %112 = vmatprep.subr.bf16.mxu0 0
  %113 = vmatpush1.bf16.msra.mxu0 0
  %114 = vmatprep.subr.bf16.mxu0 0
  %115 = vmatpush1.bf16.msra.mxu0 0
  %116 = vmatprep.subr.bf16.mxu0 0
  %117 = vmatpush1.bf16.msra.mxu0 0
  %118 = vmatprep.subr.bf16.mxu0 0
  %119 = vmatpush1.bf16.msra.mxu0 0
  %120 = vmatprep.subr.bf16.mxu0 0
  %121 = vmatpush1.bf16.msra.mxu0 0
  %122 = vmatprep.subr.bf16.mxu0 0
  %123 = vmatpush1.bf16.msra.mxu0 0
  %124 = vmatprep.subr.bf16.mxu0 0
  %125 = vmatpush1.bf16.msra.mxu0 0
  %126 = vmatprep.subr.bf16.mxu0 0
  %127 = vmatpush1.bf16.msra.mxu0 0
  %128 = vmatprep.subr.bf16.mxu0 0
  %129 = vmatpush1.bf16.msra.mxu0 0
  %130 = vmatprep.mubr.bf16.mxu0 0
  %131 = vmatmul.mubr.bf16.gmra.mrb[0].mxu0 %v75
  %v132 = vpop.f32.mrb[0].mxu0
  %v133 = vadd.f32 0.0, %v132
  %v134 = vpop.f32.mrb[0].mxu0
  %v135 = vpop.f32.mrb[0].mxu0
  %v136 = vadd.f32 0.0, %v135
  %v137 = vpop.f32.mrb[0].mxu0
  %138 = vmatprep.mubr.bf16.mxu0 0
  %139 = vmatmul.mubr.bf16.gmra.mrb[0].mxu0 %v78
  %v140 = vpop.f32.mrb[0].mxu0
  %v141 = vadd.f32 0.0, %v140
  %v142 = vpop.f32.mrb[0].mxu0
  %v143 = vpop.f32.mrb[0].mxu0
  %v144 = vadd.f32 0.0, %v143
  %v145 = vpop.f32.mrb[0].mxu0
  %146 = vmatprep.mubr.bf16.mxu0 0
  %147 = vmatmul.mubr.bf16.gmra.mrb[0].mxu0 %v81
  %v148 = vpop.f32.mrb[0].mxu0
  %v149 = vadd.f32 0.0, %v148
  %v150 = vpop.f32.mrb[0].mxu0
  %v151 = vpop.f32.mrb[0].mxu0
  %v152 = vadd.f32 0.0, %v151
  %v153 = vpop.f32.mrb[0].mxu0
  %154 = vmatprep.mubr.bf16.mxu0 0
  %155 = vmatmul.mubr.bf16.gmra.mrb[0].mxu0 %v84
  %v156 = vpop.f32.mrb[0].mxu0
  %v157 = vadd.f32 0.0, %v156
  %v158 = vpop.f32.mrb[0].mxu0
  %v159 = vpop.f32.mrb[0].mxu0
  %v160 = vadd.f32 0.0, %v159
  %v161 = vpop.f32.mrb[0].mxu0
  %162 = vmatprep.mubr.bf16.mxu0 0
  %163 = vmatmul.mubr.bf16.gmra.mrb[0].mxu0 %v87
  %v164 = vpop.f32.mrb[0].mxu0
  %v165 = vadd.f32 0.0, %v164
  %v166 = vpop.f32.mrb[0].mxu0
  %v167 = vpop.f32.mrb[0].mxu0
  %v168 = vadd.f32 0.0, %v167
  %v169 = vpop.f32.mrb[0].mxu0
  %170 = vmatprep.mubr.bf16.mxu0 0
  %171 = vmatmul.mubr.bf16.gmra.mrb[0].mxu0 %v90
  %v172 = vpop.f32.mrb[0].mxu0
  %v173 = vadd.f32 0.0, %v172
  %v174 = vpop.f32.mrb[0].mxu0
  %v175 = vpop.f32.mrb[0].mxu0
  %v176 = vadd.f32 0.0, %v175
  %v177 = vpop.f32.mrb[0].mxu0
  %178 = vmatprep.mubr.bf16.mxu0 0
  %179 = vmatmul.mubr.bf16.gmra.mrb[0].mxu0 %v93
  %v180 = vpop.f32.mrb[0].mxu0
  %v181 = vadd.f32 0.0, %v180
  %v182 = vpop.f32.mrb[0].mxu0
  %v183 = vpop.f32.mrb[0].mxu0
  %v184 = vadd.f32 0.0, %v183
  %v185 = vpop.f32.mrb[0].mxu0
  %186 = vmatprep.mubr.bf16.mxu0 0
  %187 = vmatmul.mubr.bf16.gmra.mrb[0].mxu0 %v96
  %v188 = vpop.f32.mrb[0].mxu0
  %v189 = vadd.f32 0.0, %v188
  %v190 = vpop.f32.mrb[0].mxu0
  %v191 = vpop.f32.mrb[0].mxu0
  %v192 = vadd.f32 0.0, %v191
  %v193 = vpop.f32.mrb[0].mxu0
  %194 = vdwg.mxu0
  %v196 = vsel %vm73, %v34, 0
  %v199 = vsel %vm73, %v35, 0
  %v202 = vsel %vm73, %v36, 0
  %v205 = vsel %vm73, %v37, 0
  %v208 = vsel %vm73, %v38, 0
  %v211 = vsel %vm73, %v39, 0
  %v214 = vsel %vm73, %v40, 0
  %v217 = vsel %vm73, %v41, 0
  %219 = vmatprep.subr.bf16.mxu0 0
  %220 = vmatpush1.bf16.msra.mxu0 %v44
  %221 = vmatprep.subr.bf16.mxu0 0
  %222 = vmatpush1.bf16.msra.mxu0 0
  %223 = vmatprep.subr.bf16.mxu0 0
  %224 = vmatpush1.bf16.msra.mxu0 0
  %225 = vmatprep.subr.bf16.mxu0 0
  %226 = vmatpush1.bf16.msra.mxu0 0
  %227 = vmatprep.subr.bf16.mxu0 0
  %228 = vmatpush1.bf16.msra.mxu0 0
  %229 = vmatprep.subr.bf16.mxu0 0
  %230 = vmatpush1.bf16.msra.mxu0 0
  %231 = vmatprep.subr.bf16.mxu0 0
  %232 = vmatpush1.bf16.msra.mxu0 0
  %233 = vmatprep.subr.bf16.mxu0 0
  %234 = vmatpush1.bf16.msra.mxu0 0
  %235 = vmatprep.subr.bf16.mxu0 0
  %236 = vmatpush1.bf16.msra.mxu0 0
  %237 = vmatprep.subr.bf16.mxu0 0
  %238 = vmatpush1.bf16.msra.mxu0 0
  %239 = vmatprep.subr.bf16.mxu0 0
  %240 = vmatpush1.bf16.msra.mxu0 0
  %241 = vmatprep.subr.bf16.mxu0 0
  %242 = vmatpush1.bf16.msra.mxu0 0
  %243 = vmatprep.subr.bf16.mxu0 0
  %244 = vmatpush1.bf16.msra.mxu0 0
  %245 = vmatprep.subr.bf16.mxu0 0
  %246 = vmatpush1.bf16.msra.mxu0 0
  %247 = vmatprep.subr.bf16.mxu0 0
  %248 = vmatpush1.bf16.msra.mxu0 0
  %249 = vmatprep.subr.bf16.mxu0 0
  %250 = vmatpush1.bf16.msra.mxu0 0
  %251 = vmatprep.mubr.bf16.mxu0 0
  %252 = vmatmul.mubr.bf16.gmra.mrb[0].mxu0 %v196
  %v253 = vpop.f32.mrb[0].mxu0
  %v254 = vadd.f32 %v133, %v253
  %v255 = vpop.f32.mrb[0].mxu0
  %v256 = vpop.f32.mrb[0].mxu0
  %v257 = vadd.f32 %v136, %v256
  %v258 = vpop.f32.mrb[0].mxu0
  %259 = vmatprep.mubr.bf16.mxu0 0
  %260 = vmatmul.mubr.bf16.gmra.mrb[0].mxu0 %v199
  %v261 = vpop.f32.mrb[0].mxu0
  %v262 = vadd.f32 %v141, %v261
  %v263 = vpop.f32.mrb[0].mxu0
  %v264 = vpop.f32.mrb[0].mxu0
  %v265 = vadd.f32 %v144, %v264
  %v266 = vpop.f32.mrb[0].mxu0
  %267 = vmatprep.mubr.bf16.mxu0 0
  %268 = vmatmul.mubr.bf16.gmra.mrb[0].mxu0 %v202
  %v269 = vpop.f32.mrb[0].mxu0
  %v270 = vadd.f32 %v149, %v269
  %v271 = vpop.f32.mrb[0].mxu0
  %v272 = vpop.f32.mrb[0].mxu0
  %v273 = vadd.f32 %v152, %v272
  %v274 = vpop.f32.mrb[0].mxu0
  %275 = vmatprep.mubr.bf16.mxu0 0
  %276 = vmatmul.mubr.bf16.gmra.mrb[0].mxu0 %v205
  %v277 = vpop.f32.mrb[0].mxu0
  %v278 = vadd.f32 %v157, %v277
  %v279 = vpop.f32.mrb[0].mxu0
  %v280 = vpop.f32.mrb[0].mxu0
  %v281 = vadd.f32 %v160, %v280
  %v282 = vpop.f32.mrb[0].mxu0
  %283 = vmatprep.mubr.bf16.mxu0 0
  %284 = vmatmul.mubr.bf16.gmra.mrb[0].mxu0 %v208
  %v285 = vpop.f32.mrb[0].mxu0
  %v286 = vadd.f32 %v165, %v285
  %v287 = vpop.f32.mrb[0].mxu0
  %v288 = vpop.f32.mrb[0].mxu0
  %v289 = vadd.f32 %v168, %v288
  %v290 = vpop.f32.mrb[0].mxu0
  %291 = vmatprep.mubr.bf16.mxu0 0
  %292 = vmatmul.mubr.bf16.gmra.mrb[0].mxu0 %v211
  %v293 = vpop.f32.mrb[0].mxu0
  %v294 = vadd.f32 %v173, %v293
  %v295 = vpop.f32.mrb[0].mxu0
  %v296 = vpop.f32.mrb[0].mxu0
  %v297 = vadd.f32 %v176, %v296
  %v298 = vpop.f32.mrb[0].mxu0
  %299 = vmatprep.mubr.bf16.mxu0 0
  %300 = vmatmul.mubr.bf16.gmra.mrb[0].mxu0 %v214
  %v301 = vpop.f32.mrb[0].mxu0
  %v302 = vadd.f32 %v181, %v301
  %v303 = vpop.f32.mrb[0].mxu0
  %v304 = vpop.f32.mrb[0].mxu0
  %v305 = vadd.f32 %v184, %v304
  %v306 = vpop.f32.mrb[0].mxu0
  %307 = vmatprep.mubr.bf16.mxu0 0
  %308 = vmatmul.mubr.bf16.gmra.mrb[0].mxu0 %v217
  %v309 = vpop.f32.mrb[0].mxu0
  %v310 = vadd.f32 %v189, %v309
  %v311 = vpop.f32.mrb[0].mxu0
  %v312 = vpop.f32.mrb[0].mxu0
  %v313 = vadd.f32 %v192, %v312
  %v314 = vpop.f32.mrb[0].mxu0
  %315 = vdwg.mxu0
  %v316 = vld [vmem:[%s0 + $0x2] sm:$0xff]
  %v317 = vld [vmem:[%s0 + $0x12] sm:$0xff]
  %v318 = vld [vmem:[%s0 + $0x22] sm:$0xff]
  %v319 = vld [vmem:[%s0 + $0x32] sm:$0xff]
  %v320 = vld [vmem:[%s0 + $0x42] sm:$0xff]
  %v321 = vld [vmem:[%s0 + $0x52] sm:$0xff]
  %v322 = vld [vmem:[%s0 + $0x62] sm:$0xff]
  %v323 = vld [vmem:[%s0 + $0x72] sm:$0xff]
  %v324 = vld [vmem:[%s0 + $0xb2] sm:$0xff]
  %v325 = vld [vmem:[%s0 + $0xc2] sm:$0xff]
  %v326 = vld [vmem:[%s0 + $0xd2] sm:$0xff]
  %v327 = vld [vmem:[%s0 + $0xe2] sm:$0xff]
  %v328 = vld [vmem:[%s0 + $0xf2] sm:$0xff]
  %v329 = vld [vmem:[%s0 + $0x102] sm:$0xff]
  %v330 = vld [vmem:[%s0 + $0x112] sm:$0xff]
  %v331 = vld [vmem:[%s0 + $0x122] sm:$0xff]
  %v332 = vpack.c.bf16 %v317, %v316
  %v333 = vpack.c.bf16 %v319, %v318
  %v334 = vpack.c.bf16 %v321, %v320
  %v335 = vpack.c.bf16 %v323, %v322
  %v336 = vpack.c.bf16 %v325, %v324
  %v337 = vpack.c.bf16 %v327, %v326
  %v338 = vpack.c.bf16 %v329, %v328
  %v339 = vpack.c.bf16 %v331, %v330
  %s340 = scalar_lea.vmem %s1, 32
  %v341 = vld [vmem:[%s340] sm:$0xff]
  %v342 = vld [vmem:[%s340 + $0x8] sm:$0xff]
  %v343 = vpack.c.bf16 %v342, %v341
  %v345 = vsel %vm73, %v332, 0
  %v348 = vsel %vm73, %v333, 0
  %v351 = vsel %vm73, %v334, 0
  %v354 = vsel %vm73, %v335, 0
  %v357 = vsel %vm73, %v336, 0
  %v360 = vsel %vm73, %v337, 0
  %v363 = vsel %vm73, %v338, 0
  %v366 = vsel %vm73, %v339, 0
  %368 = vmatprep.subr.bf16.mxu0 0
  %369 = vmatpush1.bf16.msra.mxu0 %v343
  %370 = vmatprep.subr.bf16.mxu0 0
  %371 = vmatpush1.bf16.msra.mxu0 0
  %372 = vmatprep.subr.bf16.mxu0 0
  %373 = vmatpush1.bf16.msra.mxu0 0
  %374 = vmatprep.subr.bf16.mxu0 0
  %375 = vmatpush1.bf16.msra.mxu0 0
  %376 = vmatprep.subr.bf16.mxu0 0
  %377 = vmatpush1.bf16.msra.mxu0 0
  %378 = vmatprep.subr.bf16.mxu0 0
  %379 = vmatpush1.bf16.msra.mxu0 0
  %380 = vmatprep.subr.bf16.mxu0 0
  %381 = vmatpush1.bf16.msra.mxu0 0
  %382 = vmatprep.subr.bf16.mxu0 0
  %383 = vmatpush1.bf16.msra.mxu0 0
  %384 = vmatprep.subr.bf16.mxu0 0
  %385 = vmatpush1.bf16.msra.mxu0 0
  %386 = vmatprep.subr.bf16.mxu0 0
  %387 = vmatpush1.bf16.msra.mxu0 0
  %388 = vmatprep.subr.bf16.mxu0 0
  %389 = vmatpush1.bf16.msra.mxu0 0
  %390 = vmatprep.subr.bf16.mxu0 0
  %391 = vmatpush1.bf16.msra.mxu0 0
  %392 = vmatprep.subr.bf16.mxu0 0
  %393 = vmatpush1.bf16.msra.mxu0 0
  %394 = vmatprep.subr.bf16.mxu0 0
  %395 = vmatpush1.bf16.msra.mxu0 0
  %396 = vmatprep.subr.bf16.mxu0 0
  %397 = vmatpush1.bf16.msra.mxu0 0
  %398 = vmatprep.subr.bf16.mxu0 0
  %399 = vmatpush1.bf16.msra.mxu0 0
  %400 = vmatprep.mubr.bf16.mxu0 0
  %401 = vmatmul.mubr.bf16.gmra.mrb[0].mxu0 %v345
  %v402 = vpop.f32.mrb[0].mxu0
  %v403 = vadd.f32 0.0, %v402
  %v404 = vpop.f32.mrb[0].mxu0
  %v405 = vpop.f32.mrb[0].mxu0
  %v406 = vadd.f32 0.0, %v405
  %v407 = vpop.f32.mrb[0].mxu0
  %408 = vmatprep.mubr.bf16.mxu0 0
  %409 = vmatmul.mubr.bf16.gmra.mrb[0].mxu0 %v348
  %v410 = vpop.f32.mrb[0].mxu0
  %v411 = vadd.f32 0.0, %v410
  %v412 = vpop.f32.mrb[0].mxu0
  %v413 = vpop.f32.mrb[0].mxu0
  %v414 = vadd.f32 0.0, %v413
  %v415 = vpop.f32.mrb[0].mxu0
  %416 = vmatprep.mubr.bf16.mxu0 0
  %417 = vmatmul.mubr.bf16.gmra.mrb[0].mxu0 %v351
  %v418 = vpop.f32.mrb[0].mxu0
  %v419 = vadd.f32 0.0, %v418
  %v420 = vpop.f32.mrb[0].mxu0
  %v421 = vpop.f32.mrb[0].mxu0
  %v422 = vadd.f32 0.0, %v421
  %v423 = vpop.f32.mrb[0].mxu0
  %424 = vmatprep.mubr.bf16.mxu0 0
  %425 = vmatmul.mubr.bf16.gmra.mrb[0].mxu0 %v354
  %v426 = vpop.f32.mrb[0].mxu0
  %v427 = vadd.f32 0.0, %v426
  %v428 = vpop.f32.mrb[0].mxu0
  %v429 = vpop.f32.mrb[0].mxu0
  %v430 = vadd.f32 0.0, %v429
  %v431 = vpop.f32.mrb[0].mxu0
  %432 = vmatprep.mubr.bf16.mxu0 0
  %433 = vmatmul.mubr.bf16.gmra.mrb[0].mxu0 %v357
  %v434 = vpop.f32.mrb[0].mxu0
  %v435 = vadd.f32 0.0, %v434
  %v436 = vpop.f32.mrb[0].mxu0
  %v437 = vpop.f32.mrb[0].mxu0
  %v438 = vadd.f32 0.0, %v437
  %v439 = vpop.f32.mrb[0].mxu0
  %440 = vmatprep.mubr.bf16.mxu0 0
  %441 = vmatmul.mubr.bf16.gmra.mrb[0].mxu0 %v360
  %v442 = vpop.f32.mrb[0].mxu0
  %v443 = vadd.f32 0.0, %v442
  %v444 = vpop.f32.mrb[0].mxu0
  %v445 = vpop.f32.mrb[0].mxu0
  %v446 = vadd.f32 0.0, %v445
  %v447 = vpop.f32.mrb[0].mxu0
  %448 = vmatprep.mubr.bf16.mxu0 0
  %449 = vmatmul.mubr.bf16.gmra.mrb[0].mxu0 %v363
  %v450 = vpop.f32.mrb[0].mxu0
  %v451 = vadd.f32 0.0, %v450
  %v452 = vpop.f32.mrb[0].mxu0
  %v453 = vpop.f32.mrb[0].mxu0
  %v454 = vadd.f32 0.0, %v453
  %v455 = vpop.f32.mrb[0].mxu0
  %456 = vmatprep.mubr.bf16.mxu0 0
  %457 = vmatmul.mubr.bf16.gmra.mrb[0].mxu0 %v366
  %v458 = vpop.f32.mrb[0].mxu0
  %v459 = vadd.f32 0.0, %v458
  %v460 = vpop.f32.mrb[0].mxu0
  %v461 = vpop.f32.mrb[0].mxu0
  %v462 = vadd.f32 0.0, %v461
  %v463 = vpop.f32.mrb[0].mxu0
  %464 = vdwg.mxu0
  %v465 = vadd.f32 %v254, %v403
  %v466 = vadd.f32 %v257, %v406
  %v467 = vadd.f32 %v262, %v411
  %v468 = vadd.f32 %v265, %v414
  %v469 = vadd.f32 %v270, %v419
  %v470 = vadd.f32 %v273, %v422
  %v471 = vadd.f32 %v278, %v427
  %v472 = vadd.f32 %v281, %v430
  %v473 = vadd.f32 %v286, %v435
  %v474 = vadd.f32 %v289, %v438
  %v475 = vadd.f32 %v294, %v443
  %v476 = vadd.f32 %v297, %v446
  %v477 = vadd.f32 %v302, %v451
  %v478 = vadd.f32 %v305, %v454
  %v479 = vadd.f32 %v310, %v459
  %v480 = vadd.f32 %v313, %v462
  %v481 = vld [vmem:[%s0 + $0x3] sm:$0xff]
  %v482 = vld [vmem:[%s0 + $0x13] sm:$0xff]
  %v483 = vld [vmem:[%s0 + $0x23] sm:$0xff]
  %v484 = vld [vmem:[%s0 + $0x33] sm:$0xff]
  %v485 = vld [vmem:[%s0 + $0x43] sm:$0xff]
  %v486 = vld [vmem:[%s0 + $0x53] sm:$0xff]
  %v487 = vld [vmem:[%s0 + $0x63] sm:$0xff]
  %v488 = vld [vmem:[%s0 + $0x73] sm:$0xff]
  %v489 = vld [vmem:[%s0 + $0xb3] sm:$0xff]
  %v490 = vld [vmem:[%s0 + $0xc3] sm:$0xff]
  %v491 = vld [vmem:[%s0 + $0xd3] sm:$0xff]
  %v492 = vld [vmem:[%s0 + $0xe3] sm:$0xff]
  %v493 = vld [vmem:[%s0 + $0xf3] sm:$0xff]
  %v494 = vld [vmem:[%s0 + $0x103] sm:$0xff]
  %v495 = vld [vmem:[%s0 + $0x113] sm:$0xff]
  %v496 = vld [vmem:[%s0 + $0x123] sm:$0xff]
  %v497 = vpack.c.bf16 %v482, %v481
  %v498 = vpack.c.bf16 %v484, %v483
  %v499 = vpack.c.bf16 %v486, %v485
  %v500 = vpack.c.bf16 %v488, %v487
  %v501 = vpack.c.bf16 %v490, %v489
  %v502 = vpack.c.bf16 %v492, %v491
  %v503 = vpack.c.bf16 %v494, %v493
  %v504 = vpack.c.bf16 %v496, %v495
  %s505 = scalar_lea.vmem %s1, 48
  %v506 = vld [vmem:[%s505] sm:$0xff]
  %v507 = vld [vmem:[%s505 + $0x8] sm:$0xff]
  %v508 = vpack.c.bf16 %v507, %v506
  %v510 = vsel %vm73, %v497, 0
  %v513 = vsel %vm73, %v498, 0
  %v516 = vsel %vm73, %v499, 0
  %v519 = vsel %vm73, %v500, 0
  %v522 = vsel %vm73, %v501, 0
  %v525 = vsel %vm73, %v502, 0
  %v528 = vsel %vm73, %v503, 0
  %v531 = vsel %vm73, %v504, 0
  %533 = vmatprep.subr.bf16.mxu0 0
  %534 = vmatpush1.bf16.msra.mxu0 %v508
  %535 = vmatprep.subr.bf16.mxu0 0
  %536 = vmatpush1.bf16.msra.mxu0 0
  %537 = vmatprep.subr.bf16.mxu0 0
  %538 = vmatpush1.bf16.msra.mxu0 0
  %539 = vmatprep.subr.bf16.mxu0 0
  %540 = vmatpush1.bf16.msra.mxu0 0
  %541 = vmatprep.subr.bf16.mxu0 0
  %542 = vmatpush1.bf16.msra.mxu0 0
  %543 = vmatprep.subr.bf16.mxu0 0
  %544 = vmatpush1.bf16.msra.mxu0 0
  %545 = vmatprep.subr.bf16.mxu0 0
  %546 = vmatpush1.bf16.msra.mxu0 0
  %547 = vmatprep.subr.bf16.mxu0 0
  %548 = vmatpush1.bf16.msra.mxu0 0
  %549 = vmatprep.subr.bf16.mxu0 0
  %550 = vmatpush1.bf16.msra.mxu0 0
  %551 = vmatprep.subr.bf16.mxu0 0
  %552 = vmatpush1.bf16.msra.mxu0 0
  %553 = vmatprep.subr.bf16.mxu0 0
  %554 = vmatpush1.bf16.msra.mxu0 0
  %555 = vmatprep.subr.bf16.mxu0 0
  %556 = vmatpush1.bf16.msra.mxu0 0
  %557 = vmatprep.subr.bf16.mxu0 0
  %558 = vmatpush1.bf16.msra.mxu0 0
  %559 = vmatprep.subr.bf16.mxu0 0
  %560 = vmatpush1.bf16.msra.mxu0 0
  %561 = vmatprep.subr.bf16.mxu0 0
  %562 = vmatpush1.bf16.msra.mxu0 0
  %563 = vmatprep.subr.bf16.mxu0 0
  %564 = vmatpush1.bf16.msra.mxu0 0
  %565 = vmatprep.mubr.bf16.mxu0 0
  %566 = vmatmul.mubr.bf16.gmra.mrb[0].mxu0 %v510
  %v567 = vpop.f32.mrb[0].mxu0
  %v568 = vadd.f32 0.0, %v567
  %v569 = vpop.f32.mrb[0].mxu0
  %v570 = vpop.f32.mrb[0].mxu0
  %v571 = vadd.f32 0.0, %v570
  %v572 = vpop.f32.mrb[0].mxu0
  %573 = vmatprep.mubr.bf16.mxu0 0
  %574 = vmatmul.mubr.bf16.gmra.mrb[0].mxu0 %v513
  %v575 = vpop.f32.mrb[0].mxu0
  %v576 = vadd.f32 0.0, %v575
  %v577 = vpop.f32.mrb[0].mxu0
  %v578 = vpop.f32.mrb[0].mxu0
  %v579 = vadd.f32 0.0, %v578
  %v580 = vpop.f32.mrb[0].mxu0
  %581 = vmatprep.mubr.bf16.mxu0 0
  %582 = vmatmul.mubr.bf16.gmra.mrb[0].mxu0 %v516
  %v583 = vpop.f32.mrb[0].mxu0
  %v584 = vadd.f32 0.0, %v583
  %v585 = vpop.f32.mrb[0].mxu0
  %v586 = vpop.f32.mrb[0].mxu0
  %v587 = vadd.f32 0.0, %v586
  %v588 = vpop.f32.mrb[0].mxu0
  %589 = vmatprep.mubr.bf16.mxu0 0
  %590 = vmatmul.mubr.bf16.gmra.mrb[0].mxu0 %v519
  %v591 = vpop.f32.mrb[0].mxu0
  %v592 = vadd.f32 0.0, %v591
  %v593 = vpop.f32.mrb[0].mxu0
  %v594 = vpop.f32.mrb[0].mxu0
  %v595 = vadd.f32 0.0, %v594
  %v596 = vpop.f32.mrb[0].mxu0
  %597 = vmatprep.mubr.bf16.mxu0 0
  %598 = vmatmul.mubr.bf16.gmra.mrb[0].mxu0 %v522
  %v599 = vpop.f32.mrb[0].mxu0
  %v600 = vadd.f32 0.0, %v599
  %v601 = vpop.f32.mrb[0].mxu0
  %v602 = vpop.f32.mrb[0].mxu0
  %v603 = vadd.f32 0.0, %v602
  %v604 = vpop.f32.mrb[0].mxu0
  %605 = vmatprep.mubr.bf16.mxu0 0
  %606 = vmatmul.mubr.bf16.gmra.mrb[0].mxu0 %v525
  %v607 = vpop.f32.mrb[0].mxu0
  %v608 = vadd.f32 0.0, %v607
  %v609 = vpop.f32.mrb[0].mxu0
  %v610 = vpop.f32.mrb[0].mxu0
  %v611 = vadd.f32 0.0, %v610
  %v612 = vpop.f32.mrb[0].mxu0
  %613 = vmatprep.mubr.bf16.mxu0 0
  %614 = vmatmul.mubr.bf16.gmra.mrb[0].mxu0 %v528
  %v615 = vpop.f32.mrb[0].mxu0
  %v616 = vadd.f32 0.0, %v615
  %v617 = vpop.f32.mrb[0].mxu0
  %v618 = vpop.f32.mrb[0].mxu0
  %v619 = vadd.f32 0.0, %v618
  %v620 = vpop.f32.mrb[0].mxu0
  %621 = vmatprep.mubr.bf16.mxu0 0
  %622 = vmatmul.mubr.bf16.gmra.mrb[0].mxu0 %v531
  %v623 = vpop.f32.mrb[0].mxu0
  %v624 = vadd.f32 0.0, %v623
  %v625 = vpop.f32.mrb[0].mxu0
  %v626 = vpop.f32.mrb[0].mxu0
  %v627 = vadd.f32 0.0, %v626
  %v628 = vpop.f32.mrb[0].mxu0
  %629 = vdwg.mxu0
  %v630 = vadd.f32 %v465, %v568
  %v631 = vadd.f32 %v466, %v571
  %v632 = vadd.f32 %v467, %v576
  %v633 = vadd.f32 %v468, %v579
  %v634 = vadd.f32 %v469, %v584
  %v635 = vadd.f32 %v470, %v587
  %v636 = vadd.f32 %v471, %v592
  %v637 = vadd.f32 %v472, %v595
  %v638 = vadd.f32 %v473, %v600
  %v639 = vadd.f32 %v474, %v603
  %v640 = vadd.f32 %v475, %v608
  %v641 = vadd.f32 %v476, %v611
  %v642 = vadd.f32 %v477, %v616
  %v643 = vadd.f32 %v478, %v619
  %v644 = vadd.f32 %v479, %v624
  %v645 = vadd.f32 %v480, %v627
  %s646 = scalar_lea.vmem %s0, 16
  %v647 = vld [vmem:[%s646] sm:$0xff]
  %v648 = vld [vmem:[%s646 + $0x10] sm:$0xff]
  %v649 = vld [vmem:[%s646 + $0x20] sm:$0xff]
  %v650 = vld [vmem:[%s646 + $0x30] sm:$0xff]
  %v651 = vld [vmem:[%s646 + $0x40] sm:$0xff]
  %v652 = vld [vmem:[%s646 + $0x50] sm:$0xff]
  %v653 = vld [vmem:[%s646 + $0x60] sm:$0xff]
  %v654 = vld [vmem:[%s646 + $0x70] sm:$0xff]
  %v655 = vld [vmem:[%s646 + $0xb0] sm:$0xff]
  %v656 = vld [vmem:[%s646 + $0xc0] sm:$0xff]
  %v657 = vld [vmem:[%s646 + $0xd0] sm:$0xff]
  %v658 = vld [vmem:[%s646 + $0xe0] sm:$0xff]
  %v659 = vld [vmem:[%s646 + $0xf0] sm:$0xff]
  %v660 = vld [vmem:[%s646 + $0x100] sm:$0xff]
  %v661 = vld [vmem:[%s646 + $0x110] sm:$0xff]
  %v662 = vld [vmem:[%s646 + $0x120] sm:$0xff]
  %v663 = vpack.c.bf16 %v648, %v647
  %v664 = vpack.c.bf16 %v650, %v649
  %v665 = vpack.c.bf16 %v652, %v651
  %v666 = vpack.c.bf16 %v654, %v653
  %v667 = vpack.c.bf16 %v656, %v655
  %v668 = vpack.c.bf16 %v658, %v657
  %v669 = vpack.c.bf16 %v660, %v659
  %v670 = vpack.c.bf16 %v662, %v661
  %s671 = scalar_lea.vmem %s1, 64
  %v672 = vld [vmem:[%s671] sm:$0xff]
  %v673 = vld [vmem:[%s671 + $0x8] sm:$0xff]
  %v674 = vpack.c.bf16 %v673, %v672
  %v676 = vsel %vm73, %v663, 0
  %v679 = vsel %vm73, %v664, 0
  %v682 = vsel %vm73, %v665, 0
  %v685 = vsel %vm73, %v666, 0
  %v688 = vsel %vm73, %v667, 0
  %v691 = vsel %vm73, %v668, 0
  %v694 = vsel %vm73, %v669, 0
  %v697 = vsel %vm73, %v670, 0
  %699 = vmatprep.subr.bf16.mxu0 0
  %700 = vmatpush1.bf16.msra.mxu0 %v674
  %701 = vmatprep.subr.bf16.mxu0 0
  %702 = vmatpush1.bf16.msra.mxu0 0
  %703 = vmatprep.subr.bf16.mxu0 0
  %704 = vmatpush1.bf16.msra.mxu0 0
  %705 = vmatprep.subr.bf16.mxu0 0
  %706 = vmatpush1.bf16.msra.mxu0 0
  %707 = vmatprep.subr.bf16.mxu0 0
  %708 = vmatpush1.bf16.msra.mxu0 0
  %709 = vmatprep.subr.bf16.mxu0 0
  %710 = vmatpush1.bf16.msra.mxu0 0
  %711 = vmatprep.subr.bf16.mxu0 0
  %712 = vmatpush1.bf16.msra.mxu0 0
  %713 = vmatprep.subr.bf16.mxu0 0
  %714 = vmatpush1.bf16.msra.mxu0 0
  %715 = vmatprep.subr.bf16.mxu0 0
  %716 = vmatpush1.bf16.msra.mxu0 0
  %717 = vmatprep.subr.bf16.mxu0 0
  %718 = vmatpush1.bf16.msra.mxu0 0
  %719 = vmatprep.subr.bf16.mxu0 0
  %720 = vmatpush1.bf16.msra.mxu0 0
  %721 = vmatprep.subr.bf16.mxu0 0
  %722 = vmatpush1.bf16.msra.mxu0 0
  %723 = vmatprep.subr.bf16.mxu0 0
  %724 = vmatpush1.bf16.msra.mxu0 0
  %725 = vmatprep.subr.bf16.mxu0 0
  %726 = vmatpush1.bf16.msra.mxu0 0
  %727 = vmatprep.subr.bf16.mxu0 0
  %728 = vmatpush1.bf16.msra.mxu0 0
  %729 = vmatprep.subr.bf16.mxu0 0
  %730 = vmatpush1.bf16.msra.mxu0 0
  %731 = vmatprep.mubr.bf16.mxu0 0
  %732 = vmatmul.mubr.bf16.gmra.mrb[0].mxu0 %v676
  %v733 = vpop.f32.mrb[0].mxu0
  %v734 = vadd.f32 0.0, %v733
  %v735 = vpop.f32.mrb[0].mxu0
  %v736 = vpop.f32.mrb[0].mxu0
  %v737 = vadd.f32 0.0, %v736
  %v738 = vpop.f32.mrb[0].mxu0
  %739 = vmatprep.mubr.bf16.mxu0 0
  %740 = vmatmul.mubr.bf16.gmra.mrb[0].mxu0 %v679
  %v741 = vpop.f32.mrb[0].mxu0
  %v742 = vadd.f32 0.0, %v741
  %v743 = vpop.f32.mrb[0].mxu0
  %v744 = vpop.f32.mrb[0].mxu0
  %v745 = vadd.f32 0.0, %v744
  %v746 = vpop.f32.mrb[0].mxu0
  %747 = vmatprep.mubr.bf16.mxu0 0
  %748 = vmatmul.mubr.bf16.gmra.mrb[0].mxu0 %v682
  %v749 = vpop.f32.mrb[0].mxu0
  %v750 = vadd.f32 0.0, %v749
  %v751 = vpop.f32.mrb[0].mxu0
  %v752 = vpop.f32.mrb[0].mxu0
  %v753 = vadd.f32 0.0, %v752
  %v754 = vpop.f32.mrb[0].mxu0
  %755 = vmatprep.mubr.bf16.mxu0 0
  %756 = vmatmul.mubr.bf16.gmra.mrb[0].mxu0 %v685
  %v757 = vpop.f32.mrb[0].mxu0
  %v758 = vadd.f32 0.0, %v757
  %v759 = vpop.f32.mrb[0].mxu0
  %v760 = vpop.f32.mrb[0].mxu0
  %v761 = vadd.f32 0.0, %v760
  %v762 = vpop.f32.mrb[0].mxu0
  %763 = vmatprep.mubr.bf16.mxu0 0
  %764 = vmatmul.mubr.bf16.gmra.mrb[0].mxu0 %v688
  %v765 = vpop.f32.mrb[0].mxu0
  %v766 = vadd.f32 0.0, %v765
  %v767 = vpop.f32.mrb[0].mxu0
  %v768 = vpop.f32.mrb[0].mxu0
  %v769 = vadd.f32 0.0, %v768
  %v770 = vpop.f32.mrb[0].mxu0
  %771 = vmatprep.mubr.bf16.mxu0 0
  %772 = vmatmul.mubr.bf16.gmra.mrb[0].mxu0 %v691
  %v773 = vpop.f32.mrb[0].mxu0
  %v774 = vadd.f32 0.0, %v773
  %v775 = vpop.f32.mrb[0].mxu0
  %v776 = vpop.f32.mrb[0].mxu0
  %v777 = vadd.f32 0.0, %v776
  %v778 = vpop.f32.mrb[0].mxu0
  %779 = vmatprep.mubr.bf16.mxu0 0
  %780 = vmatmul.mubr.bf16.gmra.mrb[0].mxu0 %v694
  %v781 = vpop.f32.mrb[0].mxu0
  %v782 = vadd.f32 0.0, %v781
  %v783 = vpop.f32.mrb[0].mxu0
  %v784 = vpop.f32.mrb[0].mxu0
  %v785 = vadd.f32 0.0, %v784
  %v786 = vpop.f32.mrb[0].mxu0
  %787 = vmatprep.mubr.bf16.mxu0 0
  %788 = vmatmul.mubr.bf16.gmra.mrb[0].mxu0 %v697
  %v789 = vpop.f32.mrb[0].mxu0
  %v790 = vadd.f32 0.0, %v789
  %v791 = vpop.f32.mrb[0].mxu0
  %v792 = vpop.f32.mrb[0].mxu0
  %v793 = vadd.f32 0.0, %v792
  %v794 = vpop.f32.mrb[0].mxu0
  %795 = vdwg.mxu0
  %v796 = vadd.f32 %v630, %v734
  %v797 = vadd.f32 %v631, %v737
  %v798 = vadd.f32 %v632, %v742
  %v799 = vadd.f32 %v633, %v745
  %v800 = vadd.f32 %v634, %v750
  %v801 = vadd.f32 %v635, %v753
  %v802 = vadd.f32 %v636, %v758
  %v803 = vadd.f32 %v637, %v761
  %v804 = vadd.f32 %v638, %v766
  %v805 = vadd.f32 %v639, %v769
  %v806 = vadd.f32 %v640, %v774
  %v807 = vadd.f32 %v641, %v777
  %v808 = vadd.f32 %v642, %v782
  %v809 = vadd.f32 %v643, %v785
  %v810 = vadd.f32 %v644, %v790
  %v811 = vadd.f32 %v645, %v793
  %v812 = vld [vmem:[%s646 + $0x1] sm:$0xff]
  %v813 = vld [vmem:[%s646 + $0x11] sm:$0xff]
  %v814 = vld [vmem:[%s646 + $0x21] sm:$0xff]
  %v815 = vld [vmem:[%s646 + $0x31] sm:$0xff]
  %v816 = vld [vmem:[%s646 + $0x41] sm:$0xff]
  %v817 = vld [vmem:[%s646 + $0x51] sm:$0xff]
  %v818 = vld [vmem:[%s646 + $0x61] sm:$0xff]
  %v819 = vld [vmem:[%s646 + $0x71] sm:$0xff]
  %v820 = vld [vmem:[%s646 + $0xb1] sm:$0xff]
  %v821 = vld [vmem:[%s646 + $0xc1] sm:$0xff]
  %v822 = vld [vmem:[%s646 + $0xd1] sm:$0xff]
  %v823 = vld [vmem:[%s646 + $0xe1] sm:$0xff]
  %v824 = vld [vmem:[%s646 + $0xf1] sm:$0xff]
  %v825 = vld [vmem:[%s646 + $0x101] sm:$0xff]
  %v826 = vld [vmem:[%s646 + $0x111] sm:$0xff]
  %v827 = vld [vmem:[%s646 + $0x121] sm:$0xff]
  %v828 = vpack.c.bf16 %v813, %v812
  %v829 = vpack.c.bf16 %v815, %v814
  %v830 = vpack.c.bf16 %v817, %v816
  %v831 = vpack.c.bf16 %v819, %v818
  %v832 = vpack.c.bf16 %v821, %v820
  %v833 = vpack.c.bf16 %v823, %v822
  %v834 = vpack.c.bf16 %v825, %v824
  %v835 = vpack.c.bf16 %v827, %v826
  %s836 = scalar_lea.vmem %s1, 80
  %v837 = vld [vmem:[%s836] sm:$0xff]
  %v838 = vld [vmem:[%s836 + $0x8] sm:$0xff]
  %v839 = vpack.c.bf16 %v838, %v837
  %v841 = vsel %vm73, %v828, 0
  %v844 = vsel %vm73, %v829, 0
  %v847 = vsel %vm73, %v830, 0
  %v850 = vsel %vm73, %v831, 0
  %v853 = vsel %vm73, %v832, 0
  %v856 = vsel %vm73, %v833, 0
  %v859 = vsel %vm73, %v834, 0
  %v862 = vsel %vm73, %v835, 0
  %864 = vmatprep.subr.bf16.mxu0 0
  %865 = vmatpush1.bf16.msra.mxu0 %v839
  %866 = vmatprep.subr.bf16.mxu0 0
  %867 = vmatpush1.bf16.msra.mxu0 0
  %868 = vmatprep.subr.bf16.mxu0 0
  %869 = vmatpush1.bf16.msra.mxu0 0
  %870 = vmatprep.subr.bf16.mxu0 0
  %871 = vmatpush1.bf16.msra.mxu0 0
  %872 = vmatprep.subr.bf16.mxu0 0
  %873 = vmatpush1.bf16.msra.mxu0 0
  %874 = vmatprep.subr.bf16.mxu0 0
  %875 = vmatpush1.bf16.msra.mxu0 0
  %876 = vmatprep.subr.bf16.mxu0 0
  %877 = vmatpush1.bf16.msra.mxu0 0
  %878 = vmatprep.subr.bf16.mxu0 0
  %879 = vmatpush1.bf16.msra.mxu0 0
  %880 = vmatprep.subr.bf16.mxu0 0
  %881 = vmatpush1.bf16.msra.mxu0 0
  %882 = vmatprep.subr.bf16.mxu0 0
  %883 = vmatpush1.bf16.msra.mxu0 0
  %884 = vmatprep.subr.bf16.mxu0 0
  %885 = vmatpush1.bf16.msra.mxu0 0
  %886 = vmatprep.subr.bf16.mxu0 0
  %887 = vmatpush1.bf16.msra.mxu0 0
  %888 = vmatprep.subr.bf16.mxu0 0
  %889 = vmatpush1.bf16.msra.mxu0 0
  %890 = vmatprep.subr.bf16.mxu0 0
  %891 = vmatpush1.bf16.msra.mxu0 0
  %892 = vmatprep.subr.bf16.mxu0 0
  %893 = vmatpush1.bf16.msra.mxu0 0
  %894 = vmatprep.subr.bf16.mxu0 0
  %895 = vmatpush1.bf16.msra.mxu0 0
  %896 = vmatprep.mubr.bf16.mxu0 0
  %897 = vmatmul.mubr.bf16.gmra.mrb[0].mxu0 %v841
  %v898 = vpop.f32.mrb[0].mxu0
  %v899 = vadd.f32 0.0, %v898
  %v900 = vpop.f32.mrb[0].mxu0
  %v901 = vpop.f32.mrb[0].mxu0
  %v902 = vadd.f32 0.0, %v901
  %v903 = vpop.f32.mrb[0].mxu0
  %904 = vmatprep.mubr.bf16.mxu0 0
  %905 = vmatmul.mubr.bf16.gmra.mrb[0].mxu0 %v844
  %v906 = vpop.f32.mrb[0].mxu0
  %v907 = vadd.f32 0.0, %v906
  %v908 = vpop.f32.mrb[0].mxu0
  %v909 = vpop.f32.mrb[0].mxu0
  %v910 = vadd.f32 0.0, %v909
  %v911 = vpop.f32.mrb[0].mxu0
  %912 = vmatprep.mubr.bf16.mxu0 0
  %913 = vmatmul.mubr.bf16.gmra.mrb[0].mxu0 %v847
  %v914 = vpop.f32.mrb[0].mxu0
  %v915 = vadd.f32 0.0, %v914
  %v916 = vpop.f32.mrb[0].mxu0
  %v917 = vpop.f32.mrb[0].mxu0
  %v918 = vadd.f32 0.0, %v917
  %v919 = vpop.f32.mrb[0].mxu0
  %920 = vmatprep.mubr.bf16.mxu0 0
  %921 = vmatmul.mubr.bf16.gmra.mrb[0].mxu0 %v850
  %v922 = vpop.f32.mrb[0].mxu0
  %v923 = vadd.f32 0.0, %v922
  %v924 = vpop.f32.mrb[0].mxu0
  %v925 = vpop.f32.mrb[0].mxu0
  %v926 = vadd.f32 0.0, %v925
  %v927 = vpop.f32.mrb[0].mxu0
  %928 = vmatprep.mubr.bf16.mxu0 0
  %929 = vmatmul.mubr.bf16.gmra.mrb[0].mxu0 %v853
  %v930 = vpop.f32.mrb[0].mxu0
  %v931 = vadd.f32 0.0, %v930
  %v932 = vpop.f32.mrb[0].mxu0
  %v933 = vpop.f32.mrb[0].mxu0
  %v934 = vadd.f32 0.0, %v933
  %v935 = vpop.f32.mrb[0].mxu0
  %936 = vmatprep.mubr.bf16.mxu0 0
  %937 = vmatmul.mubr.bf16.gmra.mrb[0].mxu0 %v856
  %v938 = vpop.f32.mrb[0].mxu0
  %v939 = vadd.f32 0.0, %v938
  %v940 = vpop.f32.mrb[0].mxu0
  %v941 = vpop.f32.mrb[0].mxu0
  %v942 = vadd.f32 0.0, %v941
  %v943 = vpop.f32.mrb[0].mxu0
  %944 = vmatprep.mubr.bf16.mxu0 0
  %945 = vmatmul.mubr.bf16.gmra.mrb[0].mxu0 %v859
  %v946 = vpop.f32.mrb[0].mxu0
  %v947 = vadd.f32 0.0, %v946
  %v948 = vpop.f32.mrb[0].mxu0
  %v949 = vpop.f32.mrb[0].mxu0
  %v950 = vadd.f32 0.0, %v949
  %v951 = vpop.f32.mrb[0].mxu0
  %952 = vmatprep.mubr.bf16.mxu0 0
  %953 = vmatmul.mubr.bf16.gmra.mrb[0].mxu0 %v862
  %v954 = vpop.f32.mrb[0].mxu0
  %v955 = vadd.f32 0.0, %v954
  %v956 = vpop.f32.mrb[0].mxu0
  %v957 = vpop.f32.mrb[0].mxu0
  %v958 = vadd.f32 0.0, %v957
  %v959 = vpop.f32.mrb[0].mxu0
  %960 = vdwg.mxu0
  %v961 = vadd.f32 %v796, %v899
  %v962 = vadd.f32 %v797, %v902
  %v963 = vadd.f32 %v798, %v907
  %v964 = vadd.f32 %v799, %v910
  %v965 = vadd.f32 %v800, %v915
  %v966 = vadd.f32 %v801, %v918
  %v967 = vadd.f32 %v802, %v923
  %v968 = vadd.f32 %v803, %v926
  %v969 = vadd.f32 %v804, %v931
  %v970 = vadd.f32 %v805, %v934
  %v971 = vadd.f32 %v806, %v939
  %v972 = vadd.f32 %v807, %v942
  %v973 = vadd.f32 %v808, %v947
  %v974 = vadd.f32 %v809, %v950
  %v975 = vadd.f32 %v810, %v955
  %v976 = vadd.f32 %v811, %v958
  %v977 = vld [vmem:[%s646 + $0x2] sm:$0xff]
  %v978 = vld [vmem:[%s646 + $0x12] sm:$0xff]
  %v979 = vld [vmem:[%s646 + $0x22] sm:$0xff]
  %v980 = vld [vmem:[%s646 + $0x32] sm:$0xff]
  %v981 = vld [vmem:[%s646 + $0x42] sm:$0xff]
  %v982 = vld [vmem:[%s646 + $0x52] sm:$0xff]
  %v983 = vld [vmem:[%s646 + $0x62] sm:$0xff]
  %v984 = vld [vmem:[%s646 + $0x72] sm:$0xff]
  %v985 = vld [vmem:[%s646 + $0xb2] sm:$0xff]
  %v986 = vld [vmem:[%s646 + $0xc2] sm:$0xff]
  %v987 = vld [vmem:[%s646 + $0xd2] sm:$0xff]
  %v988 = vld [vmem:[%s646 + $0xe2] sm:$0xff]
  %v989 = vld [vmem:[%s646 + $0xf2] sm:$0xff]
  %v990 = vld [vmem:[%s646 + $0x102] sm:$0xff]
  %v991 = vld [vmem:[%s646 + $0x112] sm:$0xff]
  %v992 = vld [vmem:[%s646 + $0x122] sm:$0xff]
  %v993 = vpack.c.bf16 %v978, %v977
  %v994 = vpack.c.bf16 %v980, %v979
  %v995 = vpack.c.bf16 %v982, %v981
  %v996 = vpack.c.bf16 %v984, %v983
  %v997 = vpack.c.bf16 %v986, %v985
  %v998 = vpack.c.bf16 %v988, %v987
  %v999 = vpack.c.bf16 %v990, %v989
  %v1000 = vpack.c.bf16 %v992, %v991
  %s1001 = scalar_lea.vmem %s1, 96
  %v1002 = vld [vmem:[%s1001] sm:$0xff]
  %v1003 = vld [vmem:[%s1001 + $0x8] sm:$0xff]
  %v1004 = vpack.c.bf16 %v1003, %v1002
  %v1006 = vsel %vm73, %v993, 0
  %v1009 = vsel %vm73, %v994, 0
  %v1012 = vsel %vm73, %v995, 0
  %v1015 = vsel %vm73, %v996, 0
  %v1018 = vsel %vm73, %v997, 0
  %v1021 = vsel %vm73, %v998, 0
  %v1024 = vsel %vm73, %v999, 0
  %v1027 = vsel %vm73, %v1000, 0
  %1029 = vmatprep.subr.bf16.mxu0 0
  %1030 = vmatpush1.bf16.msra.mxu0 %v1004
  %1031 = vmatprep.subr.bf16.mxu0 0
  %1032 = vmatpush1.bf16.msra.mxu0 0
  %1033 = vmatprep.subr.bf16.mxu0 0
  %1034 = vmatpush1.bf16.msra.mxu0 0
  %1035 = vmatprep.subr.bf16.mxu0 0
  %1036 = vmatpush1.bf16.msra.mxu0 0
  %1037 = vmatprep.subr.bf16.mxu0 0
  %1038 = vmatpush1.bf16.msra.mxu0 0
  %1039 = vmatprep.subr.bf16.mxu0 0
  %1040 = vmatpush1.bf16.msra.mxu0 0
  %1041 = vmatprep.subr.bf16.mxu0 0
  %1042 = vmatpush1.bf16.msra.mxu0 0
  %1043 = vmatprep.subr.bf16.mxu0 0
  %1044 = vmatpush1.bf16.msra.mxu0 0
  %1045 = vmatprep.subr.bf16.mxu0 0
  %1046 = vmatpush1.bf16.msra.mxu0 0
  %1047 = vmatprep.subr.bf16.mxu0 0
  %1048 = vmatpush1.bf16.msra.mxu0 0
  %1049 = vmatprep.subr.bf16.mxu0 0
  %1050 = vmatpush1.bf16.msra.mxu0 0
  %1051 = vmatprep.subr.bf16.mxu0 0
  %1052 = vmatpush1.bf16.msra.mxu0 0
  %1053 = vmatprep.subr.bf16.mxu0 0
  %1054 = vmatpush1.bf16.msra.mxu0 0
  %1055 = vmatprep.subr.bf16.mxu0 0
  %1056 = vmatpush1.bf16.msra.mxu0 0
  %1057 = vmatprep.subr.bf16.mxu0 0
  %1058 = vmatpush1.bf16.msra.mxu0 0
  %1059 = vmatprep.subr.bf16.mxu0 0
  %1060 = vmatpush1.bf16.msra.mxu0 0
  %1061 = vmatprep.mubr.bf16.mxu0 0
  %1062 = vmatmul.mubr.bf16.gmra.mrb[0].mxu0 %v1006
  %v1063 = vpop.f32.mrb[0].mxu0
  %v1064 = vadd.f32 0.0, %v1063
  %v1065 = vpop.f32.mrb[0].mxu0
  %v1066 = vpop.f32.mrb[0].mxu0
  %v1067 = vadd.f32 0.0, %v1066
  %v1068 = vpop.f32.mrb[0].mxu0
  %1069 = vmatprep.mubr.bf16.mxu0 0
  %1070 = vmatmul.mubr.bf16.gmra.mrb[0].mxu0 %v1009
  %v1071 = vpop.f32.mrb[0].mxu0
  %v1072 = vadd.f32 0.0, %v1071
  %v1073 = vpop.f32.mrb[0].mxu0
  %v1074 = vpop.f32.mrb[0].mxu0
  %v1075 = vadd.f32 0.0, %v1074
  %v1076 = vpop.f32.mrb[0].mxu0
  %1077 = vmatprep.mubr.bf16.mxu0 0
  %1078 = vmatmul.mubr.bf16.gmra.mrb[0].mxu0 %v1012
  %v1079 = vpop.f32.mrb[0].mxu0
  %v1080 = vadd.f32 0.0, %v1079
  %v1081 = vpop.f32.mrb[0].mxu0
  %v1082 = vpop.f32.mrb[0].mxu0
  %v1083 = vadd.f32 0.0, %v1082
  %v1084 = vpop.f32.mrb[0].mxu0
  %1085 = vmatprep.mubr.bf16.mxu0 0
  %1086 = vmatmul.mubr.bf16.gmra.mrb[0].mxu0 %v1015
  %v1087 = vpop.f32.mrb[0].mxu0
  %v1088 = vadd.f32 0.0, %v1087
  %v1089 = vpop.f32.mrb[0].mxu0
  %v1090 = vpop.f32.mrb[0].mxu0
  %v1091 = vadd.f32 0.0, %v1090
  %v1092 = vpop.f32.mrb[0].mxu0
  %1093 = vmatprep.mubr.bf16.mxu0 0
  %1094 = vmatmul.mubr.bf16.gmra.mrb[0].mxu0 %v1018
  %v1095 = vpop.f32.mrb[0].mxu0
  %v1096 = vadd.f32 0.0, %v1095
  %v1097 = vpop.f32.mrb[0].mxu0
  %v1098 = vpop.f32.mrb[0].mxu0
  %v1099 = vadd.f32 0.0, %v1098
  %v1100 = vpop.f32.mrb[0].mxu0
  %1101 = vmatprep.mubr.bf16.mxu0 0
  %1102 = vmatmul.mubr.bf16.gmra.mrb[0].mxu0 %v1021
  %v1103 = vpop.f32.mrb[0].mxu0
  %v1104 = vadd.f32 0.0, %v1103
  %v1105 = vpop.f32.mrb[0].mxu0
  %v1106 = vpop.f32.mrb[0].mxu0
  %v1107 = vadd.f32 0.0, %v1106
  %v1108 = vpop.f32.mrb[0].mxu0
  %1109 = vmatprep.mubr.bf16.mxu0 0
  %1110 = vmatmul.mubr.bf16.gmra.mrb[0].mxu0 %v1024
  %v1111 = vpop.f32.mrb[0].mxu0
  %v1112 = vadd.f32 0.0, %v1111
  %v1113 = vpop.f32.mrb[0].mxu0
  %v1114 = vpop.f32.mrb[0].mxu0
  %v1115 = vadd.f32 0.0, %v1114
  %v1116 = vpop.f32.mrb[0].mxu0
  %1117 = vmatprep.mubr.bf16.mxu0 0
  %1118 = vmatmul.mubr.bf16.gmra.mrb[0].mxu0 %v1027
  %v1119 = vpop.f32.mrb[0].mxu0
  %v1120 = vadd.f32 0.0, %v1119
  %v1121 = vpop.f32.mrb[0].mxu0
  %v1122 = vpop.f32.mrb[0].mxu0
  %v1123 = vadd.f32 0.0, %v1122
  %v1124 = vpop.f32.mrb[0].mxu0
  %1125 = vdwg.mxu0
  %v1126 = vadd.f32 %v961, %v1064
  %v1127 = vadd.f32 %v962, %v1067
  %v1128 = vadd.f32 %v963, %v1072
  %v1129 = vadd.f32 %v964, %v1075
  %v1130 = vadd.f32 %v965, %v1080
  %v1131 = vadd.f32 %v966, %v1083
  %v1132 = vadd.f32 %v967, %v1088
  %v1133 = vadd.f32 %v968, %v1091
  %v1134 = vadd.f32 %v969, %v1096
  %v1135 = vadd.f32 %v970, %v1099
  %v1136 = vadd.f32 %v971, %v1104
  %v1137 = vadd.f32 %v972, %v1107
  %v1138 = vadd.f32 %v973, %v1112
  %v1139 = vadd.f32 %v974, %v1115
  %v1140 = vadd.f32 %v975, %v1120
  %v1141 = vadd.f32 %v976, %v1123
  %v1142 = vld [vmem:[%s646 + $0x3] sm:$0xff]
  %v1143 = vld [vmem:[%s646 + $0x13] sm:$0xff]
  %v1144 = vld [vmem:[%s646 + $0x23] sm:$0xff]
  %v1145 = vld [vmem:[%s646 + $0x33] sm:$0xff]
  %v1146 = vld [vmem:[%s646 + $0x43] sm:$0xff]
  %v1147 = vld [vmem:[%s646 + $0x53] sm:$0xff]
  %v1148 = vld [vmem:[%s646 + $0x63] sm:$0xff]
  %v1149 = vld [vmem:[%s646 + $0x73] sm:$0xff]
  %v1150 = vld [vmem:[%s646 + $0xb3] sm:$0xff]
  %v1151 = vld [vmem:[%s646 + $0xc3] sm:$0xff]
  %v1152 = vld [vmem:[%s646 + $0xd3] sm:$0xff]
  %v1153 = vld [vmem:[%s646 + $0xe3] sm:$0xff]
  %v1154 = vld [vmem:[%s646 + $0xf3] sm:$0xff]
  %v1155 = vld [vmem:[%s646 + $0x103] sm:$0xff]
  %v1156 = vld [vmem:[%s646 + $0x113] sm:$0xff]
  %v1157 = vld [vmem:[%s646 + $0x123] sm:$0xff]
  %v1158 = vpack.c.bf16 %v1143, %v1142
  %v1159 = vpack.c.bf16 %v1145, %v1144
  %v1160 = vpack.c.bf16 %v1147, %v1146
  %v1161 = vpack.c.bf16 %v1149, %v1148
  %v1162 = vpack.c.bf16 %v1151, %v1150
  %v1163 = vpack.c.bf16 %v1153, %v1152
  %v1164 = vpack.c.bf16 %v1155, %v1154
  %v1165 = vpack.c.bf16 %v1157, %v1156
  %s1166 = scalar_lea.vmem %s1, 112
  %v1167 = vld [vmem:[%s1166] sm:$0xff]
  %v1168 = vld [vmem:[%s1166 + $0x8] sm:$0xff]
  %v1169 = vpack.c.bf16 %v1168, %v1167
  %v1171 = vsel %vm73, %v1158, 0
  %v1174 = vsel %vm73, %v1159, 0
  %v1177 = vsel %vm73, %v1160, 0
  %v1180 = vsel %vm73, %v1161, 0
  %v1183 = vsel %vm73, %v1162, 0
  %v1186 = vsel %vm73, %v1163, 0
  %v1189 = vsel %vm73, %v1164, 0
  %v1192 = vsel %vm73, %v1165, 0
  %1194 = vmatprep.subr.bf16.mxu0 0
  %1195 = vmatpush1.bf16.msra.mxu0 %v1169
  %1196 = vmatprep.subr.bf16.mxu0 0
  %1197 = vmatpush1.bf16.msra.mxu0 0
  %1198 = vmatprep.subr.bf16.mxu0 0
  %1199 = vmatpush1.bf16.msra.mxu0 0
  %1200 = vmatprep.subr.bf16.mxu0 0
  %1201 = vmatpush1.bf16.msra.mxu0 0
  %1202 = vmatprep.subr.bf16.mxu0 0
  %1203 = vmatpush1.bf16.msra.mxu0 0
  %1204 = vmatprep.subr.bf16.mxu0 0
  %1205 = vmatpush1.bf16.msra.mxu0 0
  %1206 = vmatprep.subr.bf16.mxu0 0
  %1207 = vmatpush1.bf16.msra.mxu0 0
  %1208 = vmatprep.subr.bf16.mxu0 0
  %1209 = vmatpush1.bf16.msra.mxu0 0
  %1210 = vmatprep.subr.bf16.mxu0 0
  %1211 = vmatpush1.bf16.msra.mxu0 0
  %1212 = vmatprep.subr.bf16.mxu0 0
  %1213 = vmatpush1.bf16.msra.mxu0 0
  %1214 = vmatprep.subr.bf16.mxu0 0
  %1215 = vmatpush1.bf16.msra.mxu0 0
  %1216 = vmatprep.subr.bf16.mxu0 0
  %1217 = vmatpush1.bf16.msra.mxu0 0
  %1218 = vmatprep.subr.bf16.mxu0 0
  %1219 = vmatpush1.bf16.msra.mxu0 0
  %1220 = vmatprep.subr.bf16.mxu0 0
  %1221 = vmatpush1.bf16.msra.mxu0 0
  %1222 = vmatprep.subr.bf16.mxu0 0
  %1223 = vmatpush1.bf16.msra.mxu0 0
  %1224 = vmatprep.subr.bf16.mxu0 0
  %1225 = vmatpush1.bf16.msra.mxu0 0
  %1226 = vmatprep.mubr.bf16.mxu0 0
  %1227 = vmatmul.mubr.bf16.gmra.mrb[0].mxu0 %v1171
  %v1228 = vpop.f32.mrb[0].mxu0
  %v1229 = vadd.f32 0.0, %v1228
  %v1230 = vpop.f32.mrb[0].mxu0
  %v1231 = vpop.f32.mrb[0].mxu0
  %v1232 = vadd.f32 0.0, %v1231
  %v1233 = vpop.f32.mrb[0].mxu0
  %1234 = vmatprep.mubr.bf16.mxu0 0
  %1235 = vmatmul.mubr.bf16.gmra.mrb[0].mxu0 %v1174
  %v1236 = vpop.f32.mrb[0].mxu0
  %v1237 = vadd.f32 0.0, %v1236
  %v1238 = vpop.f32.mrb[0].mxu0
  %v1239 = vpop.f32.mrb[0].mxu0
  %v1240 = vadd.f32 0.0, %v1239
  %v1241 = vpop.f32.mrb[0].mxu0
  %1242 = vmatprep.mubr.bf16.mxu0 0
  %1243 = vmatmul.mubr.bf16.gmra.mrb[0].mxu0 %v1177
  %v1244 = vpop.f32.mrb[0].mxu0
  %v1245 = vadd.f32 0.0, %v1244
  %v1246 = vpop.f32.mrb[0].mxu0
  %v1247 = vpop.f32.mrb[0].mxu0
  %v1248 = vadd.f32 0.0, %v1247
  %v1249 = vpop.f32.mrb[0].mxu0
  %1250 = vmatprep.mubr.bf16.mxu0 0
  %1251 = vmatmul.mubr.bf16.gmra.mrb[0].mxu0 %v1180
  %v1252 = vpop.f32.mrb[0].mxu0
  %v1253 = vadd.f32 0.0, %v1252
  %v1254 = vpop.f32.mrb[0].mxu0
  %v1255 = vpop.f32.mrb[0].mxu0
  %v1256 = vadd.f32 0.0, %v1255
  %v1257 = vpop.f32.mrb[0].mxu0
  %1258 = vmatprep.mubr.bf16.mxu0 0
  %1259 = vmatmul.mubr.bf16.gmra.mrb[0].mxu0 %v1183
  %v1260 = vpop.f32.mrb[0].mxu0
  %v1261 = vadd.f32 0.0, %v1260
  %v1262 = vpop.f32.mrb[0].mxu0
  %v1263 = vpop.f32.mrb[0].mxu0
  %v1264 = vadd.f32 0.0, %v1263
  %v1265 = vpop.f32.mrb[0].mxu0
  %1266 = vmatprep.mubr.bf16.mxu0 0
  %1267 = vmatmul.mubr.bf16.gmra.mrb[0].mxu0 %v1186
  %v1268 = vpop.f32.mrb[0].mxu0
  %v1269 = vadd.f32 0.0, %v1268
  %v1270 = vpop.f32.mrb[0].mxu0
  %v1271 = vpop.f32.mrb[0].mxu0
  %v1272 = vadd.f32 0.0, %v1271
  %v1273 = vpop.f32.mrb[0].mxu0
  %1274 = vmatprep.mubr.bf16.mxu0 0
  %1275 = vmatmul.mubr.bf16.gmra.mrb[0].mxu0 %v1189
  %v1276 = vpop.f32.mrb[0].mxu0
  %v1277 = vadd.f32 0.0, %v1276
  %v1278 = vpop.f32.mrb[0].mxu0
  %v1279 = vpop.f32.mrb[0].mxu0
  %v1280 = vadd.f32 0.0, %v1279
  %v1281 = vpop.f32.mrb[0].mxu0
  %1282 = vmatprep.mubr.bf16.mxu0 0
  %1283 = vmatmul.mubr.bf16.gmra.mrb[0].mxu0 %v1192
  %v1284 = vpop.f32.mrb[0].mxu0
  %v1285 = vadd.f32 0.0, %v1284
  %v1286 = vpop.f32.mrb[0].mxu0
  %v1287 = vpop.f32.mrb[0].mxu0
  %v1288 = vadd.f32 0.0, %v1287
  %v1289 = vpop.f32.mrb[0].mxu0
  %1290 = vdwg.mxu0
  %v1291 = vadd.f32 %v1126, %v1229
  %v1292 = vadd.f32 %v1127, %v1232
  %v1293 = vadd.f32 %v1128, %v1237
  %v1294 = vadd.f32 %v1129, %v1240
  %v1295 = vadd.f32 %v1130, %v1245
  %v1296 = vadd.f32 %v1131, %v1248
  %v1297 = vadd.f32 %v1132, %v1253
  %v1298 = vadd.f32 %v1133, %v1256
  %v1299 = vadd.f32 %v1134, %v1261
  %v1300 = vadd.f32 %v1135, %v1264
  %v1301 = vadd.f32 %v1136, %v1269
  %v1302 = vadd.f32 %v1137, %v1272
  %v1303 = vadd.f32 %v1138, %v1277
  %v1304 = vadd.f32 %v1139, %v1280
  %v1305 = vadd.f32 %v1140, %v1285
  %v1306 = vadd.f32 %v1141, %v1288
  %s1307 = scalar_lea.vmem %s0, 32
  %v1308 = vld [vmem:[%s1307] sm:$0xff]
  %v1309 = vld [vmem:[%s1307 + $0x10] sm:$0xff]
  %v1310 = vld [vmem:[%s1307 + $0x20] sm:$0xff]
  %v1311 = vld [vmem:[%s1307 + $0x30] sm:$0xff]
  %v1312 = vld [vmem:[%s1307 + $0x40] sm:$0xff]
  %v1313 = vld [vmem:[%s1307 + $0x50] sm:$0xff]
  %v1314 = vld [vmem:[%s1307 + $0x60] sm:$0xff]
  %v1315 = vld [vmem:[%s1307 + $0x70] sm:$0xff]
  %v1316 = vld [vmem:[%s1307 + $0xb0] sm:$0xff]
  %v1317 = vld [vmem:[%s1307 + $0xc0] sm:$0xff]
  %v1318 = vld [vmem:[%s1307 + $0xd0] sm:$0xff]
  %v1319 = vld [vmem:[%s1307 + $0xe0] sm:$0xff]
  %v1320 = vld [vmem:[%s1307 + $0xf0] sm:$0xff]
  %v1321 = vld [vmem:[%s1307 + $0x100] sm:$0xff]
  %v1322 = vld [vmem:[%s1307 + $0x110] sm:$0xff]
  %v1323 = vld [vmem:[%s1307 + $0x120] sm:$0xff]
  %v1324 = vpack.c.bf16 %v1309, %v1308
  %v1325 = vpack.c.bf16 %v1311, %v1310
  %v1326 = vpack.c.bf16 %v1313, %v1312
  %v1327 = vpack.c.bf16 %v1315, %v1314
  %v1328 = vpack.c.bf16 %v1317, %v1316
  %v1329 = vpack.c.bf16 %v1319, %v1318
  %v1330 = vpack.c.bf16 %v1321, %v1320
  %v1331 = vpack.c.bf16 %v1323, %v1322
  %s1332 = scalar_lea.vmem %s1, 128
  %v1333 = vld [vmem:[%s1332] sm:$0xff]
  %v1334 = vld [vmem:[%s1332 + $0x8] sm:$0xff]
  %v1335 = vpack.c.bf16 %v1334, %v1333
  %v1337 = vsel %vm73, %v1324, 0
  %v1340 = vsel %vm73, %v1325, 0
  %v1343 = vsel %vm73, %v1326, 0
  %v1346 = vsel %vm73, %v1327, 0
  %v1349 = vsel %vm73, %v1328, 0
  %v1352 = vsel %vm73, %v1329, 0
  %v1355 = vsel %vm73, %v1330, 0
  %v1358 = vsel %vm73, %v1331, 0
  %1360 = vmatprep.subr.bf16.mxu0 0
  %1361 = vmatpush1.bf16.msra.mxu0 %v1335
  %1362 = vmatprep.subr.bf16.mxu0 0
  %1363 = vmatpush1.bf16.msra.mxu0 0
  %1364 = vmatprep.subr.bf16.mxu0 0
  %1365 = vmatpush1.bf16.msra.mxu0 0
  %1366 = vmatprep.subr.bf16.mxu0 0
  %1367 = vmatpush1.bf16.msra.mxu0 0
  %1368 = vmatprep.subr.bf16.mxu0 0
  %1369 = vmatpush1.bf16.msra.mxu0 0
  %1370 = vmatprep.subr.bf16.mxu0 0
  %1371 = vmatpush1.bf16.msra.mxu0 0
  %1372 = vmatprep.subr.bf16.mxu0 0
  %1373 = vmatpush1.bf16.msra.mxu0 0
  %1374 = vmatprep.subr.bf16.mxu0 0
  %1375 = vmatpush1.bf16.msra.mxu0 0
  %1376 = vmatprep.subr.bf16.mxu0 0
  %1377 = vmatpush1.bf16.msra.mxu0 0
  %1378 = vmatprep.subr.bf16.mxu0 0
  %1379 = vmatpush1.bf16.msra.mxu0 0
  %1380 = vmatprep.subr.bf16.mxu0 0
  %1381 = vmatpush1.bf16.msra.mxu0 0
  %1382 = vmatprep.subr.bf16.mxu0 0
  %1383 = vmatpush1.bf16.msra.mxu0 0
  %1384 = vmatprep.subr.bf16.mxu0 0
  %1385 = vmatpush1.bf16.msra.mxu0 0
  %1386 = vmatprep.subr.bf16.mxu0 0
  %1387 = vmatpush1.bf16.msra.mxu0 0
  %1388 = vmatprep.subr.bf16.mxu0 0
  %1389 = vmatpush1.bf16.msra.mxu0 0
  %1390 = vmatprep.subr.bf16.mxu0 0
  %1391 = vmatpush1.bf16.msra.mxu0 0
  %1392 = vmatprep.mubr.bf16.mxu0 0
  %1393 = vmatmul.mubr.bf16.gmra.mrb[0].mxu0 %v1337
  %v1394 = vpop.f32.mrb[0].mxu0
  %v1395 = vadd.f32 0.0, %v1394
  %v1396 = vpop.f32.mrb[0].mxu0
  %v1397 = vpop.f32.mrb[0].mxu0
  %v1398 = vadd.f32 0.0, %v1397
  %v1399 = vpop.f32.mrb[0].mxu0
  %1400 = vmatprep.mubr.bf16.mxu0 0
  %1401 = vmatmul.mubr.bf16.gmra.mrb[0].mxu0 %v1340
  %v1402 = vpop.f32.mrb[0].mxu0
  %v1403 = vadd.f32 0.0, %v1402
  %v1404 = vpop.f32.mrb[0].mxu0
  %v1405 = vpop.f32.mrb[0].mxu0
  %v1406 = vadd.f32 0.0, %v1405
  %v1407 = vpop.f32.mrb[0].mxu0
  %1408 = vmatprep.mubr.bf16.mxu0 0
  %1409 = vmatmul.mubr.bf16.gmra.mrb[0].mxu0 %v1343
  %v1410 = vpop.f32.mrb[0].mxu0
  %v1411 = vadd.f32 0.0, %v1410
  %v1412 = vpop.f32.mrb[0].mxu0
  %v1413 = vpop.f32.mrb[0].mxu0
  %v1414 = vadd.f32 0.0, %v1413
  %v1415 = vpop.f32.mrb[0].mxu0
  %1416 = vmatprep.mubr.bf16.mxu0 0
  %1417 = vmatmul.mubr.bf16.gmra.mrb[0].mxu0 %v1346
  %v1418 = vpop.f32.mrb[0].mxu0
  %v1419 = vadd.f32 0.0, %v1418
  %v1420 = vpop.f32.mrb[0].mxu0
  %v1421 = vpop.f32.mrb[0].mxu0
  %v1422 = vadd.f32 0.0, %v1421
  %v1423 = vpop.f32.mrb[0].mxu0
  %1424 = vmatprep.mubr.bf16.mxu0 0
  %1425 = vmatmul.mubr.bf16.gmra.mrb[0].mxu0 %v1349
  %v1426 = vpop.f32.mrb[0].mxu0
  %v1427 = vadd.f32 0.0, %v1426
  %v1428 = vpop.f32.mrb[0].mxu0
  %v1429 = vpop.f32.mrb[0].mxu0
  %v1430 = vadd.f32 0.0, %v1429
  %v1431 = vpop.f32.mrb[0].mxu0
  %1432 = vmatprep.mubr.bf16.mxu0 0
  %1433 = vmatmul.mubr.bf16.gmra.mrb[0].mxu0 %v1352
  %v1434 = vpop.f32.mrb[0].mxu0
  %v1435 = vadd.f32 0.0, %v1434
  %v1436 = vpop.f32.mrb[0].mxu0
  %v1437 = vpop.f32.mrb[0].mxu0
  %v1438 = vadd.f32 0.0, %v1437
  %v1439 = vpop.f32.mrb[0].mxu0
  %1440 = vmatprep.mubr.bf16.mxu0 0
  %1441 = vmatmul.mubr.bf16.gmra.mrb[0].mxu0 %v1355
  %v1442 = vpop.f32.mrb[0].mxu0
  %v1443 = vadd.f32 0.0, %v1442
  %v1444 = vpop.f32.mrb[0].mxu0
  %v1445 = vpop.f32.mrb[0].mxu0
  %v1446 = vadd.f32 0.0, %v1445
  %v1447 = vpop.f32.mrb[0].mxu0
  %1448 = vmatprep.mubr.bf16.mxu0 0
  %1449 = vmatmul.mubr.bf16.gmra.mrb[0].mxu0 %v1358
  %v1450 = vpop.f32.mrb[0].mxu0
  %v1451 = vadd.f32 0.0, %v1450
  %v1452 = vpop.f32.mrb[0].mxu0
  %v1453 = vpop.f32.mrb[0].mxu0
  %v1454 = vadd.f32 0.0, %v1453
  %v1455 = vpop.f32.mrb[0].mxu0
  %1456 = vdwg.mxu0
  %v1457 = vadd.f32 %v1291, %v1395
  %v1458 = vadd.f32 %v1292, %v1398
  %v1459 = vadd.f32 %v1293, %v1403
  %v1460 = vadd.f32 %v1294, %v1406
  %v1461 = vadd.f32 %v1295, %v1411
  %v1462 = vadd.f32 %v1296, %v1414
  %v1463 = vadd.f32 %v1297, %v1419
  %v1464 = vadd.f32 %v1298, %v1422
  %v1465 = vadd.f32 %v1299, %v1427
  %v1466 = vadd.f32 %v1300, %v1430
  %v1467 = vadd.f32 %v1301, %v1435
  %v1468 = vadd.f32 %v1302, %v1438
  %v1469 = vadd.f32 %v1303, %v1443
  %v1470 = vadd.f32 %v1304, %v1446
  %v1471 = vadd.f32 %v1305, %v1451
  %v1472 = vadd.f32 %v1306, %v1454
  %v1473 = vld [vmem:[%s1307 + $0x1] sm:$0xff]
  %v1474 = vld [vmem:[%s1307 + $0x11] sm:$0xff]
  %v1475 = vld [vmem:[%s1307 + $0x21] sm:$0xff]
  %v1476 = vld [vmem:[%s1307 + $0x31] sm:$0xff]
  %v1477 = vld [vmem:[%s1307 + $0x41] sm:$0xff]
  %v1478 = vld [vmem:[%s1307 + $0x51] sm:$0xff]
  %v1479 = vld [vmem:[%s1307 + $0x61] sm:$0xff]
  %v1480 = vld [vmem:[%s1307 + $0x71] sm:$0xff]
  %v1481 = vld [vmem:[%s1307 + $0xb1] sm:$0xff]
  %v1482 = vld [vmem:[%s1307 + $0xc1] sm:$0xff]
  %v1483 = vld [vmem:[%s1307 + $0xd1] sm:$0xff]
  %v1484 = vld [vmem:[%s1307 + $0xe1] sm:$0xff]
  %v1485 = vld [vmem:[%s1307 + $0xf1] sm:$0xff]
  %v1486 = vld [vmem:[%s1307 + $0x101] sm:$0xff]
  %v1487 = vld [vmem:[%s1307 + $0x111] sm:$0xff]
  %v1488 = vld [vmem:[%s1307 + $0x121] sm:$0xff]
  %v1489 = vpack.c.bf16 %v1474, %v1473
  %v1490 = vpack.c.bf16 %v1476, %v1475
  %v1491 = vpack.c.bf16 %v1478, %v1477
  %v1492 = vpack.c.bf16 %v1480, %v1479
  %v1493 = vpack.c.bf16 %v1482, %v1481
  %v1494 = vpack.c.bf16 %v1484, %v1483
  %v1495 = vpack.c.bf16 %v1486, %v1485
  %v1496 = vpack.c.bf16 %v1488, %v1487
  %s1497 = scalar_lea.vmem %s1, 144
  %v1498 = vld [vmem:[%s1497] sm:$0xff]
  %v1499 = vld [vmem:[%s1497 + $0x8] sm:$0xff]
  %v1500 = vpack.c.bf16 %v1499, %v1498
  %v1502 = vsel %vm73, %v1489, 0
  %v1505 = vsel %vm73, %v1490, 0
  %v1508 = vsel %vm73, %v1491, 0
  %v1511 = vsel %vm73, %v1492, 0
  %v1514 = vsel %vm73, %v1493, 0
  %v1517 = vsel %vm73, %v1494, 0
  %v1520 = vsel %vm73, %v1495, 0
  %v1523 = vsel %vm73, %v1496, 0
  %1525 = vmatprep.subr.bf16.mxu0 0
  %1526 = vmatpush1.bf16.msra.mxu0 %v1500
  %1527 = vmatprep.subr.bf16.mxu0 0
  %1528 = vmatpush1.bf16.msra.mxu0 0
  %1529 = vmatprep.subr.bf16.mxu0 0
  %1530 = vmatpush1.bf16.msra.mxu0 0
  %1531 = vmatprep.subr.bf16.mxu0 0
  %1532 = vmatpush1.bf16.msra.mxu0 0
  %1533 = vmatprep.subr.bf16.mxu0 0
  %1534 = vmatpush1.bf16.msra.mxu0 0
  %1535 = vmatprep.subr.bf16.mxu0 0
  %1536 = vmatpush1.bf16.msra.mxu0 0
  %1537 = vmatprep.subr.bf16.mxu0 0
  %1538 = vmatpush1.bf16.msra.mxu0 0
  %1539 = vmatprep.subr.bf16.mxu0 0
  %1540 = vmatpush1.bf16.msra.mxu0 0
  %1541 = vmatprep.subr.bf16.mxu0 0
  %1542 = vmatpush1.bf16.msra.mxu0 0
  %1543 = vmatprep.subr.bf16.mxu0 0
  %1544 = vmatpush1.bf16.msra.mxu0 0
  %1545 = vmatprep.subr.bf16.mxu0 0
  %1546 = vmatpush1.bf16.msra.mxu0 0
  %1547 = vmatprep.subr.bf16.mxu0 0
  %1548 = vmatpush1.bf16.msra.mxu0 0
  %1549 = vmatprep.subr.bf16.mxu0 0
  %1550 = vmatpush1.bf16.msra.mxu0 0
  %1551 = vmatprep.subr.bf16.mxu0 0
  %1552 = vmatpush1.bf16.msra.mxu0 0
  %1553 = vmatprep.subr.bf16.mxu0 0
  %1554 = vmatpush1.bf16.msra.mxu0 0
  %1555 = vmatprep.subr.bf16.mxu0 0
  %1556 = vmatpush1.bf16.msra.mxu0 0
  %1557 = vmatprep.mubr.bf16.mxu0 0
  %1558 = vmatmul.mubr.bf16.gmra.mrb[0].mxu0 %v1502
  %v1559 = vpop.f32.mrb[0].mxu0
  %v1560 = vadd.f32 0.0, %v1559
  %v1561 = vpop.f32.mrb[0].mxu0
  %v1562 = vpop.f32.mrb[0].mxu0
  %v1563 = vadd.f32 0.0, %v1562
  %v1564 = vpop.f32.mrb[0].mxu0
  %1565 = vmatprep.mubr.bf16.mxu0 0
  %1566 = vmatmul.mubr.bf16.gmra.mrb[0].mxu0 %v1505
  %v1567 = vpop.f32.mrb[0].mxu0
  %v1568 = vadd.f32 0.0, %v1567
  %v1569 = vpop.f32.mrb[0].mxu0
  %v1570 = vpop.f32.mrb[0].mxu0
  %v1571 = vadd.f32 0.0, %v1570
  %v1572 = vpop.f32.mrb[0].mxu0
  %1573 = vmatprep.mubr.bf16.mxu0 0
  %1574 = vmatmul.mubr.bf16.gmra.mrb[0].mxu0 %v1508
  %v1575 = vpop.f32.mrb[0].mxu0
  %v1576 = vadd.f32 0.0, %v1575
  %v1577 = vpop.f32.mrb[0].mxu0
  %v1578 = vpop.f32.mrb[0].mxu0
  %v1579 = vadd.f32 0.0, %v1578
  %v1580 = vpop.f32.mrb[0].mxu0
  %1581 = vmatprep.mubr.bf16.mxu0 0
  %1582 = vmatmul.mubr.bf16.gmra.mrb[0].mxu0 %v1511
  %v1583 = vpop.f32.mrb[0].mxu0
  %v1584 = vadd.f32 0.0, %v1583
  %v1585 = vpop.f32.mrb[0].mxu0
  %v1586 = vpop.f32.mrb[0].mxu0
  %v1587 = vadd.f32 0.0, %v1586
  %v1588 = vpop.f32.mrb[0].mxu0
  %1589 = vmatprep.mubr.bf16.mxu0 0
  %1590 = vmatmul.mubr.bf16.gmra.mrb[0].mxu0 %v1514
  %v1591 = vpop.f32.mrb[0].mxu0
  %v1592 = vadd.f32 0.0, %v1591
  %v1593 = vpop.f32.mrb[0].mxu0
  %v1594 = vpop.f32.mrb[0].mxu0
  %v1595 = vadd.f32 0.0, %v1594
  %v1596 = vpop.f32.mrb[0].mxu0
  %1597 = vmatprep.mubr.bf16.mxu0 0
  %1598 = vmatmul.mubr.bf16.gmra.mrb[0].mxu0 %v1517
  %v1599 = vpop.f32.mrb[0].mxu0
  %v1600 = vadd.f32 0.0, %v1599
  %v1601 = vpop.f32.mrb[0].mxu0
  %v1602 = vpop.f32.mrb[0].mxu0
  %v1603 = vadd.f32 0.0, %v1602
  %v1604 = vpop.f32.mrb[0].mxu0
  %1605 = vmatprep.mubr.bf16.mxu0 0
  %1606 = vmatmul.mubr.bf16.gmra.mrb[0].mxu0 %v1520
  %v1607 = vpop.f32.mrb[0].mxu0
  %v1608 = vadd.f32 0.0, %v1607
  %v1609 = vpop.f32.mrb[0].mxu0
  %v1610 = vpop.f32.mrb[0].mxu0
  %v1611 = vadd.f32 0.0, %v1610
  %v1612 = vpop.f32.mrb[0].mxu0
  %1613 = vmatprep.mubr.bf16.mxu0 0
  %1614 = vmatmul.mubr.bf16.gmra.mrb[0].mxu0 %v1523
  %v1615 = vpop.f32.mrb[0].mxu0
  %v1616 = vadd.f32 0.0, %v1615
  %v1617 = vpop.f32.mrb[0].mxu0
  %v1618 = vpop.f32.mrb[0].mxu0
  %v1619 = vadd.f32 0.0, %v1618
  %v1620 = vpop.f32.mrb[0].mxu0
  %1621 = vdwg.mxu0
  %v1622 = vadd.f32 %v1457, %v1560
  %v1623 = vadd.f32 %v1458, %v1563
  %v1624 = vadd.f32 %v1459, %v1568
  %v1625 = vadd.f32 %v1460, %v1571
  %v1626 = vadd.f32 %v1461, %v1576
  %v1627 = vadd.f32 %v1462, %v1579
  %v1628 = vadd.f32 %v1463, %v1584
  %v1629 = vadd.f32 %v1464, %v1587
  %v1630 = vadd.f32 %v1465, %v1592
  %v1631 = vadd.f32 %v1466, %v1595
  %v1632 = vadd.f32 %v1467, %v1600
  %v1633 = vadd.f32 %v1468, %v1603
  %v1634 = vadd.f32 %v1469, %v1608
  %v1635 = vadd.f32 %v1470, %v1611
  %v1636 = vadd.f32 %v1471, %v1616
  %v1637 = vadd.f32 %v1472, %v1619
  %v1638 = vld [vmem:[%s1307 + $0x2] sm:$0xff]
  %v1639 = vld [vmem:[%s1307 + $0x12] sm:$0xff]
  %v1640 = vld [vmem:[%s1307 + $0x22] sm:$0xff]
  %v1641 = vld [vmem:[%s1307 + $0x32] sm:$0xff]
  %v1642 = vld [vmem:[%s1307 + $0x42] sm:$0xff]
  %v1643 = vld [vmem:[%s1307 + $0x52] sm:$0xff]
  %v1644 = vld [vmem:[%s1307 + $0x62] sm:$0xff]
  %v1645 = vld [vmem:[%s1307 + $0x72] sm:$0xff]
  %v1646 = vld [vmem:[%s1307 + $0xb2] sm:$0xff]
  %v1647 = vld [vmem:[%s1307 + $0xc2] sm:$0xff]
  %v1648 = vld [vmem:[%s1307 + $0xd2] sm:$0xff]
  %v1649 = vld [vmem:[%s1307 + $0xe2] sm:$0xff]
  %v1650 = vld [vmem:[%s1307 + $0xf2] sm:$0xff]
  %v1651 = vld [vmem:[%s1307 + $0x102] sm:$0xff]
  %v1652 = vld [vmem:[%s1307 + $0x112] sm:$0xff]
  %v1653 = vld [vmem:[%s1307 + $0x122] sm:$0xff]
  %v1654 = vpack.c.bf16 %v1639, %v1638
  %v1655 = vpack.c.bf16 %v1641, %v1640
  %v1656 = vpack.c.bf16 %v1643, %v1642
  %v1657 = vpack.c.bf16 %v1645, %v1644
  %v1658 = vpack.c.bf16 %v1647, %v1646
  %v1659 = vpack.c.bf16 %v1649, %v1648
  %v1660 = vpack.c.bf16 %v1651, %v1650
  %v1661 = vpack.c.bf16 %v1653, %v1652
  %s1662 = scalar_lea.vmem %s1, 160
  %v1663 = vld [vmem:[%s1662] sm:$0xff]
  %v1664 = vld [vmem:[%s1662 + $0x8] sm:$0xff]
  %v1665 = vpack.c.bf16 %v1664, %v1663
  %v1667 = vsel %vm73, %v1654, 0
  %v1670 = vsel %vm73, %v1655, 0
  %v1673 = vsel %vm73, %v1656, 0
  %v1676 = vsel %vm73, %v1657, 0
  %v1679 = vsel %vm73, %v1658, 0
  %v1682 = vsel %vm73, %v1659, 0
  %v1685 = vsel %vm73, %v1660, 0
  %v1688 = vsel %vm73, %v1661, 0
  %1690 = vmatprep.subr.bf16.mxu0 0
  %1691 = vmatpush1.bf16.msra.mxu0 %v1665
  %1692 = vmatprep.subr.bf16.mxu0 0
  %1693 = vmatpush1.bf16.msra.mxu0 0
  %1694 = vmatprep.subr.bf16.mxu0 0
  %1695 = vmatpush1.bf16.msra.mxu0 0
  %1696 = vmatprep.subr.bf16.mxu0 0
  %1697 = vmatpush1.bf16.msra.mxu0 0
  %1698 = vmatprep.subr.bf16.mxu0 0
  %1699 = vmatpush1.bf16.msra.mxu0 0
  %1700 = vmatprep.subr.bf16.mxu0 0
  %1701 = vmatpush1.bf16.msra.mxu0 0
  %1702 = vmatprep.subr.bf16.mxu0 0
  %1703 = vmatpush1.bf16.msra.mxu0 0
  %1704 = vmatprep.subr.bf16.mxu0 0
  %1705 = vmatpush1.bf16.msra.mxu0 0
  %1706 = vmatprep.subr.bf16.mxu0 0
  %1707 = vmatpush1.bf16.msra.mxu0 0
  %1708 = vmatprep.subr.bf16.mxu0 0
  %1709 = vmatpush1.bf16.msra.mxu0 0
  %1710 = vmatprep.subr.bf16.mxu0 0
  %1711 = vmatpush1.bf16.msra.mxu0 0
  %1712 = vmatprep.subr.bf16.mxu0 0
  %1713 = vmatpush1.bf16.msra.mxu0 0
  %1714 = vmatprep.subr.bf16.mxu0 0
  %1715 = vmatpush1.bf16.msra.mxu0 0
  %1716 = vmatprep.subr.bf16.mxu0 0
  %1717 = vmatpush1.bf16.msra.mxu0 0
  %1718 = vmatprep.subr.bf16.mxu0 0
  %1719 = vmatpush1.bf16.msra.mxu0 0
  %1720 = vmatprep.subr.bf16.mxu0 0
  %1721 = vmatpush1.bf16.msra.mxu0 0
  %1722 = vmatprep.mubr.bf16.mxu0 0
  %1723 = vmatmul.mubr.bf16.gmra.mrb[0].mxu0 %v1667
  %v1724 = vpop.f32.mrb[0].mxu0
  %v1725 = vadd.f32 0.0, %v1724
  %v1726 = vpop.f32.mrb[0].mxu0
  %v1727 = vpop.f32.mrb[0].mxu0
  %v1728 = vadd.f32 0.0, %v1727
  %v1729 = vpop.f32.mrb[0].mxu0
  %1730 = vmatprep.mubr.bf16.mxu0 0
  %1731 = vmatmul.mubr.bf16.gmra.mrb[0].mxu0 %v1670
  %v1732 = vpop.f32.mrb[0].mxu0
  %v1733 = vadd.f32 0.0, %v1732
  %v1734 = vpop.f32.mrb[0].mxu0
  %v1735 = vpop.f32.mrb[0].mxu0
  %v1736 = vadd.f32 0.0, %v1735
  %v1737 = vpop.f32.mrb[0].mxu0
  %1738 = vmatprep.mubr.bf16.mxu0 0
  %1739 = vmatmul.mubr.bf16.gmra.mrb[0].mxu0 %v1673
  %v1740 = vpop.f32.mrb[0].mxu0
  %v1741 = vadd.f32 0.0, %v1740
  %v1742 = vpop.f32.mrb[0].mxu0
  %v1743 = vpop.f32.mrb[0].mxu0
  %v1744 = vadd.f32 0.0, %v1743
  %v1745 = vpop.f32.mrb[0].mxu0
  %1746 = vmatprep.mubr.bf16.mxu0 0
  %1747 = vmatmul.mubr.bf16.gmra.mrb[0].mxu0 %v1676
  %v1748 = vpop.f32.mrb[0].mxu0
  %v1749 = vadd.f32 0.0, %v1748
  %v1750 = vpop.f32.mrb[0].mxu0
  %v1751 = vpop.f32.mrb[0].mxu0
  %v1752 = vadd.f32 0.0, %v1751
  %v1753 = vpop.f32.mrb[0].mxu0
  %1754 = vmatprep.mubr.bf16.mxu0 0
  %1755 = vmatmul.mubr.bf16.gmra.mrb[0].mxu0 %v1679
  %v1756 = vpop.f32.mrb[0].mxu0
  %v1757 = vadd.f32 0.0, %v1756
  %v1758 = vpop.f32.mrb[0].mxu0
  %v1759 = vpop.f32.mrb[0].mxu0
  %v1760 = vadd.f32 0.0, %v1759
  %v1761 = vpop.f32.mrb[0].mxu0
  %1762 = vmatprep.mubr.bf16.mxu0 0
  %1763 = vmatmul.mubr.bf16.gmra.mrb[0].mxu0 %v1682
  %v1764 = vpop.f32.mrb[0].mxu0
  %v1765 = vadd.f32 0.0, %v1764
  %v1766 = vpop.f32.mrb[0].mxu0
  %v1767 = vpop.f32.mrb[0].mxu0
  %v1768 = vadd.f32 0.0, %v1767
  %v1769 = vpop.f32.mrb[0].mxu0
  %1770 = vmatprep.mubr.bf16.mxu0 0
  %1771 = vmatmul.mubr.bf16.gmra.mrb[0].mxu0 %v1685
  %v1772 = vpop.f32.mrb[0].mxu0
  %v1773 = vadd.f32 0.0, %v1772
  %v1774 = vpop.f32.mrb[0].mxu0
  %v1775 = vpop.f32.mrb[0].mxu0
  %v1776 = vadd.f32 0.0, %v1775
  %v1777 = vpop.f32.mrb[0].mxu0
  %1778 = vmatprep.mubr.bf16.mxu0 0
  %1779 = vmatmul.mubr.bf16.gmra.mrb[0].mxu0 %v1688
  %v1780 = vpop.f32.mrb[0].mxu0
  %v1781 = vadd.f32 0.0, %v1780
  %v1782 = vpop.f32.mrb[0].mxu0
  %v1783 = vpop.f32.mrb[0].mxu0
  %v1784 = vadd.f32 0.0, %v1783
  %v1785 = vpop.f32.mrb[0].mxu0
  %1786 = vdwg.mxu0
  %v1787 = vadd.f32 %v1622, %v1725
  %v1788 = vadd.f32 %v1623, %v1728
  %v1789 = vadd.f32 %v1624, %v1733
  %v1790 = vadd.f32 %v1625, %v1736
  %v1791 = vadd.f32 %v1626, %v1741
  %v1792 = vadd.f32 %v1627, %v1744
  %v1793 = vadd.f32 %v1628, %v1749
  %v1794 = vadd.f32 %v1629, %v1752
  %v1795 = vadd.f32 %v1630, %v1757
  %v1796 = vadd.f32 %v1631, %v1760
  %v1797 = vadd.f32 %v1632, %v1765
  %v1798 = vadd.f32 %v1633, %v1768
  %v1799 = vadd.f32 %v1634, %v1773
  %v1800 = vadd.f32 %v1635, %v1776
  %v1801 = vadd.f32 %v1636, %v1781
  %v1802 = vadd.f32 %v1637, %v1784
  %v1803 = vld [vmem:[%s1307 + $0x3] sm:$0xff]
  %v1804 = vld [vmem:[%s1307 + $0x13] sm:$0xff]
  %v1805 = vld [vmem:[%s1307 + $0x23] sm:$0xff]
  %v1806 = vld [vmem:[%s1307 + $0x33] sm:$0xff]
  %v1807 = vld [vmem:[%s1307 + $0x43] sm:$0xff]
  %v1808 = vld [vmem:[%s1307 + $0x53] sm:$0xff]
  %v1809 = vld [vmem:[%s1307 + $0x63] sm:$0xff]
  %v1810 = vld [vmem:[%s1307 + $0x73] sm:$0xff]
  %v1811 = vld [vmem:[%s1307 + $0xb3] sm:$0xff]
  %v1812 = vld [vmem:[%s1307 + $0xc3] sm:$0xff]
  %v1813 = vld [vmem:[%s1307 + $0xd3] sm:$0xff]
  %v1814 = vld [vmem:[%s1307 + $0xe3] sm:$0xff]
  %v1815 = vld [vmem:[%s1307 + $0xf3] sm:$0xff]
  %v1816 = vld [vmem:[%s1307 + $0x103] sm:$0xff]
  %v1817 = vld [vmem:[%s1307 + $0x113] sm:$0xff]
  %v1818 = vld [vmem:[%s1307 + $0x123] sm:$0xff]
  %v1819 = vpack.c.bf16 %v1804, %v1803
  %v1820 = vpack.c.bf16 %v1806, %v1805
  %v1821 = vpack.c.bf16 %v1808, %v1807
  %v1822 = vpack.c.bf16 %v1810, %v1809
  %v1823 = vpack.c.bf16 %v1812, %v1811
  %v1824 = vpack.c.bf16 %v1814, %v1813
  %v1825 = vpack.c.bf16 %v1816, %v1815
  %v1826 = vpack.c.bf16 %v1818, %v1817
  %s1827 = scalar_lea.vmem %s1, 176
  %v1828 = vld [vmem:[%s1827] sm:$0xff]
  %v1829 = vld [vmem:[%s1827 + $0x8] sm:$0xff]
  %v1830 = vpack.c.bf16 %v1829, %v1828
  %v1832 = vsel %vm73, %v1819, 0
  %v1835 = vsel %vm73, %v1820, 0
  %v1838 = vsel %vm73, %v1821, 0
  %v1841 = vsel %vm73, %v1822, 0
  %v1844 = vsel %vm73, %v1823, 0
  %v1847 = vsel %vm73, %v1824, 0
  %v1850 = vsel %vm73, %v1825, 0
  %v1853 = vsel %vm73, %v1826, 0
  %1855 = vmatprep.subr.bf16.mxu0 0
  %1856 = vmatpush1.bf16.msra.mxu0 %v1830
  %1857 = vmatprep.subr.bf16.mxu0 0
  %1858 = vmatpush1.bf16.msra.mxu0 0
  %1859 = vmatprep.subr.bf16.mxu0 0
  %1860 = vmatpush1.bf16.msra.mxu0 0
  %1861 = vmatprep.subr.bf16.mxu0 0
  %1862 = vmatpush1.bf16.msra.mxu0 0
  %1863 = vmatprep.subr.bf16.mxu0 0
  %1864 = vmatpush1.bf16.msra.mxu0 0
  %1865 = vmatprep.subr.bf16.mxu0 0
  %1866 = vmatpush1.bf16.msra.mxu0 0
  %1867 = vmatprep.subr.bf16.mxu0 0
  %1868 = vmatpush1.bf16.msra.mxu0 0
  %1869 = vmatprep.subr.bf16.mxu0 0
  %1870 = vmatpush1.bf16.msra.mxu0 0
  %1871 = vmatprep.subr.bf16.mxu0 0
  %1872 = vmatpush1.bf16.msra.mxu0 0
  %1873 = vmatprep.subr.bf16.mxu0 0
  %1874 = vmatpush1.bf16.msra.mxu0 0
  %1875 = vmatprep.subr.bf16.mxu0 0
  %1876 = vmatpush1.bf16.msra.mxu0 0
  %1877 = vmatprep.subr.bf16.mxu0 0
  %1878 = vmatpush1.bf16.msra.mxu0 0
  %1879 = vmatprep.subr.bf16.mxu0 0
  %1880 = vmatpush1.bf16.msra.mxu0 0
  %1881 = vmatprep.subr.bf16.mxu0 0
  %1882 = vmatpush1.bf16.msra.mxu0 0
  %1883 = vmatprep.subr.bf16.mxu0 0
  %1884 = vmatpush1.bf16.msra.mxu0 0
  %1885 = vmatprep.subr.bf16.mxu0 0
  %1886 = vmatpush1.bf16.msra.mxu0 0
  %1887 = vmatprep.mubr.bf16.mxu0 0
  %1888 = vmatmul.mubr.bf16.gmra.mrb[0].mxu0 %v1832
  %v1889 = vpop.f32.mrb[0].mxu0
  %v1890 = vadd.f32 0.0, %v1889
  %v1891 = vpop.f32.mrb[0].mxu0
  %v1892 = vpop.f32.mrb[0].mxu0
  %v1893 = vadd.f32 0.0, %v1892
  %v1894 = vpop.f32.mrb[0].mxu0
  %1895 = vmatprep.mubr.bf16.mxu0 0
  %1896 = vmatmul.mubr.bf16.gmra.mrb[0].mxu0 %v1835
  %v1897 = vpop.f32.mrb[0].mxu0
  %v1898 = vadd.f32 0.0, %v1897
  %v1899 = vpop.f32.mrb[0].mxu0
  %v1900 = vpop.f32.mrb[0].mxu0
  %v1901 = vadd.f32 0.0, %v1900
  %v1902 = vpop.f32.mrb[0].mxu0
  %1903 = vmatprep.mubr.bf16.mxu0 0
  %1904 = vmatmul.mubr.bf16.gmra.mrb[0].mxu0 %v1838
  %v1905 = vpop.f32.mrb[0].mxu0
  %v1906 = vadd.f32 0.0, %v1905
  %v1907 = vpop.f32.mrb[0].mxu0
  %v1908 = vpop.f32.mrb[0].mxu0
  %v1909 = vadd.f32 0.0, %v1908
  %v1910 = vpop.f32.mrb[0].mxu0
  %1911 = vmatprep.mubr.bf16.mxu0 0
  %1912 = vmatmul.mubr.bf16.gmra.mrb[0].mxu0 %v1841
  %v1913 = vpop.f32.mrb[0].mxu0
  %v1914 = vadd.f32 0.0, %v1913
  %v1915 = vpop.f32.mrb[0].mxu0
  %v1916 = vpop.f32.mrb[0].mxu0
  %v1917 = vadd.f32 0.0, %v1916
  %v1918 = vpop.f32.mrb[0].mxu0
  %1919 = vmatprep.mubr.bf16.mxu0 0
  %1920 = vmatmul.mubr.bf16.gmra.mrb[0].mxu0 %v1844
  %v1921 = vpop.f32.mrb[0].mxu0
  %v1922 = vadd.f32 0.0, %v1921
  %v1923 = vpop.f32.mrb[0].mxu0
  %v1924 = vpop.f32.mrb[0].mxu0
  %v1925 = vadd.f32 0.0, %v1924
  %v1926 = vpop.f32.mrb[0].mxu0
  %1927 = vmatprep.mubr.bf16.mxu0 0
  %1928 = vmatmul.mubr.bf16.gmra.mrb[0].mxu0 %v1847
  %v1929 = vpop.f32.mrb[0].mxu0
  %v1930 = vadd.f32 0.0, %v1929
  %v1931 = vpop.f32.mrb[0].mxu0
  %v1932 = vpop.f32.mrb[0].mxu0
  %v1933 = vadd.f32 0.0, %v1932
  %v1934 = vpop.f32.mrb[0].mxu0
  %1935 = vmatprep.mubr.bf16.mxu0 0
  %1936 = vmatmul.mubr.bf16.gmra.mrb[0].mxu0 %v1850
  %v1937 = vpop.f32.mrb[0].mxu0
  %v1938 = vadd.f32 0.0, %v1937
  %v1939 = vpop.f32.mrb[0].mxu0
  %v1940 = vpop.f32.mrb[0].mxu0
  %v1941 = vadd.f32 0.0, %v1940
  %v1942 = vpop.f32.mrb[0].mxu0
  %1943 = vmatprep.mubr.bf16.mxu0 0
  %1944 = vmatmul.mubr.bf16.gmra.mrb[0].mxu0 %v1853
  %v1945 = vpop.f32.mrb[0].mxu0
  %v1946 = vadd.f32 0.0, %v1945
  %v1947 = vpop.f32.mrb[0].mxu0
  %v1948 = vpop.f32.mrb[0].mxu0
  %v1949 = vadd.f32 0.0, %v1948
  %v1950 = vpop.f32.mrb[0].mxu0
  %1951 = vdwg.mxu0
  %v1952 = vadd.f32 %v1787, %v1890
  %v1953 = vadd.f32 %v1788, %v1893
  %v1954 = vadd.f32 %v1789, %v1898
  %v1955 = vadd.f32 %v1790, %v1901
  %v1956 = vadd.f32 %v1791, %v1906
  %v1957 = vadd.f32 %v1792, %v1909
  %v1958 = vadd.f32 %v1793, %v1914
  %v1959 = vadd.f32 %v1794, %v1917
  %v1960 = vadd.f32 %v1795, %v1922
  %v1961 = vadd.f32 %v1796, %v1925
  %v1962 = vadd.f32 %v1797, %v1930
  %v1963 = vadd.f32 %v1798, %v1933
  %v1964 = vadd.f32 %v1799, %v1938
  %v1965 = vadd.f32 %v1800, %v1941
  %v1966 = vadd.f32 %v1801, %v1946
  %v1967 = vadd.f32 %v1802, %v1949
  %s1968 = scalar_lea.vmem %s0, 48
  %v1969 = vld [vmem:[%s1968] sm:$0xff]
  %v1970 = vld [vmem:[%s1968 + $0x10] sm:$0xff]
  %v1971 = vld [vmem:[%s1968 + $0x20] sm:$0xff]
  %v1972 = vld [vmem:[%s1968 + $0x30] sm:$0xff]
  %v1973 = vld [vmem:[%s1968 + $0x40] sm:$0xff]
  %v1974 = vld [vmem:[%s1968 + $0x50] sm:$0xff]
  %v1975 = vld [vmem:[%s1968 + $0x60] sm:$0xff]
  %v1976 = vld [vmem:[%s1968 + $0x70] sm:$0xff]
  %v1977 = vld [vmem:[%s1968 + $0xb0] sm:$0xff]
  %v1978 = vld [vmem:[%s1968 + $0xc0] sm:$0xff]
  %v1979 = vld [vmem:[%s1968 + $0xd0] sm:$0xff]
  %v1980 = vld [vmem:[%s1968 + $0xe0] sm:$0xff]
  %v1981 = vld [vmem:[%s1968 + $0xf0] sm:$0xff]
  %v1982 = vld [vmem:[%s1968 + $0x100] sm:$0xff]
  %v1983 = vld [vmem:[%s1968 + $0x110] sm:$0xff]
  %v1984 = vld [vmem:[%s1968 + $0x120] sm:$0xff]
  %v1985 = vpack.c.bf16 %v1970, %v1969
  %v1986 = vpack.c.bf16 %v1972, %v1971
  %v1987 = vpack.c.bf16 %v1974, %v1973
  %v1988 = vpack.c.bf16 %v1976, %v1975
  %v1989 = vpack.c.bf16 %v1978, %v1977
  %v1990 = vpack.c.bf16 %v1980, %v1979
  %v1991 = vpack.c.bf16 %v1982, %v1981
  %v1992 = vpack.c.bf16 %v1984, %v1983
  %s1993 = scalar_lea.vmem %s1, 192
  %v1994 = vld [vmem:[%s1993] sm:$0xff]
  %v1995 = vld [vmem:[%s1993 + $0x8] sm:$0xff]
  %v1996 = vpack.c.bf16 %v1995, %v1994
  %v1998 = vsel %vm73, %v1985, 0
  %v2001 = vsel %vm73, %v1986, 0
  %v2004 = vsel %vm73, %v1987, 0
  %v2007 = vsel %vm73, %v1988, 0
  %v2010 = vsel %vm73, %v1989, 0
  %v2013 = vsel %vm73, %v1990, 0
  %v2016 = vsel %vm73, %v1991, 0
  %v2019 = vsel %vm73, %v1992, 0
  %2021 = vmatprep.subr.bf16.mxu0 0
  %2022 = vmatpush1.bf16.msra.mxu0 %v1996
  %2023 = vmatprep.subr.bf16.mxu0 0
  %2024 = vmatpush1.bf16.msra.mxu0 0
  %2025 = vmatprep.subr.bf16.mxu0 0
  %2026 = vmatpush1.bf16.msra.mxu0 0
  %2027 = vmatprep.subr.bf16.mxu0 0
  %2028 = vmatpush1.bf16.msra.mxu0 0
  %2029 = vmatprep.subr.bf16.mxu0 0
  %2030 = vmatpush1.bf16.msra.mxu0 0
  %2031 = vmatprep.subr.bf16.mxu0 0
  %2032 = vmatpush1.bf16.msra.mxu0 0
  %2033 = vmatprep.subr.bf16.mxu0 0
  %2034 = vmatpush1.bf16.msra.mxu0 0
  %2035 = vmatprep.subr.bf16.mxu0 0
  %2036 = vmatpush1.bf16.msra.mxu0 0
  %2037 = vmatprep.subr.bf16.mxu0 0
  %2038 = vmatpush1.bf16.msra.mxu0 0
  %2039 = vmatprep.subr.bf16.mxu0 0
  %2040 = vmatpush1.bf16.msra.mxu0 0
  %2041 = vmatprep.subr.bf16.mxu0 0
  %2042 = vmatpush1.bf16.msra.mxu0 0
  %2043 = vmatprep.subr.bf16.mxu0 0
  %2044 = vmatpush1.bf16.msra.mxu0 0
  %2045 = vmatprep.subr.bf16.mxu0 0
  %2046 = vmatpush1.bf16.msra.mxu0 0
  %2047 = vmatprep.subr.bf16.mxu0 0
  %2048 = vmatpush1.bf16.msra.mxu0 0
  %2049 = vmatprep.subr.bf16.mxu0 0
  %2050 = vmatpush1.bf16.msra.mxu0 0
  %2051 = vmatprep.subr.bf16.mxu0 0
  %2052 = vmatpush1.bf16.msra.mxu0 0
  %2053 = vmatprep.mubr.bf16.mxu0 0
  %2054 = vmatmul.mubr.bf16.gmra.mrb[0].mxu0 %v1998
  %v2055 = vpop.f32.mrb[0].mxu0
  %v2056 = vadd.f32 0.0, %v2055
  %v2057 = vpop.f32.mrb[0].mxu0
  %v2058 = vpop.f32.mrb[0].mxu0
  %v2059 = vadd.f32 0.0, %v2058
  %v2060 = vpop.f32.mrb[0].mxu0
  %2061 = vmatprep.mubr.bf16.mxu0 0
  %2062 = vmatmul.mubr.bf16.gmra.mrb[0].mxu0 %v2001
  %v2063 = vpop.f32.mrb[0].mxu0
  %v2064 = vadd.f32 0.0, %v2063
  %v2065 = vpop.f32.mrb[0].mxu0
  %v2066 = vpop.f32.mrb[0].mxu0
  %v2067 = vadd.f32 0.0, %v2066
  %v2068 = vpop.f32.mrb[0].mxu0
  %2069 = vmatprep.mubr.bf16.mxu0 0
  %2070 = vmatmul.mubr.bf16.gmra.mrb[0].mxu0 %v2004
  %v2071 = vpop.f32.mrb[0].mxu0
  %v2072 = vadd.f32 0.0, %v2071
  %v2073 = vpop.f32.mrb[0].mxu0
  %v2074 = vpop.f32.mrb[0].mxu0
  %v2075 = vadd.f32 0.0, %v2074
  %v2076 = vpop.f32.mrb[0].mxu0
  %2077 = vmatprep.mubr.bf16.mxu0 0
  %2078 = vmatmul.mubr.bf16.gmra.mrb[0].mxu0 %v2007
  %v2079 = vpop.f32.mrb[0].mxu0
  %v2080 = vadd.f32 0.0, %v2079
  %v2081 = vpop.f32.mrb[0].mxu0
  %v2082 = vpop.f32.mrb[0].mxu0
  %v2083 = vadd.f32 0.0, %v2082
  %v2084 = vpop.f32.mrb[0].mxu0
  %2085 = vmatprep.mubr.bf16.mxu0 0
  %2086 = vmatmul.mubr.bf16.gmra.mrb[0].mxu0 %v2010
  %v2087 = vpop.f32.mrb[0].mxu0
  %v2088 = vadd.f32 0.0, %v2087
  %v2089 = vpop.f32.mrb[0].mxu0
  %v2090 = vpop.f32.mrb[0].mxu0
  %v2091 = vadd.f32 0.0, %v2090
  %v2092 = vpop.f32.mrb[0].mxu0
  %2093 = vmatprep.mubr.bf16.mxu0 0
  %2094 = vmatmul.mubr.bf16.gmra.mrb[0].mxu0 %v2013
  %v2095 = vpop.f32.mrb[0].mxu0
  %v2096 = vadd.f32 0.0, %v2095
  %v2097 = vpop.f32.mrb[0].mxu0
  %v2098 = vpop.f32.mrb[0].mxu0
  %v2099 = vadd.f32 0.0, %v2098
  %v2100 = vpop.f32.mrb[0].mxu0
  %2101 = vmatprep.mubr.bf16.mxu0 0
  %2102 = vmatmul.mubr.bf16.gmra.mrb[0].mxu0 %v2016
  %v2103 = vpop.f32.mrb[0].mxu0
  %v2104 = vadd.f32 0.0, %v2103
  %v2105 = vpop.f32.mrb[0].mxu0
  %v2106 = vpop.f32.mrb[0].mxu0
  %v2107 = vadd.f32 0.0, %v2106
  %v2108 = vpop.f32.mrb[0].mxu0
  %2109 = vmatprep.mubr.bf16.mxu0 0
  %2110 = vmatmul.mubr.bf16.gmra.mrb[0].mxu0 %v2019
  %v2111 = vpop.f32.mrb[0].mxu0
  %v2112 = vadd.f32 0.0, %v2111
  %v2113 = vpop.f32.mrb[0].mxu0
  %v2114 = vpop.f32.mrb[0].mxu0
  %v2115 = vadd.f32 0.0, %v2114
  %v2116 = vpop.f32.mrb[0].mxu0
  %2117 = vdwg.mxu0
  %v2118 = vadd.f32 %v1952, %v2056
  %v2119 = vadd.f32 %v1953, %v2059
  %v2120 = vadd.f32 %v1954, %v2064
  %v2121 = vadd.f32 %v1955, %v2067
  %v2122 = vadd.f32 %v1956, %v2072
  %v2123 = vadd.f32 %v1957, %v2075
  %v2124 = vadd.f32 %v1958, %v2080
  %v2125 = vadd.f32 %v1959, %v2083
  %v2126 = vadd.f32 %v1960, %v2088
  %v2127 = vadd.f32 %v1961, %v2091
  %v2128 = vadd.f32 %v1962, %v2096
  %v2129 = vadd.f32 %v1963, %v2099
  %v2130 = vadd.f32 %v1964, %v2104
  %v2131 = vadd.f32 %v1965, %v2107
  %v2132 = vadd.f32 %v1966, %v2112
  %v2133 = vadd.f32 %v1967, %v2115
  %v2134 = vld [vmem:[%s1968 + $0x1] sm:$0xff]
  %v2135 = vld [vmem:[%s1968 + $0x11] sm:$0xff]
  %v2136 = vld [vmem:[%s1968 + $0x21] sm:$0xff]
  %v2137 = vld [vmem:[%s1968 + $0x31] sm:$0xff]
  %v2138 = vld [vmem:[%s1968 + $0x41] sm:$0xff]
  %v2139 = vld [vmem:[%s1968 + $0x51] sm:$0xff]
  %v2140 = vld [vmem:[%s1968 + $0x61] sm:$0xff]
  %v2141 = vld [vmem:[%s1968 + $0x71] sm:$0xff]
  %v2142 = vld [vmem:[%s1968 + $0xb1] sm:$0xff]
  %v2143 = vld [vmem:[%s1968 + $0xc1] sm:$0xff]
  %v2144 = vld [vmem:[%s1968 + $0xd1] sm:$0xff]
  %v2145 = vld [vmem:[%s1968 + $0xe1] sm:$0xff]
  %v2146 = vld [vmem:[%s1968 + $0xf1] sm:$0xff]
  %v2147 = vld [vmem:[%s1968 + $0x101] sm:$0xff]
  %v2148 = vld [vmem:[%s1968 + $0x111] sm:$0xff]
  %v2149 = vld [vmem:[%s1968 + $0x121] sm:$0xff]
  %v2150 = vpack.c.bf16 %v2135, %v2134
  %v2151 = vpack.c.bf16 %v2137, %v2136
  %v2152 = vpack.c.bf16 %v2139, %v2138
  %v2153 = vpack.c.bf16 %v2141, %v2140
  %v2154 = vpack.c.bf16 %v2143, %v2142
  %v2155 = vpack.c.bf16 %v2145, %v2144
  %v2156 = vpack.c.bf16 %v2147, %v2146
  %v2157 = vpack.c.bf16 %v2149, %v2148
  %s2158 = scalar_lea.vmem %s1, 208
  %v2159 = vld [vmem:[%s2158] sm:$0xff]
  %v2160 = vld [vmem:[%s2158 + $0x8] sm:$0xff]
  %v2161 = vpack.c.bf16 %v2160, %v2159
  %v2163 = vsel %vm73, %v2150, 0
  %v2166 = vsel %vm73, %v2151, 0
  %v2169 = vsel %vm73, %v2152, 0
  %v2172 = vsel %vm73, %v2153, 0
  %v2175 = vsel %vm73, %v2154, 0
  %v2178 = vsel %vm73, %v2155, 0
  %v2181 = vsel %vm73, %v2156, 0
  %v2184 = vsel %vm73, %v2157, 0
  %2186 = vmatprep.subr.bf16.mxu0 0
  %2187 = vmatpush1.bf16.msra.mxu0 %v2161
  %2188 = vmatprep.subr.bf16.mxu0 0
  %2189 = vmatpush1.bf16.msra.mxu0 0
  %2190 = vmatprep.subr.bf16.mxu0 0
  %2191 = vmatpush1.bf16.msra.mxu0 0
  %2192 = vmatprep.subr.bf16.mxu0 0
  %2193 = vmatpush1.bf16.msra.mxu0 0
  %2194 = vmatprep.subr.bf16.mxu0 0
  %2195 = vmatpush1.bf16.msra.mxu0 0
  %2196 = vmatprep.subr.bf16.mxu0 0
  %2197 = vmatpush1.bf16.msra.mxu0 0
  %2198 = vmatprep.subr.bf16.mxu0 0
  %2199 = vmatpush1.bf16.msra.mxu0 0
  %2200 = vmatprep.subr.bf16.mxu0 0
  %2201 = vmatpush1.bf16.msra.mxu0 0
  %2202 = vmatprep.subr.bf16.mxu0 0
  %2203 = vmatpush1.bf16.msra.mxu0 0
  %2204 = vmatprep.subr.bf16.mxu0 0
  %2205 = vmatpush1.bf16.msra.mxu0 0
  %2206 = vmatprep.subr.bf16.mxu0 0
  %2207 = vmatpush1.bf16.msra.mxu0 0
  %2208 = vmatprep.subr.bf16.mxu0 0
  %2209 = vmatpush1.bf16.msra.mxu0 0
  %2210 = vmatprep.subr.bf16.mxu0 0
  %2211 = vmatpush1.bf16.msra.mxu0 0
  %2212 = vmatprep.subr.bf16.mxu0 0
  %2213 = vmatpush1.bf16.msra.mxu0 0
  %2214 = vmatprep.subr.bf16.mxu0 0
  %2215 = vmatpush1.bf16.msra.mxu0 0
  %2216 = vmatprep.subr.bf16.mxu0 0
  %2217 = vmatpush1.bf16.msra.mxu0 0
  %2218 = vmatprep.mubr.bf16.mxu0 0
  %2219 = vmatmul.mubr.bf16.gmra.mrb[0].mxu0 %v2163
  %v2220 = vpop.f32.mrb[0].mxu0
  %v2221 = vadd.f32 0.0, %v2220
  %v2222 = vpop.f32.mrb[0].mxu0
  %v2223 = vpop.f32.mrb[0].mxu0
  %v2224 = vadd.f32 0.0, %v2223
  %v2225 = vpop.f32.mrb[0].mxu0
  %2226 = vmatprep.mubr.bf16.mxu0 0
  %2227 = vmatmul.mubr.bf16.gmra.mrb[0].mxu0 %v2166
  %v2228 = vpop.f32.mrb[0].mxu0
  %v2229 = vadd.f32 0.0, %v2228
  %v2230 = vpop.f32.mrb[0].mxu0
  %v2231 = vpop.f32.mrb[0].mxu0
  %v2232 = vadd.f32 0.0, %v2231
  %v2233 = vpop.f32.mrb[0].mxu0
  %2234 = vmatprep.mubr.bf16.mxu0 0
  %2235 = vmatmul.mubr.bf16.gmra.mrb[0].mxu0 %v2169
  %v2236 = vpop.f32.mrb[0].mxu0
  %v2237 = vadd.f32 0.0, %v2236
  %v2238 = vpop.f32.mrb[0].mxu0
  %v2239 = vpop.f32.mrb[0].mxu0
  %v2240 = vadd.f32 0.0, %v2239
  %v2241 = vpop.f32.mrb[0].mxu0
  %2242 = vmatprep.mubr.bf16.mxu0 0
  %2243 = vmatmul.mubr.bf16.gmra.mrb[0].mxu0 %v2172
  %v2244 = vpop.f32.mrb[0].mxu0
  %v2245 = vadd.f32 0.0, %v2244
  %v2246 = vpop.f32.mrb[0].mxu0
  %v2247 = vpop.f32.mrb[0].mxu0
  %v2248 = vadd.f32 0.0, %v2247
  %v2249 = vpop.f32.mrb[0].mxu0
  %2250 = vmatprep.mubr.bf16.mxu0 0
  %2251 = vmatmul.mubr.bf16.gmra.mrb[0].mxu0 %v2175
  %v2252 = vpop.f32.mrb[0].mxu0
  %v2253 = vadd.f32 0.0, %v2252
  %v2254 = vpop.f32.mrb[0].mxu0
  %v2255 = vpop.f32.mrb[0].mxu0
  %v2256 = vadd.f32 0.0, %v2255
  %v2257 = vpop.f32.mrb[0].mxu0
  %2258 = vmatprep.mubr.bf16.mxu0 0
  %2259 = vmatmul.mubr.bf16.gmra.mrb[0].mxu0 %v2178
  %v2260 = vpop.f32.mrb[0].mxu0
  %v2261 = vadd.f32 0.0, %v2260
  %v2262 = vpop.f32.mrb[0].mxu0
  %v2263 = vpop.f32.mrb[0].mxu0
  %v2264 = vadd.f32 0.0, %v2263
  %v2265 = vpop.f32.mrb[0].mxu0
  %2266 = vmatprep.mubr.bf16.mxu0 0
  %2267 = vmatmul.mubr.bf16.gmra.mrb[0].mxu0 %v2181
  %v2268 = vpop.f32.mrb[0].mxu0
  %v2269 = vadd.f32 0.0, %v2268
  %v2270 = vpop.f32.mrb[0].mxu0
  %v2271 = vpop.f32.mrb[0].mxu0
  %v2272 = vadd.f32 0.0, %v2271
  %v2273 = vpop.f32.mrb[0].mxu0
  %2274 = vmatprep.mubr.bf16.mxu0 0
  %2275 = vmatmul.mubr.bf16.gmra.mrb[0].mxu0 %v2184
  %v2276 = vpop.f32.mrb[0].mxu0
  %v2277 = vadd.f32 0.0, %v2276
  %v2278 = vpop.f32.mrb[0].mxu0
  %v2279 = vpop.f32.mrb[0].mxu0
  %v2280 = vadd.f32 0.0, %v2279
  %v2281 = vpop.f32.mrb[0].mxu0
  %2282 = vdwg.mxu0
  %v2283 = vadd.f32 %v2118, %v2221
  %v2284 = vadd.f32 %v2119, %v2224
  %v2285 = vadd.f32 %v2120, %v2229
  %v2286 = vadd.f32 %v2121, %v2232
  %v2287 = vadd.f32 %v2122, %v2237
  %v2288 = vadd.f32 %v2123, %v2240
  %v2289 = vadd.f32 %v2124, %v2245
  %v2290 = vadd.f32 %v2125, %v2248
  %v2291 = vadd.f32 %v2126, %v2253
  %v2292 = vadd.f32 %v2127, %v2256
  %v2293 = vadd.f32 %v2128, %v2261
  %v2294 = vadd.f32 %v2129, %v2264
  %v2295 = vadd.f32 %v2130, %v2269
  %v2296 = vadd.f32 %v2131, %v2272
  %v2297 = vadd.f32 %v2132, %v2277
  %v2298 = vadd.f32 %v2133, %v2280
  %v2299 = vld [vmem:[%s1968 + $0x2] sm:$0xff]
  %v2300 = vld [vmem:[%s1968 + $0x12] sm:$0xff]
  %v2301 = vld [vmem:[%s1968 + $0x22] sm:$0xff]
  %v2302 = vld [vmem:[%s1968 + $0x32] sm:$0xff]
  %v2303 = vld [vmem:[%s1968 + $0x42] sm:$0xff]
  %v2304 = vld [vmem:[%s1968 + $0x52] sm:$0xff]
  %v2305 = vld [vmem:[%s1968 + $0x62] sm:$0xff]
  %v2306 = vld [vmem:[%s1968 + $0x72] sm:$0xff]
  %v2307 = vld [vmem:[%s1968 + $0xb2] sm:$0xff]
  %v2308 = vld [vmem:[%s1968 + $0xc2] sm:$0xff]
  %v2309 = vld [vmem:[%s1968 + $0xd2] sm:$0xff]
  %v2310 = vld [vmem:[%s1968 + $0xe2] sm:$0xff]
  %v2311 = vld [vmem:[%s1968 + $0xf2] sm:$0xff]
  %v2312 = vld [vmem:[%s1968 + $0x102] sm:$0xff]
  %v2313 = vld [vmem:[%s1968 + $0x112] sm:$0xff]
  %v2314 = vld [vmem:[%s1968 + $0x122] sm:$0xff]
  %v2315 = vpack.c.bf16 %v2300, %v2299
  %v2316 = vpack.c.bf16 %v2302, %v2301
  %v2317 = vpack.c.bf16 %v2304, %v2303
  %v2318 = vpack.c.bf16 %v2306, %v2305
  %v2319 = vpack.c.bf16 %v2308, %v2307
  %v2320 = vpack.c.bf16 %v2310, %v2309
  %v2321 = vpack.c.bf16 %v2312, %v2311
  %v2322 = vpack.c.bf16 %v2314, %v2313
  %s2323 = scalar_lea.vmem %s1, 224
  %v2324 = vld [vmem:[%s2323] sm:$0xff]
  %v2325 = vld [vmem:[%s2323 + $0x8] sm:$0xff]
  %v2326 = vpack.c.bf16 %v2325, %v2324
  %v2328 = vsel %vm73, %v2315, 0
  %v2331 = vsel %vm73, %v2316, 0
  %v2334 = vsel %vm73, %v2317, 0
  %v2337 = vsel %vm73, %v2318, 0
  %v2340 = vsel %vm73, %v2319, 0
  %v2343 = vsel %vm73, %v2320, 0
  %v2346 = vsel %vm73, %v2321, 0
  %v2349 = vsel %vm73, %v2322, 0
  %2351 = vmatprep.subr.bf16.mxu0 0
  %2352 = vmatpush1.bf16.msra.mxu0 %v2326
  %2353 = vmatprep.subr.bf16.mxu0 0
  %2354 = vmatpush1.bf16.msra.mxu0 0
  %2355 = vmatprep.subr.bf16.mxu0 0
  %2356 = vmatpush1.bf16.msra.mxu0 0
  %2357 = vmatprep.subr.bf16.mxu0 0
  %2358 = vmatpush1.bf16.msra.mxu0 0
  %2359 = vmatprep.subr.bf16.mxu0 0
  %2360 = vmatpush1.bf16.msra.mxu0 0
  %2361 = vmatprep.subr.bf16.mxu0 0
  %2362 = vmatpush1.bf16.msra.mxu0 0
  %2363 = vmatprep.subr.bf16.mxu0 0
  %2364 = vmatpush1.bf16.msra.mxu0 0
  %2365 = vmatprep.subr.bf16.mxu0 0
  %2366 = vmatpush1.bf16.msra.mxu0 0
  %2367 = vmatprep.subr.bf16.mxu0 0
  %2368 = vmatpush1.bf16.msra.mxu0 0
  %2369 = vmatprep.subr.bf16.mxu0 0
  %2370 = vmatpush1.bf16.msra.mxu0 0
  %2371 = vmatprep.subr.bf16.mxu0 0
  %2372 = vmatpush1.bf16.msra.mxu0 0
  %2373 = vmatprep.subr.bf16.mxu0 0
  %2374 = vmatpush1.bf16.msra.mxu0 0
  %2375 = vmatprep.subr.bf16.mxu0 0
  %2376 = vmatpush1.bf16.msra.mxu0 0
  %2377 = vmatprep.subr.bf16.mxu0 0
  %2378 = vmatpush1.bf16.msra.mxu0 0
  %2379 = vmatprep.subr.bf16.mxu0 0
  %2380 = vmatpush1.bf16.msra.mxu0 0
  %2381 = vmatprep.subr.bf16.mxu0 0
  %2382 = vmatpush1.bf16.msra.mxu0 0
  %2383 = vmatprep.mubr.bf16.mxu0 0
  %2384 = vmatmul.mubr.bf16.gmra.mrb[0].mxu0 %v2328
  %v2385 = vpop.f32.mrb[0].mxu0
  %v2386 = vadd.f32 0.0, %v2385
  %v2387 = vpop.f32.mrb[0].mxu0
  %v2388 = vpop.f32.mrb[0].mxu0
  %v2389 = vadd.f32 0.0, %v2388
  %v2390 = vpop.f32.mrb[0].mxu0
  %2391 = vmatprep.mubr.bf16.mxu0 0
  %2392 = vmatmul.mubr.bf16.gmra.mrb[0].mxu0 %v2331
  %v2393 = vpop.f32.mrb[0].mxu0
  %v2394 = vadd.f32 0.0, %v2393
  %v2395 = vpop.f32.mrb[0].mxu0
  %v2396 = vpop.f32.mrb[0].mxu0
  %v2397 = vadd.f32 0.0, %v2396
  %v2398 = vpop.f32.mrb[0].mxu0
  %2399 = vmatprep.mubr.bf16.mxu0 0
  %2400 = vmatmul.mubr.bf16.gmra.mrb[0].mxu0 %v2334
  %v2401 = vpop.f32.mrb[0].mxu0
  %v2402 = vadd.f32 0.0, %v2401
  %v2403 = vpop.f32.mrb[0].mxu0
  %v2404 = vpop.f32.mrb[0].mxu0
  %v2405 = vadd.f32 0.0, %v2404
  %v2406 = vpop.f32.mrb[0].mxu0
  %2407 = vmatprep.mubr.bf16.mxu0 0
  %2408 = vmatmul.mubr.bf16.gmra.mrb[0].mxu0 %v2337
  %v2409 = vpop.f32.mrb[0].mxu0
  %v2410 = vadd.f32 0.0, %v2409
  %v2411 = vpop.f32.mrb[0].mxu0
  %v2412 = vpop.f32.mrb[0].mxu0
  %v2413 = vadd.f32 0.0, %v2412
  %v2414 = vpop.f32.mrb[0].mxu0
  %2415 = vmatprep.mubr.bf16.mxu0 0
  %2416 = vmatmul.mubr.bf16.gmra.mrb[0].mxu0 %v2340
  %v2417 = vpop.f32.mrb[0].mxu0
  %v2418 = vadd.f32 0.0, %v2417
  %v2419 = vpop.f32.mrb[0].mxu0
  %v2420 = vpop.f32.mrb[0].mxu0
  %v2421 = vadd.f32 0.0, %v2420
  %v2422 = vpop.f32.mrb[0].mxu0
  %2423 = vmatprep.mubr.bf16.mxu0 0
  %2424 = vmatmul.mubr.bf16.gmra.mrb[0].mxu0 %v2343
  %v2425 = vpop.f32.mrb[0].mxu0
  %v2426 = vadd.f32 0.0, %v2425
  %v2427 = vpop.f32.mrb[0].mxu0
  %v2428 = vpop.f32.mrb[0].mxu0
  %v2429 = vadd.f32 0.0, %v2428
  %v2430 = vpop.f32.mrb[0].mxu0
  %2431 = vmatprep.mubr.bf16.mxu0 0
  %2432 = vmatmul.mubr.bf16.gmra.mrb[0].mxu0 %v2346
  %v2433 = vpop.f32.mrb[0].mxu0
  %v2434 = vadd.f32 0.0, %v2433
  %v2435 = vpop.f32.mrb[0].mxu0
  %v2436 = vpop.f32.mrb[0].mxu0
  %v2437 = vadd.f32 0.0, %v2436
  %v2438 = vpop.f32.mrb[0].mxu0
  %2439 = vmatprep.mubr.bf16.mxu0 0
  %2440 = vmatmul.mubr.bf16.gmra.mrb[0].mxu0 %v2349
  %v2441 = vpop.f32.mrb[0].mxu0
  %v2442 = vadd.f32 0.0, %v2441
  %v2443 = vpop.f32.mrb[0].mxu0
  %v2444 = vpop.f32.mrb[0].mxu0
  %v2445 = vadd.f32 0.0, %v2444
  %v2446 = vpop.f32.mrb[0].mxu0
  %2447 = vdwg.mxu0
  %v2448 = vadd.f32 %v2283, %v2386
  %v2449 = vadd.f32 %v2284, %v2389
  %v2450 = vadd.f32 %v2285, %v2394
  %v2451 = vadd.f32 %v2286, %v2397
  %v2452 = vadd.f32 %v2287, %v2402
  %v2453 = vadd.f32 %v2288, %v2405
  %v2454 = vadd.f32 %v2289, %v2410
  %v2455 = vadd.f32 %v2290, %v2413
  %v2456 = vadd.f32 %v2291, %v2418
  %v2457 = vadd.f32 %v2292, %v2421
  %v2458 = vadd.f32 %v2293, %v2426
  %v2459 = vadd.f32 %v2294, %v2429
  %v2460 = vadd.f32 %v2295, %v2434
  %v2461 = vadd.f32 %v2296, %v2437
  %v2462 = vadd.f32 %v2297, %v2442
  %v2463 = vadd.f32 %v2298, %v2445
  %v2464 = vld [vmem:[%s1968 + $0x3] sm:$0xff]
  %v2465 = vld [vmem:[%s1968 + $0x13] sm:$0xff]
  %v2466 = vld [vmem:[%s1968 + $0x23] sm:$0xff]
  %v2467 = vld [vmem:[%s1968 + $0x33] sm:$0xff]
  %v2468 = vld [vmem:[%s1968 + $0x43] sm:$0xff]
  %v2469 = vld [vmem:[%s1968 + $0x53] sm:$0xff]
  %v2470 = vld [vmem:[%s1968 + $0x63] sm:$0xff]
  %v2471 = vld [vmem:[%s1968 + $0x73] sm:$0xff]
  %v2472 = vld [vmem:[%s1968 + $0xb3] sm:$0xff]
  %v2473 = vld [vmem:[%s1968 + $0xc3] sm:$0xff]
  %v2474 = vld [vmem:[%s1968 + $0xd3] sm:$0xff]
  %v2475 = vld [vmem:[%s1968 + $0xe3] sm:$0xff]
  %v2476 = vld [vmem:[%s1968 + $0xf3] sm:$0xff]
  %v2477 = vld [vmem:[%s1968 + $0x103] sm:$0xff]
  %v2478 = vld [vmem:[%s1968 + $0x113] sm:$0xff]
  %v2479 = vld [vmem:[%s1968 + $0x123] sm:$0xff]
  %v2480 = vpack.c.bf16 %v2465, %v2464
  %v2481 = vpack.c.bf16 %v2467, %v2466
  %v2482 = vpack.c.bf16 %v2469, %v2468
  %v2483 = vpack.c.bf16 %v2471, %v2470
  %v2484 = vpack.c.bf16 %v2473, %v2472
  %v2485 = vpack.c.bf16 %v2475, %v2474
  %v2486 = vpack.c.bf16 %v2477, %v2476
  %v2487 = vpack.c.bf16 %v2479, %v2478
  %s2488 = scalar_lea.vmem %s1, 240
  %v2489 = vld [vmem:[%s2488] sm:$0xff]
  %v2490 = vld [vmem:[%s2488 + $0x8] sm:$0xff]
  %v2491 = vpack.c.bf16 %v2490, %v2489
  %v2493 = vsel %vm73, %v2480, 0
  %v2496 = vsel %vm73, %v2481, 0
  %v2499 = vsel %vm73, %v2482, 0
  %v2502 = vsel %vm73, %v2483, 0
  %v2505 = vsel %vm73, %v2484, 0
  %v2508 = vsel %vm73, %v2485, 0
  %v2511 = vsel %vm73, %v2486, 0
  %v2514 = vsel %vm73, %v2487, 0
  %2516 = vmatprep.subr.bf16.mxu0 0
  %2517 = vmatpush1.bf16.msra.mxu0 %v2491
  %2518 = vmatprep.subr.bf16.mxu0 0
  %2519 = vmatpush1.bf16.msra.mxu0 0
  %2520 = vmatprep.subr.bf16.mxu0 0
  %2521 = vmatpush1.bf16.msra.mxu0 0
  %2522 = vmatprep.subr.bf16.mxu0 0
  %2523 = vmatpush1.bf16.msra.mxu0 0
  %2524 = vmatprep.subr.bf16.mxu0 0
  %2525 = vmatpush1.bf16.msra.mxu0 0
  %2526 = vmatprep.subr.bf16.mxu0 0
  %2527 = vmatpush1.bf16.msra.mxu0 0
  %2528 = vmatprep.subr.bf16.mxu0 0
  %2529 = vmatpush1.bf16.msra.mxu0 0
  %2530 = vmatprep.subr.bf16.mxu0 0
  %2531 = vmatpush1.bf16.msra.mxu0 0
  %2532 = vmatprep.subr.bf16.mxu0 0
  %2533 = vmatpush1.bf16.msra.mxu0 0
  %2534 = vmatprep.subr.bf16.mxu0 0
  %2535 = vmatpush1.bf16.msra.mxu0 0
  %2536 = vmatprep.subr.bf16.mxu0 0
  %2537 = vmatpush1.bf16.msra.mxu0 0
  %2538 = vmatprep.subr.bf16.mxu0 0
  %2539 = vmatpush1.bf16.msra.mxu0 0
  %2540 = vmatprep.subr.bf16.mxu0 0
  %2541 = vmatpush1.bf16.msra.mxu0 0
  %2542 = vmatprep.subr.bf16.mxu0 0
  %2543 = vmatpush1.bf16.msra.mxu0 0
  %2544 = vmatprep.subr.bf16.mxu0 0
  %2545 = vmatpush1.bf16.msra.mxu0 0
  %2546 = vmatprep.subr.bf16.mxu0 0
  %2547 = vmatpush1.bf16.msra.mxu0 0
  %2548 = vmatprep.mubr.bf16.mxu0 0
  %2549 = vmatmul.mubr.bf16.gmra.mrb[0].mxu0 %v2493
  %v2550 = vpop.f32.mrb[0].mxu0
  %v2551 = vadd.f32 0.0, %v2550
  %v2552 = vpop.f32.mrb[0].mxu0
  %v2553 = vpop.f32.mrb[0].mxu0
  %v2554 = vadd.f32 0.0, %v2553
  %v2555 = vpop.f32.mrb[0].mxu0
  %2556 = vmatprep.mubr.bf16.mxu0 0
  %2557 = vmatmul.mubr.bf16.gmra.mrb[0].mxu0 %v2496
  %v2558 = vpop.f32.mrb[0].mxu0
  %v2559 = vadd.f32 0.0, %v2558
  %v2560 = vpop.f32.mrb[0].mxu0
  %v2561 = vpop.f32.mrb[0].mxu0
  %v2562 = vadd.f32 0.0, %v2561
  %v2563 = vpop.f32.mrb[0].mxu0
  %2564 = vmatprep.mubr.bf16.mxu0 0
  %2565 = vmatmul.mubr.bf16.gmra.mrb[0].mxu0 %v2499
  %v2566 = vpop.f32.mrb[0].mxu0
  %v2567 = vadd.f32 0.0, %v2566
  %v2568 = vpop.f32.mrb[0].mxu0
  %v2569 = vpop.f32.mrb[0].mxu0
  %v2570 = vadd.f32 0.0, %v2569
  %v2571 = vpop.f32.mrb[0].mxu0
  %2572 = vmatprep.mubr.bf16.mxu0 0
  %2573 = vmatmul.mubr.bf16.gmra.mrb[0].mxu0 %v2502
  %v2574 = vpop.f32.mrb[0].mxu0
  %v2575 = vadd.f32 0.0, %v2574
  %v2576 = vpop.f32.mrb[0].mxu0
  %v2577 = vpop.f32.mrb[0].mxu0
  %v2578 = vadd.f32 0.0, %v2577
  %v2579 = vpop.f32.mrb[0].mxu0
  %2580 = vmatprep.mubr.bf16.mxu0 0
  %2581 = vmatmul.mubr.bf16.gmra.mrb[0].mxu0 %v2505
  %v2582 = vpop.f32.mrb[0].mxu0
  %v2583 = vadd.f32 0.0, %v2582
  %v2584 = vpop.f32.mrb[0].mxu0
  %v2585 = vpop.f32.mrb[0].mxu0
  %v2586 = vadd.f32 0.0, %v2585
  %v2587 = vpop.f32.mrb[0].mxu0
  %2588 = vmatprep.mubr.bf16.mxu0 0
  %2589 = vmatmul.mubr.bf16.gmra.mrb[0].mxu0 %v2508
  %v2590 = vpop.f32.mrb[0].mxu0
  %v2591 = vadd.f32 0.0, %v2590
  %v2592 = vpop.f32.mrb[0].mxu0
  %v2593 = vpop.f32.mrb[0].mxu0
  %v2594 = vadd.f32 0.0, %v2593
  %v2595 = vpop.f32.mrb[0].mxu0
  %2596 = vmatprep.mubr.bf16.mxu0 0
  %2597 = vmatmul.mubr.bf16.gmra.mrb[0].mxu0 %v2511
  %v2598 = vpop.f32.mrb[0].mxu0
  %v2599 = vadd.f32 0.0, %v2598
  %v2600 = vpop.f32.mrb[0].mxu0
  %v2601 = vpop.f32.mrb[0].mxu0
  %v2602 = vadd.f32 0.0, %v2601
  %v2603 = vpop.f32.mrb[0].mxu0
  %2604 = vmatprep.mubr.bf16.mxu0 0
  %2605 = vmatmul.mubr.bf16.gmra.mrb[0].mxu0 %v2514
  %v2606 = vpop.f32.mrb[0].mxu0
  %v2607 = vadd.f32 0.0, %v2606
  %v2608 = vpop.f32.mrb[0].mxu0
  %v2609 = vpop.f32.mrb[0].mxu0
  %v2610 = vadd.f32 0.0, %v2609
  %v2611 = vpop.f32.mrb[0].mxu0
  %2612 = vdwg.mxu0
  %v2613 = vadd.f32 %v2448, %v2551
  %v2614 = vadd.f32 %v2449, %v2554
  %v2615 = vadd.f32 %v2450, %v2559
  %v2616 = vadd.f32 %v2451, %v2562
  %v2617 = vadd.f32 %v2452, %v2567
  %v2618 = vadd.f32 %v2453, %v2570
  %v2619 = vadd.f32 %v2454, %v2575
  %v2620 = vadd.f32 %v2455, %v2578
  %v2621 = vadd.f32 %v2456, %v2583
  %v2622 = vadd.f32 %v2457, %v2586
  %v2623 = vadd.f32 %v2458, %v2591
  %v2624 = vadd.f32 %v2459, %v2594
  %v2625 = vadd.f32 %v2460, %v2599
  %v2626 = vadd.f32 %v2461, %v2602
  %v2627 = vadd.f32 %v2462, %v2607
  %v2628 = vadd.f32 %v2463, %v2610
  %vm2629 = vcmask 64512
  %v2630 = vsel %vm2629, %v2613, 0.0
  %v2631 = vsel %vm2629, %v2614, 0.0
  %v2632 = vadd.f32 %v2630, %v2631
  %v2633 = vsel %vm2629, %v2615, 0.0
  %v2634 = vadd.f32 %v2632, %v2633
  %v2635 = vsel %vm2629, %v2616, 0.0
  %v2636 = vadd.f32 %v2634, %v2635
  %v2637 = vsel %vm2629, %v2617, 0.0
  %v2638 = vadd.f32 %v2636, %v2637
  %v2639 = vsel %vm2629, %v2618, 0.0
  %v2640 = vadd.f32 %v2638, %v2639
  %v2641 = vsel %vm2629, %v2619, 0.0
  %v2642 = vadd.f32 %v2640, %v2641
  %v2643 = vsel %vm2629, %v2620, 0.0
  %v2644 = vadd.f32 %v2642, %v2643
  %v2645 = vsel %vm2629, %v2621, 0.0
  %v2646 = vadd.f32 %v2644, %v2645
  %v2647 = vsel %vm2629, %v2622, 0.0
  %v2648 = vadd.f32 %v2646, %v2647
  %v2649 = vsel %vm2629, %v2623, 0.0
  %v2650 = vadd.f32 %v2648, %v2649
  %v2651 = vsel %vm2629, %v2624, 0.0
  %v2652 = vadd.f32 %v2650, %v2651
  %v2653 = vsel %vm2629, %v2625, 0.0
  %v2654 = vadd.f32 %v2652, %v2653
  %v2655 = vsel %vm2629, %v2626, 0.0
  %v2656 = vadd.f32 %v2654, %v2655
  %v2657 = vsel %vm2629, %v2627, 0.0
  %v2658 = vadd.f32 %v2656, %v2657
  %v2659 = vsel %vm2629, %v2628, 0.0
  %v2660 = vadd.f32 %v2658, %v2659
  %v2661 = vrot.slane %v2660, 4
  %v2662 = vadd.f32 %v2660, %v2661
  %v2663 = vrot.slane %v2662, 2
  %v2664 = vadd.f32 %v2662, %v2663
  %v2665 = vrot.slane %v2664, 1
  %v2666 = vadd.f32 %v2664, %v2665
  %v2667 = vrcp.pop 128.0
  %v2668 = vmul.f32 %v2666, %v2667
  %v2669 = vsub.f32 %v2613, %v2668
  %v2670 = vsub.f32 %v2614, %v2668
  %v2671 = vsub.f32 %v2615, %v2668
  %v2672 = vsub.f32 %v2616, %v2668
  %v2673 = vsub.f32 %v2617, %v2668
  %v2674 = vsub.f32 %v2618, %v2668
  %v2675 = vsub.f32 %v2619, %v2668
  %v2676 = vsub.f32 %v2620, %v2668
  %v2677 = vsub.f32 %v2621, %v2668
  %v2678 = vsub.f32 %v2622, %v2668
  %v2679 = vsub.f32 %v2623, %v2668
  %v2680 = vsub.f32 %v2624, %v2668
  %v2681 = vsub.f32 %v2625, %v2668
  %v2682 = vsub.f32 %v2626, %v2668
  %v2683 = vsub.f32 %v2627, %v2668
  %v2684 = vsub.f32 %v2628, %v2668
  %v2685 = vmul.f32 %v2669, %v2669
  %v2686 = vmul.f32 %v2670, %v2670
  %v2687 = vmul.f32 %v2671, %v2671
  %v2688 = vmul.f32 %v2672, %v2672
  %v2689 = vmul.f32 %v2673, %v2673
  %v2690 = vmul.f32 %v2674, %v2674
  %v2691 = vmul.f32 %v2675, %v2675
  %v2692 = vmul.f32 %v2676, %v2676
  %v2693 = vmul.f32 %v2677, %v2677
  %v2694 = vmul.f32 %v2678, %v2678
  %v2695 = vmul.f32 %v2679, %v2679
  %v2696 = vmul.f32 %v2680, %v2680
  %v2697 = vmul.f32 %v2681, %v2681
  %v2698 = vmul.f32 %v2682, %v2682
  %v2699 = vmul.f32 %v2683, %v2683
  %v2700 = vmul.f32 %v2684, %v2684
  %v2701 = vsel %vm2629, %v2685, 0.0
  %v2702 = vsel %vm2629, %v2686, 0.0
  %v2703 = vadd.f32 %v2701, %v2702
  %v2704 = vsel %vm2629, %v2687, 0.0
  %v2705 = vadd.f32 %v2703, %v2704
  %v2706 = vsel %vm2629, %v2688, 0.0
  %v2707 = vadd.f32 %v2705, %v2706
  %v2708 = vsel %vm2629, %v2689, 0.0
  %v2709 = vadd.f32 %v2707, %v2708
  %v2710 = vsel %vm2629, %v2690, 0.0
  %v2711 = vadd.f32 %v2709, %v2710
  %v2712 = vsel %vm2629, %v2691, 0.0
  %v2713 = vadd.f32 %v2711, %v2712
  %v2714 = vsel %vm2629, %v2692, 0.0
  %v2715 = vadd.f32 %v2713, %v2714
  %v2716 = vsel %vm2629, %v2693, 0.0
  %v2717 = vadd.f32 %v2715, %v2716
  %v2718 = vsel %vm2629, %v2694, 0.0
  %v2719 = vadd.f32 %v2717, %v2718
  %v2720 = vsel %vm2629, %v2695, 0.0
  %v2721 = vadd.f32 %v2719, %v2720
  %v2722 = vsel %vm2629, %v2696, 0.0
  %v2723 = vadd.f32 %v2721, %v2722
  %v2724 = vsel %vm2629, %v2697, 0.0
  %v2725 = vadd.f32 %v2723, %v2724
  %v2726 = vsel %vm2629, %v2698, 0.0
  %v2727 = vadd.f32 %v2725, %v2726
  %v2728 = vsel %vm2629, %v2699, 0.0
  %v2729 = vadd.f32 %v2727, %v2728
  %v2730 = vsel %vm2629, %v2700, 0.0
  %v2731 = vadd.f32 %v2729, %v2730
  %v2732 = vrot.slane %v2731, 4
  %v2733 = vadd.f32 %v2731, %v2732
  %v2734 = vrot.slane %v2733, 2
  %v2735 = vadd.f32 %v2733, %v2734
  %v2736 = vrot.slane %v2735, 1
  %v2737 = vadd.f32 %v2735, %v2736
  %v2738 = vmul.f32 %v2737, %v2667
  %v2739 = vadd.f32 %v2738, 1e-05
  %v2740 = vrsqrt.pop %v2739
  %v2741 = vmul.f32 %v2669, %v2740
  %v2742 = vmul.f32 %v2670, %v2740
  %v2743 = vmul.f32 %v2671, %v2740
  %v2744 = vmul.f32 %v2672, %v2740
  %v2745 = vmul.f32 %v2673, %v2740
  %v2746 = vmul.f32 %v2674, %v2740
  %v2747 = vmul.f32 %v2675, %v2740
  %v2748 = vmul.f32 %v2676, %v2740
  %v2749 = vmul.f32 %v2677, %v2740
  %v2750 = vmul.f32 %v2678, %v2740
  %v2751 = vmul.f32 %v2679, %v2740
  %v2752 = vmul.f32 %v2680, %v2740
  %v2753 = vmul.f32 %v2681, %v2740
  %v2754 = vmul.f32 %v2682, %v2740
  %v2755 = vmul.f32 %v2683, %v2740
  %v2756 = vmul.f32 %v2684, %v2740
  %v2757 = vld [vmem:[%s2] sm:$0x1]
  %v2759 = vlaneseq
  %v2760 = vshrl.u32 %v2759, 7
  %v2761 = vsub.s32 0, %v2760
  %v2762 = vrot.slane %v2757, %v2761
  %v2764 = vmul.f32 %v2741, %v2762
  %v2765 = vmul.f32 %v2742, %v2762
  %v2766 = vmul.f32 %v2743, %v2762
  %v2767 = vmul.f32 %v2744, %v2762
  %v2768 = vmul.f32 %v2745, %v2762
  %v2769 = vmul.f32 %v2746, %v2762
  %v2770 = vmul.f32 %v2747, %v2762
  %v2771 = vmul.f32 %v2748, %v2762
  %v2772 = vmul.f32 %v2749, %v2762
  %v2773 = vmul.f32 %v2750, %v2762
  %v2774 = vmul.f32 %v2751, %v2762
  %v2775 = vmul.f32 %v2752, %v2762
  %v2776 = vmul.f32 %v2753, %v2762
  %v2777 = vmul.f32 %v2754, %v2762
  %v2778 = vmul.f32 %v2755, %v2762
  %v2779 = vmul.f32 %v2756, %v2762
  %v2780 = vld [vmem:[%s3] sm:$0x1]
  %v2782 = vlaneseq
  %v2783 = vshrl.u32 %v2782, 7
  %v2784 = vsub.s32 0, %v2783
  %v2785 = vrot.slane %v2780, %v2784
  %v2787 = vadd.f32 %v2764, %v2785
  %v2788 = vadd.f32 %v2765, %v2785
  %v2789 = vadd.f32 %v2766, %v2785
  %v2790 = vadd.f32 %v2767, %v2785
  %v2791 = vadd.f32 %v2768, %v2785
  %v2792 = vadd.f32 %v2769, %v2785
  %v2793 = vadd.f32 %v2770, %v2785
  %v2794 = vadd.f32 %v2771, %v2785
  %v2795 = vadd.f32 %v2772, %v2785
  %v2796 = vadd.f32 %v2773, %v2785
  %v2797 = vadd.f32 %v2774, %v2785
  %v2798 = vadd.f32 %v2775, %v2785
  %v2799 = vadd.f32 %v2776, %v2785
  %v2800 = vadd.f32 %v2777, %v2785
  %v2801 = vadd.f32 %v2778, %v2785
  %v2802 = vadd.f32 %v2779, %v2785
  %v2803 = vmax.f32 %v2787, 0.0
  %v2804 = vmax.f32 %v2788, 0.0
  %v2805 = vmax.f32 %v2789, 0.0
  %v2806 = vmax.f32 %v2790, 0.0
  %v2807 = vmax.f32 %v2791, 0.0
  %v2808 = vmax.f32 %v2792, 0.0
  %v2809 = vmax.f32 %v2793, 0.0
  %v2810 = vmax.f32 %v2794, 0.0
  %v2811 = vmax.f32 %v2795, 0.0
  %v2812 = vmax.f32 %v2796, 0.0
  %v2813 = vmax.f32 %v2797, 0.0
  %v2814 = vmax.f32 %v2798, 0.0
  %v2815 = vmax.f32 %v2799, 0.0
  %v2816 = vmax.f32 %v2800, 0.0
  %v2817 = vmax.f32 %v2801, 0.0
  %v2818 = vmax.f32 %v2802, 0.0
  %2819 = vst.msk [vmem:[%s4] sm:$0xff] %vm2629, %v2803
  %2820 = vst.msk [vmem:[%s4 + $0x8] sm:$0xff] %vm2629, %v2804
  %2821 = vst.msk [vmem:[%s4 + $0x10] sm:$0xff] %vm2629, %v2805
  %2822 = vst.msk [vmem:[%s4 + $0x18] sm:$0xff] %vm2629, %v2806
  %2823 = vst.msk [vmem:[%s4 + $0x20] sm:$0xff] %vm2629, %v2807
  %2824 = vst.msk [vmem:[%s4 + $0x28] sm:$0xff] %vm2629, %v2808
  %2825 = vst.msk [vmem:[%s4 + $0x30] sm:$0xff] %vm2629, %v2809
  %2826 = vst.msk [vmem:[%s4 + $0x38] sm:$0xff] %vm2629, %v2810
  %2827 = vst.msk [vmem:[%s4 + $0x40] sm:$0xff] %vm2629, %v2811
  %2828 = vst.msk [vmem:[%s4 + $0x48] sm:$0xff] %vm2629, %v2812
  %2829 = vst.msk [vmem:[%s4 + $0x50] sm:$0xff] %vm2629, %v2813
  %2830 = vst.msk [vmem:[%s4 + $0x58] sm:$0xff] %vm2629, %v2814
  %2831 = vst.msk [vmem:[%s4 + $0x60] sm:$0xff] %vm2629, %v2815
  %2832 = vst.msk [vmem:[%s4 + $0x68] sm:$0xff] %vm2629, %v2816
  %2833 = vst.msk [vmem:[%s4 + $0x70] sm:$0xff] %vm2629, %v2817
  %2834 = vst.msk [vmem:[%s4 + $0x78] sm:$0xff] %vm2629, %v2818
  // Predicated region
  $region18: #{tpu_custom_call.1} parent=0 // pred_check
    _
  $region19: #{tpu_custom_call.1} parent=0 // pred_check_branch
    %2836 = sbr.rel (0) target = $region21
  $region20: #{tpu_custom_call.1} parent=0 // pred_region
    _
  $region21: #{tpu_custom_call.1} parent=0 // pred_fallthru
    _
  // Predicated region
  $region22: #{tpu_custom_call.1} parent=0 // pred_check
    _
  $region23: #{tpu_custom_call.1} parent=0 // pred_check_branch
    %2838 = sbr.rel (0) target = $region25
  $region24: #{tpu_custom_call.1} parent=0 // pred_region
    _
  $region25: #{tpu_custom_call.1} parent=0 // pred_fallthru
    _

// kernel: generator_forward.6
$region0: #{generator_forward.6}
  #allocation0 [shape = 'u32[]', space=smem, size = 0x4, offset = 0x4, fixed_abs, tag = 'smem constant byte address 0x4 - core index']
  #allocation1 [shape = 'u32[144,128]{1,0:T(1,128)}', space=vmem, size = 0x12000, scoped, tag = 'internal scratch']
  %s0 = inlined_call_operand.hbm [shape: f32[2,32], index: 0, kind: input, shape index: {}]
  %s1 = inlined_call_operand.vmem [shape: f32[32,256], index: 1, kind: input, shape index: {}]
  %s2 = inlined_call_operand.vmem [shape: f32[1,256], index: 2, kind: input, shape index: {}]
  %s3 = inlined_call_operand.vmem [shape: f32[2,256], index: 3, kind: output, shape index: {}]
  %s4 = sld [smem:[#allocation0]]
  $region26: #{generator_forward.6} parent=0
    _
  %s6 = ssub.s32 1, %s4
  %s7 = scalar_select 0, %s6, %s4
  $region1: #{generator_forward.6} parent=0
    #allocation2 [shape = 'u8[1024]{0}', space=vmem, size = 0x400, scoped, tag = 'input window, operand 0, single buffered']
    #allocation3 [shape = 's32[1]{0}', space=sflag, size = 0x4, scoped, tag = 'scoped memory for generator_forward.6']
    %8 = vsyncpa [#allocation3], 0
    // Predicated region
    $region2: #{generator_forward.6} parent=1 // pred_check
      _
    $region3: #{generator_forward.6} parent=1 // pred_check_branch
      %10 = sbr.rel (0) target = $region5
    $region4: #{generator_forward.6} parent=1 // pred_region
      %s12 = ssub.s32 32, 32
      %13 = vsyncadd [#allocation3], %s12
      %s15 = sshll.u32 [#allocation2], 4
      %s16 = int_to_ptr.vmem [resolvable:$true] %s15
      %18 = dma.hbm_to_vmem [thread:$0]  %s0, 32, %s16, [#allocation3]
    $region5: #{generator_forward.6} parent=1 // pred_fallthru
      _
    // Predicated region
    $region6: #{generator_forward.6} parent=1 // pred_check
      _
    $region7: #{generator_forward.6} parent=1 // pred_check_branch
      %20 = sbr.rel (0) target = $region9
    $region8: #{generator_forward.6} parent=1 // pred_region
      _
    $region9: #{generator_forward.6} parent=1 // pred_fallthru
      _
    // Predicated region
    $region10: #{generator_forward.6} parent=1 // pred_check
      _
    $region11: #{generator_forward.6} parent=1 // pred_check_branch
      %22 = sbr.rel (0) target = $region13
    $region12: #{generator_forward.6} parent=1 // pred_region
      _
    $region13: #{generator_forward.6} parent=1 // pred_fallthru
      _
    // Predicated region
    $region14: #{generator_forward.6} parent=1 // pred_check
      _
    $region15: #{generator_forward.6} parent=1 // pred_check_branch
      %24 = sbr.rel (0) target = $region17
    $region16: #{generator_forward.6} parent=1 // pred_region
      %25 = dma.done [#allocation3], 32
    $region17: #{generator_forward.6} parent=1 // pred_fallthru
      _
    %v27 = vld [vmem:[#allocation2] sm:$0x3]
    %v28 = vpack.c.bf16 %v27, %v27
    %v29 = vld [vmem:[%s1] sm:$0xff]
    %v30 = vld [vmem:[%s1 + $0x8] sm:$0xff]
    %v31 = vld [vmem:[%s1 + $0x10] sm:$0xff]
    %v32 = vld [vmem:[%s1 + $0x18] sm:$0xff]
    %v33 = vld [vmem:[%s1 + $0x20] sm:$0xff]
    %v34 = vld [vmem:[%s1 + $0x28] sm:$0xff]
    %v35 = vld [vmem:[%s1 + $0x30] sm:$0xff]
    %v36 = vld [vmem:[%s1 + $0x38] sm:$0xff]
    %v37 = vpack.c.bf16 %v31, %v29
    %v38 = vpack.c.bf16 %v32, %v30
    %v39 = vpack.c.bf16 %v35, %v33
    %v40 = vpack.c.bf16 %v36, %v34
    %v41 = vld [vmem:[%s2] sm:$0x3]
    %v43 = vlaneseq
    %v44 = vshrl.u32 %v43, 7
    %v45 = vsub.s32 0, %v44
    %v46 = vrot.slane %v41, %v45
    %v47 = vlaneseq
    %v48 = vshrl.u32 %v47, 7
    %v49 = vsub.s32 1, %v48
    %v50 = vrot.slane %v41, %v49
    %vm53 = vcmask 261120
    %v55 = vsel %vm53, %v28, 0
    %57 = vmatprep.subr.bf16.mxu0 %v38
    %58 = vmatpush1.bf16.msra.mxu0 %v37
    %59 = vmatprep.subr.bf16.mxu0 %v40
    %60 = vmatpush1.bf16.msra.mxu0 %v39
    %61 = vmatprep.subr.bf16.mxu0 0
    %62 = vmatpush1.bf16.msra.mxu0 0
    %63 = vmatprep.subr.bf16.mxu0 0
    %64 = vmatpush1.bf16.msra.mxu0 0
    %65 = vmatprep.subr.bf16.mxu0 0
    %66 = vmatpush1.bf16.msra.mxu0 0
    %67 = vmatprep.subr.bf16.mxu0 0
    %68 = vmatpush1.bf16.msra.mxu0 0
    %69 = vmatprep.subr.bf16.mxu0 0
    %70 = vmatpush1.bf16.msra.mxu0 0
    %71 = vmatprep.subr.bf16.mxu0 0
    %72 = vmatpush1.bf16.msra.mxu0 0
    %73 = vmatprep.subr.bf16.mxu0 0
    %74 = vmatpush1.bf16.msra.mxu0 0
    %75 = vmatprep.subr.bf16.mxu0 0
    %76 = vmatpush1.bf16.msra.mxu0 0
    %77 = vmatprep.subr.bf16.mxu0 0
    %78 = vmatpush1.bf16.msra.mxu0 0
    %79 = vmatprep.subr.bf16.mxu0 0
    %80 = vmatpush1.bf16.msra.mxu0 0
    %81 = vmatprep.subr.bf16.mxu0 0
    %82 = vmatpush1.bf16.msra.mxu0 0
    %83 = vmatprep.subr.bf16.mxu0 0
    %84 = vmatpush1.bf16.msra.mxu0 0
    %85 = vmatprep.subr.bf16.mxu0 0
    %86 = vmatpush1.bf16.msra.mxu0 0
    %87 = vmatprep.subr.bf16.mxu0 0
    %88 = vmatpush1.bf16.msra.mxu0 0
    %89 = vmatprep.mubr.bf16.mxu0 0
    %90 = vmatmul.mubr.bf16.gmra.mrb[0].mxu0 %v55
    %v91 = vpop.f32.mrb[0].mxu0
    %v92 = vadd.f32 %v46, %v91
    %v93 = vpop.f32.mrb[0].mxu0
    %v94 = vadd.f32 %v50, %v93
    %v95 = vpop.f32.mrb[0].mxu0
    %v96 = vpop.f32.mrb[0].mxu0
    %97 = vdwg.mxu0
    %v100 = vcombine.low %v92, %v94
    %v102 = vunpack.c.l.s4 1983009808
    %v103 = vunpack.c.0.s8 %v102
    %v104 = vlaneseq
    %v105 = vshrl.u32 %v104, 7
    %v106 = vsub.s32 %v103, %v105
    %v107 = vrot.slane %v100, %v106
    %109 = vst [vmem:[%s3] sm:$0xf] %v107
    // Predicated region
    $region18: #{generator_forward.6} parent=1 // pred_check
      _
    $region19: #{generator_forward.6} parent=1 // pred_check_branch
      %111 = sbr.rel (0) target = $region21
    $region20: #{generator_forward.6} parent=1 // pred_region
      _
    $region21: #{generator_forward.6} parent=1 // pred_fallthru
      _
    // Predicated region
    $region22: #{generator_forward.6} parent=1 // pred_check
      _
    $region23: #{generator_forward.6} parent=1 // pred_check_branch
      %113 = sbr.rel (0) target = $region25
    $region24: #{generator_forward.6} parent=1 // pred_region
      _
    $region25: #{generator_forward.6} parent=1 // pred_fallthru
      _
    %114 = vsyncpa [#allocation3], 1

// kernel: generator_forward.7
$region0: #{generator_forward.7}
  #allocation0 [shape = 'u32[]', space=smem, size = 0x4, offset = 0x4, fixed_abs, tag = 'smem constant byte address 0x4 - core index']
  #allocation1 [shape = 'u32[144,128]{1,0:T(1,128)}', space=vmem, size = 0x12000, scoped, tag = 'internal scratch']
  %s0 = inlined_call_operand.vmem [shape: f32[8,64], index: 0, kind: input, shape index: {}]
  %s1 = inlined_call_operand.hbm [shape: f32[1,64], index: 1, kind: input, shape index: {}]
  %s2 = inlined_call_operand.hbm [shape: f32[1,64], index: 2, kind: input, shape index: {}]
  %s3 = inlined_call_operand.vmem [shape: f32[8,64], index: 3, kind: output, shape index: {}]
  %s4 = sld [smem:[#allocation0]]
  $region30: #{generator_forward.7} parent=0
    _
  %s6 = ssub.s32 1, %s4
  %s7 = scalar_select 0, %s6, %s4
  $region1: #{generator_forward.7} parent=0
    #allocation2 [shape = 'u8[512]{0}', space=vmem, size = 0x400, scoped, tag = 'input window, operand 1, single buffered']
    #allocation3 [shape = 's32[1]{0}', space=sflag, size = 0x4, scoped, tag = 'scoped memory for generator_forward.7']
    #allocation4 [shape = 'u8[512]{0}', space=vmem, size = 0x400, scoped, tag = 'input window, operand 2, single buffered']
    #allocation5 [shape = 's32[1]{0}', space=sflag, size = 0x4, scoped, tag = 'scoped memory for generator_forward.7']
    %8 = vsyncpa [#allocation3], 0
    %9 = vsyncpa [#allocation5], 0
    // Predicated region
    $region2: #{generator_forward.7} parent=1 // pred_check
      _
    $region3: #{generator_forward.7} parent=1 // pred_check_branch
      %11 = sbr.rel (0) target = $region5
    $region4: #{generator_forward.7} parent=1 // pred_region
      _
    $region5: #{generator_forward.7} parent=1 // pred_fallthru
      _
    // Predicated region
    $region6: #{generator_forward.7} parent=1 // pred_check
      _
    $region7: #{generator_forward.7} parent=1 // pred_check_branch
      %13 = sbr.rel (0) target = $region9
    $region8: #{generator_forward.7} parent=1 // pred_region
      %s15 = ssub.s32 16, 16
      %16 = vsyncadd [#allocation3], %s15
      %s18 = sshll.u32 [#allocation2], 4
      %s19 = int_to_ptr.vmem [resolvable:$true] %s18
      %21 = dma.hbm_to_vmem [thread:$0]  %s1, 16, %s19, [#allocation3]
    $region9: #{generator_forward.7} parent=1 // pred_fallthru
      _
    // Predicated region
    $region10: #{generator_forward.7} parent=1 // pred_check
      _
    $region11: #{generator_forward.7} parent=1 // pred_check_branch
      %23 = sbr.rel (0) target = $region13
    $region12: #{generator_forward.7} parent=1 // pred_region
      %s25 = ssub.s32 16, 16
      %26 = vsyncadd [#allocation5], %s25
      %s28 = sshll.u32 [#allocation4], 4
      %s29 = int_to_ptr.vmem [resolvable:$true] %s28
      %31 = dma.hbm_to_vmem [thread:$0]  %s2, 16, %s29, [#allocation5]
    $region13: #{generator_forward.7} parent=1 // pred_fallthru
      _
    // Predicated region
    $region14: #{generator_forward.7} parent=1 // pred_check
      _
    $region15: #{generator_forward.7} parent=1 // pred_check_branch
      %33 = sbr.rel (0) target = $region17
    $region16: #{generator_forward.7} parent=1 // pred_region
      %34 = dma.done [#allocation3], 16
    $region17: #{generator_forward.7} parent=1 // pred_fallthru
      _
    // Predicated region
    $region18: #{generator_forward.7} parent=1 // pred_check
      _
    $region19: #{generator_forward.7} parent=1 // pred_check_branch
      %36 = sbr.rel (0) target = $region21
    $region20: #{generator_forward.7} parent=1 // pred_region
      %37 = dma.done [#allocation5], 16
    $region21: #{generator_forward.7} parent=1 // pred_fallthru
      _
    %v38 = vld [vmem:[%s0] sm:$0xff]
    %vm39 = vcmask 523264
    %v40 = vsel %vm39, %v38, 0.0
    %v41 = vrot.slane %v40, 4
    %v42 = vadd.f32 %v40, %v41
    %v43 = vrot.slane %v42, 2
    %v44 = vadd.f32 %v42, %v43
    %v45 = vrot.slane %v44, 1
    %v46 = vadd.f32 %v44, %v45
    %v47 = vrcp.pop 8.0
    %v48 = vmul.f32 %v46, %v47
    %v49 = vsub.f32 %v38, %v48
    %v50 = vmul.f32 %v49, %v49
    %v51 = vsel %vm39, %v50, 0.0
    %v52 = vrot.slane %v51, 4
    %v53 = vadd.f32 %v51, %v52
    %v54 = vrot.slane %v53, 2
    %v55 = vadd.f32 %v53, %v54
    %v56 = vrot.slane %v55, 1
    %v57 = vadd.f32 %v55, %v56
    %v58 = vmul.f32 %v57, %v47
    %v59 = vadd.f32 %v58, 1e-05
    %v60 = vrsqrt.pop %v59
    %v61 = vmul.f32 %v49, %v60
    %v62 = vld [vmem:[#allocation2] sm:$0x1]
    %v64 = vlaneseq
    %v65 = vshrl.u32 %v64, 7
    %v66 = vsub.s32 0, %v65
    %v67 = vrot.slane %v62, %v66
    %v69 = vmul.f32 %v61, %v67
    %v70 = vld [vmem:[#allocation4] sm:$0x1]
    %v72 = vlaneseq
    %v73 = vshrl.u32 %v72, 7
    %v74 = vsub.s32 0, %v73
    %v75 = vrot.slane %v70, %v74
    %v77 = vadd.f32 %v69, %v75
    %v78 = vmax.f32 %v77, 0.0
    %79 = vst.msk [vmem:[%s3] sm:$0xff] %vm39, %v78
    // Predicated region
    $region22: #{generator_forward.7} parent=1 // pred_check
      _
    $region23: #{generator_forward.7} parent=1 // pred_check_branch
      %81 = sbr.rel (0) target = $region25
    $region24: #{generator_forward.7} parent=1 // pred_region
      _
    $region25: #{generator_forward.7} parent=1 // pred_fallthru
      _
    // Predicated region
    $region26: #{generator_forward.7} parent=1 // pred_check
      _
    $region27: #{generator_forward.7} parent=1 // pred_check_branch
      %83 = sbr.rel (0) target = $region29
    $region28: #{generator_forward.7} parent=1 // pred_region
      _
    $region29: #{generator_forward.7} parent=1 // pred_fallthru
      _
    %84 = vsyncpa [#allocation3], 1
    %85 = vsyncpa [#allocation5], 1

// kernel: generator_forward.8
$region0: #{generator_forward.8}
  #allocation0 [shape = 'u32[]', space=smem, size = 0x4, offset = 0x4, fixed_abs, tag = 'smem constant byte address 0x4 - core index']
  #allocation1 [shape = 'u32[144,128]{1,0:T(1,128)}', space=vmem, size = 0x12000, scoped, tag = 'internal scratch']
  %s0 = inlined_call_operand.vmem [shape: f32[32,1024], index: 0, kind: input, shape index: {}]
  %s1 = inlined_call_operand.vmem [shape: f32[1024,32], index: 1, kind: input, shape index: {}]
  %s2 = inlined_call_operand.hbm [shape: f32[1,32], index: 2, kind: input, shape index: {}]
  %s3 = inlined_call_operand.hbm [shape: f32[1,32], index: 3, kind: input, shape index: {}]
  %s4 = inlined_call_operand.vmem [shape: f32[32,32], index: 4, kind: output, shape index: {}]
  %s5 = sld [smem:[#allocation0]]
  $region34: #{generator_forward.8} parent=0
    _
  %s7 = ssub.s32 1, %s5
  %s8 = scalar_select 0, %s7, %s5
  $region1: #{generator_forward.8} parent=0
    #allocation2 [shape = 'u8[512]{0}', space=vmem, size = 0x400, scoped, tag = 'input window, operand 2, single buffered']
    #allocation3 [shape = 's32[1]{0}', space=sflag, size = 0x4, scoped, tag = 'scoped memory for generator_forward.8']
    #allocation4 [shape = 'u8[512]{0}', space=vmem, size = 0x400, scoped, tag = 'input window, operand 3, single buffered']
    #allocation5 [shape = 's32[1]{0}', space=sflag, size = 0x4, scoped, tag = 'scoped memory for generator_forward.8']
    %9 = vsyncpa [#allocation3], 0
    %10 = vsyncpa [#allocation5], 0
    // Predicated region
    $region2: #{generator_forward.8} parent=1 // pred_check
      _
    $region3: #{generator_forward.8} parent=1 // pred_check_branch
      %12 = sbr.rel (0) target = $region5
    $region4: #{generator_forward.8} parent=1 // pred_region
      _
    $region5: #{generator_forward.8} parent=1 // pred_fallthru
      _
    // Predicated region
    $region6: #{generator_forward.8} parent=1 // pred_check
      _
    $region7: #{generator_forward.8} parent=1 // pred_check_branch
      %14 = sbr.rel (0) target = $region9
    $region8: #{generator_forward.8} parent=1 // pred_region
      _
    $region9: #{generator_forward.8} parent=1 // pred_fallthru
      _
    // Predicated region
    $region10: #{generator_forward.8} parent=1 // pred_check
      _
    $region11: #{generator_forward.8} parent=1 // pred_check_branch
      %16 = sbr.rel (0) target = $region13
    $region12: #{generator_forward.8} parent=1 // pred_region
      %s18 = ssub.s32 16, 16
      %19 = vsyncadd [#allocation3], %s18
      %s21 = sshll.u32 [#allocation2], 4
      %s22 = int_to_ptr.vmem [resolvable:$true] %s21
      %24 = dma.hbm_to_vmem [thread:$0]  %s2, 16, %s22, [#allocation3]
    $region13: #{generator_forward.8} parent=1 // pred_fallthru
      _
    // Predicated region
    $region14: #{generator_forward.8} parent=1 // pred_check
      _
    $region15: #{generator_forward.8} parent=1 // pred_check_branch
      %26 = sbr.rel (0) target = $region17
    $region16: #{generator_forward.8} parent=1 // pred_region
      %s28 = ssub.s32 16, 16
      %29 = vsyncadd [#allocation5], %s28
      %s31 = sshll.u32 [#allocation4], 4
      %s32 = int_to_ptr.vmem [resolvable:$true] %s31
      %34 = dma.hbm_to_vmem [thread:$0]  %s3, 16, %s32, [#allocation5]
    $region17: #{generator_forward.8} parent=1 // pred_fallthru
      _
    // Predicated region
    $region18: #{generator_forward.8} parent=1 // pred_check
      _
    $region19: #{generator_forward.8} parent=1 // pred_check_branch
      %36 = sbr.rel (0) target = $region21
    $region20: #{generator_forward.8} parent=1 // pred_region
      %37 = dma.done [#allocation3], 16
    $region21: #{generator_forward.8} parent=1 // pred_fallthru
      _
    // Predicated region
    $region22: #{generator_forward.8} parent=1 // pred_check
      _
    $region23: #{generator_forward.8} parent=1 // pred_check_branch
      %39 = sbr.rel (0) target = $region25
    $region24: #{generator_forward.8} parent=1 // pred_region
      %40 = dma.done [#allocation5], 16
    $region25: #{generator_forward.8} parent=1 // pred_fallthru
      _
    %v42 = vld [vmem:[%s0] sm:$0xff]
    %v43 = vld [vmem:[%s0 + $0x8] sm:$0xff]
    %v44 = vld [vmem:[%s0 + $0x10] sm:$0xff]
    %v45 = vld [vmem:[%s0 + $0x18] sm:$0xff]
    %v46 = vld [vmem:[%s0 + $0x20] sm:$0xff]
    %v47 = vld [vmem:[%s0 + $0x28] sm:$0xff]
    %v48 = vld [vmem:[%s0 + $0x30] sm:$0xff]
    %v49 = vld [vmem:[%s0 + $0x38] sm:$0xff]
    %v50 = vld [vmem:[%s0 + $0x40] sm:$0xff]
    %v51 = vld [vmem:[%s0 + $0x48] sm:$0xff]
    %v52 = vld [vmem:[%s0 + $0x50] sm:$0xff]
    %v53 = vld [vmem:[%s0 + $0x58] sm:$0xff]
    %v54 = vld [vmem:[%s0 + $0x60] sm:$0xff]
    %v55 = vld [vmem:[%s0 + $0x68] sm:$0xff]
    %v56 = vld [vmem:[%s0 + $0x70] sm:$0xff]
    %v57 = vld [vmem:[%s0 + $0x78] sm:$0xff]
    %v58 = vld [vmem:[%s0 + $0x80] sm:$0xff]
    %v59 = vld [vmem:[%s0 + $0x88] sm:$0xff]
    %v60 = vld [vmem:[%s0 + $0x90] sm:$0xff]
    %v61 = vld [vmem:[%s0 + $0x98] sm:$0xff]
    %v62 = vld [vmem:[%s0 + $0xa0] sm:$0xff]
    %v63 = vld [vmem:[%s0 + $0xa8] sm:$0xff]
    %v64 = vld [vmem:[%s0 + $0xb0] sm:$0xff]
    %v65 = vld [vmem:[%s0 + $0xb8] sm:$0xff]
    %v66 = vld [vmem:[%s0 + $0xc0] sm:$0xff]
    %v67 = vld [vmem:[%s0 + $0xc8] sm:$0xff]
    %v68 = vld [vmem:[%s0 + $0xd0] sm:$0xff]
    %v69 = vld [vmem:[%s0 + $0xd8] sm:$0xff]
    %v70 = vld [vmem:[%s0 + $0xe0] sm:$0xff]
    %v71 = vld [vmem:[%s0 + $0xe8] sm:$0xff]
    %v72 = vld [vmem:[%s0 + $0xf0] sm:$0xff]
    %v73 = vld [vmem:[%s0 + $0xf8] sm:$0xff]
    %v74 = vpack.c.bf16 %v50, %v42
    %v75 = vpack.c.bf16 %v51, %v43
    %v76 = vpack.c.bf16 %v52, %v44
    %v77 = vpack.c.bf16 %v53, %v45
    %v78 = vpack.c.bf16 %v54, %v46
    %v79 = vpack.c.bf16 %v55, %v47
    %v80 = vpack.c.bf16 %v56, %v48
    %v81 = vpack.c.bf16 %v57, %v49
    %v82 = vpack.c.bf16 %v66, %v58
    %v83 = vpack.c.bf16 %v67, %v59
    %v84 = vpack.c.bf16 %v68, %v60
    %v85 = vpack.c.bf16 %v69, %v61
    %v86 = vpack.c.bf16 %v70, %v62
    %v87 = vpack.c.bf16 %v71, %v63
    %v88 = vpack.c.bf16 %v72, %v64
    %v89 = vpack.c.bf16 %v73, %v65
    %v90 = vld [vmem:[%s1] sm:$0xff]
    %v91 = vld [vmem:[%s1 + $0x8] sm:$0xff]
    %v92 = vld [vmem:[%s1 + $0x10] sm:$0xff]
    %v93 = vld [vmem:[%s1 + $0x18] sm:$0xff]
    %v94 = vld [vmem:[%s1 + $0x20] sm:$0xff]
    %v95 = vld [vmem:[%s1 + $0x28] sm:$0xff]
    %v96 = vld [vmem:[%s1 + $0x30] sm:$0xff]
    %v97 = vld [vmem:[%s1 + $0x38] sm:$0xff]
    %v98 = vld [vmem:[%s1 + $0x40] sm:$0xff]
    %v99 = vld [vmem:[%s1 + $0x48] sm:$0xff]
    %v100 = vld [vmem:[%s1 + $0x50] sm:$0xff]
    %v101 = vld [vmem:[%s1 + $0x58] sm:$0xff]
    %v102 = vld [vmem:[%s1 + $0x60] sm:$0xff]
    %v103 = vld [vmem:[%s1 + $0x68] sm:$0xff]
    %v104 = vld [vmem:[%s1 + $0x70] sm:$0xff]
    %v105 = vld [vmem:[%s1 + $0x78] sm:$0xff]
    %v106 = vld [vmem:[%s1 + $0x80] sm:$0xff]
    %v107 = vld [vmem:[%s1 + $0x88] sm:$0xff]
    %v108 = vld [vmem:[%s1 + $0x90] sm:$0xff]
    %v109 = vld [vmem:[%s1 + $0x98] sm:$0xff]
    %v110 = vld [vmem:[%s1 + $0xa0] sm:$0xff]
    %v111 = vld [vmem:[%s1 + $0xa8] sm:$0xff]
    %v112 = vld [vmem:[%s1 + $0xb0] sm:$0xff]
    %v113 = vld [vmem:[%s1 + $0xb8] sm:$0xff]
    %v114 = vld [vmem:[%s1 + $0xc0] sm:$0xff]
    %v115 = vld [vmem:[%s1 + $0xc8] sm:$0xff]
    %v116 = vld [vmem:[%s1 + $0xd0] sm:$0xff]
    %v117 = vld [vmem:[%s1 + $0xd8] sm:$0xff]
    %v118 = vld [vmem:[%s1 + $0xe0] sm:$0xff]
    %v119 = vld [vmem:[%s1 + $0xe8] sm:$0xff]
    %v120 = vld [vmem:[%s1 + $0xf0] sm:$0xff]
    %v121 = vld [vmem:[%s1 + $0xf8] sm:$0xff]
    %v122 = vld [vmem:[%s1 + $0x100] sm:$0xff]
    %v123 = vld [vmem:[%s1 + $0x108] sm:$0xff]
    %v124 = vld [vmem:[%s1 + $0x110] sm:$0xff]
    %v125 = vld [vmem:[%s1 + $0x118] sm:$0xff]
    %v126 = vld [vmem:[%s1 + $0x120] sm:$0xff]
    %v127 = vld [vmem:[%s1 + $0x128] sm:$0xff]
    %v128 = vld [vmem:[%s1 + $0x130] sm:$0xff]
    %v129 = vld [vmem:[%s1 + $0x138] sm:$0xff]
    %v130 = vld [vmem:[%s1 + $0x140] sm:$0xff]
    %v131 = vld [vmem:[%s1 + $0x148] sm:$0xff]
    %v132 = vld [vmem:[%s1 + $0x150] sm:$0xff]
    %v133 = vld [vmem:[%s1 + $0x158] sm:$0xff]
    %v134 = vld [vmem:[%s1 + $0x160] sm:$0xff]
    %v135 = vld [vmem:[%s1 + $0x168] sm:$0xff]
    %v136 = vld [vmem:[%s1 + $0x170] sm:$0xff]
    %v137 = vld [vmem:[%s1 + $0x178] sm:$0xff]
    %v138 = vld [vmem:[%s1 + $0x180] sm:$0xff]
    %v139 = vld [vmem:[%s1 + $0x188] sm:$0xff]
    %v140 = vld [vmem:[%s1 + $0x190] sm:$0xff]
    %v141 = vld [vmem:[%s1 + $0x198] sm:$0xff]
    %v142 = vld [vmem:[%s1 + $0x1a0] sm:$0xff]
    %v143 = vld [vmem:[%s1 + $0x1a8] sm:$0xff]
    %v144 = vld [vmem:[%s1 + $0x1b0] sm:$0xff]
    %v145 = vld [vmem:[%s1 + $0x1b8] sm:$0xff]
    %v146 = vld [vmem:[%s1 + $0x1c0] sm:$0xff]
    %v147 = vld [vmem:[%s1 + $0x1c8] sm:$0xff]
    %v148 = vld [vmem:[%s1 + $0x1d0] sm:$0xff]
    %v149 = vld [vmem:[%s1 + $0x1d8] sm:$0xff]
    %v150 = vld [vmem:[%s1 + $0x1e0] sm:$0xff]
    %v151 = vld [vmem:[%s1 + $0x1e8] sm:$0xff]
    %v152 = vld [vmem:[%s1 + $0x1f0] sm:$0xff]
    %v153 = vld [vmem:[%s1 + $0x1f8] sm:$0xff]
    %v154 = vld [vmem:[%s1 + $0x200] sm:$0xff]
    %v155 = vld [vmem:[%s1 + $0x208] sm:$0xff]
    %v156 = vld [vmem:[%s1 + $0x210] sm:$0xff]
    %v157 = vld [vmem:[%s1 + $0x218] sm:$0xff]
    %v158 = vld [vmem:[%s1 + $0x220] sm:$0xff]
    %v159 = vld [vmem:[%s1 + $0x228] sm:$0xff]
    %v160 = vld [vmem:[%s1 + $0x230] sm:$0xff]
    %v161 = vld [vmem:[%s1 + $0x238] sm:$0xff]
    %v162 = vld [vmem:[%s1 + $0x240] sm:$0xff]
    %v163 = vld [vmem:[%s1 + $0x248] sm:$0xff]
    %v164 = vld [vmem:[%s1 + $0x250] sm:$0xff]
    %v165 = vld [vmem:[%s1 + $0x258] sm:$0xff]
    %v166 = vld [vmem:[%s1 + $0x260] sm:$0xff]
    %v167 = vld [vmem:[%s1 + $0x268] sm:$0xff]
    %v168 = vld [vmem:[%s1 + $0x270] sm:$0xff]
    %v169 = vld [vmem:[%s1 + $0x278] sm:$0xff]
    %v170 = vld [vmem:[%s1 + $0x280] sm:$0xff]
    %v171 = vld [vmem:[%s1 + $0x288] sm:$0xff]
    %v172 = vld [vmem:[%s1 + $0x290] sm:$0xff]
    %v173 = vld [vmem:[%s1 + $0x298] sm:$0xff]
    %v174 = vld [vmem:[%s1 + $0x2a0] sm:$0xff]
    %v175 = vld [vmem:[%s1 + $0x2a8] sm:$0xff]
    %v176 = vld [vmem:[%s1 + $0x2b0] sm:$0xff]
    %v177 = vld [vmem:[%s1 + $0x2b8] sm:$0xff]
    %v178 = vld [vmem:[%s1 + $0x2c0] sm:$0xff]
    %v179 = vld [vmem:[%s1 + $0x2c8] sm:$0xff]
    %v180 = vld [vmem:[%s1 + $0x2d0] sm:$0xff]
    %v181 = vld [vmem:[%s1 + $0x2d8] sm:$0xff]
    %v182 = vld [vmem:[%s1 + $0x2e0] sm:$0xff]
    %v183 = vld [vmem:[%s1 + $0x2e8] sm:$0xff]
    %v184 = vld [vmem:[%s1 + $0x2f0] sm:$0xff]
    %v185 = vld [vmem:[%s1 + $0x2f8] sm:$0xff]
    %v186 = vld [vmem:[%s1 + $0x300] sm:$0xff]
    %v187 = vld [vmem:[%s1 + $0x308] sm:$0xff]
    %v188 = vld [vmem:[%s1 + $0x310] sm:$0xff]
    %v189 = vld [vmem:[%s1 + $0x318] sm:$0xff]
    %v190 = vld [vmem:[%s1 + $0x320] sm:$0xff]
    %v191 = vld [vmem:[%s1 + $0x328] sm:$0xff]
    %v192 = vld [vmem:[%s1 + $0x330] sm:$0xff]
    %v193 = vld [vmem:[%s1 + $0x338] sm:$0xff]
    %v194 = vld [vmem:[%s1 + $0x340] sm:$0xff]
    %v195 = vld [vmem:[%s1 + $0x348] sm:$0xff]
    %v196 = vld [vmem:[%s1 + $0x350] sm:$0xff]
    %v197 = vld [vmem:[%s1 + $0x358] sm:$0xff]
    %v198 = vld [vmem:[%s1 + $0x360] sm:$0xff]
    %v199 = vld [vmem:[%s1 + $0x368] sm:$0xff]
    %v200 = vld [vmem:[%s1 + $0x370] sm:$0xff]
    %v201 = vld [vmem:[%s1 + $0x378] sm:$0xff]
    %v202 = vld [vmem:[%s1 + $0x380] sm:$0xff]
    %v203 = vld [vmem:[%s1 + $0x388] sm:$0xff]
    %v204 = vld [vmem:[%s1 + $0x390] sm:$0xff]
    %v205 = vld [vmem:[%s1 + $0x398] sm:$0xff]
    %v206 = vld [vmem:[%s1 + $0x3a0] sm:$0xff]
    %v207 = vld [vmem:[%s1 + $0x3a8] sm:$0xff]
    %v208 = vld [vmem:[%s1 + $0x3b0] sm:$0xff]
    %v209 = vld [vmem:[%s1 + $0x3b8] sm:$0xff]
    %v210 = vld [vmem:[%s1 + $0x3c0] sm:$0xff]
    %v211 = vld [vmem:[%s1 + $0x3c8] sm:$0xff]
    %v212 = vld [vmem:[%s1 + $0x3d0] sm:$0xff]
    %v213 = vld [vmem:[%s1 + $0x3d8] sm:$0xff]
    %v214 = vld [vmem:[%s1 + $0x3e0] sm:$0xff]
    %v215 = vld [vmem:[%s1 + $0x3e8] sm:$0xff]
    %v216 = vld [vmem:[%s1 + $0x3f0] sm:$0xff]
    %v217 = vld [vmem:[%s1 + $0x3f8] sm:$0xff]
    %v218 = vpack.c.bf16 %v91, %v90
    %v219 = vpack.c.bf16 %v93, %v92
    %v220 = vpack.c.bf16 %v95, %v94
    %v221 = vpack.c.bf16 %v97, %v96
    %v222 = vpack.c.bf16 %v99, %v98
    %v223 = vpack.c.bf16 %v101, %v100
    %v224 = vpack.c.bf16 %v103, %v102
    %v225 = vpack.c.bf16 %v105, %v104
    %v226 = vpack.c.bf16 %v107, %v106
    %v227 = vpack.c.bf16 %v109, %v108
    %v228 = vpack.c.bf16 %v111, %v110
    %v229 = vpack.c.bf16 %v113, %v112
    %v230 = vpack.c.bf16 %v115, %v114
    %v231 = vpack.c.bf16 %v117, %v116
    %v232 = vpack.c.bf16 %v119, %v118
    %v233 = vpack.c.bf16 %v121, %v120
    %v234 = vpack.c.bf16 %v123, %v122
    %v235 = vpack.c.bf16 %v125, %v124
    %v236 = vpack.c.bf16 %v127, %v126
    %v237 = vpack.c.bf16 %v129, %v128
    %v238 = vpack.c.bf16 %v131, %v130
    %v239 = vpack.c.bf16 %v133, %v132
    %v240 = vpack.c.bf16 %v135, %v134
    %v241 = vpack.c.bf16 %v137, %v136
    %v242 = vpack.c.bf16 %v139, %v138
    %v243 = vpack.c.bf16 %v141, %v140
    %v244 = vpack.c.bf16 %v143, %v142
    %v245 = vpack.c.bf16 %v145, %v144
    %v246 = vpack.c.bf16 %v147, %v146
    %v247 = vpack.c.bf16 %v149, %v148
    %v248 = vpack.c.bf16 %v151, %v150
    %v249 = vpack.c.bf16 %v153, %v152
    %v250 = vpack.c.bf16 %v155, %v154
    %v251 = vpack.c.bf16 %v157, %v156
    %v252 = vpack.c.bf16 %v159, %v158
    %v253 = vpack.c.bf16 %v161, %v160
    %v254 = vpack.c.bf16 %v163, %v162
    %v255 = vpack.c.bf16 %v165, %v164
    %v256 = vpack.c.bf16 %v167, %v166
    %v257 = vpack.c.bf16 %v169, %v168
    %v258 = vpack.c.bf16 %v171, %v170
    %v259 = vpack.c.bf16 %v173, %v172
    %v260 = vpack.c.bf16 %v175, %v174
    %v261 = vpack.c.bf16 %v177, %v176
    %v262 = vpack.c.bf16 %v179, %v178
    %v263 = vpack.c.bf16 %v181, %v180
    %v264 = vpack.c.bf16 %v183, %v182
    %v265 = vpack.c.bf16 %v185, %v184
    %v266 = vpack.c.bf16 %v187, %v186
    %v267 = vpack.c.bf16 %v189, %v188
    %v268 = vpack.c.bf16 %v191, %v190
    %v269 = vpack.c.bf16 %v193, %v192
    %v270 = vpack.c.bf16 %v195, %v194
    %v271 = vpack.c.bf16 %v197, %v196
    %v272 = vpack.c.bf16 %v199, %v198
    %v273 = vpack.c.bf16 %v201, %v200
    %v274 = vpack.c.bf16 %v203, %v202
    %v275 = vpack.c.bf16 %v205, %v204
    %v276 = vpack.c.bf16 %v207, %v206
    %v277 = vpack.c.bf16 %v209, %v208
    %v278 = vpack.c.bf16 %v211, %v210
    %v279 = vpack.c.bf16 %v213, %v212
    %v280 = vpack.c.bf16 %v215, %v214
    %v281 = vpack.c.bf16 %v217, %v216
    %282 = vmatprep.subr.bf16.mxu0 0
    %283 = vmatpush1.bf16.msra.mxu0 %v218
    %284 = vmatprep.subr.bf16.mxu0 0
    %285 = vmatpush1.bf16.msra.mxu0 %v219
    %286 = vmatprep.subr.bf16.mxu0 0
    %287 = vmatpush1.bf16.msra.mxu0 %v220
    %288 = vmatprep.subr.bf16.mxu0 0
    %289 = vmatpush1.bf16.msra.mxu0 %v221
    %290 = vmatprep.subr.bf16.mxu0 0
    %291 = vmatpush1.bf16.msra.mxu0 %v222
    %292 = vmatprep.subr.bf16.mxu0 0
    %293 = vmatpush1.bf16.msra.mxu0 %v223
    %294 = vmatprep.subr.bf16.mxu0 0
    %295 = vmatpush1.bf16.msra.mxu0 %v224
    %296 = vmatprep.subr.bf16.mxu0 0
    %297 = vmatpush1.bf16.msra.mxu0 %v225
    %298 = vmatprep.subr.bf16.mxu0 0
    %299 = vmatpush1.bf16.msra.mxu0 %v226
    %300 = vmatprep.subr.bf16.mxu0 0
    %301 = vmatpush1.bf16.msra.mxu0 %v227
    %302 = vmatprep.subr.bf16.mxu0 0
    %303 = vmatpush1.bf16.msra.mxu0 %v228
    %304 = vmatprep.subr.bf16.mxu0 0
    %305 = vmatpush1.bf16.msra.mxu0 %v229
    %306 = vmatprep.subr.bf16.mxu0 0
    %307 = vmatpush1.bf16.msra.mxu0 %v230
    %308 = vmatprep.subr.bf16.mxu0 0
    %309 = vmatpush1.bf16.msra.mxu0 %v231
    %310 = vmatprep.subr.bf16.mxu0 0
    %311 = vmatpush1.bf16.msra.mxu0 %v232
    %312 = vmatprep.subr.bf16.mxu0 0
    %313 = vmatpush1.bf16.msra.mxu0 %v233
    %314 = vmatprep.mubr.bf16.mxu0 %v75
    %315 = vmatmul.mubr.bf16.gmra.mrb[0].mxu0 %v74
    %v316 = vpop.f32.mrb[0].mxu0
    %v317 = vadd.f32 0.0, %v316
    %v318 = vpop.f32.mrb[0].mxu0
    %v319 = vpop.f32.mrb[0].mxu0
    %v320 = vadd.f32 0.0, %v319
    %v321 = vpop.f32.mrb[0].mxu0
    %322 = vmatprep.mubr.bf16.mxu0 %v83
    %323 = vmatmul.mubr.bf16.gmra.mrb[0].mxu0 %v82
    %v324 = vpop.f32.mrb[0].mxu0
    %v325 = vadd.f32 0.0, %v324
    %v326 = vpop.f32.mrb[0].mxu0
    %v327 = vpop.f32.mrb[0].mxu0
    %v328 = vadd.f32 0.0, %v327
    %v329 = vpop.f32.mrb[0].mxu0
    %330 = vdwg.mxu0
    %331 = vmatprep.subr.bf16.mxu0 0
    %332 = vmatpush1.bf16.msra.mxu0 %v234
    %333 = vmatprep.subr.bf16.mxu0 0
    %334 = vmatpush1.bf16.msra.mxu0 %v235
    %335 = vmatprep.subr.bf16.mxu0 0
    %336 = vmatpush1.bf16.msra.mxu0 %v236
    %337 = vmatprep.subr.bf16.mxu0 0
    %338 = vmatpush1.bf16.msra.mxu0 %v237
    %339 = vmatprep.subr.bf16.mxu0 0
    %340 = vmatpush1.bf16.msra.mxu0 %v238
    %341 = vmatprep.subr.bf16.mxu0 0
    %342 = vmatpush1.bf16.msra.mxu0 %v239
    %343 = vmatprep.subr.bf16.mxu0 0
    %344 = vmatpush1.bf16.msra.mxu0 %v240
    %345 = vmatprep.subr.bf16.mxu0 0
    %346 = vmatpush1.bf16.msra.mxu0 %v241
    %347 = vmatprep.subr.bf16.mxu0 0
    %348 = vmatpush1.bf16.msra.mxu0 %v242
    %349 = vmatprep.subr.bf16.mxu0 0
    %350 = vmatpush1.bf16.msra.mxu0 %v243
    %351 = vmatprep.subr.bf16.mxu0 0
    %352 = vmatpush1.bf16.msra.mxu0 %v244
    %353 = vmatprep.subr.bf16.mxu0 0
    %354 = vmatpush1.bf16.msra.mxu0 %v245
    %355 = vmatprep.subr.bf16.mxu0 0
    %356 = vmatpush1.bf16.msra.mxu0 %v246
    %357 = vmatprep.subr.bf16.mxu0 0
    %358 = vmatpush1.bf16.msra.mxu0 %v247
    %359 = vmatprep.subr.bf16.mxu0 0
    %360 = vmatpush1.bf16.msra.mxu0 %v248
    %361 = vmatprep.subr.bf16.mxu0 0
    %362 = vmatpush1.bf16.msra.mxu0 %v249
    %363 = vmatprep.mubr.bf16.mxu0 %v77
    %364 = vmatmul.mubr.bf16.gmra.mrb[0].mxu0 %v76
    %v365 = vpop.f32.mrb[0].mxu0
    %v366 = vadd.f32 %v317, %v365
    %v367 = vpop.f32.mrb[0].mxu0
    %v368 = vpop.f32.mrb[0].mxu0
    %v369 = vadd.f32 %v320, %v368
    %v370 = vpop.f32.mrb[0].mxu0
    %371 = vmatprep.mubr.bf16.mxu0 %v85
    %372 = vmatmul.mubr.bf16.gmra.mrb[0].mxu0 %v84
    %v373 = vpop.f32.mrb[0].mxu0
    %v374 = vadd.f32 %v325, %v373
    %v375 = vpop.f32.mrb[0].mxu0
    %v376 = vpop.f32.mrb[0].mxu0
    %v377 = vadd.f32 %v328, %v376
    %v378 = vpop.f32.mrb[0].mxu0
    %379 = vdwg.mxu0
    %380 = vmatprep.subr.bf16.mxu0 0
    %381 = vmatpush1.bf16.msra.mxu0 %v250
    %382 = vmatprep.subr.bf16.mxu0 0
    %383 = vmatpush1.bf16.msra.mxu0 %v251
    %384 = vmatprep.subr.bf16.mxu0 0
    %385 = vmatpush1.bf16.msra.mxu0 %v252
    %386 = vmatprep.subr.bf16.mxu0 0
    %387 = vmatpush1.bf16.msra.mxu0 %v253
    %388 = vmatprep.subr.bf16.mxu0 0
    %389 = vmatpush1.bf16.msra.mxu0 %v254
    %390 = vmatprep.subr.bf16.mxu0 0
    %391 = vmatpush1.bf16.msra.mxu0 %v255
    %392 = vmatprep.subr.bf16.mxu0 0
    %393 = vmatpush1.bf16.msra.mxu0 %v256
    %394 = vmatprep.subr.bf16.mxu0 0
    %395 = vmatpush1.bf16.msra.mxu0 %v257
    %396 = vmatprep.subr.bf16.mxu0 0
    %397 = vmatpush1.bf16.msra.mxu0 %v258
    %398 = vmatprep.subr.bf16.mxu0 0
    %399 = vmatpush1.bf16.msra.mxu0 %v259
    %400 = vmatprep.subr.bf16.mxu0 0
    %401 = vmatpush1.bf16.msra.mxu0 %v260
    %402 = vmatprep.subr.bf16.mxu0 0
    %403 = vmatpush1.bf16.msra.mxu0 %v261
    %404 = vmatprep.subr.bf16.mxu0 0
    %405 = vmatpush1.bf16.msra.mxu0 %v262
    %406 = vmatprep.subr.bf16.mxu0 0
    %407 = vmatpush1.bf16.msra.mxu0 %v263
    %408 = vmatprep.subr.bf16.mxu0 0
    %409 = vmatpush1.bf16.msra.mxu0 %v264
    %410 = vmatprep.subr.bf16.mxu0 0
    %411 = vmatpush1.bf16.msra.mxu0 %v265
    %412 = vmatprep.mubr.bf16.mxu0 %v79
    %413 = vmatmul.mubr.bf16.gmra.mrb[0].mxu0 %v78
    %v414 = vpop.f32.mrb[0].mxu0
    %v415 = vadd.f32 %v366, %v414
    %v416 = vpop.f32.mrb[0].mxu0
    %v417 = vpop.f32.mrb[0].mxu0
    %v418 = vadd.f32 %v369, %v417
    %v419 = vpop.f32.mrb[0].mxu0
    %420 = vmatprep.mubr.bf16.mxu0 %v87
    %421 = vmatmul.mubr.bf16.gmra.mrb[0].mxu0 %v86
    %v422 = vpop.f32.mrb[0].mxu0
    %v423 = vadd.f32 %v374, %v422
    %v424 = vpop.f32.mrb[0].mxu0
    %v425 = vpop.f32.mrb[0].mxu0
    %v426 = vadd.f32 %v377, %v425
    %v427 = vpop.f32.mrb[0].mxu0
    %428 = vdwg.mxu0
    %429 = vmatprep.subr.bf16.mxu0 0
    %430 = vmatpush1.bf16.msra.mxu0 %v266
    %431 = vmatprep.subr.bf16.mxu0 0
    %432 = vmatpush1.bf16.msra.mxu0 %v267
    %433 = vmatprep.subr.bf16.mxu0 0
    %434 = vmatpush1.bf16.msra.mxu0 %v268
    %435 = vmatprep.subr.bf16.mxu0 0
    %436 = vmatpush1.bf16.msra.mxu0 %v269
    %437 = vmatprep.subr.bf16.mxu0 0
    %438 = vmatpush1.bf16.msra.mxu0 %v270
    %439 = vmatprep.subr.bf16.mxu0 0
    %440 = vmatpush1.bf16.msra.mxu0 %v271
    %441 = vmatprep.subr.bf16.mxu0 0
    %442 = vmatpush1.bf16.msra.mxu0 %v272
    %443 = vmatprep.subr.bf16.mxu0 0
    %444 = vmatpush1.bf16.msra.mxu0 %v273
    %445 = vmatprep.subr.bf16.mxu0 0
    %446 = vmatpush1.bf16.msra.mxu0 %v274
    %447 = vmatprep.subr.bf16.mxu0 0
    %448 = vmatpush1.bf16.msra.mxu0 %v275
    %449 = vmatprep.subr.bf16.mxu0 0
    %450 = vmatpush1.bf16.msra.mxu0 %v276
    %451 = vmatprep.subr.bf16.mxu0 0
    %452 = vmatpush1.bf16.msra.mxu0 %v277
    %453 = vmatprep.subr.bf16.mxu0 0
    %454 = vmatpush1.bf16.msra.mxu0 %v278
    %455 = vmatprep.subr.bf16.mxu0 0
    %456 = vmatpush1.bf16.msra.mxu0 %v279
    %457 = vmatprep.subr.bf16.mxu0 0
    %458 = vmatpush1.bf16.msra.mxu0 %v280
    %459 = vmatprep.subr.bf16.mxu0 0
    %460 = vmatpush1.bf16.msra.mxu0 %v281
    %461 = vmatprep.mubr.bf16.mxu0 %v81
    %462 = vmatmul.mubr.bf16.gmra.mrb[0].mxu0 %v80
    %v463 = vpop.f32.mrb[0].mxu0
    %v464 = vadd.f32 %v415, %v463
    %v465 = vpop.f32.mrb[0].mxu0
    %v466 = vpop.f32.mrb[0].mxu0
    %v467 = vadd.f32 %v418, %v466
    %v468 = vpop.f32.mrb[0].mxu0
    %469 = vmatprep.mubr.bf16.mxu0 %v89
    %470 = vmatmul.mubr.bf16.gmra.mrb[0].mxu0 %v88
    %v471 = vpop.f32.mrb[0].mxu0
    %v472 = vadd.f32 %v423, %v471
    %v473 = vpop.f32.mrb[0].mxu0
    %v474 = vpop.f32.mrb[0].mxu0
    %v475 = vadd.f32 %v426, %v474
    %v476 = vpop.f32.mrb[0].mxu0
    %477 = vdwg.mxu0
    %vm478 = vcmask 261120
    %v479 = vsel %vm478, %v464, 0.0
    %v480 = vsel %vm478, %v467, 0.0
    %v481 = vadd.f32 %v479, %v480
    %v482 = vsel %vm478, %v472, 0.0
    %v483 = vadd.f32 %v481, %v482
    %v484 = vsel %vm478, %v475, 0.0
    %v485 = vadd.f32 %v483, %v484
    %v486 = vrot.slane %v485, 4
    %v487 = vadd.f32 %v485, %v486
    %v488 = vrot.slane %v487, 2
    %v489 = vadd.f32 %v487, %v488
    %v490 = vrot.slane %v489, 1
    %v491 = vadd.f32 %v489, %v490
    %v492 = vrcp.pop 32.0
    %v493 = vmul.f32 %v491, %v492
    %v494 = vsub.f32 %v464, %v493
    %v495 = vsub.f32 %v467, %v493
    %v496 = vsub.f32 %v472, %v493
    %v497 = vsub.f32 %v475, %v493
    %v498 = vmul.f32 %v494, %v494
    %v499 = vmul.f32 %v495, %v495
    %v500 = vmul.f32 %v496, %v496
    %v501 = vmul.f32 %v497, %v497
    %v502 = vsel %vm478, %v498, 0.0
    %v503 = vsel %vm478, %v499, 0.0
    %v504 = vadd.f32 %v502, %v503
    %v505 = vsel %vm478, %v500, 0.0
    %v506 = vadd.f32 %v504, %v505
    %v507 = vsel %vm478, %v501, 0.0
    %v508 = vadd.f32 %v506, %v507
    %v509 = vrot.slane %v508, 4
    %v510 = vadd.f32 %v508, %v509
    %v511 = vrot.slane %v510, 2
    %v512 = vadd.f32 %v510, %v511
    %v513 = vrot.slane %v512, 1
    %v514 = vadd.f32 %v512, %v513
    %v515 = vmul.f32 %v514, %v492
    %v516 = vadd.f32 %v515, 1e-05
    %v517 = vrsqrt.pop %v516
    %v518 = vmul.f32 %v494, %v517
    %v519 = vmul.f32 %v495, %v517
    %v520 = vmul.f32 %v496, %v517
    %v521 = vmul.f32 %v497, %v517
    %v522 = vld [vmem:[#allocation2] sm:$0x1]
    %v524 = vlaneseq
    %v525 = vshrl.u32 %v524, 7
    %v526 = vsub.s32 0, %v525
    %v527 = vrot.slane %v522, %v526
    %v529 = vmul.f32 %v518, %v527
    %v530 = vmul.f32 %v519, %v527
    %v531 = vmul.f32 %v520, %v527
    %v532 = vmul.f32 %v521, %v527
    %v533 = vld [vmem:[#allocation4] sm:$0x1]
    %v535 = vlaneseq
    %v536 = vshrl.u32 %v535, 7
    %v537 = vsub.s32 0, %v536
    %v538 = vrot.slane %v533, %v537
    %v540 = vadd.f32 %v529, %v538
    %v541 = vadd.f32 %v530, %v538
    %v542 = vadd.f32 %v531, %v538
    %v543 = vadd.f32 %v532, %v538
    %v544 = vmax.f32 %v540, 0.0
    %v545 = vmax.f32 %v541, 0.0
    %v546 = vmax.f32 %v542, 0.0
    %v547 = vmax.f32 %v543, 0.0
    %548 = vst.msk [vmem:[%s4] sm:$0xff] %vm478, %v544
    %549 = vst.msk [vmem:[%s4 + $0x8] sm:$0xff] %vm478, %v545
    %550 = vst.msk [vmem:[%s4 + $0x10] sm:$0xff] %vm478, %v546
    %551 = vst.msk [vmem:[%s4 + $0x18] sm:$0xff] %vm478, %v547
    // Predicated region
    $region26: #{generator_forward.8} parent=1 // pred_check
      _
    $region27: #{generator_forward.8} parent=1 // pred_check_branch
      %553 = sbr.rel (0) target = $region29
    $region28: #{generator_forward.8} parent=1 // pred_region
      _
    $region29: #{generator_forward.8} parent=1 // pred_fallthru
      _
    // Predicated region
    $region30: #{generator_forward.8} parent=1 // pred_check
      _
    $region31: #{generator_forward.8} parent=1 // pred_check_branch
      %555 = sbr.rel (0) target = $region33
    $region32: #{generator_forward.8} parent=1 // pred_region
      _
    $region33: #{generator_forward.8} parent=1 // pred_fallthru
      _
    %556 = vsyncpa [#allocation3], 1
    %557 = vsyncpa [#allocation5], 1

// kernel: generator_forward.9
$region0: #{generator_forward.9}
  #allocation0 [shape = 'u32[]', space=smem, size = 0x4, offset = 0x4, fixed_abs, tag = 'smem constant byte address 0x4 - core index']
  #allocation1 [shape = 'u32[144,128]{1,0:T(1,128)}', space=vmem, size = 0x12000, scoped, tag = 'internal scratch']
  %s0 = inlined_call_operand.vmem [shape: f32[128,512], index: 0, kind: input, shape index: {}]
  %s1 = inlined_call_operand.vmem [shape: f32[512,16], index: 1, kind: input, shape index: {}]
  %s2 = inlined_call_operand.vmem [shape: f32[1,16], index: 2, kind: input, shape index: {}]
  %s3 = inlined_call_operand.vmem [shape: f32[1,16], index: 3, kind: input, shape index: {}]
  %s4 = inlined_call_operand.vmem [shape: f32[128,16], index: 4, kind: output, shape index: {}]
  %s5 = sld [smem:[#allocation0]]
  $region26: #{generator_forward.9} parent=0
    _
  %s7 = ssub.s32 1, %s5
  %s8 = scalar_select 0, %s7, %s5
  // Predicated region
  $region2: #{generator_forward.9} parent=0 // pred_check
    _
  $region3: #{generator_forward.9} parent=0 // pred_check_branch
    %10 = sbr.rel (0) target = $region5
  $region4: #{generator_forward.9} parent=0 // pred_region
    _
  $region5: #{generator_forward.9} parent=0 // pred_fallthru
    _
  // Predicated region
  $region6: #{generator_forward.9} parent=0 // pred_check
    _
  $region7: #{generator_forward.9} parent=0 // pred_check_branch
    %12 = sbr.rel (0) target = $region9
  $region8: #{generator_forward.9} parent=0 // pred_region
    _
  $region9: #{generator_forward.9} parent=0 // pred_fallthru
    _
  // Predicated region
  $region10: #{generator_forward.9} parent=0 // pred_check
    _
  $region11: #{generator_forward.9} parent=0 // pred_check_branch
    %14 = sbr.rel (0) target = $region13
  $region12: #{generator_forward.9} parent=0 // pred_region
    _
  $region13: #{generator_forward.9} parent=0 // pred_fallthru
    _
  // Predicated region
  $region14: #{generator_forward.9} parent=0 // pred_check
    _
  $region15: #{generator_forward.9} parent=0 // pred_check_branch
    %16 = sbr.rel (0) target = $region17
  $region16: #{generator_forward.9} parent=0 // pred_region
    _
  $region17: #{generator_forward.9} parent=0 // pred_fallthru
    _
  %v18 = vld [vmem:[%s0] sm:$0xff]
  %v19 = vld [vmem:[%s0 + $0x8] sm:$0xff]
  %v20 = vld [vmem:[%s0 + $0x10] sm:$0xff]
  %v21 = vld [vmem:[%s0 + $0x18] sm:$0xff]
  %v22 = vld [vmem:[%s0 + $0x20] sm:$0xff]
  %v23 = vld [vmem:[%s0 + $0x28] sm:$0xff]
  %v24 = vld [vmem:[%s0 + $0x30] sm:$0xff]
  %v25 = vld [vmem:[%s0 + $0x38] sm:$0xff]
  %v26 = vld [vmem:[%s0 + $0x40] sm:$0xff]
  %v27 = vld [vmem:[%s0 + $0x48] sm:$0xff]
  %v28 = vld [vmem:[%s0 + $0x50] sm:$0xff]
  %v29 = vld [vmem:[%s0 + $0x58] sm:$0xff]
  %v30 = vld [vmem:[%s0 + $0x60] sm:$0xff]
  %v31 = vld [vmem:[%s0 + $0x68] sm:$0xff]
  %v32 = vld [vmem:[%s0 + $0x70] sm:$0xff]
  %v33 = vld [vmem:[%s0 + $0x78] sm:$0xff]
  %v34 = vld [vmem:[%s0 + $0x80] sm:$0xff]
  %v35 = vld [vmem:[%s0 + $0x88] sm:$0xff]
  %v36 = vld [vmem:[%s0 + $0x90] sm:$0xff]
  %v37 = vld [vmem:[%s0 + $0x98] sm:$0xff]
  %v38 = vld [vmem:[%s0 + $0xa0] sm:$0xff]
  %v39 = vld [vmem:[%s0 + $0xa8] sm:$0xff]
  %v40 = vld [vmem:[%s0 + $0xb0] sm:$0xff]
  %v41 = vld [vmem:[%s0 + $0xb8] sm:$0xff]
  %v42 = vld [vmem:[%s0 + $0xc0] sm:$0xff]
  %v43 = vld [vmem:[%s0 + $0xc8] sm:$0xff]
  %v44 = vld [vmem:[%s0 + $0xd0] sm:$0xff]
  %v45 = vld [vmem:[%s0 + $0xd8] sm:$0xff]
  %v46 = vld [vmem:[%s0 + $0xe0] sm:$0xff]
  %v47 = vld [vmem:[%s0 + $0xe8] sm:$0xff]
  %v48 = vld [vmem:[%s0 + $0xf0] sm:$0xff]
  %v49 = vld [vmem:[%s0 + $0xf8] sm:$0xff]
  %v50 = vld [vmem:[%s0 + $0x100] sm:$0xff]
  %v51 = vld [vmem:[%s0 + $0x108] sm:$0xff]
  %v52 = vld [vmem:[%s0 + $0x110] sm:$0xff]
  %v53 = vld [vmem:[%s0 + $0x118] sm:$0xff]
  %v54 = vld [vmem:[%s0 + $0x120] sm:$0xff]
  %v55 = vld [vmem:[%s0 + $0x128] sm:$0xff]
  %v56 = vld [vmem:[%s0 + $0x130] sm:$0xff]
  %v57 = vld [vmem:[%s0 + $0x138] sm:$0xff]
  %v58 = vld [vmem:[%s0 + $0x140] sm:$0xff]
  %v59 = vld [vmem:[%s0 + $0x148] sm:$0xff]
  %v60 = vld [vmem:[%s0 + $0x150] sm:$0xff]
  %v61 = vld [vmem:[%s0 + $0x158] sm:$0xff]
  %v62 = vld [vmem:[%s0 + $0x160] sm:$0xff]
  %v63 = vld [vmem:[%s0 + $0x168] sm:$0xff]
  %v64 = vld [vmem:[%s0 + $0x170] sm:$0xff]
  %v65 = vld [vmem:[%s0 + $0x178] sm:$0xff]
  %v66 = vld [vmem:[%s0 + $0x180] sm:$0xff]
  %v67 = vld [vmem:[%s0 + $0x188] sm:$0xff]
  %v68 = vld [vmem:[%s0 + $0x190] sm:$0xff]
  %v69 = vld [vmem:[%s0 + $0x198] sm:$0xff]
  %v70 = vld [vmem:[%s0 + $0x1a0] sm:$0xff]
  %v71 = vld [vmem:[%s0 + $0x1a8] sm:$0xff]
  %v72 = vld [vmem:[%s0 + $0x1b0] sm:$0xff]
  %v73 = vld [vmem:[%s0 + $0x1b8] sm:$0xff]
  %v74 = vld [vmem:[%s0 + $0x1c0] sm:$0xff]
  %v75 = vld [vmem:[%s0 + $0x1c8] sm:$0xff]
  %v76 = vld [vmem:[%s0 + $0x1d0] sm:$0xff]
  %v77 = vld [vmem:[%s0 + $0x1d8] sm:$0xff]
  %v78 = vld [vmem:[%s0 + $0x1e0] sm:$0xff]
  %v79 = vld [vmem:[%s0 + $0x1e8] sm:$0xff]
  %v80 = vld [vmem:[%s0 + $0x1f0] sm:$0xff]
  %v81 = vld [vmem:[%s0 + $0x1f8] sm:$0xff]
  %v82 = vpack.c.bf16 %v22, %v18
  %v83 = vpack.c.bf16 %v23, %v19
  %v84 = vpack.c.bf16 %v24, %v20
  %v85 = vpack.c.bf16 %v25, %v21
  %v86 = vpack.c.bf16 %v30, %v26
  %v87 = vpack.c.bf16 %v31, %v27
  %v88 = vpack.c.bf16 %v32, %v28
  %v89 = vpack.c.bf16 %v33, %v29
  %v90 = vpack.c.bf16 %v38, %v34
  %v91 = vpack.c.bf16 %v39, %v35
  %v92 = vpack.c.bf16 %v40, %v36
  %v93 = vpack.c.bf16 %v41, %v37
  %v94 = vpack.c.bf16 %v46, %v42
  %v95 = vpack.c.bf16 %v47, %v43
  %v96 = vpack.c.bf16 %v48, %v44
  %v97 = vpack.c.bf16 %v49, %v45
  %v98 = vpack.c.bf16 %v54, %v50
  %v99 = vpack.c.bf16 %v55, %v51
  %v100 = vpack.c.bf16 %v56, %v52
  %v101 = vpack.c.bf16 %v57, %v53
  %v102 = vpack.c.bf16 %v62, %v58
  %v103 = vpack.c.bf16 %v63, %v59
  %v104 = vpack.c.bf16 %v64, %v60
  %v105 = vpack.c.bf16 %v65, %v61
  %v106 = vpack.c.bf16 %v70, %v66
  %v107 = vpack.c.bf16 %v71, %v67
  %v108 = vpack.c.bf16 %v72, %v68
  %v109 = vpack.c.bf16 %v73, %v69
  %v110 = vpack.c.bf16 %v78, %v74
  %v111 = vpack.c.bf16 %v79, %v75
  %v112 = vpack.c.bf16 %v80, %v76
  %v113 = vpack.c.bf16 %v81, %v77
  %v114 = vld [vmem:[%s1] sm:$0xff]
  %v115 = vld [vmem:[%s1 + $0x8] sm:$0xff]
  %v116 = vld [vmem:[%s1 + $0x10] sm:$0xff]
  %v117 = vld [vmem:[%s1 + $0x18] sm:$0xff]
  %v118 = vld [vmem:[%s1 + $0x20] sm:$0xff]
  %v119 = vld [vmem:[%s1 + $0x28] sm:$0xff]
  %v120 = vld [vmem:[%s1 + $0x30] sm:$0xff]
  %v121 = vld [vmem:[%s1 + $0x38] sm:$0xff]
  %v122 = vld [vmem:[%s1 + $0x40] sm:$0xff]
  %v123 = vld [vmem:[%s1 + $0x48] sm:$0xff]
  %v124 = vld [vmem:[%s1 + $0x50] sm:$0xff]
  %v125 = vld [vmem:[%s1 + $0x58] sm:$0xff]
  %v126 = vld [vmem:[%s1 + $0x60] sm:$0xff]
  %v127 = vld [vmem:[%s1 + $0x68] sm:$0xff]
  %v128 = vld [vmem:[%s1 + $0x70] sm:$0xff]
  %v129 = vld [vmem:[%s1 + $0x78] sm:$0xff]
  %v130 = vld [vmem:[%s1 + $0x80] sm:$0xff]
  %v131 = vld [vmem:[%s1 + $0x88] sm:$0xff]
  %v132 = vld [vmem:[%s1 + $0x90] sm:$0xff]
  %v133 = vld [vmem:[%s1 + $0x98] sm:$0xff]
  %v134 = vld [vmem:[%s1 + $0xa0] sm:$0xff]
  %v135 = vld [vmem:[%s1 + $0xa8] sm:$0xff]
  %v136 = vld [vmem:[%s1 + $0xb0] sm:$0xff]
  %v137 = vld [vmem:[%s1 + $0xb8] sm:$0xff]
  %v138 = vld [vmem:[%s1 + $0xc0] sm:$0xff]
  %v139 = vld [vmem:[%s1 + $0xc8] sm:$0xff]
  %v140 = vld [vmem:[%s1 + $0xd0] sm:$0xff]
  %v141 = vld [vmem:[%s1 + $0xd8] sm:$0xff]
  %v142 = vld [vmem:[%s1 + $0xe0] sm:$0xff]
  %v143 = vld [vmem:[%s1 + $0xe8] sm:$0xff]
  %v144 = vld [vmem:[%s1 + $0xf0] sm:$0xff]
  %v145 = vld [vmem:[%s1 + $0xf8] sm:$0xff]
  %v146 = vld [vmem:[%s1 + $0x100] sm:$0xff]
  %v147 = vld [vmem:[%s1 + $0x108] sm:$0xff]
  %v148 = vld [vmem:[%s1 + $0x110] sm:$0xff]
  %v149 = vld [vmem:[%s1 + $0x118] sm:$0xff]
  %v150 = vld [vmem:[%s1 + $0x120] sm:$0xff]
  %v151 = vld [vmem:[%s1 + $0x128] sm:$0xff]
  %v152 = vld [vmem:[%s1 + $0x130] sm:$0xff]
  %v153 = vld [vmem:[%s1 + $0x138] sm:$0xff]
  %v154 = vld [vmem:[%s1 + $0x140] sm:$0xff]
  %v155 = vld [vmem:[%s1 + $0x148] sm:$0xff]
  %v156 = vld [vmem:[%s1 + $0x150] sm:$0xff]
  %v157 = vld [vmem:[%s1 + $0x158] sm:$0xff]
  %v158 = vld [vmem:[%s1 + $0x160] sm:$0xff]
  %v159 = vld [vmem:[%s1 + $0x168] sm:$0xff]
  %v160 = vld [vmem:[%s1 + $0x170] sm:$0xff]
  %v161 = vld [vmem:[%s1 + $0x178] sm:$0xff]
  %v162 = vld [vmem:[%s1 + $0x180] sm:$0xff]
  %v163 = vld [vmem:[%s1 + $0x188] sm:$0xff]
  %v164 = vld [vmem:[%s1 + $0x190] sm:$0xff]
  %v165 = vld [vmem:[%s1 + $0x198] sm:$0xff]
  %v166 = vld [vmem:[%s1 + $0x1a0] sm:$0xff]
  %v167 = vld [vmem:[%s1 + $0x1a8] sm:$0xff]
  %v168 = vld [vmem:[%s1 + $0x1b0] sm:$0xff]
  %v169 = vld [vmem:[%s1 + $0x1b8] sm:$0xff]
  %v170 = vld [vmem:[%s1 + $0x1c0] sm:$0xff]
  %v171 = vld [vmem:[%s1 + $0x1c8] sm:$0xff]
  %v172 = vld [vmem:[%s1 + $0x1d0] sm:$0xff]
  %v173 = vld [vmem:[%s1 + $0x1d8] sm:$0xff]
  %v174 = vld [vmem:[%s1 + $0x1e0] sm:$0xff]
  %v175 = vld [vmem:[%s1 + $0x1e8] sm:$0xff]
  %v176 = vld [vmem:[%s1 + $0x1f0] sm:$0xff]
  %v177 = vld [vmem:[%s1 + $0x1f8] sm:$0xff]
  %v178 = vpack.c.bf16 %v115, %v114
  %v179 = vpack.c.bf16 %v117, %v116
  %v180 = vpack.c.bf16 %v119, %v118
  %v181 = vpack.c.bf16 %v121, %v120
  %v182 = vpack.c.bf16 %v123, %v122
  %v183 = vpack.c.bf16 %v125, %v124
  %v184 = vpack.c.bf16 %v127, %v126
  %v185 = vpack.c.bf16 %v129, %v128
  %v186 = vpack.c.bf16 %v131, %v130
  %v187 = vpack.c.bf16 %v133, %v132
  %v188 = vpack.c.bf16 %v135, %v134
  %v189 = vpack.c.bf16 %v137, %v136
  %v190 = vpack.c.bf16 %v139, %v138
  %v191 = vpack.c.bf16 %v141, %v140
  %v192 = vpack.c.bf16 %v143, %v142
  %v193 = vpack.c.bf16 %v145, %v144
  %v194 = vpack.c.bf16 %v147, %v146
  %v195 = vpack.c.bf16 %v149, %v148
  %v196 = vpack.c.bf16 %v151, %v150
  %v197 = vpack.c.bf16 %v153, %v152
  %v198 = vpack.c.bf16 %v155, %v154
  %v199 = vpack.c.bf16 %v157, %v156
  %v200 = vpack.c.bf16 %v159, %v158
  %v201 = vpack.c.bf16 %v161, %v160
  %v202 = vpack.c.bf16 %v163, %v162
  %v203 = vpack.c.bf16 %v165, %v164
  %v204 = vpack.c.bf16 %v167, %v166
  %v205 = vpack.c.bf16 %v169, %v168
  %v206 = vpack.c.bf16 %v171, %v170
  %v207 = vpack.c.bf16 %v173, %v172
  %v208 = vpack.c.bf16 %v175, %v174
  %v209 = vpack.c.bf16 %v177, %v176
  %210 = vmatprep.subr.bf16.mxu0 0
  %211 = vmatpush1.bf16.msra.mxu0 %v178
  %212 = vmatprep.subr.bf16.mxu0 0
  %213 = vmatpush1.bf16.msra.mxu0 %v179
  %214 = vmatprep.subr.bf16.mxu0 0
  %215 = vmatpush1.bf16.msra.mxu0 %v180
  %216 = vmatprep.subr.bf16.mxu0 0
  %217 = vmatpush1.bf16.msra.mxu0 %v181
  %218 = vmatprep.subr.bf16.mxu0 0
  %219 = vmatpush1.bf16.msra.mxu0 %v182
  %220 = vmatprep.subr.bf16.mxu0 0
  %221 = vmatpush1.bf16.msra.mxu0 %v183
  %222 = vmatprep.subr.bf16.mxu0 0
  %223 = vmatpush1.bf16.msra.mxu0 %v184
  %224 = vmatprep.subr.bf16.mxu0 0
  %225 = vmatpush1.bf16.msra.mxu0 %v185
  %226 = vmatprep.subr.bf16.mxu0 0
  %227 = vmatpush1.bf16.msra.mxu0 %v186
  %228 = vmatprep.subr.bf16.mxu0 0
  %229 = vmatpush1.bf16.msra.mxu0 %v187
  %230 = vmatprep.subr.bf16.mxu0 0
  %231 = vmatpush1.bf16.msra.mxu0 %v188
  %232 = vmatprep.subr.bf16.mxu0 0
  %233 = vmatpush1.bf16.msra.mxu0 %v189
  %234 = vmatprep.subr.bf16.mxu0 0
  %235 = vmatpush1.bf16.msra.mxu0 %v190
  %236 = vmatprep.subr.bf16.mxu0 0
  %237 = vmatpush1.bf16.msra.mxu0 %v191
  %238 = vmatprep.subr.bf16.mxu0 0
  %239 = vmatpush1.bf16.msra.mxu0 %v192
  %240 = vmatprep.subr.bf16.mxu0 0
  %241 = vmatpush1.bf16.msra.mxu0 %v193
  %242 = vmatprep.mubr.bf16.mxu0 %v83
  %243 = vmatmul.mubr.bf16.gmra.mrb[0].mxu0 %v82
  %v244 = vpop.f32.mrb[0].mxu0
  %v245 = vadd.f32 0.0, %v244
  %v246 = vpop.f32.mrb[0].mxu0
  %v247 = vpop.f32.mrb[0].mxu0
  %v248 = vadd.f32 0.0, %v247
  %v249 = vpop.f32.mrb[0].mxu0
  %250 = vmatprep.mubr.bf16.mxu0 %v87
  %251 = vmatmul.mubr.bf16.gmra.mrb[0].mxu0 %v86
  %v252 = vpop.f32.mrb[0].mxu0
  %v253 = vadd.f32 0.0, %v252
  %v254 = vpop.f32.mrb[0].mxu0
  %v255 = vpop.f32.mrb[0].mxu0
  %v256 = vadd.f32 0.0, %v255
  %v257 = vpop.f32.mrb[0].mxu0
  %258 = vmatprep.mubr.bf16.mxu0 %v91
  %259 = vmatmul.mubr.bf16.gmra.mrb[0].mxu0 %v90
  %v260 = vpop.f32.mrb[0].mxu0
  %v261 = vadd.f32 0.0, %v260
  %v262 = vpop.f32.mrb[0].mxu0
  %v263 = vpop.f32.mrb[0].mxu0
  %v264 = vadd.f32 0.0, %v263
  %v265 = vpop.f32.mrb[0].mxu0
  %266 = vmatprep.mubr.bf16.mxu0 %v95
  %267 = vmatmul.mubr.bf16.gmra.mrb[0].mxu0 %v94
  %v268 = vpop.f32.mrb[0].mxu0
  %v269 = vadd.f32 0.0, %v268
  %v270 = vpop.f32.mrb[0].mxu0
  %v271 = vpop.f32.mrb[0].mxu0
  %v272 = vadd.f32 0.0, %v271
  %v273 = vpop.f32.mrb[0].mxu0
  %274 = vmatprep.mubr.bf16.mxu0 %v99
  %275 = vmatmul.mubr.bf16.gmra.mrb[0].mxu0 %v98
  %v276 = vpop.f32.mrb[0].mxu0
  %v277 = vadd.f32 0.0, %v276
  %v278 = vpop.f32.mrb[0].mxu0
  %v279 = vpop.f32.mrb[0].mxu0
  %v280 = vadd.f32 0.0, %v279
  %v281 = vpop.f32.mrb[0].mxu0
  %282 = vmatprep.mubr.bf16.mxu0 %v103
  %283 = vmatmul.mubr.bf16.gmra.mrb[0].mxu0 %v102
  %v284 = vpop.f32.mrb[0].mxu0
  %v285 = vadd.f32 0.0, %v284
  %v286 = vpop.f32.mrb[0].mxu0
  %v287 = vpop.f32.mrb[0].mxu0
  %v288 = vadd.f32 0.0, %v287
  %v289 = vpop.f32.mrb[0].mxu0
  %290 = vmatprep.mubr.bf16.mxu0 %v107
  %291 = vmatmul.mubr.bf16.gmra.mrb[0].mxu0 %v106
  %v292 = vpop.f32.mrb[0].mxu0
  %v293 = vadd.f32 0.0, %v292
  %v294 = vpop.f32.mrb[0].mxu0
  %v295 = vpop.f32.mrb[0].mxu0
  %v296 = vadd.f32 0.0, %v295
  %v297 = vpop.f32.mrb[0].mxu0
  %298 = vmatprep.mubr.bf16.mxu0 %v111
  %299 = vmatmul.mubr.bf16.gmra.mrb[0].mxu0 %v110
  %v300 = vpop.f32.mrb[0].mxu0
  %v301 = vadd.f32 0.0, %v300
  %v302 = vpop.f32.mrb[0].mxu0
  %v303 = vpop.f32.mrb[0].mxu0
  %v304 = vadd.f32 0.0, %v303
  %v305 = vpop.f32.mrb[0].mxu0
  %306 = vdwg.mxu0
  %307 = vmatprep.subr.bf16.mxu0 0
  %308 = vmatpush1.bf16.msra.mxu0 %v194
  %309 = vmatprep.subr.bf16.mxu0 0
  %310 = vmatpush1.bf16.msra.mxu0 %v195
  %311 = vmatprep.subr.bf16.mxu0 0
  %312 = vmatpush1.bf16.msra.mxu0 %v196
  %313 = vmatprep.subr.bf16.mxu0 0
  %314 = vmatpush1.bf16.msra.mxu0 %v197
  %315 = vmatprep.subr.bf16.mxu0 0
  %316 = vmatpush1.bf16.msra.mxu0 %v198
  %317 = vmatprep.subr.bf16.mxu0 0
  %318 = vmatpush1.bf16.msra.mxu0 %v199
  %319 = vmatprep.subr.bf16.mxu0 0
  %320 = vmatpush1.bf16.msra.mxu0 %v200
  %321 = vmatprep.subr.bf16.mxu0 0
  %322 = vmatpush1.bf16.msra.mxu0 %v201
  %323 = vmatprep.subr.bf16.mxu0 0
  %324 = vmatpush1.bf16.msra.mxu0 %v202
  %325 = vmatprep.subr.bf16.mxu0 0
  %326 = vmatpush1.bf16.msra.mxu0 %v203
  %327 = vmatprep.subr.bf16.mxu0 0
  %328 = vmatpush1.bf16.msra.mxu0 %v204
  %329 = vmatprep.subr.bf16.mxu0 0
  %330 = vmatpush1.bf16.msra.mxu0 %v205
  %331 = vmatprep.subr.bf16.mxu0 0
  %332 = vmatpush1.bf16.msra.mxu0 %v206
  %333 = vmatprep.subr.bf16.mxu0 0
  %334 = vmatpush1.bf16.msra.mxu0 %v207
  %335 = vmatprep.subr.bf16.mxu0 0
  %336 = vmatpush1.bf16.msra.mxu0 %v208
  %337 = vmatprep.subr.bf16.mxu0 0
  %338 = vmatpush1.bf16.msra.mxu0 %v209
  %339 = vmatprep.mubr.bf16.mxu0 %v85
  %340 = vmatmul.mubr.bf16.gmra.mrb[0].mxu0 %v84
  %v341 = vpop.f32.mrb[0].mxu0
  %v342 = vadd.f32 %v245, %v341
  %v343 = vpop.f32.mrb[0].mxu0
  %v344 = vpop.f32.mrb[0].mxu0
  %v345 = vadd.f32 %v248, %v344
  %v346 = vpop.f32.mrb[0].mxu0
  %347 = vmatprep.mubr.bf16.mxu0 %v89
  %348 = vmatmul.mubr.bf16.gmra.mrb[0].mxu0 %v88
  %v349 = vpop.f32.mrb[0].mxu0
  %v350 = vadd.f32 %v253, %v349
  %v351 = vpop.f32.mrb[0].mxu0
  %v352 = vpop.f32.mrb[0].mxu0
  %v353 = vadd.f32 %v256, %v352
  %v354 = vpop.f32.mrb[0].mxu0
  %355 = vmatprep.mubr.bf16.mxu0 %v93
  %356 = vmatmul.mubr.bf16.gmra.mrb[0].mxu0 %v92
  %v357 = vpop.f32.mrb[0].mxu0
  %v358 = vadd.f32 %v261, %v357
  %v359 = vpop.f32.mrb[0].mxu0
  %v360 = vpop.f32.mrb[0].mxu0
  %v361 = vadd.f32 %v264, %v360
  %v362 = vpop.f32.mrb[0].mxu0
  %363 = vmatprep.mubr.bf16.mxu0 %v97
  %364 = vmatmul.mubr.bf16.gmra.mrb[0].mxu0 %v96
  %v365 = vpop.f32.mrb[0].mxu0
  %v366 = vadd.f32 %v269, %v365
  %v367 = vpop.f32.mrb[0].mxu0
  %v368 = vpop.f32.mrb[0].mxu0
  %v369 = vadd.f32 %v272, %v368
  %v370 = vpop.f32.mrb[0].mxu0
  %371 = vmatprep.mubr.bf16.mxu0 %v101
  %372 = vmatmul.mubr.bf16.gmra.mrb[0].mxu0 %v100
  %v373 = vpop.f32.mrb[0].mxu0
  %v374 = vadd.f32 %v277, %v373
  %v375 = vpop.f32.mrb[0].mxu0
  %v376 = vpop.f32.mrb[0].mxu0
  %v377 = vadd.f32 %v280, %v376
  %v378 = vpop.f32.mrb[0].mxu0
  %379 = vmatprep.mubr.bf16.mxu0 %v105
  %380 = vmatmul.mubr.bf16.gmra.mrb[0].mxu0 %v104
  %v381 = vpop.f32.mrb[0].mxu0
  %v382 = vadd.f32 %v285, %v381
  %v383 = vpop.f32.mrb[0].mxu0
  %v384 = vpop.f32.mrb[0].mxu0
  %v385 = vadd.f32 %v288, %v384
  %v386 = vpop.f32.mrb[0].mxu0
  %387 = vmatprep.mubr.bf16.mxu0 %v109
  %388 = vmatmul.mubr.bf16.gmra.mrb[0].mxu0 %v108
  %v389 = vpop.f32.mrb[0].mxu0
  %v390 = vadd.f32 %v293, %v389
  %v391 = vpop.f32.mrb[0].mxu0
  %v392 = vpop.f32.mrb[0].mxu0
  %v393 = vadd.f32 %v296, %v392
  %v394 = vpop.f32.mrb[0].mxu0
  %395 = vmatprep.mubr.bf16.mxu0 %v113
  %396 = vmatmul.mubr.bf16.gmra.mrb[0].mxu0 %v112
  %v397 = vpop.f32.mrb[0].mxu0
  %v398 = vadd.f32 %v301, %v397
  %v399 = vpop.f32.mrb[0].mxu0
  %v400 = vpop.f32.mrb[0].mxu0
  %v401 = vadd.f32 %v304, %v400
  %v402 = vpop.f32.mrb[0].mxu0
  %403 = vdwg.mxu0
  %vm404 = vcmask 130048
  %v405 = vsel %vm404, %v342, 0.0
  %v406 = vsel %vm404, %v345, 0.0
  %v407 = vadd.f32 %v405, %v406
  %v408 = vsel %vm404, %v350, 0.0
  %v409 = vadd.f32 %v407, %v408
  %v410 = vsel %vm404, %v353, 0.0
  %v411 = vadd.f32 %v409, %v410
  %v412 = vsel %vm404, %v358, 0.0
  %v413 = vadd.f32 %v411, %v412
  %v414 = vsel %vm404, %v361, 0.0
  %v415 = vadd.f32 %v413, %v414
  %v416 = vsel %vm404, %v366, 0.0
  %v417 = vadd.f32 %v415, %v416
  %v418 = vsel %vm404, %v369, 0.0
  %v419 = vadd.f32 %v417, %v418
  %v420 = vsel %vm404, %v374, 0.0
  %v421 = vadd.f32 %v419, %v420
  %v422 = vsel %vm404, %v377, 0.0
  %v423 = vadd.f32 %v421, %v422
  %v424 = vsel %vm404, %v382, 0.0
  %v425 = vadd.f32 %v423, %v424
  %v426 = vsel %vm404, %v385, 0.0
  %v427 = vadd.f32 %v425, %v426
  %v428 = vsel %vm404, %v390, 0.0
  %v429 = vadd.f32 %v427, %v428
  %v430 = vsel %vm404, %v393, 0.0
  %v431 = vadd.f32 %v429, %v430
  %v432 = vsel %vm404, %v398, 0.0
  %v433 = vadd.f32 %v431, %v432
  %v434 = vsel %vm404, %v401, 0.0
  %v435 = vadd.f32 %v433, %v434
  %v436 = vrot.slane %v435, 4
  %v437 = vadd.f32 %v435, %v436
  %v438 = vrot.slane %v437, 2
  %v439 = vadd.f32 %v437, %v438
  %v440 = vrot.slane %v439, 1
  %v441 = vadd.f32 %v439, %v440
  %v442 = vrcp.pop 128.0
  %v443 = vmul.f32 %v441, %v442
  %v444 = vsub.f32 %v342, %v443
  %v445 = vsub.f32 %v345, %v443
  %v446 = vsub.f32 %v350, %v443
  %v447 = vsub.f32 %v353, %v443
  %v448 = vsub.f32 %v358, %v443
  %v449 = vsub.f32 %v361, %v443
  %v450 = vsub.f32 %v366, %v443
  %v451 = vsub.f32 %v369, %v443
  %v452 = vsub.f32 %v374, %v443
  %v453 = vsub.f32 %v377, %v443
  %v454 = vsub.f32 %v382, %v443
  %v455 = vsub.f32 %v385, %v443
  %v456 = vsub.f32 %v390, %v443
  %v457 = vsub.f32 %v393, %v443
  %v458 = vsub.f32 %v398, %v443
  %v459 = vsub.f32 %v401, %v443
  %v460 = vmul.f32 %v444, %v444
  %v461 = vmul.f32 %v445, %v445
  %v462 = vmul.f32 %v446, %v446
  %v463 = vmul.f32 %v447, %v447
  %v464 = vmul.f32 %v448, %v448
  %v465 = vmul.f32 %v449, %v449
  %v466 = vmul.f32 %v450, %v450
  %v467 = vmul.f32 %v451, %v451
  %v468 = vmul.f32 %v452, %v452
  %v469 = vmul.f32 %v453, %v453
  %v470 = vmul.f32 %v454, %v454
  %v471 = vmul.f32 %v455, %v455
  %v472 = vmul.f32 %v456, %v456
  %v473 = vmul.f32 %v457, %v457
  %v474 = vmul.f32 %v458, %v458
  %v475 = vmul.f32 %v459, %v459
  %v476 = vsel %vm404, %v460, 0.0
  %v477 = vsel %vm404, %v461, 0.0
  %v478 = vadd.f32 %v476, %v477
  %v479 = vsel %vm404, %v462, 0.0
  %v480 = vadd.f32 %v478, %v479
  %v481 = vsel %vm404, %v463, 0.0
  %v482 = vadd.f32 %v480, %v481
  %v483 = vsel %vm404, %v464, 0.0
  %v484 = vadd.f32 %v482, %v483
  %v485 = vsel %vm404, %v465, 0.0
  %v486 = vadd.f32 %v484, %v485
  %v487 = vsel %vm404, %v466, 0.0
  %v488 = vadd.f32 %v486, %v487
  %v489 = vsel %vm404, %v467, 0.0
  %v490 = vadd.f32 %v488, %v489
  %v491 = vsel %vm404, %v468, 0.0
  %v492 = vadd.f32 %v490, %v491
  %v493 = vsel %vm404, %v469, 0.0
  %v494 = vadd.f32 %v492, %v493
  %v495 = vsel %vm404, %v470, 0.0
  %v496 = vadd.f32 %v494, %v495
  %v497 = vsel %vm404, %v471, 0.0
  %v498 = vadd.f32 %v496, %v497
  %v499 = vsel %vm404, %v472, 0.0
  %v500 = vadd.f32 %v498, %v499
  %v501 = vsel %vm404, %v473, 0.0
  %v502 = vadd.f32 %v500, %v501
  %v503 = vsel %vm404, %v474, 0.0
  %v504 = vadd.f32 %v502, %v503
  %v505 = vsel %vm404, %v475, 0.0
  %v506 = vadd.f32 %v504, %v505
  %v507 = vrot.slane %v506, 4
  %v508 = vadd.f32 %v506, %v507
  %v509 = vrot.slane %v508, 2
  %v510 = vadd.f32 %v508, %v509
  %v511 = vrot.slane %v510, 1
  %v512 = vadd.f32 %v510, %v511
  %v513 = vmul.f32 %v512, %v442
  %v514 = vadd.f32 %v513, 1e-05
  %v515 = vrsqrt.pop %v514
  %v516 = vmul.f32 %v444, %v515
  %v517 = vmul.f32 %v445, %v515
  %v518 = vmul.f32 %v446, %v515
  %v519 = vmul.f32 %v447, %v515
  %v520 = vmul.f32 %v448, %v515
  %v521 = vmul.f32 %v449, %v515
  %v522 = vmul.f32 %v450, %v515
  %v523 = vmul.f32 %v451, %v515
  %v524 = vmul.f32 %v452, %v515
  %v525 = vmul.f32 %v453, %v515
  %v526 = vmul.f32 %v454, %v515
  %v527 = vmul.f32 %v455, %v515
  %v528 = vmul.f32 %v456, %v515
  %v529 = vmul.f32 %v457, %v515
  %v530 = vmul.f32 %v458, %v515
  %v531 = vmul.f32 %v459, %v515
  %v532 = vld [vmem:[%s2] sm:$0x1]
  %v534 = vlaneseq
  %v535 = vshrl.u32 %v534, 7
  %v536 = vsub.s32 0, %v535
  %v537 = vrot.slane %v532, %v536
  %v539 = vmul.f32 %v516, %v537
  %v540 = vmul.f32 %v517, %v537
  %v541 = vmul.f32 %v518, %v537
  %v542 = vmul.f32 %v519, %v537
  %v543 = vmul.f32 %v520, %v537
  %v544 = vmul.f32 %v521, %v537
  %v545 = vmul.f32 %v522, %v537
  %v546 = vmul.f32 %v523, %v537
  %v547 = vmul.f32 %v524, %v537
  %v548 = vmul.f32 %v525, %v537
  %v549 = vmul.f32 %v526, %v537
  %v550 = vmul.f32 %v527, %v537
  %v551 = vmul.f32 %v528, %v537
  %v552 = vmul.f32 %v529, %v537
  %v553 = vmul.f32 %v530, %v537
  %v554 = vmul.f32 %v531, %v537
  %v555 = vld [vmem:[%s3] sm:$0x1]
  %v557 = vlaneseq
  %v558 = vshrl.u32 %v557, 7
  %v559 = vsub.s32 0, %v558
  %v560 = vrot.slane %v555, %v559
  %v562 = vadd.f32 %v539, %v560
  %v563 = vadd.f32 %v540, %v560
  %v564 = vadd.f32 %v541, %v560
  %v565 = vadd.f32 %v542, %v560
  %v566 = vadd.f32 %v543, %v560
  %v567 = vadd.f32 %v544, %v560
  %v568 = vadd.f32 %v545, %v560
  %v569 = vadd.f32 %v546, %v560
  %v570 = vadd.f32 %v547, %v560
  %v571 = vadd.f32 %v548, %v560
  %v572 = vadd.f32 %v549, %v560
  %v573 = vadd.f32 %v550, %v560
  %v574 = vadd.f32 %v551, %v560
  %v575 = vadd.f32 %v552, %v560
  %v576 = vadd.f32 %v553, %v560
  %v577 = vadd.f32 %v554, %v560
  %v578 = vmax.f32 %v562, 0.0
  %v579 = vmax.f32 %v563, 0.0
  %v580 = vmax.f32 %v564, 0.0
  %v581 = vmax.f32 %v565, 0.0
  %v582 = vmax.f32 %v566, 0.0
  %v583 = vmax.f32 %v567, 0.0
  %v584 = vmax.f32 %v568, 0.0
  %v585 = vmax.f32 %v569, 0.0
  %v586 = vmax.f32 %v570, 0.0
  %v587 = vmax.f32 %v571, 0.0
  %v588 = vmax.f32 %v572, 0.0
  %v589 = vmax.f32 %v573, 0.0
  %v590 = vmax.f32 %v574, 0.0
  %v591 = vmax.f32 %v575, 0.0
  %v592 = vmax.f32 %v576, 0.0
  %v593 = vmax.f32 %v577, 0.0
  %594 = vst.msk [vmem:[%s4] sm:$0xff] %vm404, %v578
  %595 = vst.msk [vmem:[%s4 + $0x8] sm:$0xff] %vm404, %v579
  %596 = vst.msk [vmem:[%s4 + $0x10] sm:$0xff] %vm404, %v580
  %597 = vst.msk [vmem:[%s4 + $0x18] sm:$0xff] %vm404, %v581
  %598 = vst.msk [vmem:[%s4 + $0x20] sm:$0xff] %vm404, %v582
  %599 = vst.msk [vmem:[%s4 + $0x28] sm:$0xff] %vm404, %v583
  %600 = vst.msk [vmem:[%s4 + $0x30] sm:$0xff] %vm404, %v584
  %601 = vst.msk [vmem:[%s4 + $0x38] sm:$0xff] %vm404, %v585
  %602 = vst.msk [vmem:[%s4 + $0x40] sm:$0xff] %vm404, %v586
  %603 = vst.msk [vmem:[%s4 + $0x48] sm:$0xff] %vm404, %v587
  %604 = vst.msk [vmem:[%s4 + $0x50] sm:$0xff] %vm404, %v588
  %605 = vst.msk [vmem:[%s4 + $0x58] sm:$0xff] %vm404, %v589
  %606 = vst.msk [vmem:[%s4 + $0x60] sm:$0xff] %vm404, %v590
  %607 = vst.msk [vmem:[%s4 + $0x68] sm:$0xff] %vm404, %v591
  %608 = vst.msk [vmem:[%s4 + $0x70] sm:$0xff] %vm404, %v592
  %609 = vst.msk [vmem:[%s4 + $0x78] sm:$0xff] %vm404, %v593
  // Predicated region
  $region18: #{generator_forward.9} parent=0 // pred_check
    _
  $region19: #{generator_forward.9} parent=0 // pred_check_branch
    %611 = sbr.rel (0) target = $region21
  $region20: #{generator_forward.9} parent=0 // pred_region
    _
  $region21: #{generator_forward.9} parent=0 // pred_fallthru
    _
  // Predicated region
  $region22: #{generator_forward.9} parent=0 // pred_check
    _
  $region23: #{generator_forward.9} parent=0 // pred_check_branch
    %613 = sbr.rel (0) target = $region25
  $region24: #{generator_forward.9} parent=0 // pred_region
    _
  $region25: #{generator_forward.9} parent=0 // pred_fallthru
    _

// kernel: generator_forward.10
$region0: #{generator_forward.10}
  #allocation0 [shape = 'u32[]', space=smem, size = 0x4, offset = 0x4, fixed_abs, tag = 'smem constant byte address 0x4 - core index']
  #allocation1 [shape = 'u32[144,128]{1,0:T(1,128)}', space=vmem, size = 0x12000, scoped, tag = 'internal scratch']
  %s0 = inlined_call_operand.vmem [shape: f32[512,256], index: 0, kind: input, shape index: {}]
  %s1 = inlined_call_operand.vmem [shape: f32[256,8], index: 1, kind: input, shape index: {}]
  %s2 = inlined_call_operand.vmem [shape: f32[1,8], index: 2, kind: input, shape index: {}]
  %s3 = inlined_call_operand.vmem [shape: f32[1,8], index: 3, kind: input, shape index: {}]
  %s4 = inlined_call_operand.vmem [shape: f32[512,8], index: 4, kind: output, shape index: {}]
  %s5 = sld [smem:[#allocation0]]
  $region26: #{generator_forward.10} parent=0
    _
  %s7 = ssub.s32 1, %s5
  %s8 = scalar_select 0, %s7, %s5
  // Predicated region
  $region2: #{generator_forward.10} parent=0 // pred_check
    _
  $region3: #{generator_forward.10} parent=0 // pred_check_branch
    %10 = sbr.rel (0) target = $region5
  $region4: #{generator_forward.10} parent=0 // pred_region
    _
  $region5: #{generator_forward.10} parent=0 // pred_fallthru
    _
  // Predicated region
  $region6: #{generator_forward.10} parent=0 // pred_check
    _
  $region7: #{generator_forward.10} parent=0 // pred_check_branch
    %12 = sbr.rel (0) target = $region9
  $region8: #{generator_forward.10} parent=0 // pred_region
    _
  $region9: #{generator_forward.10} parent=0 // pred_fallthru
    _
  // Predicated region
  $region10: #{generator_forward.10} parent=0 // pred_check
    _
  $region11: #{generator_forward.10} parent=0 // pred_check_branch
    %14 = sbr.rel (0) target = $region13
  $region12: #{generator_forward.10} parent=0 // pred_region
    _
  $region13: #{generator_forward.10} parent=0 // pred_fallthru
    _
  // Predicated region
  $region14: #{generator_forward.10} parent=0 // pred_check
    _
  $region15: #{generator_forward.10} parent=0 // pred_check_branch
    %16 = sbr.rel (0) target = $region17
  $region16: #{generator_forward.10} parent=0 // pred_region
    _
  $region17: #{generator_forward.10} parent=0 // pred_fallthru
    _
  %v18 = vld [vmem:[%s0] sm:$0xff]
  %v19 = vld [vmem:[%s0 + $0x8] sm:$0xff]
  %v20 = vld [vmem:[%s0 + $0x10] sm:$0xff]
  %v21 = vld [vmem:[%s0 + $0x18] sm:$0xff]
  %v22 = vld [vmem:[%s0 + $0x20] sm:$0xff]
  %v23 = vld [vmem:[%s0 + $0x28] sm:$0xff]
  %v24 = vld [vmem:[%s0 + $0x30] sm:$0xff]
  %v25 = vld [vmem:[%s0 + $0x38] sm:$0xff]
  %v26 = vld [vmem:[%s0 + $0x40] sm:$0xff]
  %v27 = vld [vmem:[%s0 + $0x48] sm:$0xff]
  %v28 = vld [vmem:[%s0 + $0x50] sm:$0xff]
  %v29 = vld [vmem:[%s0 + $0x58] sm:$0xff]
  %v30 = vld [vmem:[%s0 + $0x60] sm:$0xff]
  %v31 = vld [vmem:[%s0 + $0x68] sm:$0xff]
  %v32 = vld [vmem:[%s0 + $0x70] sm:$0xff]
  %v33 = vld [vmem:[%s0 + $0x78] sm:$0xff]
  %v34 = vld [vmem:[%s0 + $0x80] sm:$0xff]
  %v35 = vld [vmem:[%s0 + $0x88] sm:$0xff]
  %v36 = vld [vmem:[%s0 + $0x90] sm:$0xff]
  %v37 = vld [vmem:[%s0 + $0x98] sm:$0xff]
  %v38 = vld [vmem:[%s0 + $0xa0] sm:$0xff]
  %v39 = vld [vmem:[%s0 + $0xa8] sm:$0xff]
  %v40 = vld [vmem:[%s0 + $0xb0] sm:$0xff]
  %v41 = vld [vmem:[%s0 + $0xb8] sm:$0xff]
  %v42 = vld [vmem:[%s0 + $0xc0] sm:$0xff]
  %v43 = vld [vmem:[%s0 + $0xc8] sm:$0xff]
  %v44 = vld [vmem:[%s0 + $0xd0] sm:$0xff]
  %v45 = vld [vmem:[%s0 + $0xd8] sm:$0xff]
  %v46 = vld [vmem:[%s0 + $0xe0] sm:$0xff]
  %v47 = vld [vmem:[%s0 + $0xe8] sm:$0xff]
  %v48 = vld [vmem:[%s0 + $0xf0] sm:$0xff]
  %v49 = vld [vmem:[%s0 + $0xf8] sm:$0xff]
  %v50 = vld [vmem:[%s0 + $0x100] sm:$0xff]
  %v51 = vld [vmem:[%s0 + $0x108] sm:$0xff]
  %v52 = vld [vmem:[%s0 + $0x110] sm:$0xff]
  %v53 = vld [vmem:[%s0 + $0x118] sm:$0xff]
  %v54 = vld [vmem:[%s0 + $0x120] sm:$0xff]
  %v55 = vld [vmem:[%s0 + $0x128] sm:$0xff]
  %v56 = vld [vmem:[%s0 + $0x130] sm:$0xff]
  %v57 = vld [vmem:[%s0 + $0x138] sm:$0xff]
  %v58 = vld [vmem:[%s0 + $0x140] sm:$0xff]
  %v59 = vld [vmem:[%s0 + $0x148] sm:$0xff]
  %v60 = vld [vmem:[%s0 + $0x150] sm:$0xff]
  %v61 = vld [vmem:[%s0 + $0x158] sm:$0xff]
  %v62 = vld [vmem:[%s0 + $0x160] sm:$0xff]
  %v63 = vld [vmem:[%s0 + $0x168] sm:$0xff]
  %v64 = vld [vmem:[%s0 + $0x170] sm:$0xff]
  %v65 = vld [vmem:[%s0 + $0x178] sm:$0xff]
  %v66 = vld [vmem:[%s0 + $0x180] sm:$0xff]
  %v67 = vld [vmem:[%s0 + $0x188] sm:$0xff]
  %v68 = vld [vmem:[%s0 + $0x190] sm:$0xff]
  %v69 = vld [vmem:[%s0 + $0x198] sm:$0xff]
  %v70 = vld [vmem:[%s0 + $0x1a0] sm:$0xff]
  %v71 = vld [vmem:[%s0 + $0x1a8] sm:$0xff]
  %v72 = vld [vmem:[%s0 + $0x1b0] sm:$0xff]
  %v73 = vld [vmem:[%s0 + $0x1b8] sm:$0xff]
  %v74 = vld [vmem:[%s0 + $0x1c0] sm:$0xff]
  %v75 = vld [vmem:[%s0 + $0x1c8] sm:$0xff]
  %v76 = vld [vmem:[%s0 + $0x1d0] sm:$0xff]
  %v77 = vld [vmem:[%s0 + $0x1d8] sm:$0xff]
  %v78 = vld [vmem:[%s0 + $0x1e0] sm:$0xff]
  %v79 = vld [vmem:[%s0 + $0x1e8] sm:$0xff]
  %v80 = vld [vmem:[%s0 + $0x1f0] sm:$0xff]
  %v81 = vld [vmem:[%s0 + $0x1f8] sm:$0xff]
  %v82 = vld [vmem:[%s0 + $0x200] sm:$0xff]
  %v83 = vld [vmem:[%s0 + $0x208] sm:$0xff]
  %v84 = vld [vmem:[%s0 + $0x210] sm:$0xff]
  %v85 = vld [vmem:[%s0 + $0x218] sm:$0xff]
  %v86 = vld [vmem:[%s0 + $0x220] sm:$0xff]
  %v87 = vld [vmem:[%s0 + $0x228] sm:$0xff]
  %v88 = vld [vmem:[%s0 + $0x230] sm:$0xff]
  %v89 = vld [vmem:[%s0 + $0x238] sm:$0xff]
  %v90 = vld [vmem:[%s0 + $0x240] sm:$0xff]
  %v91 = vld [vmem:[%s0 + $0x248] sm:$0xff]
  %v92 = vld [vmem:[%s0 + $0x250] sm:$0xff]
  %v93 = vld [vmem:[%s0 + $0x258] sm:$0xff]
  %v94 = vld [vmem:[%s0 + $0x260] sm:$0xff]
  %v95 = vld [vmem:[%s0 + $0x268] sm:$0xff]
  %v96 = vld [vmem:[%s0 + $0x270] sm:$0xff]
  %v97 = vld [vmem:[%s0 + $0x278] sm:$0xff]
  %v98 = vld [vmem:[%s0 + $0x280] sm:$0xff]
  %v99 = vld [vmem:[%s0 + $0x288] sm:$0xff]
  %v100 = vld [vmem:[%s0 + $0x290] sm:$0xff]
  %v101 = vld [vmem:[%s0 + $0x298] sm:$0xff]
  %v102 = vld [vmem:[%s0 + $0x2a0] sm:$0xff]
  %v103 = vld [vmem:[%s0 + $0x2a8] sm:$0xff]
  %v104 = vld [vmem:[%s0 + $0x2b0] sm:$0xff]
  %v105 = vld [vmem:[%s0 + $0x2b8] sm:$0xff]
  %v106 = vld [vmem:[%s0 + $0x2c0] sm:$0xff]
  %v107 = vld [vmem:[%s0 + $0x2c8] sm:$0xff]
  %v108 = vld [vmem:[%s0 + $0x2d0] sm:$0xff]
  %v109 = vld [vmem:[%s0 + $0x2d8] sm:$0xff]
  %v110 = vld [vmem:[%s0 + $0x2e0] sm:$0xff]
  %v111 = vld [vmem:[%s0 + $0x2e8] sm:$0xff]
  %v112 = vld [vmem:[%s0 + $0x2f0] sm:$0xff]
  %v113 = vld [vmem:[%s0 + $0x2f8] sm:$0xff]
  %v114 = vld [vmem:[%s0 + $0x300] sm:$0xff]
  %v115 = vld [vmem:[%s0 + $0x308] sm:$0xff]
  %v116 = vld [vmem:[%s0 + $0x310] sm:$0xff]
  %v117 = vld [vmem:[%s0 + $0x318] sm:$0xff]
  %v118 = vld [vmem:[%s0 + $0x320] sm:$0xff]
  %v119 = vld [vmem:[%s0 + $0x328] sm:$0xff]
  %v120 = vld [vmem:[%s0 + $0x330] sm:$0xff]
  %v121 = vld [vmem:[%s0 + $0x338] sm:$0xff]
  %v122 = vld [vmem:[%s0 + $0x340] sm:$0xff]
  %v123 = vld [vmem:[%s0 + $0x348] sm:$0xff]
  %v124 = vld [vmem:[%s0 + $0x350] sm:$0xff]
  %v125 = vld [vmem:[%s0 + $0x358] sm:$0xff]
  %v126 = vld [vmem:[%s0 + $0x360] sm:$0xff]
  %v127 = vld [vmem:[%s0 + $0x368] sm:$0xff]
  %v128 = vld [vmem:[%s0 + $0x370] sm:$0xff]
  %v129 = vld [vmem:[%s0 + $0x378] sm:$0xff]
  %v130 = vld [vmem:[%s0 + $0x380] sm:$0xff]
  %v131 = vld [vmem:[%s0 + $0x388] sm:$0xff]
  %v132 = vld [vmem:[%s0 + $0x390] sm:$0xff]
  %v133 = vld [vmem:[%s0 + $0x398] sm:$0xff]
  %v134 = vld [vmem:[%s0 + $0x3a0] sm:$0xff]
  %v135 = vld [vmem:[%s0 + $0x3a8] sm:$0xff]
  %v136 = vld [vmem:[%s0 + $0x3b0] sm:$0xff]
  %v137 = vld [vmem:[%s0 + $0x3b8] sm:$0xff]
  %v138 = vld [vmem:[%s0 + $0x3c0] sm:$0xff]
  %v139 = vld [vmem:[%s0 + $0x3c8] sm:$0xff]
  %v140 = vld [vmem:[%s0 + $0x3d0] sm:$0xff]
  %v141 = vld [vmem:[%s0 + $0x3d8] sm:$0xff]
  %v142 = vld [vmem:[%s0 + $0x3e0] sm:$0xff]
  %v143 = vld [vmem:[%s0 + $0x3e8] sm:$0xff]
  %v144 = vld [vmem:[%s0 + $0x3f0] sm:$0xff]
  %v145 = vld [vmem:[%s0 + $0x3f8] sm:$0xff]
  %v146 = vpack.c.bf16 %v20, %v18
  %v147 = vpack.c.bf16 %v21, %v19
  %v148 = vpack.c.bf16 %v24, %v22
  %v149 = vpack.c.bf16 %v25, %v23
  %v150 = vpack.c.bf16 %v28, %v26
  %v151 = vpack.c.bf16 %v29, %v27
  %v152 = vpack.c.bf16 %v32, %v30
  %v153 = vpack.c.bf16 %v33, %v31
  %v154 = vpack.c.bf16 %v36, %v34
  %v155 = vpack.c.bf16 %v37, %v35
  %v156 = vpack.c.bf16 %v40, %v38
  %v157 = vpack.c.bf16 %v41, %v39
  %v158 = vpack.c.bf16 %v44, %v42
  %v159 = vpack.c.bf16 %v45, %v43
  %v160 = vpack.c.bf16 %v48, %v46
  %v161 = vpack.c.bf16 %v49, %v47
  %v162 = vpack.c.bf16 %v52, %v50
  %v163 = vpack.c.bf16 %v53, %v51
  %v164 = vpack.c.bf16 %v56, %v54
  %v165 = vpack.c.bf16 %v57, %v55
  %v166 = vpack.c.bf16 %v60, %v58
  %v167 = vpack.c.bf16 %v61, %v59
  %v168 = vpack.c.bf16 %v64, %v62
  %v169 = vpack.c.bf16 %v65, %v63
  %v170 = vpack.c.bf16 %v68, %v66
  %v171 = vpack.c.bf16 %v69, %v67
  %v172 = vpack.c.bf16 %v72, %v70
  %v173 = vpack.c.bf16 %v73, %v71
  %v174 = vpack.c.bf16 %v76, %v74
  %v175 = vpack.c.bf16 %v77, %v75
  %v176 = vpack.c.bf16 %v80, %v78
  %v177 = vpack.c.bf16 %v81, %v79
  %v178 = vpack.c.bf16 %v84, %v82
  %v179 = vpack.c.bf16 %v85, %v83
  %v180 = vpack.c.bf16 %v88, %v86
  %v181 = vpack.c.bf16 %v89, %v87
  %v182 = vpack.c.bf16 %v92, %v90
  %v183 = vpack.c.bf16 %v93, %v91
  %v184 = vpack.c.bf16 %v96, %v94
  %v185 = vpack.c.bf16 %v97, %v95
  %v186 = vpack.c.bf16 %v100, %v98
  %v187 = vpack.c.bf16 %v101, %v99
  %v188 = vpack.c.bf16 %v104, %v102
  %v189 = vpack.c.bf16 %v105, %v103
  %v190 = vpack.c.bf16 %v108, %v106
  %v191 = vpack.c.bf16 %v109, %v107
  %v192 = vpack.c.bf16 %v112, %v110
  %v193 = vpack.c.bf16 %v113, %v111
  %v194 = vpack.c.bf16 %v116, %v114
  %v195 = vpack.c.bf16 %v117, %v115
  %v196 = vpack.c.bf16 %v120, %v118
  %v197 = vpack.c.bf16 %v121, %v119
  %v198 = vpack.c.bf16 %v124, %v122
  %v199 = vpack.c.bf16 %v125, %v123
  %v200 = vpack.c.bf16 %v128, %v126
  %v201 = vpack.c.bf16 %v129, %v127
  %v202 = vpack.c.bf16 %v132, %v130
  %v203 = vpack.c.bf16 %v133, %v131
  %v204 = vpack.c.bf16 %v136, %v134
  %v205 = vpack.c.bf16 %v137, %v135
  %v206 = vpack.c.bf16 %v140, %v138
  %v207 = vpack.c.bf16 %v141, %v139
  %v208 = vpack.c.bf16 %v144, %v142
  %v209 = vpack.c.bf16 %v145, %v143
  %v210 = vld [vmem:[%s1] sm:$0xff]
  %v211 = vld [vmem:[%s1 + $0x8] sm:$0xff]
  %v212 = vld [vmem:[%s1 + $0x10] sm:$0xff]
  %v213 = vld [vmem:[%s1 + $0x18] sm:$0xff]
  %v214 = vld [vmem:[%s1 + $0x20] sm:$0xff]
  %v215 = vld [vmem:[%s1 + $0x28] sm:$0xff]
  %v216 = vld [vmem:[%s1 + $0x30] sm:$0xff]
  %v217 = vld [vmem:[%s1 + $0x38] sm:$0xff]
  %v218 = vld [vmem:[%s1 + $0x40] sm:$0xff]
  %v219 = vld [vmem:[%s1 + $0x48] sm:$0xff]
  %v220 = vld [vmem:[%s1 + $0x50] sm:$0xff]
  %v221 = vld [vmem:[%s1 + $0x58] sm:$0xff]
  %v222 = vld [vmem:[%s1 + $0x60] sm:$0xff]
  %v223 = vld [vmem:[%s1 + $0x68] sm:$0xff]
  %v224 = vld [vmem:[%s1 + $0x70] sm:$0xff]
  %v225 = vld [vmem:[%s1 + $0x78] sm:$0xff]
  %v226 = vld [vmem:[%s1 + $0x80] sm:$0xff]
  %v227 = vld [vmem:[%s1 + $0x88] sm:$0xff]
  %v228 = vld [vmem:[%s1 + $0x90] sm:$0xff]
  %v229 = vld [vmem:[%s1 + $0x98] sm:$0xff]
  %v230 = vld [vmem:[%s1 + $0xa0] sm:$0xff]
  %v231 = vld [vmem:[%s1 + $0xa8] sm:$0xff]
  %v232 = vld [vmem:[%s1 + $0xb0] sm:$0xff]
  %v233 = vld [vmem:[%s1 + $0xb8] sm:$0xff]
  %v234 = vld [vmem:[%s1 + $0xc0] sm:$0xff]
  %v235 = vld [vmem:[%s1 + $0xc8] sm:$0xff]
  %v236 = vld [vmem:[%s1 + $0xd0] sm:$0xff]
  %v237 = vld [vmem:[%s1 + $0xd8] sm:$0xff]
  %v238 = vld [vmem:[%s1 + $0xe0] sm:$0xff]
  %v239 = vld [vmem:[%s1 + $0xe8] sm:$0xff]
  %v240 = vld [vmem:[%s1 + $0xf0] sm:$0xff]
  %v241 = vld [vmem:[%s1 + $0xf8] sm:$0xff]
  %v242 = vpack.c.bf16 %v211, %v210
  %v243 = vpack.c.bf16 %v213, %v212
  %v244 = vpack.c.bf16 %v215, %v214
  %v245 = vpack.c.bf16 %v217, %v216
  %v246 = vpack.c.bf16 %v219, %v218
  %v247 = vpack.c.bf16 %v221, %v220
  %v248 = vpack.c.bf16 %v223, %v222
  %v249 = vpack.c.bf16 %v225, %v224
  %v250 = vpack.c.bf16 %v227, %v226
  %v251 = vpack.c.bf16 %v229, %v228
  %v252 = vpack.c.bf16 %v231, %v230
  %v253 = vpack.c.bf16 %v233, %v232
  %v254 = vpack.c.bf16 %v235, %v234
  %v255 = vpack.c.bf16 %v237, %v236
  %v256 = vpack.c.bf16 %v239, %v238
  %v257 = vpack.c.bf16 %v241, %v240
  %258 = vmatprep.subr.bf16.mxu0 0
  %259 = vmatpush1.bf16.msra.mxu0 %v242
  %260 = vmatprep.subr.bf16.mxu0 0
  %261 = vmatpush1.bf16.msra.mxu0 %v243
  %262 = vmatprep.subr.bf16.mxu0 0
  %263 = vmatpush1.bf16.msra.mxu0 %v244
  %264 = vmatprep.subr.bf16.mxu0 0
  %265 = vmatpush1.bf16.msra.mxu0 %v245
  %266 = vmatprep.subr.bf16.mxu0 0
  %267 = vmatpush1.bf16.msra.mxu0 %v246
  %268 = vmatprep.subr.bf16.mxu0 0
  %269 = vmatpush1.bf16.msra.mxu0 %v247
  %270 = vmatprep.subr.bf16.mxu0 0
  %271 = vmatpush1.bf16.msra.mxu0 %v248
  %272 = vmatprep.subr.bf16.mxu0 0
  %273 = vmatpush1.bf16.msra.mxu0 %v249
  %274 = vmatprep.subr.bf16.mxu0 0
  %275 = vmatpush1.bf16.msra.mxu0 %v250
  %276 = vmatprep.subr.bf16.mxu0 0
  %277 = vmatpush1.bf16.msra.mxu0 %v251
  %278 = vmatprep.subr.bf16.mxu0 0
  %279 = vmatpush1.bf16.msra.mxu0 %v252
  %280 = vmatprep.subr.bf16.mxu0 0
  %281 = vmatpush1.bf16.msra.mxu0 %v253
  %282 = vmatprep.subr.bf16.mxu0 0
  %283 = vmatpush1.bf16.msra.mxu0 %v254
  %284 = vmatprep.subr.bf16.mxu0 0
  %285 = vmatpush1.bf16.msra.mxu0 %v255
  %286 = vmatprep.subr.bf16.mxu0 0
  %287 = vmatpush1.bf16.msra.mxu0 %v256
  %288 = vmatprep.subr.bf16.mxu0 0
  %289 = vmatpush1.bf16.msra.mxu0 %v257
  %290 = vmatprep.mubr.bf16.mxu0 %v147
  %291 = vmatmul.mubr.bf16.gmra.mrb[0].mxu0 %v146
  %v292 = vpop.f32.mrb[0].mxu0
  %v293 = vadd.f32 0.0, %v292
  %v294 = vpop.f32.mrb[0].mxu0
  %v295 = vpop.f32.mrb[0].mxu0
  %v296 = vadd.f32 0.0, %v295
  %v297 = vpop.f32.mrb[0].mxu0
  %298 = vmatprep.mubr.bf16.mxu0 %v149
  %299 = vmatmul.mubr.bf16.gmra.mrb[0].mxu0 %v148
  %v300 = vpop.f32.mrb[0].mxu0
  %v301 = vadd.f32 0.0, %v300
  %v302 = vpop.f32.mrb[0].mxu0
  %v303 = vpop.f32.mrb[0].mxu0
  %v304 = vadd.f32 0.0, %v303
  %v305 = vpop.f32.mrb[0].mxu0
  %306 = vmatprep.mubr.bf16.mxu0 %v151
  %307 = vmatmul.mubr.bf16.gmra.mrb[0].mxu0 %v150
  %v308 = vpop.f32.mrb[0].mxu0
  %v309 = vadd.f32 0.0, %v308
  %v310 = vpop.f32.mrb[0].mxu0
  %v311 = vpop.f32.mrb[0].mxu0
  %v312 = vadd.f32 0.0, %v311
  %v313 = vpop.f32.mrb[0].mxu0
  %314 = vmatprep.mubr.bf16.mxu0 %v153
  %315 = vmatmul.mubr.bf16.gmra.mrb[0].mxu0 %v152
  %v316 = vpop.f32.mrb[0].mxu0
  %v317 = vadd.f32 0.0, %v316
  %v318 = vpop.f32.mrb[0].mxu0
  %v319 = vpop.f32.mrb[0].mxu0
  %v320 = vadd.f32 0.0, %v319
  %v321 = vpop.f32.mrb[0].mxu0
  %322 = vmatprep.mubr.bf16.mxu0 %v155
  %323 = vmatmul.mubr.bf16.gmra.mrb[0].mxu0 %v154
  %v324 = vpop.f32.mrb[0].mxu0
  %v325 = vadd.f32 0.0, %v324
  %v326 = vpop.f32.mrb[0].mxu0
  %v327 = vpop.f32.mrb[0].mxu0
  %v328 = vadd.f32 0.0, %v327
  %v329 = vpop.f32.mrb[0].mxu0
  %330 = vmatprep.mubr.bf16.mxu0 %v157
  %331 = vmatmul.mubr.bf16.gmra.mrb[0].mxu0 %v156
  %v332 = vpop.f32.mrb[0].mxu0
  %v333 = vadd.f32 0.0, %v332
  %v334 = vpop.f32.mrb[0].mxu0
  %v335 = vpop.f32.mrb[0].mxu0
  %v336 = vadd.f32 0.0, %v335
  %v337 = vpop.f32.mrb[0].mxu0
  %338 = vmatprep.mubr.bf16.mxu0 %v159
  %339 = vmatmul.mubr.bf16.gmra.mrb[0].mxu0 %v158
  %v340 = vpop.f32.mrb[0].mxu0
  %v341 = vadd.f32 0.0, %v340
  %v342 = vpop.f32.mrb[0].mxu0
  %v343 = vpop.f32.mrb[0].mxu0
  %v344 = vadd.f32 0.0, %v343
  %v345 = vpop.f32.mrb[0].mxu0
  %346 = vmatprep.mubr.bf16.mxu0 %v161
  %347 = vmatmul.mubr.bf16.gmra.mrb[0].mxu0 %v160
  %v348 = vpop.f32.mrb[0].mxu0
  %v349 = vadd.f32 0.0, %v348
  %v350 = vpop.f32.mrb[0].mxu0
  %v351 = vpop.f32.mrb[0].mxu0
  %v352 = vadd.f32 0.0, %v351
  %v353 = vpop.f32.mrb[0].mxu0
  %354 = vmatprep.mubr.bf16.mxu0 %v163
  %355 = vmatmul.mubr.bf16.gmra.mrb[0].mxu0 %v162
  %v356 = vpop.f32.mrb[0].mxu0
  %v357 = vadd.f32 0.0, %v356
  %v358 = vpop.f32.mrb[0].mxu0
  %v359 = vpop.f32.mrb[0].mxu0
  %v360 = vadd.f32 0.0, %v359
  %v361 = vpop.f32.mrb[0].mxu0
  %362 = vmatprep.mubr.bf16.mxu0 %v165
  %363 = vmatmul.mubr.bf16.gmra.mrb[0].mxu0 %v164
  %v364 = vpop.f32.mrb[0].mxu0
  %v365 = vadd.f32 0.0, %v364
  %v366 = vpop.f32.mrb[0].mxu0
  %v367 = vpop.f32.mrb[0].mxu0
  %v368 = vadd.f32 0.0, %v367
  %v369 = vpop.f32.mrb[0].mxu0
  %370 = vmatprep.mubr.bf16.mxu0 %v167
  %371 = vmatmul.mubr.bf16.gmra.mrb[0].mxu0 %v166
  %v372 = vpop.f32.mrb[0].mxu0
  %v373 = vadd.f32 0.0, %v372
  %v374 = vpop.f32.mrb[0].mxu0
  %v375 = vpop.f32.mrb[0].mxu0
  %v376 = vadd.f32 0.0, %v375
  %v377 = vpop.f32.mrb[0].mxu0
  %378 = vmatprep.mubr.bf16.mxu0 %v169
  %379 = vmatmul.mubr.bf16.gmra.mrb[0].mxu0 %v168
  %v380 = vpop.f32.mrb[0].mxu0
  %v381 = vadd.f32 0.0, %v380
  %v382 = vpop.f32.mrb[0].mxu0
  %v383 = vpop.f32.mrb[0].mxu0
  %v384 = vadd.f32 0.0, %v383
  %v385 = vpop.f32.mrb[0].mxu0
  %386 = vmatprep.mubr.bf16.mxu0 %v171
  %387 = vmatmul.mubr.bf16.gmra.mrb[0].mxu0 %v170
  %v388 = vpop.f32.mrb[0].mxu0
  %v389 = vadd.f32 0.0, %v388
  %v390 = vpop.f32.mrb[0].mxu0
  %v391 = vpop.f32.mrb[0].mxu0
  %v392 = vadd.f32 0.0, %v391
  %v393 = vpop.f32.mrb[0].mxu0
  %394 = vmatprep.mubr.bf16.mxu0 %v173
  %395 = vmatmul.mubr.bf16.gmra.mrb[0].mxu0 %v172
  %v396 = vpop.f32.mrb[0].mxu0
  %v397 = vadd.f32 0.0, %v396
  %v398 = vpop.f32.mrb[0].mxu0
  %v399 = vpop.f32.mrb[0].mxu0
  %v400 = vadd.f32 0.0, %v399
  %v401 = vpop.f32.mrb[0].mxu0
  %402 = vmatprep.mubr.bf16.mxu0 %v175
  %403 = vmatmul.mubr.bf16.gmra.mrb[0].mxu0 %v174
  %v404 = vpop.f32.mrb[0].mxu0
  %v405 = vadd.f32 0.0, %v404
  %v406 = vpop.f32.mrb[0].mxu0
  %v407 = vpop.f32.mrb[0].mxu0
  %v408 = vadd.f32 0.0, %v407
  %v409 = vpop.f32.mrb[0].mxu0
  %410 = vmatprep.mubr.bf16.mxu0 %v177
  %411 = vmatmul.mubr.bf16.gmra.mrb[0].mxu0 %v176
  %v412 = vpop.f32.mrb[0].mxu0
  %v413 = vadd.f32 0.0, %v412
  %v414 = vpop.f32.mrb[0].mxu0
  %v415 = vpop.f32.mrb[0].mxu0
  %v416 = vadd.f32 0.0, %v415
  %v417 = vpop.f32.mrb[0].mxu0
  %418 = vmatprep.mubr.bf16.mxu0 %v179
  %419 = vmatmul.mubr.bf16.gmra.mrb[0].mxu0 %v178
  %v420 = vpop.f32.mrb[0].mxu0
  %v421 = vadd.f32 0.0, %v420
  %v422 = vpop.f32.mrb[0].mxu0
  %v423 = vpop.f32.mrb[0].mxu0
  %v424 = vadd.f32 0.0, %v423
  %v425 = vpop.f32.mrb[0].mxu0
  %426 = vmatprep.mubr.bf16.mxu0 %v181
  %427 = vmatmul.mubr.bf16.gmra.mrb[0].mxu0 %v180
  %v428 = vpop.f32.mrb[0].mxu0
  %v429 = vadd.f32 0.0, %v428
  %v430 = vpop.f32.mrb[0].mxu0
  %v431 = vpop.f32.mrb[0].mxu0
  %v432 = vadd.f32 0.0, %v431
  %v433 = vpop.f32.mrb[0].mxu0
  %434 = vmatprep.mubr.bf16.mxu0 %v183
  %435 = vmatmul.mubr.bf16.gmra.mrb[0].mxu0 %v182
  %v436 = vpop.f32.mrb[0].mxu0
  %v437 = vadd.f32 0.0, %v436
  %v438 = vpop.f32.mrb[0].mxu0
  %v439 = vpop.f32.mrb[0].mxu0
  %v440 = vadd.f32 0.0, %v439
  %v441 = vpop.f32.mrb[0].mxu0
  %442 = vmatprep.mubr.bf16.mxu0 %v185
  %443 = vmatmul.mubr.bf16.gmra.mrb[0].mxu0 %v184
  %v444 = vpop.f32.mrb[0].mxu0
  %v445 = vadd.f32 0.0, %v444
  %v446 = vpop.f32.mrb[0].mxu0
  %v447 = vpop.f32.mrb[0].mxu0
  %v448 = vadd.f32 0.0, %v447
  %v449 = vpop.f32.mrb[0].mxu0
  %450 = vmatprep.mubr.bf16.mxu0 %v187
  %451 = vmatmul.mubr.bf16.gmra.mrb[0].mxu0 %v186
  %v452 = vpop.f32.mrb[0].mxu0
  %v453 = vadd.f32 0.0, %v452
  %v454 = vpop.f32.mrb[0].mxu0
  %v455 = vpop.f32.mrb[0].mxu0
  %v456 = vadd.f32 0.0, %v455
  %v457 = vpop.f32.mrb[0].mxu0
  %458 = vmatprep.mubr.bf16.mxu0 %v189
  %459 = vmatmul.mubr.bf16.gmra.mrb[0].mxu0 %v188
  %v460 = vpop.f32.mrb[0].mxu0
  %v461 = vadd.f32 0.0, %v460
  %v462 = vpop.f32.mrb[0].mxu0
  %v463 = vpop.f32.mrb[0].mxu0
  %v464 = vadd.f32 0.0, %v463
  %v465 = vpop.f32.mrb[0].mxu0
  %466 = vmatprep.mubr.bf16.mxu0 %v191
  %467 = vmatmul.mubr.bf16.gmra.mrb[0].mxu0 %v190
  %v468 = vpop.f32.mrb[0].mxu0
  %v469 = vadd.f32 0.0, %v468
  %v470 = vpop.f32.mrb[0].mxu0
  %v471 = vpop.f32.mrb[0].mxu0
  %v472 = vadd.f32 0.0, %v471
  %v473 = vpop.f32.mrb[0].mxu0
  %474 = vmatprep.mubr.bf16.mxu0 %v193
  %475 = vmatmul.mubr.bf16.gmra.mrb[0].mxu0 %v192
  %v476 = vpop.f32.mrb[0].mxu0
  %v477 = vadd.f32 0.0, %v476
  %v478 = vpop.f32.mrb[0].mxu0
  %v479 = vpop.f32.mrb[0].mxu0
  %v480 = vadd.f32 0.0, %v479
  %v481 = vpop.f32.mrb[0].mxu0
  %482 = vmatprep.mubr.bf16.mxu0 %v195
  %483 = vmatmul.mubr.bf16.gmra.mrb[0].mxu0 %v194
  %v484 = vpop.f32.mrb[0].mxu0
  %v485 = vadd.f32 0.0, %v484
  %v486 = vpop.f32.mrb[0].mxu0
  %v487 = vpop.f32.mrb[0].mxu0
  %v488 = vadd.f32 0.0, %v487
  %v489 = vpop.f32.mrb[0].mxu0
  %490 = vmatprep.mubr.bf16.mxu0 %v197
  %491 = vmatmul.mubr.bf16.gmra.mrb[0].mxu0 %v196
  %v492 = vpop.f32.mrb[0].mxu0
  %v493 = vadd.f32 0.0, %v492
  %v494 = vpop.f32.mrb[0].mxu0
  %v495 = vpop.f32.mrb[0].mxu0
  %v496 = vadd.f32 0.0, %v495
  %v497 = vpop.f32.mrb[0].mxu0
  %498 = vmatprep.mubr.bf16.mxu0 %v199
  %499 = vmatmul.mubr.bf16.gmra.mrb[0].mxu0 %v198
  %v500 = vpop.f32.mrb[0].mxu0
  %v501 = vadd.f32 0.0, %v500
  %v502 = vpop.f32.mrb[0].mxu0
  %v503 = vpop.f32.mrb[0].mxu0
  %v504 = vadd.f32 0.0, %v503
  %v505 = vpop.f32.mrb[0].mxu0
  %506 = vmatprep.mubr.bf16.mxu0 %v201
  %507 = vmatmul.mubr.bf16.gmra.mrb[0].mxu0 %v200
  %v508 = vpop.f32.mrb[0].mxu0
  %v509 = vadd.f32 0.0, %v508
  %v510 = vpop.f32.mrb[0].mxu0
  %v511 = vpop.f32.mrb[0].mxu0
  %v512 = vadd.f32 0.0, %v511
  %v513 = vpop.f32.mrb[0].mxu0
  %514 = vmatprep.mubr.bf16.mxu0 %v203
  %515 = vmatmul.mubr.bf16.gmra.mrb[0].mxu0 %v202
  %v516 = vpop.f32.mrb[0].mxu0
  %v517 = vadd.f32 0.0, %v516
  %v518 = vpop.f32.mrb[0].mxu0
  %v519 = vpop.f32.mrb[0].mxu0
  %v520 = vadd.f32 0.0, %v519
  %v521 = vpop.f32.mrb[0].mxu0
  %522 = vmatprep.mubr.bf16.mxu0 %v205
  %523 = vmatmul.mubr.bf16.gmra.mrb[0].mxu0 %v204
  %v524 = vpop.f32.mrb[0].mxu0
  %v525 = vadd.f32 0.0, %v524
  %v526 = vpop.f32.mrb[0].mxu0
  %v527 = vpop.f32.mrb[0].mxu0
  %v528 = vadd.f32 0.0, %v527
  %v529 = vpop.f32.mrb[0].mxu0
  %530 = vmatprep.mubr.bf16.mxu0 %v207
  %531 = vmatmul.mubr.bf16.gmra.mrb[0].mxu0 %v206
  %v532 = vpop.f32.mrb[0].mxu0
  %v533 = vadd.f32 0.0, %v532
  %v534 = vpop.f32.mrb[0].mxu0
  %v535 = vpop.f32.mrb[0].mxu0
  %v536 = vadd.f32 0.0, %v535
  %v537 = vpop.f32.mrb[0].mxu0
  %538 = vmatprep.mubr.bf16.mxu0 %v209
  %539 = vmatmul.mubr.bf16.gmra.mrb[0].mxu0 %v208
  %v540 = vpop.f32.mrb[0].mxu0
  %v541 = vadd.f32 0.0, %v540
  %v542 = vpop.f32.mrb[0].mxu0
  %v543 = vpop.f32.mrb[0].mxu0
  %v544 = vadd.f32 0.0, %v543
  %v545 = vpop.f32.mrb[0].mxu0
  %546 = vdwg.mxu0
  %vm547 = vcmask 64512
  %v548 = vsel %vm547, %v293, 0.0
  %v549 = vsel %vm547, %v296, 0.0
  %v550 = vadd.f32 %v548, %v549
  %v551 = vsel %vm547, %v301, 0.0
  %v552 = vadd.f32 %v550, %v551
  %v553 = vsel %vm547, %v304, 0.0
  %v554 = vadd.f32 %v552, %v553
  %v555 = vsel %vm547, %v309, 0.0
  %v556 = vadd.f32 %v554, %v555
  %v557 = vsel %vm547, %v312, 0.0
  %v558 = vadd.f32 %v556, %v557
  %v559 = vsel %vm547, %v317, 0.0
  %v560 = vadd.f32 %v558, %v559
  %v561 = vsel %vm547, %v320, 0.0
  %v562 = vadd.f32 %v560, %v561
  %v563 = vsel %vm547, %v325, 0.0
  %v564 = vadd.f32 %v562, %v563
  %v565 = vsel %vm547, %v328, 0.0
  %v566 = vadd.f32 %v564, %v565
  %v567 = vsel %vm547, %v333, 0.0
  %v568 = vadd.f32 %v566, %v567
  %v569 = vsel %vm547, %v336, 0.0
  %v570 = vadd.f32 %v568, %v569
  %v571 = vsel %vm547, %v341, 0.0
  %v572 = vadd.f32 %v570, %v571
  %v573 = vsel %vm547, %v344, 0.0
  %v574 = vadd.f32 %v572, %v573
  %v575 = vsel %vm547, %v349, 0.0
  %v576 = vadd.f32 %v574, %v575
  %v577 = vsel %vm547, %v352, 0.0
  %v578 = vadd.f32 %v576, %v577
  %v579 = vsel %vm547, %v357, 0.0
  %v580 = vadd.f32 %v578, %v579
  %v581 = vsel %vm547, %v360, 0.0
  %v582 = vadd.f32 %v580, %v581
  %v583 = vsel %vm547, %v365, 0.0
  %v584 = vadd.f32 %v582, %v583
  %v585 = vsel %vm547, %v368, 0.0
  %v586 = vadd.f32 %v584, %v585
  %v587 = vsel %vm547, %v373, 0.0
  %v588 = vadd.f32 %v586, %v587
  %v589 = vsel %vm547, %v376, 0.0
  %v590 = vadd.f32 %v588, %v589
  %v591 = vsel %vm547, %v381, 0.0
  %v592 = vadd.f32 %v590, %v591
  %v593 = vsel %vm547, %v384, 0.0
  %v594 = vadd.f32 %v592, %v593
  %v595 = vsel %vm547, %v389, 0.0
  %v596 = vadd.f32 %v594, %v595
  %v597 = vsel %vm547, %v392, 0.0
  %v598 = vadd.f32 %v596, %v597
  %v599 = vsel %vm547, %v397, 0.0
  %v600 = vadd.f32 %v598, %v599
  %v601 = vsel %vm547, %v400, 0.0
  %v602 = vadd.f32 %v600, %v601
  %v603 = vsel %vm547, %v405, 0.0
  %v604 = vadd.f32 %v602, %v603
  %v605 = vsel %vm547, %v408, 0.0
  %v606 = vadd.f32 %v604, %v605
  %v607 = vsel %vm547, %v413, 0.0
  %v608 = vadd.f32 %v606, %v607
  %v609 = vsel %vm547, %v416, 0.0
  %v610 = vadd.f32 %v608, %v609
  %v611 = vsel %vm547, %v421, 0.0
  %v612 = vadd.f32 %v610, %v611
  %v613 = vsel %vm547, %v424, 0.0
  %v614 = vadd.f32 %v612, %v613
  %v615 = vsel %vm547, %v429, 0.0
  %v616 = vadd.f32 %v614, %v615
  %v617 = vsel %vm547, %v432, 0.0
  %v618 = vadd.f32 %v616, %v617
  %v619 = vsel %vm547, %v437, 0.0
  %v620 = vadd.f32 %v618, %v619
  %v621 = vsel %vm547, %v440, 0.0
  %v622 = vadd.f32 %v620, %v621
  %v623 = vsel %vm547, %v445, 0.0
  %v624 = vadd.f32 %v622, %v623
  %v625 = vsel %vm547, %v448, 0.0
  %v626 = vadd.f32 %v624, %v625
  %v627 = vsel %vm547, %v453, 0.0
  %v628 = vadd.f32 %v626, %v627
  %v629 = vsel %vm547, %v456, 0.0
  %v630 = vadd.f32 %v628, %v629
  %v631 = vsel %vm547, %v461, 0.0
  %v632 = vadd.f32 %v630, %v631
  %v633 = vsel %vm547, %v464, 0.0
  %v634 = vadd.f32 %v632, %v633
  %v635 = vsel %vm547, %v469, 0.0
  %v636 = vadd.f32 %v634, %v635
  %v637 = vsel %vm547, %v472, 0.0
  %v638 = vadd.f32 %v636, %v637
  %v639 = vsel %vm547, %v477, 0.0
  %v640 = vadd.f32 %v638, %v639
  %v641 = vsel %vm547, %v480, 0.0
  %v642 = vadd.f32 %v640, %v641
  %v643 = vsel %vm547, %v485, 0.0
  %v644 = vadd.f32 %v642, %v643
  %v645 = vsel %vm547, %v488, 0.0
  %v646 = vadd.f32 %v644, %v645
  %v647 = vsel %vm547, %v493, 0.0
  %v648 = vadd.f32 %v646, %v647
  %v649 = vsel %vm547, %v496, 0.0
  %v650 = vadd.f32 %v648, %v649
  %v651 = vsel %vm547, %v501, 0.0
  %v652 = vadd.f32 %v650, %v651
  %v653 = vsel %vm547, %v504, 0.0
  %v654 = vadd.f32 %v652, %v653
  %v655 = vsel %vm547, %v509, 0.0
  %v656 = vadd.f32 %v654, %v655
  %v657 = vsel %vm547, %v512, 0.0
  %v658 = vadd.f32 %v656, %v657
  %v659 = vsel %vm547, %v517, 0.0
  %v660 = vadd.f32 %v658, %v659
  %v661 = vsel %vm547, %v520, 0.0
  %v662 = vadd.f32 %v660, %v661
  %v663 = vsel %vm547, %v525, 0.0
  %v664 = vadd.f32 %v662, %v663
  %v665 = vsel %vm547, %v528, 0.0
  %v666 = vadd.f32 %v664, %v665
  %v667 = vsel %vm547, %v533, 0.0
  %v668 = vadd.f32 %v666, %v667
  %v669 = vsel %vm547, %v536, 0.0
  %v670 = vadd.f32 %v668, %v669
  %v671 = vsel %vm547, %v541, 0.0
  %v672 = vadd.f32 %v670, %v671
  %v673 = vsel %vm547, %v544, 0.0
  %v674 = vadd.f32 %v672, %v673
  %v675 = vrot.slane %v674, 4
  %v676 = vadd.f32 %v674, %v675
  %v677 = vrot.slane %v676, 2
  %v678 = vadd.f32 %v676, %v677
  %v679 = vrot.slane %v678, 1
  %v680 = vadd.f32 %v678, %v679
  %v681 = vrcp.pop 512.0
  %v682 = vmul.f32 %v680, %v681
  %v683 = vsub.f32 %v293, %v682
  %v684 = vsub.f32 %v296, %v682
  %v685 = vsub.f32 %v301, %v682
  %v686 = vsub.f32 %v304, %v682
  %v687 = vsub.f32 %v309, %v682
  %v688 = vsub.f32 %v312, %v682
  %v689 = vsub.f32 %v317, %v682
  %v690 = vsub.f32 %v320, %v682
  %v691 = vsub.f32 %v325, %v682
  %v692 = vsub.f32 %v328, %v682
  %v693 = vsub.f32 %v333, %v682
  %v694 = vsub.f32 %v336, %v682
  %v695 = vsub.f32 %v341, %v682
  %v696 = vsub.f32 %v344, %v682
  %v697 = vsub.f32 %v349, %v682
  %v698 = vsub.f32 %v352, %v682
  %v699 = vsub.f32 %v357, %v682
  %v700 = vsub.f32 %v360, %v682
  %v701 = vsub.f32 %v365, %v682
  %v702 = vsub.f32 %v368, %v682
  %v703 = vsub.f32 %v373, %v682
  %v704 = vsub.f32 %v376, %v682
  %v705 = vsub.f32 %v381, %v682
  %v706 = vsub.f32 %v384, %v682
  %v707 = vsub.f32 %v389, %v682
  %v708 = vsub.f32 %v392, %v682
  %v709 = vsub.f32 %v397, %v682
  %v710 = vsub.f32 %v400, %v682
  %v711 = vsub.f32 %v405, %v682
  %v712 = vsub.f32 %v408, %v682
  %v713 = vsub.f32 %v413, %v682
  %v714 = vsub.f32 %v416, %v682
  %v715 = vsub.f32 %v421, %v682
  %v716 = vsub.f32 %v424, %v682
  %v717 = vsub.f32 %v429, %v682
  %v718 = vsub.f32 %v432, %v682
  %v719 = vsub.f32 %v437, %v682
  %v720 = vsub.f32 %v440, %v682
  %v721 = vsub.f32 %v445, %v682
  %v722 = vsub.f32 %v448, %v682
  %v723 = vsub.f32 %v453, %v682
  %v724 = vsub.f32 %v456, %v682
  %v725 = vsub.f32 %v461, %v682
  %v726 = vsub.f32 %v464, %v682
  %v727 = vsub.f32 %v469, %v682
  %v728 = vsub.f32 %v472, %v682
  %v729 = vsub.f32 %v477, %v682
  %v730 = vsub.f32 %v480, %v682
  %v731 = vsub.f32 %v485, %v682
  %v732 = vsub.f32 %v488, %v682
  %v733 = vsub.f32 %v493, %v682
  %v734 = vsub.f32 %v496, %v682
  %v735 = vsub.f32 %v501, %v682
  %v736 = vsub.f32 %v504, %v682
  %v737 = vsub.f32 %v509, %v682
  %v738 = vsub.f32 %v512, %v682
  %v739 = vsub.f32 %v517, %v682
  %v740 = vsub.f32 %v520, %v682
  %v741 = vsub.f32 %v525, %v682
  %v742 = vsub.f32 %v528, %v682
  %v743 = vsub.f32 %v533, %v682
  %v744 = vsub.f32 %v536, %v682
  %v745 = vsub.f32 %v541, %v682
  %v746 = vsub.f32 %v544, %v682
  %v747 = vmul.f32 %v683, %v683
  %v748 = vmul.f32 %v684, %v684
  %v749 = vmul.f32 %v685, %v685
  %v750 = vmul.f32 %v686, %v686
  %v751 = vmul.f32 %v687, %v687
  %v752 = vmul.f32 %v688, %v688
  %v753 = vmul.f32 %v689, %v689
  %v754 = vmul.f32 %v690, %v690
  %v755 = vmul.f32 %v691, %v691
  %v756 = vmul.f32 %v692, %v692
  %v757 = vmul.f32 %v693, %v693
  %v758 = vmul.f32 %v694, %v694
  %v759 = vmul.f32 %v695, %v695
  %v760 = vmul.f32 %v696, %v696
  %v761 = vmul.f32 %v697, %v697
  %v762 = vmul.f32 %v698, %v698
  %v763 = vmul.f32 %v699, %v699
  %v764 = vmul.f32 %v700, %v700
  %v765 = vmul.f32 %v701, %v701
  %v766 = vmul.f32 %v702, %v702
  %v767 = vmul.f32 %v703, %v703
  %v768 = vmul.f32 %v704, %v704
  %v769 = vmul.f32 %v705, %v705
  %v770 = vmul.f32 %v706, %v706
  %v771 = vmul.f32 %v707, %v707
  %v772 = vmul.f32 %v708, %v708
  %v773 = vmul.f32 %v709, %v709
  %v774 = vmul.f32 %v710, %v710
  %v775 = vmul.f32 %v711, %v711
  %v776 = vmul.f32 %v712, %v712
  %v777 = vmul.f32 %v713, %v713
  %v778 = vmul.f32 %v714, %v714
  %v779 = vmul.f32 %v715, %v715
  %v780 = vmul.f32 %v716, %v716
  %v781 = vmul.f32 %v717, %v717
  %v782 = vmul.f32 %v718, %v718
  %v783 = vmul.f32 %v719, %v719
  %v784 = vmul.f32 %v720, %v720
  %v785 = vmul.f32 %v721, %v721
  %v786 = vmul.f32 %v722, %v722
  %v787 = vmul.f32 %v723, %v723
  %v788 = vmul.f32 %v724, %v724
  %v789 = vmul.f32 %v725, %v725
  %v790 = vmul.f32 %v726, %v726
  %v791 = vmul.f32 %v727, %v727
  %v792 = vmul.f32 %v728, %v728
  %v793 = vmul.f32 %v729, %v729
  %v794 = vmul.f32 %v730, %v730
  %v795 = vmul.f32 %v731, %v731
  %v796 = vmul.f32 %v732, %v732
  %v797 = vmul.f32 %v733, %v733
  %v798 = vmul.f32 %v734, %v734
  %v799 = vmul.f32 %v735, %v735
  %v800 = vmul.f32 %v736, %v736
  %v801 = vmul.f32 %v737, %v737
  %v802 = vmul.f32 %v738, %v738
  %v803 = vmul.f32 %v739, %v739
  %v804 = vmul.f32 %v740, %v740
  %v805 = vmul.f32 %v741, %v741
  %v806 = vmul.f32 %v742, %v742
  %v807 = vmul.f32 %v743, %v743
  %v808 = vmul.f32 %v744, %v744
  %v809 = vmul.f32 %v745, %v745
  %v810 = vmul.f32 %v746, %v746
  %v811 = vsel %vm547, %v747, 0.0
  %v812 = vsel %vm547, %v748, 0.0
  %v813 = vadd.f32 %v811, %v812
  %v814 = vsel %vm547, %v749, 0.0
  %v815 = vadd.f32 %v813, %v814
  %v816 = vsel %vm547, %v750, 0.0
  %v817 = vadd.f32 %v815, %v816
  %v818 = vsel %vm547, %v751, 0.0
  %v819 = vadd.f32 %v817, %v818
  %v820 = vsel %vm547, %v752, 0.0
  %v821 = vadd.f32 %v819, %v820
  %v822 = vsel %vm547, %v753, 0.0
  %v823 = vadd.f32 %v821, %v822
  %v824 = vsel %vm547, %v754, 0.0
  %v825 = vadd.f32 %v823, %v824
  %v826 = vsel %vm547, %v755, 0.0
  %v827 = vadd.f32 %v825, %v826
  %v828 = vsel %vm547, %v756, 0.0
  %v829 = vadd.f32 %v827, %v828
  %v830 = vsel %vm547, %v757, 0.0
  %v831 = vadd.f32 %v829, %v830
  %v832 = vsel %vm547, %v758, 0.0
  %v833 = vadd.f32 %v831, %v832
  %v834 = vsel %vm547, %v759, 0.0
  %v835 = vadd.f32 %v833, %v834
  %v836 = vsel %vm547, %v760, 0.0
  %v837 = vadd.f32 %v835, %v836
  %v838 = vsel %vm547, %v761, 0.0
  %v839 = vadd.f32 %v837, %v838
  %v840 = vsel %vm547, %v762, 0.0
  %v841 = vadd.f32 %v839, %v840
  %v842 = vsel %vm547, %v763, 0.0
  %v843 = vadd.f32 %v841, %v842
  %v844 = vsel %vm547, %v764, 0.0
  %v845 = vadd.f32 %v843, %v844
  %v846 = vsel %vm547, %v765, 0.0
  %v847 = vadd.f32 %v845, %v846
  %v848 = vsel %vm547, %v766, 0.0
  %v849 = vadd.f32 %v847, %v848
  %v850 = vsel %vm547, %v767, 0.0
  %v851 = vadd.f32 %v849, %v850
  %v852 = vsel %vm547, %v768, 0.0
  %v853 = vadd.f32 %v851, %v852
  %v854 = vsel %vm547, %v769, 0.0
  %v855 = vadd.f32 %v853, %v854
  %v856 = vsel %vm547, %v770, 0.0
  %v857 = vadd.f32 %v855, %v856
  %v858 = vsel %vm547, %v771, 0.0
  %v859 = vadd.f32 %v857, %v858
  %v860 = vsel %vm547, %v772, 0.0
  %v861 = vadd.f32 %v859, %v860
  %v862 = vsel %vm547, %v773, 0.0
  %v863 = vadd.f32 %v861, %v862
  %v864 = vsel %vm547, %v774, 0.0
  %v865 = vadd.f32 %v863, %v864
  %v866 = vsel %vm547, %v775, 0.0
  %v867 = vadd.f32 %v865, %v866
  %v868 = vsel %vm547, %v776, 0.0
  %v869 = vadd.f32 %v867, %v868
  %v870 = vsel %vm547, %v777, 0.0
  %v871 = vadd.f32 %v869, %v870
  %v872 = vsel %vm547, %v778, 0.0
  %v873 = vadd.f32 %v871, %v872
  %v874 = vsel %vm547, %v779, 0.0
  %v875 = vadd.f32 %v873, %v874
  %v876 = vsel %vm547, %v780, 0.0
  %v877 = vadd.f32 %v875, %v876
  %v878 = vsel %vm547, %v781, 0.0
  %v879 = vadd.f32 %v877, %v878
  %v880 = vsel %vm547, %v782, 0.0
  %v881 = vadd.f32 %v879, %v880
  %v882 = vsel %vm547, %v783, 0.0
  %v883 = vadd.f32 %v881, %v882
  %v884 = vsel %vm547, %v784, 0.0
  %v885 = vadd.f32 %v883, %v884
  %v886 = vsel %vm547, %v785, 0.0
  %v887 = vadd.f32 %v885, %v886
  %v888 = vsel %vm547, %v786, 0.0
  %v889 = vadd.f32 %v887, %v888
  %v890 = vsel %vm547, %v787, 0.0
  %v891 = vadd.f32 %v889, %v890
  %v892 = vsel %vm547, %v788, 0.0
  %v893 = vadd.f32 %v891, %v892
  %v894 = vsel %vm547, %v789, 0.0
  %v895 = vadd.f32 %v893, %v894
  %v896 = vsel %vm547, %v790, 0.0
  %v897 = vadd.f32 %v895, %v896
  %v898 = vsel %vm547, %v791, 0.0
  %v899 = vadd.f32 %v897, %v898
  %v900 = vsel %vm547, %v792, 0.0
  %v901 = vadd.f32 %v899, %v900
  %v902 = vsel %vm547, %v793, 0.0
  %v903 = vadd.f32 %v901, %v902
  %v904 = vsel %vm547, %v794, 0.0
  %v905 = vadd.f32 %v903, %v904
  %v906 = vsel %vm547, %v795, 0.0
  %v907 = vadd.f32 %v905, %v906
  %v908 = vsel %vm547, %v796, 0.0
  %v909 = vadd.f32 %v907, %v908
  %v910 = vsel %vm547, %v797, 0.0
  %v911 = vadd.f32 %v909, %v910
  %v912 = vsel %vm547, %v798, 0.0
  %v913 = vadd.f32 %v911, %v912
  %v914 = vsel %vm547, %v799, 0.0
  %v915 = vadd.f32 %v913, %v914
  %v916 = vsel %vm547, %v800, 0.0
  %v917 = vadd.f32 %v915, %v916
  %v918 = vsel %vm547, %v801, 0.0
  %v919 = vadd.f32 %v917, %v918
  %v920 = vsel %vm547, %v802, 0.0
  %v921 = vadd.f32 %v919, %v920
  %v922 = vsel %vm547, %v803, 0.0
  %v923 = vadd.f32 %v921, %v922
  %v924 = vsel %vm547, %v804, 0.0
  %v925 = vadd.f32 %v923, %v924
  %v926 = vsel %vm547, %v805, 0.0
  %v927 = vadd.f32 %v925, %v926
  %v928 = vsel %vm547, %v806, 0.0
  %v929 = vadd.f32 %v927, %v928
  %v930 = vsel %vm547, %v807, 0.0
  %v931 = vadd.f32 %v929, %v930
  %v932 = vsel %vm547, %v808, 0.0
  %v933 = vadd.f32 %v931, %v932
  %v934 = vsel %vm547, %v809, 0.0
  %v935 = vadd.f32 %v933, %v934
  %v936 = vsel %vm547, %v810, 0.0
  %v937 = vadd.f32 %v935, %v936
  %v938 = vrot.slane %v937, 4
  %v939 = vadd.f32 %v937, %v938
  %v940 = vrot.slane %v939, 2
  %v941 = vadd.f32 %v939, %v940
  %v942 = vrot.slane %v941, 1
  %v943 = vadd.f32 %v941, %v942
  %v944 = vmul.f32 %v943, %v681
  %v945 = vadd.f32 %v944, 1e-05
  %v946 = vrsqrt.pop %v945
  %v947 = vmul.f32 %v683, %v946
  %v948 = vmul.f32 %v684, %v946
  %v949 = vmul.f32 %v685, %v946
  %v950 = vmul.f32 %v686, %v946
  %v951 = vmul.f32 %v687, %v946
  %v952 = vmul.f32 %v688, %v946
  %v953 = vmul.f32 %v689, %v946
  %v954 = vmul.f32 %v690, %v946
  %v955 = vmul.f32 %v691, %v946
  %v956 = vmul.f32 %v692, %v946
  %v957 = vmul.f32 %v693, %v946
  %v958 = vmul.f32 %v694, %v946
  %v959 = vmul.f32 %v695, %v946
  %v960 = vmul.f32 %v696, %v946
  %v961 = vmul.f32 %v697, %v946
  %v962 = vmul.f32 %v698, %v946
  %v963 = vmul.f32 %v699, %v946
  %v964 = vmul.f32 %v700, %v946
  %v965 = vmul.f32 %v701, %v946
  %v966 = vmul.f32 %v702, %v946
  %v967 = vmul.f32 %v703, %v946
  %v968 = vmul.f32 %v704, %v946
  %v969 = vmul.f32 %v705, %v946
  %v970 = vmul.f32 %v706, %v946
  %v971 = vmul.f32 %v707, %v946
  %v972 = vmul.f32 %v708, %v946
  %v973 = vmul.f32 %v709, %v946
  %v974 = vmul.f32 %v710, %v946
  %v975 = vmul.f32 %v711, %v946
  %v976 = vmul.f32 %v712, %v946
  %v977 = vmul.f32 %v713, %v946
  %v978 = vmul.f32 %v714, %v946
  %v979 = vmul.f32 %v715, %v946
  %v980 = vmul.f32 %v716, %v946
  %v981 = vmul.f32 %v717, %v946
  %v982 = vmul.f32 %v718, %v946
  %v983 = vmul.f32 %v719, %v946
  %v984 = vmul.f32 %v720, %v946
  %v985 = vmul.f32 %v721, %v946
  %v986 = vmul.f32 %v722, %v946
  %v987 = vmul.f32 %v723, %v946
  %v988 = vmul.f32 %v724, %v946
  %v989 = vmul.f32 %v725, %v946
  %v990 = vmul.f32 %v726, %v946
  %v991 = vmul.f32 %v727, %v946
  %v992 = vmul.f32 %v728, %v946
  %v993 = vmul.f32 %v729, %v946
  %v994 = vmul.f32 %v730, %v946
  %v995 = vmul.f32 %v731, %v946
  %v996 = vmul.f32 %v732, %v946
  %v997 = vmul.f32 %v733, %v946
  %v998 = vmul.f32 %v734, %v946
  %v999 = vmul.f32 %v735, %v946
  %v1000 = vmul.f32 %v736, %v946
  %v1001 = vmul.f32 %v737, %v946
  %v1002 = vmul.f32 %v738, %v946
  %v1003 = vmul.f32 %v739, %v946
  %v1004 = vmul.f32 %v740, %v946
  %v1005 = vmul.f32 %v741, %v946
  %v1006 = vmul.f32 %v742, %v946
  %v1007 = vmul.f32 %v743, %v946
  %v1008 = vmul.f32 %v744, %v946
  %v1009 = vmul.f32 %v745, %v946
  %v1010 = vmul.f32 %v746, %v946
  %v1011 = vld [vmem:[%s2] sm:$0x1]
  %v1013 = vlaneseq
  %v1014 = vshrl.u32 %v1013, 7
  %v1015 = vsub.s32 0, %v1014
  %v1016 = vrot.slane %v1011, %v1015
  %v1018 = vmul.f32 %v947, %v1016
  %v1019 = vmul.f32 %v948, %v1016
  %v1020 = vmul.f32 %v949, %v1016
  %v1021 = vmul.f32 %v950, %v1016
  %v1022 = vmul.f32 %v951, %v1016
  %v1023 = vmul.f32 %v952, %v1016
  %v1024 = vmul.f32 %v953, %v1016
  %v1025 = vmul.f32 %v954, %v1016
  %v1026 = vmul.f32 %v955, %v1016
  %v1027 = vmul.f32 %v956, %v1016
  %v1028 = vmul.f32 %v957, %v1016
  %v1029 = vmul.f32 %v958, %v1016
  %v1030 = vmul.f32 %v959, %v1016
  %v1031 = vmul.f32 %v960, %v1016
  %v1032 = vmul.f32 %v961, %v1016
  %v1033 = vmul.f32 %v962, %v1016
  %v1034 = vmul.f32 %v963, %v1016
  %v1035 = vmul.f32 %v964, %v1016
  %v1036 = vmul.f32 %v965, %v1016
  %v1037 = vmul.f32 %v966, %v1016
  %v1038 = vmul.f32 %v967, %v1016
  %v1039 = vmul.f32 %v968, %v1016
  %v1040 = vmul.f32 %v969, %v1016
  %v1041 = vmul.f32 %v970, %v1016
  %v1042 = vmul.f32 %v971, %v1016
  %v1043 = vmul.f32 %v972, %v1016
  %v1044 = vmul.f32 %v973, %v1016
  %v1045 = vmul.f32 %v974, %v1016
  %v1046 = vmul.f32 %v975, %v1016
  %v1047 = vmul.f32 %v976, %v1016
  %v1048 = vmul.f32 %v977, %v1016
  %v1049 = vmul.f32 %v978, %v1016
  %v1050 = vmul.f32 %v979, %v1016
  %v1051 = vmul.f32 %v980, %v1016
  %v1052 = vmul.f32 %v981, %v1016
  %v1053 = vmul.f32 %v982, %v1016
  %v1054 = vmul.f32 %v983, %v1016
  %v1055 = vmul.f32 %v984, %v1016
  %v1056 = vmul.f32 %v985, %v1016
  %v1057 = vmul.f32 %v986, %v1016
  %v1058 = vmul.f32 %v987, %v1016
  %v1059 = vmul.f32 %v988, %v1016
  %v1060 = vmul.f32 %v989, %v1016
  %v1061 = vmul.f32 %v990, %v1016
  %v1062 = vmul.f32 %v991, %v1016
  %v1063 = vmul.f32 %v992, %v1016
  %v1064 = vmul.f32 %v993, %v1016
  %v1065 = vmul.f32 %v994, %v1016
  %v1066 = vmul.f32 %v995, %v1016
  %v1067 = vmul.f32 %v996, %v1016
  %v1068 = vmul.f32 %v997, %v1016
  %v1069 = vmul.f32 %v998, %v1016
  %v1070 = vmul.f32 %v999, %v1016
  %v1071 = vmul.f32 %v1000, %v1016
  %v1072 = vmul.f32 %v1001, %v1016
  %v1073 = vmul.f32 %v1002, %v1016
  %v1074 = vmul.f32 %v1003, %v1016
  %v1075 = vmul.f32 %v1004, %v1016
  %v1076 = vmul.f32 %v1005, %v1016
  %v1077 = vmul.f32 %v1006, %v1016
  %v1078 = vmul.f32 %v1007, %v1016
  %v1079 = vmul.f32 %v1008, %v1016
  %v1080 = vmul.f32 %v1009, %v1016
  %v1081 = vmul.f32 %v1010, %v1016
  %v1082 = vld [vmem:[%s3] sm:$0x1]
  %v1084 = vlaneseq
  %v1085 = vshrl.u32 %v1084, 7
  %v1086 = vsub.s32 0, %v1085
  %v1087 = vrot.slane %v1082, %v1086
  %v1089 = vadd.f32 %v1018, %v1087
  %v1090 = vadd.f32 %v1019, %v1087
  %v1091 = vadd.f32 %v1020, %v1087
  %v1092 = vadd.f32 %v1021, %v1087
  %v1093 = vadd.f32 %v1022, %v1087
  %v1094 = vadd.f32 %v1023, %v1087
  %v1095 = vadd.f32 %v1024, %v1087
  %v1096 = vadd.f32 %v1025, %v1087
  %v1097 = vadd.f32 %v1026, %v1087
  %v1098 = vadd.f32 %v1027, %v1087
  %v1099 = vadd.f32 %v1028, %v1087
  %v1100 = vadd.f32 %v1029, %v1087
  %v1101 = vadd.f32 %v1030, %v1087
  %v1102 = vadd.f32 %v1031, %v1087
  %v1103 = vadd.f32 %v1032, %v1087
  %v1104 = vadd.f32 %v1033, %v1087
  %v1105 = vadd.f32 %v1034, %v1087
  %v1106 = vadd.f32 %v1035, %v1087
  %v1107 = vadd.f32 %v1036, %v1087
  %v1108 = vadd.f32 %v1037, %v1087
  %v1109 = vadd.f32 %v1038, %v1087
  %v1110 = vadd.f32 %v1039, %v1087
  %v1111 = vadd.f32 %v1040, %v1087
  %v1112 = vadd.f32 %v1041, %v1087
  %v1113 = vadd.f32 %v1042, %v1087
  %v1114 = vadd.f32 %v1043, %v1087
  %v1115 = vadd.f32 %v1044, %v1087
  %v1116 = vadd.f32 %v1045, %v1087
  %v1117 = vadd.f32 %v1046, %v1087
  %v1118 = vadd.f32 %v1047, %v1087
  %v1119 = vadd.f32 %v1048, %v1087
  %v1120 = vadd.f32 %v1049, %v1087
  %v1121 = vadd.f32 %v1050, %v1087
  %v1122 = vadd.f32 %v1051, %v1087
  %v1123 = vadd.f32 %v1052, %v1087
  %v1124 = vadd.f32 %v1053, %v1087
  %v1125 = vadd.f32 %v1054, %v1087
  %v1126 = vadd.f32 %v1055, %v1087
  %v1127 = vadd.f32 %v1056, %v1087
  %v1128 = vadd.f32 %v1057, %v1087
  %v1129 = vadd.f32 %v1058, %v1087
  %v1130 = vadd.f32 %v1059, %v1087
  %v1131 = vadd.f32 %v1060, %v1087
  %v1132 = vadd.f32 %v1061, %v1087
  %v1133 = vadd.f32 %v1062, %v1087
  %v1134 = vadd.f32 %v1063, %v1087
  %v1135 = vadd.f32 %v1064, %v1087
  %v1136 = vadd.f32 %v1065, %v1087
  %v1137 = vadd.f32 %v1066, %v1087
  %v1138 = vadd.f32 %v1067, %v1087
  %v1139 = vadd.f32 %v1068, %v1087
  %v1140 = vadd.f32 %v1069, %v1087
  %v1141 = vadd.f32 %v1070, %v1087
  %v1142 = vadd.f32 %v1071, %v1087
  %v1143 = vadd.f32 %v1072, %v1087
  %v1144 = vadd.f32 %v1073, %v1087
  %v1145 = vadd.f32 %v1074, %v1087
  %v1146 = vadd.f32 %v1075, %v1087
  %v1147 = vadd.f32 %v1076, %v1087
  %v1148 = vadd.f32 %v1077, %v1087
  %v1149 = vadd.f32 %v1078, %v1087
  %v1150 = vadd.f32 %v1079, %v1087
  %v1151 = vadd.f32 %v1080, %v1087
  %v1152 = vadd.f32 %v1081, %v1087
  %v1153 = vmax.f32 %v1089, 0.0
  %v1154 = vmax.f32 %v1090, 0.0
  %v1155 = vmax.f32 %v1091, 0.0
  %v1156 = vmax.f32 %v1092, 0.0
  %v1157 = vmax.f32 %v1093, 0.0
  %v1158 = vmax.f32 %v1094, 0.0
  %v1159 = vmax.f32 %v1095, 0.0
  %v1160 = vmax.f32 %v1096, 0.0
  %v1161 = vmax.f32 %v1097, 0.0
  %v1162 = vmax.f32 %v1098, 0.0
  %v1163 = vmax.f32 %v1099, 0.0
  %v1164 = vmax.f32 %v1100, 0.0
  %v1165 = vmax.f32 %v1101, 0.0
  %v1166 = vmax.f32 %v1102, 0.0
  %v1167 = vmax.f32 %v1103, 0.0
  %v1168 = vmax.f32 %v1104, 0.0
  %v1169 = vmax.f32 %v1105, 0.0
  %v1170 = vmax.f32 %v1106, 0.0
  %v1171 = vmax.f32 %v1107, 0.0
  %v1172 = vmax.f32 %v1108, 0.0
  %v1173 = vmax.f32 %v1109, 0.0
  %v1174 = vmax.f32 %v1110, 0.0
  %v1175 = vmax.f32 %v1111, 0.0
  %v1176 = vmax.f32 %v1112, 0.0
  %v1177 = vmax.f32 %v1113, 0.0
  %v1178 = vmax.f32 %v1114, 0.0
  %v1179 = vmax.f32 %v1115, 0.0
  %v1180 = vmax.f32 %v1116, 0.0
  %v1181 = vmax.f32 %v1117, 0.0
  %v1182 = vmax.f32 %v1118, 0.0
  %v1183 = vmax.f32 %v1119, 0.0
  %v1184 = vmax.f32 %v1120, 0.0
  %v1185 = vmax.f32 %v1121, 0.0
  %v1186 = vmax.f32 %v1122, 0.0
  %v1187 = vmax.f32 %v1123, 0.0
  %v1188 = vmax.f32 %v1124, 0.0
  %v1189 = vmax.f32 %v1125, 0.0
  %v1190 = vmax.f32 %v1126, 0.0
  %v1191 = vmax.f32 %v1127, 0.0
  %v1192 = vmax.f32 %v1128, 0.0
  %v1193 = vmax.f32 %v1129, 0.0
  %v1194 = vmax.f32 %v1130, 0.0
  %v1195 = vmax.f32 %v1131, 0.0
  %v1196 = vmax.f32 %v1132, 0.0
  %v1197 = vmax.f32 %v1133, 0.0
  %v1198 = vmax.f32 %v1134, 0.0
  %v1199 = vmax.f32 %v1135, 0.0
  %v1200 = vmax.f32 %v1136, 0.0
  %v1201 = vmax.f32 %v1137, 0.0
  %v1202 = vmax.f32 %v1138, 0.0
  %v1203 = vmax.f32 %v1139, 0.0
  %v1204 = vmax.f32 %v1140, 0.0
  %v1205 = vmax.f32 %v1141, 0.0
  %v1206 = vmax.f32 %v1142, 0.0
  %v1207 = vmax.f32 %v1143, 0.0
  %v1208 = vmax.f32 %v1144, 0.0
  %v1209 = vmax.f32 %v1145, 0.0
  %v1210 = vmax.f32 %v1146, 0.0
  %v1211 = vmax.f32 %v1147, 0.0
  %v1212 = vmax.f32 %v1148, 0.0
  %v1213 = vmax.f32 %v1149, 0.0
  %v1214 = vmax.f32 %v1150, 0.0
  %v1215 = vmax.f32 %v1151, 0.0
  %v1216 = vmax.f32 %v1152, 0.0
  %1217 = vst.msk [vmem:[%s4] sm:$0xff] %vm547, %v1153
  %1218 = vst.msk [vmem:[%s4 + $0x8] sm:$0xff] %vm547, %v1154
  %1219 = vst.msk [vmem:[%s4 + $0x10] sm:$0xff] %vm547, %v1155
  %1220 = vst.msk [vmem:[%s4 + $0x18] sm:$0xff] %vm547, %v1156
  %1221 = vst.msk [vmem:[%s4 + $0x20] sm:$0xff] %vm547, %v1157
  %1222 = vst.msk [vmem:[%s4 + $0x28] sm:$0xff] %vm547, %v1158
  %1223 = vst.msk [vmem:[%s4 + $0x30] sm:$0xff] %vm547, %v1159
  %1224 = vst.msk [vmem:[%s4 + $0x38] sm:$0xff] %vm547, %v1160
  %1225 = vst.msk [vmem:[%s4 + $0x40] sm:$0xff] %vm547, %v1161
  %1226 = vst.msk [vmem:[%s4 + $0x48] sm:$0xff] %vm547, %v1162
  %1227 = vst.msk [vmem:[%s4 + $0x50] sm:$0xff] %vm547, %v1163
  %1228 = vst.msk [vmem:[%s4 + $0x58] sm:$0xff] %vm547, %v1164
  %1229 = vst.msk [vmem:[%s4 + $0x60] sm:$0xff] %vm547, %v1165
  %1230 = vst.msk [vmem:[%s4 + $0x68] sm:$0xff] %vm547, %v1166
  %1231 = vst.msk [vmem:[%s4 + $0x70] sm:$0xff] %vm547, %v1167
  %1232 = vst.msk [vmem:[%s4 + $0x78] sm:$0xff] %vm547, %v1168
  %1233 = vst.msk [vmem:[%s4 + $0x80] sm:$0xff] %vm547, %v1169
  %1234 = vst.msk [vmem:[%s4 + $0x88] sm:$0xff] %vm547, %v1170
  %1235 = vst.msk [vmem:[%s4 + $0x90] sm:$0xff] %vm547, %v1171
  %1236 = vst.msk [vmem:[%s4 + $0x98] sm:$0xff] %vm547, %v1172
  %1237 = vst.msk [vmem:[%s4 + $0xa0] sm:$0xff] %vm547, %v1173
  %1238 = vst.msk [vmem:[%s4 + $0xa8] sm:$0xff] %vm547, %v1174
  %1239 = vst.msk [vmem:[%s4 + $0xb0] sm:$0xff] %vm547, %v1175
  %1240 = vst.msk [vmem:[%s4 + $0xb8] sm:$0xff] %vm547, %v1176
  %1241 = vst.msk [vmem:[%s4 + $0xc0] sm:$0xff] %vm547, %v1177
  %1242 = vst.msk [vmem:[%s4 + $0xc8] sm:$0xff] %vm547, %v1178
  %1243 = vst.msk [vmem:[%s4 + $0xd0] sm:$0xff] %vm547, %v1179
  %1244 = vst.msk [vmem:[%s4 + $0xd8] sm:$0xff] %vm547, %v1180
  %1245 = vst.msk [vmem:[%s4 + $0xe0] sm:$0xff] %vm547, %v1181
  %1246 = vst.msk [vmem:[%s4 + $0xe8] sm:$0xff] %vm547, %v1182
  %1247 = vst.msk [vmem:[%s4 + $0xf0] sm:$0xff] %vm547, %v1183
  %1248 = vst.msk [vmem:[%s4 + $0xf8] sm:$0xff] %vm547, %v1184
  %1249 = vst.msk [vmem:[%s4 + $0x100] sm:$0xff] %vm547, %v1185
  %1250 = vst.msk [vmem:[%s4 + $0x108] sm:$0xff] %vm547, %v1186
  %1251 = vst.msk [vmem:[%s4 + $0x110] sm:$0xff] %vm547, %v1187
  %1252 = vst.msk [vmem:[%s4 + $0x118] sm:$0xff] %vm547, %v1188
  %1253 = vst.msk [vmem:[%s4 + $0x120] sm:$0xff] %vm547, %v1189
  %1254 = vst.msk [vmem:[%s4 + $0x128] sm:$0xff] %vm547, %v1190
  %1255 = vst.msk [vmem:[%s4 + $0x130] sm:$0xff] %vm547, %v1191
  %1256 = vst.msk [vmem:[%s4 + $0x138] sm:$0xff] %vm547, %v1192
  %1257 = vst.msk [vmem:[%s4 + $0x140] sm:$0xff] %vm547, %v1193
  %1258 = vst.msk [vmem:[%s4 + $0x148] sm:$0xff] %vm547, %v1194
  %1259 = vst.msk [vmem:[%s4 + $0x150] sm:$0xff] %vm547, %v1195
  %1260 = vst.msk [vmem:[%s4 + $0x158] sm:$0xff] %vm547, %v1196
  %1261 = vst.msk [vmem:[%s4 + $0x160] sm:$0xff] %vm547, %v1197
  %1262 = vst.msk [vmem:[%s4 + $0x168] sm:$0xff] %vm547, %v1198
  %1263 = vst.msk [vmem:[%s4 + $0x170] sm:$0xff] %vm547, %v1199
  %1264 = vst.msk [vmem:[%s4 + $0x178] sm:$0xff] %vm547, %v1200
  %1265 = vst.msk [vmem:[%s4 + $0x180] sm:$0xff] %vm547, %v1201
  %1266 = vst.msk [vmem:[%s4 + $0x188] sm:$0xff] %vm547, %v1202
  %1267 = vst.msk [vmem:[%s4 + $0x190] sm:$0xff] %vm547, %v1203
  %1268 = vst.msk [vmem:[%s4 + $0x198] sm:$0xff] %vm547, %v1204
  %1269 = vst.msk [vmem:[%s4 + $0x1a0] sm:$0xff] %vm547, %v1205
  %1270 = vst.msk [vmem:[%s4 + $0x1a8] sm:$0xff] %vm547, %v1206
  %1271 = vst.msk [vmem:[%s4 + $0x1b0] sm:$0xff] %vm547, %v1207
  %1272 = vst.msk [vmem:[%s4 + $0x1b8] sm:$0xff] %vm547, %v1208
  %1273 = vst.msk [vmem:[%s4 + $0x1c0] sm:$0xff] %vm547, %v1209
  %1274 = vst.msk [vmem:[%s4 + $0x1c8] sm:$0xff] %vm547, %v1210
  %1275 = vst.msk [vmem:[%s4 + $0x1d0] sm:$0xff] %vm547, %v1211
  %1276 = vst.msk [vmem:[%s4 + $0x1d8] sm:$0xff] %vm547, %v1212
  %1277 = vst.msk [vmem:[%s4 + $0x1e0] sm:$0xff] %vm547, %v1213
  %1278 = vst.msk [vmem:[%s4 + $0x1e8] sm:$0xff] %vm547, %v1214
  %1279 = vst.msk [vmem:[%s4 + $0x1f0] sm:$0xff] %vm547, %v1215
  %1280 = vst.msk [vmem:[%s4 + $0x1f8] sm:$0xff] %vm547, %v1216
  // Predicated region
  $region18: #{generator_forward.10} parent=0 // pred_check
    _
  $region19: #{generator_forward.10} parent=0 // pred_check_branch
    %1282 = sbr.rel (0) target = $region21
  $region20: #{generator_forward.10} parent=0 // pred_region
    _
  $region21: #{generator_forward.10} parent=0 // pred_fallthru
    _
  // Predicated region
  $region22: #{generator_forward.10} parent=0 // pred_check
    _
  $region23: #{generator_forward.10} parent=0 // pred_check_branch
    %1284 = sbr.rel (0) target = $region25
  $region24: #{generator_forward.10} parent=0 // pred_region
    _
  $region25: #{generator_forward.10} parent=0 // pred_fallthru
    _

// kernel: generator_forward.11
$region0: #{generator_forward.11}
  #allocation0 [shape = 'u32[]', space=smem, size = 0x4, offset = 0x4, fixed_abs, tag = 'smem constant byte address 0x4 - core index']
  #allocation1 [shape = 'u32[144,128]{1,0:T(1,128)}', space=vmem, size = 0x12000, scoped, tag = 'internal scratch']
  %s0 = inlined_call_operand.vmem [shape: f32[3,72], index: 0, kind: input, shape index: {}]
  %s1 = inlined_call_operand.vmem [shape: f32[72,512], index: 1, kind: input, shape index: {}]
  %s2 = inlined_call_operand.vmem [shape: f32[3,1], index: 2, kind: input, shape index: {}]
  %s3 = inlined_call_operand.vmem [shape: f32[3,512], index: 3, kind: output, shape index: {}]
  %s4 = sld [smem:[#allocation0]]
  $region68: #{generator_forward.11} parent=0
    _
  %s6 = ssub.s32 1, %s4
  %s7 = scalar_select 0, %s6, %s4
  $region1: #{generator_forward.11} parent=0
    #allocation2 [shape = 'u8[147456]{0}', space=vmem, size = 0x24000, scoped, tag = 'input window, operand 1']
    loop: start=0, step=1, limit=4
    $region2: #{generator_forward.11} parent=1 // loop_pre_header
      _
    $region3: #{generator_forward.11} parent=1 // loop_header
      %s9 = sphi 0, %s13
      %p10 = scmp.ge.s32.totalorder %s9, 4
      %s17 = sphi 0, %s17
      %s19 = sphi 0, %s17
      %s20 = sphi 0, %s19
      %s34 = sphi 0, %s20
      %s40 = sphi 0, %s42
      %s43 = sphi 0, %s40
      %s44 = sphi 0, %s43
      %s60 = sphi 0, %s44
      %s64 = sphi 0, %s64
      %s66 = sphi 0, %s64
      %s67 = sphi 0, %s66
      %s81 = sphi 0, %s67
      %s87 = sphi 0, %s89
      %s90 = sphi 0, %s87
      %s91 = sphi 0, %s90
      %s107 = sphi 0, %s91
    $region4: #{generator_forward.11} parent=1 // loop_header_branch
      %12 = sbr.rel (%p10) target = $region8
    $region5: #{generator_forward.11} parent=1 // loop_body
      %s14 = ssub.s32 %s9, 1
      %s15 = ssub.s32 %s9, 2
      %s16 = sadd.s32 %s9, 1
      %s18 = sadd.s32 %s17, 1
      %p21 = scmp.eq.s32.totalorder %s9, 1
      %p22 = scmp.ne.s32.totalorder %s17, %s19
      %p23 = scmp.eq.s32.totalorder %s9, 0
      %p24 = por %p22, %p23
      %p25 = scmp.ne.s32.totalorder %s17, %s19
      %p26 = scmp.eq.s32.totalorder %s14, 1
      %p27 = por %p25, %p26
      %p28 = scmp.ne.s32.totalorder %s19, %s20
      %p29 = scmp.eq.s32.totalorder %s14, 0
      %p30 = por %p28, %p29
      %p31 = scmp.ne.s32.totalorder %s19, %s20
      %p32 = scmp.eq.s32.totalorder %s15, 1
      %p33 = por %p31, %p32
      %p35 = scmp.ne.s32.totalorder %s20, %s34
      %p36 = scmp.eq.s32.totalorder %s15, 0
      %p37 = por %p35, %p36
      %s38 = ssub.s32 %s9, %s16
      %p39 = scmp.eq.s32.totalorder %s38, 0
      %s41 = sadd.s32 %s40, 1
      %s42 = scalar_select %p39, %s40, %s41
      %p45 = pneg %p39
      %p46 = scmp.eq.s32.totalorder %s9, 1
      %p47 = por %p45, %p46
      %p48 = scmp.ne.s32.totalorder %s40, %s43
      %p49 = scmp.eq.s32.totalorder %s9, 0
      %p50 = por %p48, %p49
      %p51 = scmp.ne.s32.totalorder %s40, %s43
      %p52 = scmp.eq.s32.totalorder %s14, 1
      %p53 = por %p51, %p52
      %p54 = scmp.ne.s32.totalorder %s43, %s44
      %p55 = scmp.eq.s32.totalorder %s14, 0
      %p56 = por %p54, %p55
      %p57 = scmp.ne.s32.totalorder %s43, %s44
      %p58 = scmp.eq.s32.totalorder %s15, 1
      %p59 = por %p57, %p58
      %p61 = scmp.ne.s32.totalorder %s44, %s60
      %p62 = scmp.eq.s32.totalorder %s15, 0
      %p63 = por %p61, %p62
      %s65 = sadd.s32 %s64, 1
      %p68 = scmp.eq.s32.totalorder %s9, 1
      %p69 = scmp.ne.s32.totalorder %s64, %s66
      %p70 = scmp.eq.s32.totalorder %s9, 0
      %p71 = por %p69, %p70
      %p72 = scmp.ne.s32.totalorder %s64, %s66
      %p73 = scmp.eq.s32.totalorder %s14, 1
      %p74 = por %p72, %p73
      %p75 = scmp.ne.s32.totalorder %s66, %s67
      %p76 = scmp.eq.s32.totalorder %s14, 0
      %p77 = por %p75, %p76
      %p78 = scmp.ne.s32.totalorder %s66, %s67
      %p79 = scmp.eq.s32.totalorder %s15, 1
      %p80 = por %p78, %p79
      %p82 = scmp.ne.s32.totalorder %s67, %s81
      %p83 = scmp.eq.s32.totalorder %s15, 0
      %p84 = por %p82, %p83
      %s85 = ssub.s32 %s9, %s16
      %p86 = scmp.eq.s32.totalorder %s85, 0
      %s88 = sadd.s32 %s87, 1
      %s89 = scalar_select %p86, %s87, %s88
      %p92 = pneg %p86
      %p93 = scmp.eq.s32.totalorder %s9, 1
      %p94 = por %p92, %p93
      %p95 = scmp.ne.s32.totalorder %s87, %s90
      %p96 = scmp.eq.s32.totalorder %s9, 0
      %p97 = por %p95, %p96
      %p98 = scmp.ne.s32.totalorder %s87, %s90
      %p99 = scmp.eq.s32.totalorder %s14, 1
      %p100 = por %p98, %p99
      %p101 = scmp.ne.s32.totalorder %s90, %s91
      %p102 = scmp.eq.s32.totalorder %s14, 0
      %p103 = por %p101, %p102
      %p104 = scmp.ne.s32.totalorder %s90, %s91
      %p105 = scmp.eq.s32.totalorder %s15, 1
      %p106 = por %p104, %p105
      %p108 = scmp.ne.s32.totalorder %s91, %s107
      %p109 = scmp.eq.s32.totalorder %s15, 0
      %p110 = por %p108, %p109
      %p111 = scmp.le.s32.totalorder 1, %s9
      %p112 = scmp.lt.s32.totalorder %s9, 3
      %p113 = pnand %p111, %p112
      %p114 = pneg %p113
      // Predicated region
      $region9: #{generator_forward.11} parent=5 // pred_check
        _
      $region10: #{generator_forward.11} parent=5 // pred_check_branch
        %116 = sbr.rel (%p113) target = $region12
      $region11: #{generator_forward.11} parent=5 // pred_region
        %s117 = ssub.s32 %s9, 1
        // Predicated region
        $region13: #{generator_forward.11} parent=11 // pred_check
          %p118 = pneg %p30
        $region14: #{generator_forward.11} parent=11 // pred_check_branch
          %120 = sbr.rel (%p118) target = $region16
        $region15: #{generator_forward.11} parent=11 // pred_region
          _
        $region16: #{generator_forward.11} parent=11 // pred_fallthru
          _
        // Predicated region
        $region17: #{generator_forward.11} parent=11 // pred_check
          %p121 = pneg %p77
        $region18: #{generator_forward.11} parent=11 // pred_check_branch
          %123 = sbr.rel (%p121) target = $region20
        $region19: #{generator_forward.11} parent=11 // pred_region
          _
        $region20: #{generator_forward.11} parent=11 // pred_fallthru
          _
      $region12: #{generator_forward.11} parent=5 // pred_fallthru
        _
      %p124 = scmp.lt.s32.totalorder %s9, 2
      // Predicated region
      $region21: #{generator_forward.11} parent=5 // pred_check
        %p125 = pneg %p124
      $region22: #{generator_forward.11} parent=5 // pred_check_branch
        %127 = sbr.rel (%p125) target = $region24
      $region23: #{generator_forward.11} parent=5 // pred_region
        // Predicated region
        $region25: #{generator_forward.11} parent=23 // pred_check
          %p128 = pneg %p50
        $region26: #{generator_forward.11} parent=23 // pred_check_branch
          %130 = sbr.rel (%p128) target = $region28
        $region27: #{generator_forward.11} parent=23 // pred_region
          %s131 = sand.u32 %s40, 1
          %s132 = sand.u32 %s40, 1
          %s133 = smul.addr %s132, 144
          %s134 = scalar_lea.vmem [#allocation2], %s133
          %s135 = smul.u32 2, %s9
          %s136 = smul.addr %s135, 8
          %s137 = scalar_lea.vmem %s1, %s136
          // Predicated region
          $region29: #{generator_forward.11} parent=27 // pred_check
            _
          $region30: #{generator_forward.11} parent=27 // pred_check_branch
            %139 = sbr.rel (0) target = $region32
          $region31: #{generator_forward.11} parent=27 // pred_region
            // Predicated region
            $region33: #{generator_forward.11} parent=31 // pred_check
              _
            $region34: #{generator_forward.11} parent=31 // pred_check_branch
              %141 = sbr.rel (0) target = $region36
            $region35: #{generator_forward.11} parent=31 // pred_region
              loop: start=0, step=1, limit=1
              $region37: #{generator_forward.11} parent=35 // loop_pre_header
                _
              $region38: #{generator_forward.11} parent=35 // loop_header
                %s143 = sphi 0, %s147
                %p144 = scmp.ge.s32.totalorder %s143, 1
                %s148 = sphi %s137, %s137
                %s149 = sphi %s134, %s134
              $region39: #{generator_forward.11} parent=35 // loop_header_branch
                %146 = sbr.rel (%p144) target = $region43
              $region40: #{generator_forward.11} parent=35 // loop_body
                %v150 = vld [vmem:[%s148] sm:$0xff]
                %151 = vst [vmem:[%s149] sm:$0xff] %v150
                %v152 = vld [vmem:[%s148 + $0x8] sm:$0xff]
                %153 = vst [vmem:[%s149 + $0x8] sm:$0xff] %v152
                %v154 = vld [vmem:[%s148 + $0x20] sm:$0xff]
                %155 = vst [vmem:[%s149 + $0x10] sm:$0xff] %v154
                %v156 = vld [vmem:[%s148 + $0x28] sm:$0xff]
                %157 = vst [vmem:[%s149 + $0x18] sm:$0xff] %v156
                %v158 = vld [vmem:[%s148 + $0x40] sm:$0xff]
                %159 = vst [vmem:[%s149 + $0x20] sm:$0xff] %v158
                %v160 = vld [vmem:[%s148 + $0x48] sm:$0xff]
                %161 = vst [vmem:[%s149 + $0x28] sm:$0xff] %v160
                %v162 = vld [vmem:[%s148 + $0x60] sm:$0xff]
                %163 = vst [vmem:[%s149 + $0x30] sm:$0xff] %v162
                %v164 = vld [vmem:[%s148 + $0x68] sm:$0xff]
                %165 = vst [vmem:[%s149 + $0x38] sm:$0xff] %v164
                %v166 = vld [vmem:[%s148 + $0x80] sm:$0xff]
                %167 = vst [vmem:[%s149 + $0x40] sm:$0xff] %v166
                %v168 = vld [vmem:[%s148 + $0x88] sm:$0xff]
                %169 = vst [vmem:[%s149 + $0x48] sm:$0xff] %v168
                %v170 = vld [vmem:[%s148 + $0xa0] sm:$0xff]
                %171 = vst [vmem:[%s149 + $0x50] sm:$0xff] %v170
                %v172 = vld [vmem:[%s148 + $0xa8] sm:$0xff]
                %173 = vst [vmem:[%s149 + $0x58] sm:$0xff] %v172
                %v174 = vld [vmem:[%s148 + $0xc0] sm:$0xff]
                %175 = vst [vmem:[%s149 + $0x60] sm:$0xff] %v174
                %v176 = vld [vmem:[%s148 + $0xc8] sm:$0xff]
                %177 = vst [vmem:[%s149 + $0x68] sm:$0xff] %v176
                %v178 = vld [vmem:[%s148 + $0xe0] sm:$0xff]
                %179 = vst [vmem:[%s149 + $0x70] sm:$0xff] %v178
                %v180 = vld [vmem:[%s148 + $0xe8] sm:$0xff]
                %181 = vst [vmem:[%s149 + $0x78] sm:$0xff] %v180
                %v182 = vld [vmem:[%s148 + $0x100] sm:$0xff]
                %183 = vst [vmem:[%s149 + $0x80] sm:$0xff] %v182
                %v184 = vld [vmem:[%s148 + $0x108] sm:$0xff]
                %185 = vst [vmem:[%s149 + $0x88] sm:$0xff] %v184
              $region41: #{generator_forward.11} parent=35 // loop_footer
                %s147 = sadd.s32 1, %s143
              $region42: #{generator_forward.11} parent=35 // loop_footer_branch
                %142 = sbr.rel target = $region38
              $region43: #{generator_forward.11} parent=35 // loop_exit
                _
            $region36: #{generator_forward.11} parent=31 // pred_fallthru
              _
            // Predicated region
            $region44: #{generator_forward.11} parent=31 // pred_check
              _
            $region45: #{generator_forward.11} parent=31 // pred_check_branch
              %187 = sbr.rel target = $region47
            $region46: #{generator_forward.11} parent=31 // pred_region
              _
            $region47: #{generator_forward.11} parent=31 // pred_fallthru
              _
          $region32: #{generator_forward.11} parent=27 // pred_fallthru
            _
          %188 = vnop
        $region28: #{generator_forward.11} parent=23 // pred_fallthru
          _
      $region24: #{generator_forward.11} parent=5 // pred_fallthru
        _
      %p189 = scmp.le.s32.totalorder 1, %s9
      %p190 = scmp.lt.s32.totalorder %s9, 3
      %p191 = pnand %p189, %p190
      %p192 = pneg %p191
      // Predicated region
      $region48: #{generator_forward.11} parent=5 // pred_check
        _
      $region49: #{generator_forward.11} parent=5 // pred_check_branch
        %194 = sbr.rel (%p191) target = $region51
      $region50: #{generator_forward.11} parent=5 // pred_region
        %s195 = ssub.s32 %s9, 1
        %s196 = sand.u32 %s43, 1
        %s197 = sand.u32 %s43, 1
        %s198 = smul.addr %s197, 144
        %s199 = scalar_lea.vmem [#allocation2], %s198
        // Predicated region
        $region52: #{generator_forward.11} parent=50 // pred_check
          %p200 = pneg %p56
        $region53: #{generator_forward.11} parent=50 // pred_check_branch
          %202 = sbr.rel (%p200) target = $region55
        $region54: #{generator_forward.11} parent=50 // pred_region
          _
        $region55: #{generator_forward.11} parent=50 // pred_fallthru
          _
        %p203 = pneg %p30
        %p204 = pneg %p27
        %s205 = sand.u32 %s43, 1
        %s206 = sand.u32 %s43, 1
        %s207 = smul.addr %s206, 144
        %s208 = scalar_lea.vmem [#allocation2], %s207
        %p209 = pneg %p56
        %p210 = pneg %p53
        %p211 = pneg %p77
        %p212 = pneg %p74
        %p213 = pneg %p103
        %p214 = pneg %p100
        %s215 = smul.u32 2, %s14
        %p216 = scmp.lt.s32.totalorder %s215, 3
        %s217 = scalar_select %p216, %s215, 3
        %s218 = smul.addr %s217, 4
        %s219 = scalar_lea.vmem %s3, %s218
        %s220 = smul.u32 2, %s14
        %s221 = smul.u32 2, %s14
        %p222 = scmp.lt.s32.totalorder %s221, 3
        %s223 = scalar_select %p222, %s221, 3
        %s224 = smul.addr %s223, 4
        %s225 = scalar_lea.vmem %s3, %s224
        %s226 = smul.u32 2, %s14
        %v228 = vld [vmem:[%s0] sm:$0x7]
        %v229 = vpack.c.bf16 %v228, %v228
        %v230 = vld [vmem:[%s199] sm:$0xff]
        %v231 = vld [vmem:[%s199 + $0x8] sm:$0xff]
        %v232 = vld [vmem:[%s199 + $0x10] sm:$0xff]
        %v233 = vld [vmem:[%s199 + $0x18] sm:$0xff]
        %v234 = vld [vmem:[%s199 + $0x20] sm:$0xff]
        %v235 = vld [vmem:[%s199 + $0x28] sm:$0xff]
        %v236 = vld [vmem:[%s199 + $0x30] sm:$0xff]
        %v237 = vld [vmem:[%s199 + $0x38] sm:$0xff]
        %v238 = vld [vmem:[%s199 + $0x40] sm:$0xff]
        %v239 = vld [vmem:[%s199 + $0x48] sm:$0xff]
        %v240 = vld [vmem:[%s199 + $0x50] sm:$0xff]
        %v241 = vld [vmem:[%s199 + $0x58] sm:$0xff]
        %v242 = vld [vmem:[%s199 + $0x60] sm:$0xff]
        %v243 = vld [vmem:[%s199 + $0x68] sm:$0xff]
        %v244 = vld [vmem:[%s199 + $0x70] sm:$0xff]
        %v245 = vld [vmem:[%s199 + $0x78] sm:$0xff]
        %v246 = vld [vmem:[%s199 + $0x80] sm:$0xff]
        %v247 = vld [vmem:[%s199 + $0x88] sm:$0xff]
        %v248 = vpack.c.bf16 %v232, %v230
        %v249 = vpack.c.bf16 %v233, %v231
        %v250 = vpack.c.bf16 %v236, %v234
        %v251 = vpack.c.bf16 %v237, %v235
        %v252 = vpack.c.bf16 %v240, %v238
        %v253 = vpack.c.bf16 %v241, %v239
        %v254 = vpack.c.bf16 %v244, %v242
        %v255 = vpack.c.bf16 %v245, %v243
        %v256 = vpack.c.bf16 %v246, %v246
        %v257 = vpack.c.bf16 %v247, %v247
        %v258 = vld [vmem:[%s2] sm:$0x7]
        %260 = vset.pattern.permute.xlu0 0
        %261 = vperm.xlu0 %260, %v258
        %v262 = vpop.permute.xlu0 %261
        %vm264 = vcmask 588800
        %v266 = vsel %vm264, %v229, 0
        %vm268 = vcmask 1043456
        %v270 = vsel %vm268, %v256, 0
        %v273 = vsel %vm268, %v257, 0
        %275 = vmatprep.subr.bf16.mxu0 %v249
        %276 = vmatpush1.bf16.msra.mxu0 %v248
        %277 = vmatprep.subr.bf16.mxu0 %v251
        %278 = vmatpush1.bf16.msra.mxu0 %v250
        %279 = vmatprep.subr.bf16.mxu0 %v253
        %280 = vmatpush1.bf16.msra.mxu0 %v252
        %281 = vmatprep.subr.bf16.mxu0 %v255
        %282 = vmatpush1.bf16.msra.mxu0 %v254
        %283 = vmatprep.subr.bf16.mxu0 %v273
        %284 = vmatpush1.bf16.msra.mxu0 %v270
        %285 = vmatprep.subr.bf16.mxu0 0
        %286 = vmatpush1.bf16.msra.mxu0 0
        %287 = vmatprep.subr.bf16.mxu0 0
        %288 = vmatpush1.bf16.msra.mxu0 0
        %289 = vmatprep.subr.bf16.mxu0 0
        %290 = vmatpush1.bf16.msra.mxu0 0
        %291 = vmatprep.subr.bf16.mxu0 0
        %292 = vmatpush1.bf16.msra.mxu0 0
        %293 = vmatprep.subr.bf16.mxu0 0
        %294 = vmatpush1.bf16.msra.mxu0 0
        %295 = vmatprep.subr.bf16.mxu0 0
        %296 = vmatpush1.bf16.msra.mxu0 0
        %297 = vmatprep.subr.bf16.mxu0 0
        %298 = vmatpush1.bf16.msra.mxu0 0
        %299 = vmatprep.subr.bf16.mxu0 0
        %300 = vmatpush1.bf16.msra.mxu0 0
        %301 = vmatprep.subr.bf16.mxu0 0
        %302 = vmatpush1.bf16.msra.mxu0 0
        %303 = vmatprep.subr.bf16.mxu0 0
        %304 = vmatpush1.bf16.msra.mxu0 0
        %305 = vmatprep.subr.bf16.mxu0 0
        %306 = vmatpush1.bf16.msra.mxu0 0
        %307 = vmatprep.mubr.bf16.mxu0 0
        %308 = vmatmul.mubr.bf16.gmra.mrb[0].mxu0 %v266
        %v309 = vpop.f32.mrb[0].mxu0
        %v310 = vadd.f32 %v262, %v309
        %v311 = vpop.f32.mrb[0].mxu0
        %v312 = vadd.f32 %v262, %v311
        %v313 = vpop.f32.mrb[0].mxu0
        %v314 = vpop.f32.mrb[0].mxu0
        %315 = vdwg.mxu0
        %v316 = vtanh.pop %v310
        %v317 = vtanh.pop %v312
        %v320 = vcombine.low %v316, %v317
        %322 = vst [vmem:[%s225] sm:$0x77] %v320
        %s323 = smul.u32 2, %s14
        %p324 = scmp.lt.s32.totalorder %s323, 3
        %s325 = scalar_select %p324, %s323, 3
        %s326 = smul.addr %s325, 4
        %s327 = scalar_lea.vmem %s3, %s326
        // Predicated region
        $region56: #{generator_forward.11} parent=50 // pred_check
          %p328 = pneg %p100
        $region57: #{generator_forward.11} parent=50 // pred_check_branch
          %330 = sbr.rel (%p328) target = $region59
        $region58: #{generator_forward.11} parent=50 // pred_region
          %s331 = smul.u32 2, %s14
        $region59: #{generator_forward.11} parent=50 // pred_fallthru
          _
      $region51: #{generator_forward.11} parent=5 // pred_fallthru
        _
      %p332 = scmp.le.s32.totalorder 2, %s9
      // Predicated region
      $region60: #{generator_forward.11} parent=5 // pred_check
        %p333 = pneg %p332
      $region61: #{generator_forward.11} parent=5 // pred_check_branch
        %335 = sbr.rel (%p333) target = $region63
      $region62: #{generator_forward.11} parent=5 // pred_region
        %s336 = ssub.s32 %s9, 2
        // Predicated region
        $region64: #{generator_forward.11} parent=62 // pred_check
          %p337 = pneg %p106
        $region65: #{generator_forward.11} parent=62 // pred_check_branch
          %339 = sbr.rel (%p337) target = $region67
        $region66: #{generator_forward.11} parent=62 // pred_region
          %s340 = smul.u32 2, %s15
          %p341 = scmp.lt.s32.totalorder %s340, 3
          %s342 = scalar_select %p341, %s340, 3
          %s343 = smul.addr %s342, 4
          %s344 = scalar_lea.vmem %s3, %s343
        $region67: #{generator_forward.11} parent=62 // pred_fallthru
          _
      $region63: #{generator_forward.11} parent=5 // pred_fallthru
        _
    $region6: #{generator_forward.11} parent=1 // loop_footer
      %s13 = sadd.s32 1, %s9
    $region7: #{generator_forward.11} parent=1 // loop_footer_branch
      %8 = sbr.rel target = $region3
    $region8: #{generator_forward.11} parent=1 // loop_exit
      _

</llo_original>
